<compile_context>
chip_gen: v7x
topology: tpu7x:2x2x1
jax: 0.10.0
libtpu: 0.0.40
codegen_flags: <defaults>
</compile_context>

<pallas_src>
import math
import functools

import jax
import jax.numpy as jnp
from jax import lax
from jax.experimental import pallas as pl
from jax.experimental.pallas import tpu as pltpu


LN_EPS = 1e-6
MASK_NEG = -1.0e9
# Scoped-VMEM budget: above v5e's 16 MiB default, equal to v6e/v7x defaults.
VMEM_LIMIT = 32 * 1024 * 1024


# ----------------------------------------------------------------------------
# In-kernel helpers
# ----------------------------------------------------------------------------

def _layernorm(z, gamma, beta, eps):
    """MCAN LayerNorm: gamma*(z-mean)/(std_unbiased+eps)+beta; divide on EUP."""
    H = z.shape[-1]
    mu = jnp.mean(z, axis=-1, keepdims=True)
    d = z - mu
    var = jnp.sum(d * d, axis=-1, keepdims=True) / (H - 1)
    inv = pl.reciprocal(jnp.sqrt(var) + eps, approx=True)
    return gamma * (d * inv) + beta


def _mha_core(q, k, v, mb_ref, ctx_ref, *, bt, sq, num_heads, head_dim, scale,
              mdt):
    """Per-(batch, head) scaled-dot attention.

    Each head writes its (Sq, DH) context directly into the VMEM scratch
    ctx_ref[:, h*DH:(h+1)*DH] -- no jnp.concatenate, no per-head relayout.
    """
    sk = k.shape[0] // bt
    for b in range(bt):
        rq = slice(b * sq, (b + 1) * sq)
        rk = slice(b * sk, (b + 1) * sk)
        bias = mb_ref[b]                                   # (1, Sk) additive f32
        for h in range(num_heads):
            cs = slice(h * head_dim, (h + 1) * head_dim)
            qh = q[rq, cs].astype(mdt)                     # (Sq, DH)
            kh = k[rk, cs].astype(mdt)                     # (Sk, DH)
            vh = v[rk, cs].astype(mdt)                     # (Sk, DH)
            s = lax.dot_general(qh, kh, (((1,), (1,)), ((), ())),
                                preferred_element_type=jnp.float32) * scale
            s = s + bias
            s = s - jnp.max(s, axis=-1, keepdims=True)
            p = jnp.exp(s)
            p = p * pl.reciprocal(jnp.sum(p, axis=-1, keepdims=True),
                                  approx=True)
            ctx_ref[rq, cs] = jnp.dot(p.astype(mdt), vh,
                                      preferred_element_type=jnp.float32)


# ----------------------------------------------------------------------------
# Pallas kernels
# ----------------------------------------------------------------------------

def _self_attn_kernel(x_ref, mb_ref, wqkv_ref, bqkv_ref, wm_ref, bm_ref,
                      g_ref, beta_ref, o_ref, ctx_ref, *,
                      num_heads, head_dim, scale, bt, sq, eps):
    """Fused self-attention block: QKV proj + MHA + merge + residual + LN.

    x_ref : (Bt*Sq, H) f32    (also the residual)
    mb_ref: (Bt, 1, Sq) f32   additive mask bias (-1e9 at masked keys)
    """
    H = num_heads * head_dim
    mdt = wqkv_ref.dtype
    x = x_ref[...]                                         # (Bt*Sq, H) f32
    # Single wide (M, H) x (H, 3H) fused QKV projection.
    qkv = jnp.dot(x.astype(mdt), wqkv_ref[...],
                  preferred_element_type=jnp.float32) + bqkv_ref[...]
    q = qkv[:, :H]
    k = qkv[:, H:2 * H]
    v = qkv[:, 2 * H:]
    _mha_core(q, k, v, mb_ref, ctx_ref, bt=bt, sq=sq,
              num_heads=num_heads, head_dim=head_dim, scale=scale, mdt=mdt)
    merged = jnp.dot(ctx_ref[...].astype(mdt), wm_ref[...],
                     preferred_element_type=jnp.float32) + bm_ref[...]
    z = merged + x
    o_ref[...] = _layernorm(z, g_ref[...], beta_ref[...], eps).astype(o_ref.dtype)


def _cross_attn_kernel(x_ref, kv_ref, mb_ref, wq_ref, bq_ref, wkv_ref, bkv_ref,
                       wm_ref, bm_ref, g_ref, beta_ref, o_ref, ctx_ref, *,
                       num_heads, head_dim, scale, bt, sq, residual, eps):
    """Fused cross-attention block: Q / fused-KV proj + MHA + merge (+res) + LN.

    x_ref : (Bt*Sq, H) f32  query side (residual when residual=True)
    kv_ref: (Bt*Sk, H) f32  key/value side
    mb_ref: (Bt, 1, Sk) f32 additive mask bias
    """
    H = num_heads * head_dim
    mdt = wq_ref.dtype
    x = x_ref[...]
    kv = kv_ref[...]
    q = jnp.dot(x.astype(mdt), wq_ref[...],
                preferred_element_type=jnp.float32) + bq_ref[...]
    kvp = jnp.dot(kv.astype(mdt), wkv_ref[...],
                  preferred_element_type=jnp.float32) + bkv_ref[...]
    k = kvp[:, :H]
    v = kvp[:, H:]
    _mha_core(q, k, v, mb_ref, ctx_ref, bt=bt, sq=sq,
              num_heads=num_heads, head_dim=head_dim, scale=scale, mdt=mdt)
    merged = jnp.dot(ctx_ref[...].astype(mdt), wm_ref[...],
                     preferred_element_type=jnp.float32) + bm_ref[...]
    z = merged + x if residual else merged
    o_ref[...] = _layernorm(z, g_ref[...], beta_ref[...], eps).astype(o_ref.dtype)


def _ffn_block_kernel(x_ref, w1_ref, b1_ref, w2_ref, b2_ref,
                      g_ref, beta_ref, o_ref, *, residual, eps):
    """Fused FFN: Linear+ReLU, Linear, optional residual, LayerNorm."""
    x = x_ref[...]                                         # (Tm, H) f32
    mdt = w1_ref.dtype
    h = jnp.dot(x.astype(mdt), w1_ref[...],
                preferred_element_type=jnp.float32) + b1_ref[...]
    h = jnp.maximum(h, 0.0)
    y = jnp.dot(h.astype(mdt), w2_ref[...],
                preferred_element_type=jnp.float32) + b2_ref[...]
    if residual:
        y = y + x
    o_ref[...] = _layernorm(y, g_ref[...], beta_ref[...], eps).astype(o_ref.dtype)


# ----------------------------------------------------------------------------
# Tiling helpers
# ----------------------------------------------------------------------------

def _batch_tile(B, S, target_rows=256):
    """Largest Bt dividing B with Bt*S <= target_rows, keeping the grid >= 2
    steps whenever B >= 2 (so both v7x TensorCores get work)."""
    best = 1
    for bt in range(1, B + 1):
        if B % bt:
            continue
        if B >= 2 and B // bt < 2:
            continue
        if bt * S <= max(target_rows, S):
            best = bt
    return best


def _row_tile(M, max_tile=512):
    """Row tile: multiple of 8 dividing M, <= max_tile, preferring >= 2 steps."""
    candidates = [t for t in range(8, min(M, max_tile) + 1, 8) if M % t == 0]
    two_step = [t for t in candidates if M // t >= 2]
    if two_step:
        return max(two_step)
    if candidates:
        return max(candidates)
    return M


# ----------------------------------------------------------------------------
# Pallas wrappers
# ----------------------------------------------------------------------------

def self_attention_block(att_p, ln_g, ln_b, cfg, x, mask_bias):
    """Fused self-attention + merge + residual + LayerNorm.  x: (B, S, H)."""
    B, Sq, H = x.shape
    NH, DH = cfg['MULTI_HEAD'], cfg['HIDDEN_SIZE_HEAD']
    bt = _batch_tile(B, Sq)
    x2 = x.reshape(B * Sq, H)

    kernel = functools.partial(
        _self_attn_kernel, num_heads=NH, head_dim=DH,
        scale=1.0 / math.sqrt(DH), bt=bt, sq=Sq, eps=LN_EPS)

    rows = lambda i: (i, 0)
    const2 = lambda i: (0, 0)
    mrow = lambda i: (i, 0, 0)

    flops = (2 * B * Sq * H * 3 * H + 4 * B * NH * Sq * Sq * DH
             + 2 * B * Sq * H * H)
    bytes_acc = (4 * (2 * B * Sq * H + B * Sq)
                 + 2 * (3 * H * H + H * H) + 4 * 8 * H)
    cost = pl.CostEstimate(flops=int(flops),
                           transcendentals=int(B * NH * Sq * Sq),
                           bytes_accessed=int(bytes_acc))

    y = pl.pallas_call(
        kernel,
        out_shape=jax.ShapeDtypeStruct((B * Sq, H), x.dtype),
        grid=(B // bt,),
        in_specs=[
            pl.BlockSpec((bt * Sq, H), rows),        # x (query / residual)
            pl.BlockSpec((bt, 1, Sq), mrow),         # additive mask bias
            pl.BlockSpec((H, 3 * H), const2),        # fused Wqkv (VMEM-resident)
            pl.BlockSpec((1, 3 * H), const2),        # bqkv
            pl.BlockSpec((H, H), const2),            # Wm
            pl.BlockSpec((1, H), const2),            # bm
            pl.BlockSpec((1, H), const2),            # LN gamma
            pl.BlockSpec((1, H), const2),            # LN beta
        ],
        out_specs=pl.BlockSpec((bt * Sq, H), rows),
        scratch_shapes=[pltpu.VMEM((bt * Sq, H), jnp.float32)],  # ctx scratch
        compiler_params=pltpu.CompilerParams(
            dimension_semantics=("parallel",),
            vmem_limit_bytes=VMEM_LIMIT),
        cost_estimate=cost,
    )(x2, mask_bias, att_p['Wqkv'], att_p['bqkv'], att_p['Wm'], att_p['bm'],
      ln_g, ln_b)
    return y.reshape(B, Sq, H)


def cross_attention_block(att_p, ln_g, ln_b, cfg, q_in, kv_in, mask_bias,
                          residual=True):
    """Fused cross-attention + merge (+residual) + LayerNorm.

    q_in: (B, Sq, H); kv_in: (B, Sk, H); mask_bias: (B, 1, Sk) additive f32.
    """
    B, Sq, H = q_in.shape
    Sk = kv_in.shape[1]
    NH, DH = cfg['MULTI_HEAD'], cfg['HIDDEN_SIZE_HEAD']
    bt = _batch_tile(B, max(Sq, Sk))
    x2 = q_in.reshape(B * Sq, H)
    kv2 = kv_in.reshape(B * Sk, H)

    kernel = functools.partial(
        _cross_attn_kernel, num_heads=NH, head_dim=DH,
        scale=1.0 / math.sqrt(DH), bt=bt, sq=Sq, residual=residual, eps=LN_EPS)

    qrows = lambda i: (i, 0)
    kvrows = lambda i: (i, 0)
    const2 = lambda i: (0, 0)
    mrow = lambda i: (i, 0, 0)

    flops = (2 * B * Sq * H * H + 2 * B * Sk * H * 2 * H
             + 4 * B * NH * Sq * Sk * DH + 2 * B * Sq * H * H)
    bytes_acc = (4 * (B * Sq * H + B * Sk * H + B * Sq * H + B * Sk)
                 + 2 * (H * H + 2 * H * H + H * H) + 4 * 8 * H)
    cost = pl.CostEstimate(flops=int(flops),
                           transcendentals=int(B * NH * Sq * Sk),
                           bytes_accessed=int(bytes_acc))

    y = pl.pallas_call(
        kernel,
        out_shape=jax.ShapeDtypeStruct((B * Sq, H), q_in.dtype),
        grid=(B // bt,),
        in_specs=[
            pl.BlockSpec((bt * Sq, H), qrows),       # query side / residual
            pl.BlockSpec((bt * Sk, H), kvrows),      # key/value side
            pl.BlockSpec((bt, 1, Sk), mrow),         # additive mask bias
            pl.BlockSpec((H, H), const2),            # Wq   (VMEM-resident)
            pl.BlockSpec((1, H), const2),            # bq
            pl.BlockSpec((H, 2 * H), const2),        # fused Wkv
            pl.BlockSpec((1, 2 * H), const2),        # bkv
            pl.BlockSpec((H, H), const2),            # Wm
            pl.BlockSpec((1, H), const2),            # bm
            pl.BlockSpec((1, H), const2),            # LN gamma
            pl.BlockSpec((1, H), const2),            # LN beta
        ],
        out_specs=pl.BlockSpec((bt * Sq, H), qrows),
        scratch_shapes=[pltpu.VMEM((bt * Sq, H), jnp.float32)],  # ctx scratch
        compiler_params=pltpu.CompilerParams(
            dimension_semantics=("parallel",),
            vmem_limit_bytes=VMEM_LIMIT),
        cost_estimate=cost,
    )(x2, kv2, mask_bias, att_p['Wq'], att_p['bq'], att_p['Wkv'], att_p['bkv'],
      att_p['Wm'], att_p['bm'], ln_g, ln_b)
    return y.reshape(B, Sq, H)


def ffn_block(ffn_p, ln_g, ln_b, x, residual=True):
    """Fused FFN (+residual) + LayerNorm over rows M = B*S."""
    B, S, H = x.shape
    M = B * S
    FF = ffn_p['W1'].shape[1]
    x2 = x.reshape(M, H)
    tm = _row_tile(M)

    kernel = functools.partial(_ffn_block_kernel, residual=residual, eps=LN_EPS)
    const = lambda i: (0, 0)

    flops = 4 * M * H * FF
    bytes_acc = 4 * 2 * M * H + 2 * 2 * H * FF + 4 * 4 * H
    cost = pl.CostEstimate(flops=int(flops), transcendentals=int(M),
                           bytes_accessed=int(bytes_acc))

    y = pl.pallas_call(
        kernel,
        out_shape=jax.ShapeDtypeStruct((M, H), x.dtype),
        grid=(M // tm,),
        in_specs=[
            pl.BlockSpec((tm, H), lambda i: (i, 0)),
            pl.BlockSpec((H, FF), const),            # W1 (VMEM-resident)
            pl.BlockSpec((1, FF), const),
            pl.BlockSpec((FF, H), const),            # W2
            pl.BlockSpec((1, H), const),
            pl.BlockSpec((1, H), const),             # LN gamma
            pl.BlockSpec((1, H), const),             # LN beta
        ],
        out_specs=pl.BlockSpec((tm, H), lambda i: (i, 0)),
        compiler_params=pltpu.CompilerParams(
            dimension_semantics=("parallel",),
            vmem_limit_bytes=VMEM_LIMIT),
        cost_estimate=cost,
    )(x2, ffn_p['W1'], ffn_p['b1'], ffn_p['W2'], ffn_p['b2'], ln_g, ln_b)
    return y.reshape(B, S, H)


# ----------------------------------------------------------------------------
# One-time parameter preprocessing (fuse + cast weights OUTSIDE the forward)
# ----------------------------------------------------------------------------

def _prep_mhatt_self(p, mdt):
    return {
        'Wqkv': jnp.concatenate([p['Wq'], p['Wk'], p['Wv']], axis=1).astype(mdt),
        'bqkv': jnp.concatenate([p['bq'], p['bk'], p['bv']], axis=1),
        'Wm': p['Wm'].astype(mdt), 'bm': p['bm'],
    }


def _prep_mhatt_cross(p, mdt):
    return {
        'Wq': p['Wq'].astype(mdt), 'bq': p['bq'],
        'Wkv': jnp.concatenate([p['Wk'], p['Wv']], axis=1).astype(mdt),
        'bkv': jnp.concatenate([p['bk'], p['bv']], axis=1),
        'Wm': p['Wm'].astype(mdt), 'bm': p['bm'],
    }


def _prep_ffn(p, mdt):
    return {'W1': p['W1'].astype(mdt), 'b1': p['b1'],
            'W2': p['W2'].astype(mdt), 'b2': p['b2']}


def preprocess_params(params, matmul_dtype=jnp.bfloat16):
    mdt = matmul_dtype
    enc = [{'mhatt': _prep_mhatt_self(p['mhatt'], mdt),
            'ffn': _prep_ffn(p['ffn'], mdt),
            'ln1_g': p['ln1_g'], 'ln1_b': p['ln1_b'],
            'ln2_g': p['ln2_g'], 'ln2_b': p['ln2_b']} for p in params['enc']]

    def prep_sga(p):
        return {'mhatt1': _prep_mhatt_self(p['mhatt1'], mdt),
                'mhatt2': _prep_mhatt_cross(p['mhatt2'], mdt),
                'ffn': _prep_ffn(p['ffn'], mdt),
                'ln1_g': p['ln1_g'], 'ln1_b': p['ln1_b'],
                'ln2_g': p['ln2_g'], 'ln2_b': p['ln2_b'],
                'ln3_g': p['ln3_g'], 'ln3_b': p['ln3_b']}

    return {'enc': enc,
            'dec': [prep_sga(p) for p in params['dec']],
            'dec_last': prep_sga(params['dec_last'])}


# ----------------------------------------------------------------------------
# Module-level functions (SA / SGA / SGA_last / MCA_ED)
# ----------------------------------------------------------------------------

def sa_apply(p, cfg, x, xb):
    x = self_attention_block(p['mhatt'], p['ln1_g'], p['ln1_b'], cfg, x, xb)
    x = ffn_block(p['ffn'], p['ln2_g'], p['ln2_b'], x, residual=True)
    return x


def sga_apply(p, cfg, x, y, xb, yb):
    x = self_attention_block(p['mhatt1'], p['ln1_g'], p['ln1_b'], cfg, x, xb)
    x = cross_attention_block(p['mhatt2'], p['ln2_g'], p['ln2_b'], cfg,
                              x, y, yb, residual=True)
    x = ffn_block(p['ffn'], p['ln3_g'], p['ln3_b'], x, residual=True)
    return x


def sga_last_apply(p, cfg, x, y, xb, yb):
    # x := decoder stream, y := encoder output (per MCA_ED call convention).
    x = self_attention_block(p['mhatt1'], p['ln1_g'], p['ln1_b'], cfg, x, xb)
    # norm2: mhatt2(v=x, k=x, q=y, mask=x_mask); NO residual connection.
    x = cross_attention_block(p['mhatt2'], p['ln2_g'], p['ln2_b'], cfg,
                              y, x, xb, residual=False)
    # norm3: NO residual connection.
    x = ffn_block(p['ffn'], p['ln3_g'], p['ln3_b'], x, residual=False)
    return x


def mca_ed_apply(proc, cfg, x, y, x_mask, y_mask):
    """x: (B,Sx,H), y: (B,Sy,H); masks (B,1,1,S) bool, True = masked key."""
    B = x.shape[0]
    # Convert boolean key-padding masks ONCE to additive f32 biases.
    xb = jnp.where(x_mask, MASK_NEG, 0.0).astype(jnp.float32).reshape(B, 1, -1)
    yb = jnp.where(y_mask, MASK_NEG, 0.0).astype(jnp.float32).reshape(B, 1, -1)

    for p in proc['enc']:
        x = sa_apply(p, cfg, x, xb)
    for p in proc['dec']:
        y = sga_apply(p, cfg, y, x, yb, xb)
    y = sga_last_apply(proc['dec_last'], cfg, y, x, yb, xb)
    return x, y


# ----------------------------------------------------------------------------
# Deterministic parameter initialization
# ----------------------------------------------------------------------------

def _init_linear(key, in_dim, out_dim):
    k1, k2 = jax.random.split(key)
    W = jax.random.normal(k1, (in_dim, out_dim), jnp.float32) * 0.05
    b = jax.random.normal(k2, (1, out_dim), jnp.float32) * 0.05
    return W, b


def _init_mhatt(key, H):
    ks = jax.random.split(key, 4)
    p = {}
    for name, k in zip(('v', 'k', 'q', 'm'), ks):
        W, b = _init_linear(k, H, H)
        p['W' + name], p['b' + name] = W, b
    return p


def _init_ffn(key, H, FF):
    k1, k2 = jax.random.split(key)
    W1, b1 = _init_linear(k1, H, FF)
    W2, b2 = _init_linear(k2, FF, H)
    return {'W1': W1, 'b1': b1, 'W2': W2, 'b2': b2}


def _init_ln(H):
    return jnp.ones((1, H), jnp.float32), jnp.zeros((1, H), jnp.float32)


def _init_sa(key, cfg):
    H, FF = cfg['HIDDEN_SIZE'], cfg['FF_SIZE']
    k1, k2 = jax.random.split(key)
    g1, b1 = _init_ln(H)
    g2, b2 = _init_ln(H)
    return {'mhatt': _init_mhatt(k1, H), 'ffn': _init_ffn(k2, H, FF),
            'ln1_g': g1, 'ln1_b': b1, 'ln2_g': g2, 'ln2_b': b2}


def _init_sga(key, cfg):
    H, FF = cfg['HIDDEN_SIZE'], cfg['FF_SIZE']
    k1, k2, k3 = jax.random.split(key, 3)
    g1, b1 = _init_ln(H)
    g2, b2 = _init_ln(H)
    g3, b3 = _init_ln(H)
    return {'mhatt1': _init_mhatt(k1, H), 'mhatt2': _init_mhatt(k2, H),
            'ffn': _init_ffn(k3, H, FF),
            'ln1_g': g1, 'ln1_b': b1, 'ln2_g': g2, 'ln2_b': b2,
            'ln3_g': g3, 'ln3_b': b3}


def init_mca_ed(key, cfg):
    L = cfg['LAYER']
    keys = jax.random.split(key, 2 * L)
    enc = [_init_sa(keys[i], cfg) for i in range(L)]
    dec = [_init_sga(keys[L + i], cfg) for i in range(L - 1)]
    dec_last = _init_sga(keys[2 * L - 1], cfg)
    return {'enc': enc, 'dec': dec, 'dec_last': dec_last}


# ----------------------------------------------------------------------------
# Main
# ----------------------------------------------------------------------------

if __name__ == "__main__":
    # NOTE: toy config is for correctness only (lane-sparse at H=32); benchmark
    # at H=512 / S~100 for meaningful TPU numbers.
    cfg = {
        'HIDDEN_SIZE': 32,
        'FF_SIZE': 64,
        'MULTI_HEAD': 4,
        'HIDDEN_SIZE_HEAD': 8,
        'LAYER': 2,
        'DROPOUT_R': 0.1,   # dropout is identity in inference mode
    }

    B, Sx, Sy, H = 2, 8, 16, cfg['HIDDEN_SIZE']

    root = jax.random.PRNGKey(0)
    kp, kx, ky = jax.random.split(root, 3)
    params = init_mca_ed(kp, cfg)
    # One-time weight fusing / bf16 casting (hoisted out of the forward pass).
    proc = preprocess_params(params, jnp.bfloat16)

    x = jax.random.normal(kx, (B, Sx, H), jnp.float32)
    y = jax.random.normal(ky, (B, Sy, H), jnp.float32)

    # boolean padding masks (True = masked key position), shape (B,1,1,S)
    x_mask = jnp.broadcast_to(
        jnp.arange(Sx)[None, None, None, :] >= (Sx - 2), (B, 1, 1, Sx))
    y_mask = jnp.broadcast_to(
        jnp.arange(Sy)[None, None, None, :] >= (Sy - 3), (B, 1, 1, Sy))

    @jax.jit
    def forward(proc, x, y, x_mask, y_mask):
        return mca_ed_apply(proc, cfg, x, y, x_mask, y_mask)

    x_out, y_out = forward(proc, x, y, x_mask, y_mask)
    jax.block_until_ready((x_out, y_out))

    assert x_out.shape == (B, Sx, H)
    # SGA_last's second attention uses the encoder output as the query, so the
    # returned "y" has the encoder sequence length (faithful to the PyTorch code).
    assert y_out.shape == (B, Sx, H)
    assert jnp.all(jnp.isfinite(x_out)) and jnp.all(jnp.isfinite(y_out))

    print("KERNEL_OK")
</pallas_src>

<mosaic_0001>
module attributes {stable_mosaic.version = 11 : i64} {
  func.func @_self_attn_kernel(%arg0: i32, %arg1: memref<8x32xf32, #tpu.memory_space<vmem>>, %arg2: memref<1x1x8xf32, #tpu.memory_space<vmem>>, %arg3: memref<32x96xbf16, #tpu.memory_space<vmem>>, %arg4: memref<1x96xf32, #tpu.memory_space<vmem>>, %arg5: memref<32x32xbf16, #tpu.memory_space<vmem>>, %arg6: memref<1x32xf32, #tpu.memory_space<vmem>>, %arg7: memref<1x32xf32, #tpu.memory_space<vmem>>, %arg8: memref<1x32xf32, #tpu.memory_space<vmem>>, %arg9: memref<8x32xf32, #tpu.memory_space<vmem>>, %arg10: memref<8x32xf32, #tpu.memory_space<vmem>>) attributes {dimension_semantics = [#tpu.dimension_semantics<parallel>], iteration_bounds = array<i64: 2>, scalar_prefetch = 0 : i64, scratch_operands = 1 : i64, tpu.core_type = #tpu.core_type<tc>, window_params = [{transform_indices = @transform_0, window_bounds = array<i64: 8, 32>}, {transform_indices = @transform_1, window_bounds = array<i64: 1, 1, 8>}, {pipeline_mode = #tpu.pipeline_mode<synchronous>, transform_indices = @transform_2, window_bounds = array<i64: 32, 96>}, {pipeline_mode = #tpu.pipeline_mode<synchronous>, transform_indices = @transform_3, window_bounds = array<i64: 1, 96>}, {pipeline_mode = #tpu.pipeline_mode<synchronous>, transform_indices = @transform_4, window_bounds = array<i64: 32, 32>}, {pipeline_mode = #tpu.pipeline_mode<synchronous>, transform_indices = @transform_5, window_bounds = array<i64: 1, 32>}, {pipeline_mode = #tpu.pipeline_mode<synchronous>, transform_indices = @transform_6, window_bounds = array<i64: 1, 32>}, {pipeline_mode = #tpu.pipeline_mode<synchronous>, transform_indices = @transform_7, window_bounds = array<i64: 1, 32>}, {transform_indices = @transform_8, window_bounds = array<i64: 8, 32>}]} {
    %c0 = arith.constant 0 : index
    %c0_0 = arith.constant 0 : index
    %0 = vector.load %arg1[%c0, %c0_0] : memref<8x32xf32, #tpu.memory_space<vmem>>, vector<8x32xf32>
    %1 = arith.truncf %0 : vector<8x32xf32> to vector<8x32xbf16>
    %c0_1 = arith.constant 0 : index
    %c0_2 = arith.constant 0 : index
    %2 = vector.load %arg3[%c0_1, %c0_2] : memref<32x96xbf16, #tpu.memory_space<vmem>>, vector<32x96xbf16>
    %cst = arith.constant dense<0.000000e+00> : vector<8x96xf32>
    %3 = tpu.matmul %1, %2, %cst {dimension_numbers = #tpu.dot_dimension_numbers<[1], [0], [0], [1], [0, 0, 1, 1], [], []>} : vector<8x32xbf16>, vector<32x96xbf16>, vector<8x96xf32> -> vector<8x96xf32>
    %c0_3 = arith.constant 0 : index
    %c0_4 = arith.constant 0 : index
    %4 = vector.load %arg4[%c0_3, %c0_4] : memref<1x96xf32, #tpu.memory_space<vmem>>, vector<1x96xf32>
    %5 = vector.broadcast %4 : vector<1x96xf32> to vector<8x96xf32>
    %6 = arith.addf %3, %5 : vector<8x96xf32>
    %7 = vector.extract_strided_slice %6 {offsets = [0, 0], sizes = [8, 32], strides = [1, 1]} : vector<8x96xf32> to vector<8x32xf32>
    %8 = vector.extract_strided_slice %6 {offsets = [0, 32], sizes = [8, 32], strides = [1, 1]} : vector<8x96xf32> to vector<8x32xf32>
    %9 = vector.extract_strided_slice %6 {offsets = [0, 64], sizes = [8, 32], strides = [1, 1]} : vector<8x96xf32> to vector<8x32xf32>
    %c0_5 = arith.constant 0 : index
    %c0_6 = arith.constant 0 : index
    %c0_7 = arith.constant 0 : index
    %10 = vector.load %arg2[%c0_5, %c0_6, %c0_7] : memref<1x1x8xf32, #tpu.memory_space<vmem>>, vector<1x1x8xf32>
    %11 = vector.shape_cast %10 : vector<1x1x8xf32> to vector<1x8xf32>
    %12 = vector.extract_strided_slice %7 {offsets = [0, 0], sizes = [8, 8], strides = [1, 1]} : vector<8x32xf32> to vector<8x8xf32>
    %13 = arith.truncf %12 : vector<8x8xf32> to vector<8x8xbf16>
    %14 = vector.extract_strided_slice %8 {offsets = [0, 0], sizes = [8, 8], strides = [1, 1]} : vector<8x32xf32> to vector<8x8xf32>
    %15 = arith.truncf %14 : vector<8x8xf32> to vector<8x8xbf16>
    %16 = vector.extract_strided_slice %9 {offsets = [0, 0], sizes = [8, 8], strides = [1, 1]} : vector<8x32xf32> to vector<8x8xf32>
    %17 = arith.truncf %16 : vector<8x8xf32> to vector<8x8xbf16>
    %cst_8 = arith.constant dense<0.000000e+00> : vector<8x8xf32>
    %18 = tpu.matmul %13, %15, %cst_8 {dimension_numbers = #tpu.dot_dimension_numbers<[1], [1], [0], [0], [0, 0, 1, 0], [], []>} : vector<8x8xbf16>, vector<8x8xbf16>, vector<8x8xf32> -> vector<8x8xf32>
    %cst_9 = arith.constant 0.353553385 : f32
    %19 = vector.broadcast %cst_9 : f32 to vector<8x8xf32>
    %20 = arith.mulf %18, %19 : vector<8x8xf32>
    %21 = vector.broadcast %11 : vector<1x8xf32> to vector<8x8xf32>
    %22 = arith.addf %20, %21 : vector<8x8xf32>
    %cst_10 = arith.constant dense<0xFF800000> : vector<8xf32>
    %23 = vector.multi_reduction <maximumf>, %22, %cst_10 [1] : vector<8x8xf32> to vector<8xf32>
    %24 = vector.shape_cast %23 : vector<8xf32> to vector<8x1xf32>
    %25 = vector.broadcast %24 : vector<8x1xf32> to vector<8x8xf32>
    %26 = arith.subf %22, %25 : vector<8x8xf32>
    %27 = math.exp %26 : vector<8x8xf32>
    %cst_11 = arith.constant dense<0.000000e+00> : vector<8xf32>
    %28 = vector.multi_reduction <add>, %27, %cst_11 [1] : vector<8x8xf32> to vector<8xf32>
    %29 = vector.shape_cast %28 : vector<8xf32> to vector<8x1xf32>
    %30 = tpu.reciprocal %29 {approx = true} : vector<8x1xf32> -> vector<8x1xf32>
    %31 = vector.broadcast %30 : vector<8x1xf32> to vector<8x8xf32>
    %32 = arith.mulf %27, %31 : vector<8x8xf32>
    %33 = arith.truncf %32 : vector<8x8xf32> to vector<8x8xbf16>
    %cst_12 = arith.constant dense<0.000000e+00> : vector<8x8xf32>
    %34 = tpu.matmul %33, %17, %cst_12 {dimension_numbers = #tpu.dot_dimension_numbers<[1], [0], [0], [1], [0, 0, 1, 1], [], []>} : vector<8x8xbf16>, vector<8x8xbf16>, vector<8x8xf32> -> vector<8x8xf32>
    %c0_13 = arith.constant 0 : index
    %c0_14 = arith.constant 0 : index
    %35 = vector.load %arg10[%c0_13, %c0_14] : memref<8x32xf32, #tpu.memory_space<vmem>>, vector<8x8xf32>
    tpu.vector_store %arg10[%c0_13, %c0_14], %34 {strides = array<i32>} : memref<8x32xf32, #tpu.memory_space<vmem>>, vector<8x8xf32>,
    %36 = vector.extract_strided_slice %7 {offsets = [0, 8], sizes = [8, 8], strides = [1, 1]} : vector<8x32xf32> to vector<8x8xf32>
    %37 = arith.truncf %36 : vector<8x8xf32> to vector<8x8xbf16>
    %38 = vector.extract_strided_slice %8 {offsets = [0, 8], sizes = [8, 8], strides = [1, 1]} : vector<8x32xf32> to vector<8x8xf32>
    %39 = arith.truncf %38 : vector<8x8xf32> to vector<8x8xbf16>
    %40 = vector.extract_strided_slice %9 {offsets = [0, 8], sizes = [8, 8], strides = [1, 1]} : vector<8x32xf32> to vector<8x8xf32>
    %41 = arith.truncf %40 : vector<8x8xf32> to vector<8x8xbf16>
    %cst_15 = arith.constant dense<0.000000e+00> : vector<8x8xf32>
    %42 = tpu.matmul %37, %39, %cst_15 {dimension_numbers = #tpu.dot_dimension_numbers<[1], [1], [0], [0], [0, 0, 1, 0], [], []>} : vector<8x8xbf16>, vector<8x8xbf16>, vector<8x8xf32> -> vector<8x8xf32>
    %cst_16 = arith.constant 0.353553385 : f32
    %43 = vector.broadcast %cst_16 : f32 to vector<8x8xf32>
    %44 = arith.mulf %42, %43 : vector<8x8xf32>
    %45 = vector.broadcast %11 : vector<1x8xf32> to vector<8x8xf32>
    %46 = arith.addf %44, %45 : vector<8x8xf32>
    %cst_17 = arith.constant dense<0xFF800000> : vector<8xf32>
    %47 = vector.multi_reduction <maximumf>, %46, %cst_17 [1] : vector<8x8xf32> to vector<8xf32>
    %48 = vector.shape_cast %47 : vector<8xf32> to vector<8x1xf32>
    %49 = vector.broadcast %48 : vector<8x1xf32> to vector<8x8xf32>
    %50 = arith.subf %46, %49 : vector<8x8xf32>
    %51 = math.exp %50 : vector<8x8xf32>
    %cst_18 = arith.constant dense<0.000000e+00> : vector<8xf32>
    %52 = vector.multi_reduction <add>, %51, %cst_18 [1] : vector<8x8xf32> to vector<8xf32>
    %53 = vector.shape_cast %52 : vector<8xf32> to vector<8x1xf32>
    %54 = tpu.reciprocal %53 {approx = true} : vector<8x1xf32> -> vector<8x1xf32>
    %55 = vector.broadcast %54 : vector<8x1xf32> to vector<8x8xf32>
    %56 = arith.mulf %51, %55 : vector<8x8xf32>
    %57 = arith.truncf %56 : vector<8x8xf32> to vector<8x8xbf16>
    %cst_19 = arith.constant dense<0.000000e+00> : vector<8x8xf32>
    %58 = tpu.matmul %57, %41, %cst_19 {dimension_numbers = #tpu.dot_dimension_numbers<[1], [0], [0], [1], [0, 0, 1, 1], [], []>} : vector<8x8xbf16>, vector<8x8xbf16>, vector<8x8xf32> -> vector<8x8xf32>
    %c0_20 = arith.constant 0 : index
    %c8 = arith.constant 8 : index
    %59 = vector.load %arg10[%c0_20, %c8] : memref<8x32xf32, #tpu.memory_space<vmem>>, vector<8x8xf32>
    tpu.vector_store %arg10[%c0_20, %c8], %58 {strides = array<i32>} : memref<8x32xf32, #tpu.memory_space<vmem>>, vector<8x8xf32>,
    %60 = vector.extract_strided_slice %7 {offsets = [0, 16], sizes = [8, 8], strides = [1, 1]} : vector<8x32xf32> to vector<8x8xf32>
    %61 = arith.truncf %60 : vector<8x8xf32> to vector<8x8xbf16>
    %62 = vector.extract_strided_slice %8 {offsets = [0, 16], sizes = [8, 8], strides = [1, 1]} : vector<8x32xf32> to vector<8x8xf32>
    %63 = arith.truncf %62 : vector<8x8xf32> to vector<8x8xbf16>
    %64 = vector.extract_strided_slice %9 {offsets = [0, 16], sizes = [8, 8], strides = [1, 1]} : vector<8x32xf32> to vector<8x8xf32>
    %65 = arith.truncf %64 : vector<8x8xf32> to vector<8x8xbf16>
    %cst_21 = arith.constant dense<0.000000e+00> : vector<8x8xf32>
    %66 = tpu.matmul %61, %63, %cst_21 {dimension_numbers = #tpu.dot_dimension_numbers<[1], [1], [0], [0], [0, 0, 1, 0], [], []>} : vector<8x8xbf16>, vector<8x8xbf16>, vector<8x8xf32> -> vector<8x8xf32>
    %cst_22 = arith.constant 0.353553385 : f32
    %67 = vector.broadcast %cst_22 : f32 to vector<8x8xf32>
    %68 = arith.mulf %66, %67 : vector<8x8xf32>
    %69 = vector.broadcast %11 : vector<1x8xf32> to vector<8x8xf32>
    %70 = arith.addf %68, %69 : vector<8x8xf32>
    %cst_23 = arith.constant dense<0xFF800000> : vector<8xf32>
    %71 = vector.multi_reduction <maximumf>, %70, %cst_23 [1] : vector<8x8xf32> to vector<8xf32>
    %72 = vector.shape_cast %71 : vector<8xf32> to vector<8x1xf32>
    %73 = vector.broadcast %72 : vector<8x1xf32> to vector<8x8xf32>
    %74 = arith.subf %70, %73 : vector<8x8xf32>
    %75 = math.exp %74 : vector<8x8xf32>
    %cst_24 = arith.constant dense<0.000000e+00> : vector<8xf32>
    %76 = vector.multi_reduction <add>, %75, %cst_24 [1] : vector<8x8xf32> to vector<8xf32>
    %77 = vector.shape_cast %76 : vector<8xf32> to vector<8x1xf32>
    %78 = tpu.reciprocal %77 {approx = true} : vector<8x1xf32> -> vector<8x1xf32>
    %79 = vector.broadcast %78 : vector<8x1xf32> to vector<8x8xf32>
    %80 = arith.mulf %75, %79 : vector<8x8xf32>
    %81 = arith.truncf %80 : vector<8x8xf32> to vector<8x8xbf16>
    %cst_25 = arith.constant dense<0.000000e+00> : vector<8x8xf32>
    %82 = tpu.matmul %81, %65, %cst_25 {dimension_numbers = #tpu.dot_dimension_numbers<[1], [0], [0], [1], [0, 0, 1, 1], [], []>} : vector<8x8xbf16>, vector<8x8xbf16>, vector<8x8xf32> -> vector<8x8xf32>
    %c0_26 = arith.constant 0 : index
    %c16 = arith.constant 16 : index
    %83 = vector.load %arg10[%c0_26, %c16] : memref<8x32xf32, #tpu.memory_space<vmem>>, vector<8x8xf32>
    tpu.vector_store %arg10[%c0_26, %c16], %82 {strides = array<i32>} : memref<8x32xf32, #tpu.memory_space<vmem>>, vector<8x8xf32>,
    %84 = vector.extract_strided_slice %7 {offsets = [0, 24], sizes = [8, 8], strides = [1, 1]} : vector<8x32xf32> to vector<8x8xf32>
    %85 = arith.truncf %84 : vector<8x8xf32> to vector<8x8xbf16>
    %86 = vector.extract_strided_slice %8 {offsets = [0, 24], sizes = [8, 8], strides = [1, 1]} : vector<8x32xf32> to vector<8x8xf32>
    %87 = arith.truncf %86 : vector<8x8xf32> to vector<8x8xbf16>
    %88 = vector.extract_strided_slice %9 {offsets = [0, 24], sizes = [8, 8], strides = [1, 1]} : vector<8x32xf32> to vector<8x8xf32>
    %89 = arith.truncf %88 : vector<8x8xf32> to vector<8x8xbf16>
    %cst_27 = arith.constant dense<0.000000e+00> : vector<8x8xf32>
    %90 = tpu.matmul %85, %87, %cst_27 {dimension_numbers = #tpu.dot_dimension_numbers<[1], [1], [0], [0], [0, 0, 1, 0], [], []>} : vector<8x8xbf16>, vector<8x8xbf16>, vector<8x8xf32> -> vector<8x8xf32>
    %cst_28 = arith.constant 0.353553385 : f32
    %91 = vector.broadcast %cst_28 : f32 to vector<8x8xf32>
    %92 = arith.mulf %90, %91 : vector<8x8xf32>
    %93 = vector.broadcast %11 : vector<1x8xf32> to vector<8x8xf32>
    %94 = arith.addf %92, %93 : vector<8x8xf32>
    %cst_29 = arith.constant dense<0xFF800000> : vector<8xf32>
    %95 = vector.multi_reduction <maximumf>, %94, %cst_29 [1] : vector<8x8xf32> to vector<8xf32>
    %96 = vector.shape_cast %95 : vector<8xf32> to vector<8x1xf32>
    %97 = vector.broadcast %96 : vector<8x1xf32> to vector<8x8xf32>
    %98 = arith.subf %94, %97 : vector<8x8xf32>
    %99 = math.exp %98 : vector<8x8xf32>
    %cst_30 = arith.constant dense<0.000000e+00> : vector<8xf32>
    %100 = vector.multi_reduction <add>, %99, %cst_30 [1] : vector<8x8xf32> to vector<8xf32>
    %101 = vector.shape_cast %100 : vector<8xf32> to vector<8x1xf32>
    %102 = tpu.reciprocal %101 {approx = true} : vector<8x1xf32> -> vector<8x1xf32>
    %103 = vector.broadcast %102 : vector<8x1xf32> to vector<8x8xf32>
    %104 = arith.mulf %99, %103 : vector<8x8xf32>
    %105 = arith.truncf %104 : vector<8x8xf32> to vector<8x8xbf16>
    %cst_31 = arith.constant dense<0.000000e+00> : vector<8x8xf32>
    %106 = tpu.matmul %105, %89, %cst_31 {dimension_numbers = #tpu.dot_dimension_numbers<[1], [0], [0], [1], [0, 0, 1, 1], [], []>} : vector<8x8xbf16>, vector<8x8xbf16>, vector<8x8xf32> -> vector<8x8xf32>
    %c0_32 = arith.constant 0 : index
    %c24 = arith.constant 24 : index
    %107 = vector.load %arg10[%c0_32, %c24] : memref<8x32xf32, #tpu.memory_space<vmem>>, vector<8x8xf32>
    tpu.vector_store %arg10[%c0_32, %c24], %106 {strides = array<i32>} : memref<8x32xf32, #tpu.memory_space<vmem>>, vector<8x8xf32>,
    %c0_33 = arith.constant 0 : index
    %c0_34 = arith.constant 0 : index
    %108 = vector.load %arg10[%c0_33, %c0_34] : memref<8x32xf32, #tpu.memory_space<vmem>>, vector<8x32xf32>
    %109 = arith.truncf %108 : vector<8x32xf32> to vector<8x32xbf16>
    %c0_35 = arith.constant 0 : index
    %c0_36 = arith.constant 0 : index
    %110 = vector.load %arg5[%c0_35, %c0_36] : memref<32x32xbf16, #tpu.memory_space<vmem>>, vector<32x32xbf16>
    %cst_37 = arith.constant dense<0.000000e+00> : vector<8x32xf32>
    %111 = tpu.matmul %109, %110, %cst_37 {dimension_numbers = #tpu.dot_dimension_numbers<[1], [0], [0], [1], [0, 0, 1, 1], [], []>} : vector<8x32xbf16>, vector<32x32xbf16>, vector<8x32xf32> -> vector<8x32xf32>
    %c0_38 = arith.constant 0 : index
    %c0_39 = arith.constant 0 : index
    %112 = vector.load %arg6[%c0_38, %c0_39] : memref<1x32xf32, #tpu.memory_space<vmem>>, vector<1x32xf32>
    %113 = vector.broadcast %112 : vector<1x32xf32> to vector<8x32xf32>
    %114 = arith.addf %111, %113 : vector<8x32xf32>
    %115 = arith.addf %114, %0 : vector<8x32xf32>
    %c0_40 = arith.constant 0 : index
    %c0_41 = arith.constant 0 : index
    %116 = vector.load %arg7[%c0_40, %c0_41] : memref<1x32xf32, #tpu.memory_space<vmem>>, vector<1x32xf32>
    %c0_42 = arith.constant 0 : index
    %c0_43 = arith.constant 0 : index
    %117 = vector.load %arg8[%c0_42, %c0_43] : memref<1x32xf32, #tpu.memory_space<vmem>>, vector<1x32xf32>
    %cst_44 = arith.constant dense<0.000000e+00> : vector<8xf32>
    %118 = vector.multi_reduction <add>, %115, %cst_44 [1] : vector<8x32xf32> to vector<8xf32>
    %119 = vector.shape_cast %118 : vector<8xf32> to vector<8x1xf32>
    %cst_45 = arith.constant 3.200000e+01 : f32
    %120 = vector.broadcast %cst_45 : f32 to vector<8x1xf32>
    %121 = arith.divf %119, %120 : vector<8x1xf32>
    %122 = vector.broadcast %121 : vector<8x1xf32> to vector<8x32xf32>
    %123 = arith.subf %115, %122 : vector<8x32xf32>
    %124 = arith.mulf %123, %123 : vector<8x32xf32>
    %cst_46 = arith.constant dense<0.000000e+00> : vector<8xf32>
    %125 = vector.multi_reduction <add>, %124, %cst_46 [1] : vector<8x32xf32> to vector<8xf32>
    %126 = vector.shape_cast %125 : vector<8xf32> to vector<8x1xf32>
    %cst_47 = arith.constant 3.100000e+01 : f32
    %127 = vector.broadcast %cst_47 : f32 to vector<8x1xf32>
    %128 = arith.divf %126, %127 : vector<8x1xf32>
    %129 = math.sqrt %128 : vector<8x1xf32>
    %cst_48 = arith.constant 9.99999997E-7 : f32
    %130 = vector.broadcast %cst_48 : f32 to vector<8x1xf32>
    %131 = arith.addf %129, %130 : vector<8x1xf32>
    %132 = tpu.reciprocal %131 {approx = true} : vector<8x1xf32> -> vector<8x1xf32>
    %133 = vector.broadcast %132 : vector<8x1xf32> to vector<8x32xf32>
    %134 = arith.mulf %123, %133 : vector<8x32xf32>
    %135 = vector.broadcast %116 : vector<1x32xf32> to vector<8x32xf32>
    %136 = arith.mulf %135, %134 : vector<8x32xf32>
    %137 = vector.broadcast %117 : vector<1x32xf32> to vector<8x32xf32>
    %138 = arith.addf %136, %137 : vector<8x32xf32>
    %c0_49 = arith.constant 0 : index
    %c0_50 = arith.constant 0 : index
    %139 = vector.load %arg9[%c0_49, %c0_50] : memref<8x32xf32, #tpu.memory_space<vmem>>, vector<8x32xf32>
    tpu.vector_store %arg9[%c0_49, %c0_50], %138 {strides = array<i32>} : memref<8x32xf32, #tpu.memory_space<vmem>>, vector<8x32xf32>,
    return
  }
  func.func @transform_0(%arg0: i32) -> (i32, i32) {
    %c0_i32 = arith.constant 0 : i32
    %c0_i32_0 = arith.constant 0 : i32
    return %arg0, %c0_i32 : i32, i32
  }
  func.func @transform_1(%arg0: i32) -> (i32, i32, i32) {
    %c0_i32 = arith.constant 0 : i32
    %c0_i32_0 = arith.constant 0 : i32
    %c0_i32_1 = arith.constant 0 : i32
    return %arg0, %c0_i32, %c0_i32_0 : i32, i32, i32
  }
  func.func @transform_2(%arg0: i32) -> (i32, i32) {
    %c0_i32 = arith.constant 0 : i32
    %c0_i32_0 = arith.constant 0 : i32
    %c0_i32_1 = arith.constant 0 : i32
    return %c0_i32, %c0_i32_0 : i32, i32
  }
  func.func @transform_3(%arg0: i32) -> (i32, i32) {
    %c0_i32 = arith.constant 0 : i32
    %c0_i32_0 = arith.constant 0 : i32
    %c0_i32_1 = arith.constant 0 : i32
    return %c0_i32, %c0_i32_0 : i32, i32
  }
  func.func @transform_4(%arg0: i32) -> (i32, i32) {
    %c0_i32 = arith.constant 0 : i32
    %c0_i32_0 = arith.constant 0 : i32
    %c0_i32_1 = arith.constant 0 : i32
    return %c0_i32, %c0_i32_0 : i32, i32
  }
  func.func @transform_5(%arg0: i32) -> (i32, i32) {
    %c0_i32 = arith.constant 0 : i32
    %c0_i32_0 = arith.constant 0 : i32
    %c0_i32_1 = arith.constant 0 : i32
    return %c0_i32, %c0_i32_0 : i32, i32
  }
  func.func @transform_6(%arg0: i32) -> (i32, i32) {
    %c0_i32 = arith.constant 0 : i32
    %c0_i32_0 = arith.constant 0 : i32
    %c0_i32_1 = arith.constant 0 : i32
    return %c0_i32, %c0_i32_0 : i32, i32
  }
  func.func @transform_7(%arg0: i32) -> (i32, i32) {
    %c0_i32 = arith.constant 0 : i32
    %c0_i32_0 = arith.constant 0 : i32
    %c0_i32_1 = arith.constant 0 : i32
    return %c0_i32, %c0_i32_0 : i32, i32
  }
  func.func @transform_8(%arg0: i32) -> (i32, i32) {
    %c0_i32 = arith.constant 0 : i32
    %c0_i32_0 = arith.constant 0 : i32
    return %arg0, %c0_i32 : i32, i32
  }
}

module attributes {stable_mosaic.version = 11 : i64} {
  func.func @_ffn_block_kernel(%arg0: i32, %arg1: memref<8x32xf32, #tpu.memory_space<vmem>>, %arg2: memref<32x64xbf16, #tpu.memory_space<vmem>>, %arg3: memref<1x64xf32, #tpu.memory_space<vmem>>, %arg4: memref<64x32xbf16, #tpu.memory_space<vmem>>, %arg5: memref<1x32xf32, #tpu.memory_space<vmem>>, %arg6: memref<1x32xf32, #tpu.memory_space<vmem>>, %arg7: memref<1x32xf32, #tpu.memory_space<vmem>>, %arg8: memref<8x32xf32, #tpu.memory_space<vmem>>) attributes {dimension_semantics = [#tpu.dimension_semantics<parallel>], iteration_bounds = array<i64: 2>, scalar_prefetch = 0 : i64, scratch_operands = 0 : i64, tpu.core_type = #tpu.core_type<tc>, window_params = [{transform_indices = @transform_0, window_bounds = array<i64: 8, 32>}, {pipeline_mode = #tpu.pipeline_mode<synchronous>, transform_indices = @transform_1, window_bounds = array<i64: 32, 64>}, {pipeline_mode = #tpu.pipeline_mode<synchronous>, transform_indices = @transform_2, window_bounds = array<i64: 1, 64>}, {pipeline_mode = #tpu.pipeline_mode<synchronous>, transform_indices = @transform_3, window_bounds = array<i64: 64, 32>}, {pipeline_mode = #tpu.pipeline_mode<synchronous>, transform_indices = @transform_4, window_bounds = array<i64: 1, 32>}, {pipeline_mode = #tpu.pipeline_mode<synchronous>, transform_indices = @transform_5, window_bounds = array<i64: 1, 32>}, {pipeline_mode = #tpu.pipeline_mode<synchronous>, transform_indices = @transform_6, window_bounds = array<i64: 1, 32>}, {transform_indices = @transform_7, window_bounds = array<i64: 8, 32>}]} {
    %c0 = arith.constant 0 : index
    %c0_0 = arith.constant 0 : index
    %0 = vector.load %arg1[%c0, %c0_0] : memref<8x32xf32, #tpu.memory_space<vmem>>, vector<8x32xf32>
    %1 = arith.truncf %0 : vector<8x32xf32> to vector<8x32xbf16>
    %c0_1 = arith.constant 0 : index
    %c0_2 = arith.constant 0 : index
    %2 = vector.load %arg2[%c0_1, %c0_2] : memref<32x64xbf16, #tpu.memory_space<vmem>>, vector<32x64xbf16>
    %cst = arith.constant dense<0.000000e+00> : vector<8x64xf32>
    %3 = tpu.matmul %1, %2, %cst {dimension_numbers = #tpu.dot_dimension_numbers<[1], [0], [0], [1], [0, 0, 1, 1], [], []>} : vector<8x32xbf16>, vector<32x64xbf16>, vector<8x64xf32> -> vector<8x64xf32>
    %c0_3 = arith.constant 0 : index
    %c0_4 = arith.constant 0 : index
    %4 = vector.load %arg3[%c0_3, %c0_4] : memref<1x64xf32, #tpu.memory_space<vmem>>, vector<1x64xf32>
    %5 = vector.broadcast %4 : vector<1x64xf32> to vector<8x64xf32>
    %6 = arith.addf %3, %5 : vector<8x64xf32>
    %cst_5 = arith.constant 0.000000e+00 : f32
    %7 = vector.broadcast %cst_5 : f32 to vector<8x64xf32>
    %8 = arith.maximumf %6, %7 : vector<8x64xf32>
    %9 = arith.truncf %8 : vector<8x64xf32> to vector<8x64xbf16>
    %c0_6 = arith.constant 0 : index
    %c0_7 = arith.constant 0 : index
    %10 = vector.load %arg4[%c0_6, %c0_7] : memref<64x32xbf16, #tpu.memory_space<vmem>>, vector<64x32xbf16>
    %cst_8 = arith.constant dense<0.000000e+00> : vector<8x32xf32>
    %11 = tpu.matmul %9, %10, %cst_8 {dimension_numbers = #tpu.dot_dimension_numbers<[1], [0], [0], [1], [0, 0, 1, 1], [], []>} : vector<8x64xbf16>, vector<64x32xbf16>, vector<8x32xf32> -> vector<8x32xf32>
    %c0_9 = arith.constant 0 : index
    %c0_10 = arith.constant 0 : index
    %12 = vector.load %arg5[%c0_9, %c0_10] : memref<1x32xf32, #tpu.memory_space<vmem>>, vector<1x32xf32>
    %13 = vector.broadcast %12 : vector<1x32xf32> to vector<8x32xf32>
    %14 = arith.addf %11, %13 : vector<8x32xf32>
    %15 = arith.addf %14, %0 : vector<8x32xf32>
    %c0_11 = arith.constant 0 : index
    %c0_12 = arith.constant 0 : index
    %16 = vector.load %arg6[%c0_11, %c0_12] : memref<1x32xf32, #tpu.memory_space<vmem>>, vector<1x32xf32>
    %c0_13 = arith.constant 0 : index
    %c0_14 = arith.constant 0 : index
    %17 = vector.load %arg7[%c0_13, %c0_14] : memref<1x32xf32, #tpu.memory_space<vmem>>, vector<1x32xf32>
    %cst_15 = arith.constant dense<0.000000e+00> : vector<8xf32>
    %18 = vector.multi_reduction <add>, %15, %cst_15 [1] : vector<8x32xf32> to vector<8xf32>
    %19 = vector.shape_cast %18 : vector<8xf32> to vector<8x1xf32>
    %cst_16 = arith.constant 3.200000e+01 : f32
    %20 = vector.broadcast %cst_16 : f32 to vector<8x1xf32>
    %21 = arith.divf %19, %20 : vector<8x1xf32>
    %22 = vector.broadcast %21 : vector<8x1xf32> to vector<8x32xf32>
    %23 = arith.subf %15, %22 : vector<8x32xf32>
    %24 = arith.mulf %23, %23 : vector<8x32xf32>
    %cst_17 = arith.constant dense<0.000000e+00> : vector<8xf32>
    %25 = vector.multi_reduction <add>, %24, %cst_17 [1] : vector<8x32xf32> to vector<8xf32>
    %26 = vector.shape_cast %25 : vector<8xf32> to vector<8x1xf32>
    %cst_18 = arith.constant 3.100000e+01 : f32
    %27 = vector.broadcast %cst_18 : f32 to vector<8x1xf32>
    %28 = arith.divf %26, %27 : vector<8x1xf32>
    %29 = math.sqrt %28 : vector<8x1xf32>
    %cst_19 = arith.constant 9.99999997E-7 : f32
    %30 = vector.broadcast %cst_19 : f32 to vector<8x1xf32>
    %31 = arith.addf %29, %30 : vector<8x1xf32>
    %32 = tpu.reciprocal %31 {approx = true} : vector<8x1xf32> -> vector<8x1xf32>
    %33 = vector.broadcast %32 : vector<8x1xf32> to vector<8x32xf32>
    %34 = arith.mulf %23, %33 : vector<8x32xf32>
    %35 = vector.broadcast %16 : vector<1x32xf32> to vector<8x32xf32>
    %36 = arith.mulf %35, %34 : vector<8x32xf32>
    %37 = vector.broadcast %17 : vector<1x32xf32> to vector<8x32xf32>
    %38 = arith.addf %36, %37 : vector<8x32xf32>
    %c0_20 = arith.constant 0 : index
    %c0_21 = arith.constant 0 : index
    %39 = vector.load %arg8[%c0_20, %c0_21] : memref<8x32xf32, #tpu.memory_space<vmem>>, vector<8x32xf32>
    tpu.vector_store %arg8[%c0_20, %c0_21], %38 {strides = array<i32>} : memref<8x32xf32, #tpu.memory_space<vmem>>, vector<8x32xf32>,
    return
  }
  func.func @transform_0(%arg0: i32) -> (i32, i32) {
    %c0_i32 = arith.constant 0 : i32
    %c0_i32_0 = arith.constant 0 : i32
    return %arg0, %c0_i32 : i32, i32
  }
  func.func @transform_1(%arg0: i32) -> (i32, i32) {
    %c0_i32 = arith.constant 0 : i32
    %c0_i32_0 = arith.constant 0 : i32
    %c0_i32_1 = arith.constant 0 : i32
    return %c0_i32, %c0_i32_0 : i32, i32
  }
  func.func @transform_2(%arg0: i32) -> (i32, i32) {
    %c0_i32 = arith.constant 0 : i32
    %c0_i32_0 = arith.constant 0 : i32
    %c0_i32_1 = arith.constant 0 : i32
    return %c0_i32, %c0_i32_0 : i32, i32
  }
  func.func @transform_3(%arg0: i32) -> (i32, i32) {
    %c0_i32 = arith.constant 0 : i32
    %c0_i32_0 = arith.constant 0 : i32
    %c0_i32_1 = arith.constant 0 : i32
    return %c0_i32, %c0_i32_0 : i32, i32
  }
  func.func @transform_4(%arg0: i32) -> (i32, i32) {
    %c0_i32 = arith.constant 0 : i32
    %c0_i32_0 = arith.constant 0 : i32
    %c0_i32_1 = arith.constant 0 : i32
    return %c0_i32, %c0_i32_0 : i32, i32
  }
  func.func @transform_5(%arg0: i32) -> (i32, i32) {
    %c0_i32 = arith.constant 0 : i32
    %c0_i32_0 = arith.constant 0 : i32
    %c0_i32_1 = arith.constant 0 : i32
    return %c0_i32, %c0_i32_0 : i32, i32
  }
  func.func @transform_6(%arg0: i32) -> (i32, i32) {
    %c0_i32 = arith.constant 0 : i32
    %c0_i32_0 = arith.constant 0 : i32
    %c0_i32_1 = arith.constant 0 : i32
    return %c0_i32, %c0_i32_0 : i32, i32
  }
  func.func @transform_7(%arg0: i32) -> (i32, i32) {
    %c0_i32 = arith.constant 0 : i32
    %c0_i32_0 = arith.constant 0 : i32
    return %arg0, %c0_i32 : i32, i32
  }
}

module attributes {stable_mosaic.version = 11 : i64} {
  func.func @_self_attn_kernel(%arg0: i32, %arg1: memref<16x32xf32, #tpu.memory_space<vmem>>, %arg2: memref<1x1x16xf32, #tpu.memory_space<vmem>>, %arg3: memref<32x96xbf16, #tpu.memory_space<vmem>>, %arg4: memref<1x96xf32, #tpu.memory_space<vmem>>, %arg5: memref<32x32xbf16, #tpu.memory_space<vmem>>, %arg6: memref<1x32xf32, #tpu.memory_space<vmem>>, %arg7: memref<1x32xf32, #tpu.memory_space<vmem>>, %arg8: memref<1x32xf32, #tpu.memory_space<vmem>>, %arg9: memref<16x32xf32, #tpu.memory_space<vmem>>, %arg10: memref<16x32xf32, #tpu.memory_space<vmem>>) attributes {dimension_semantics = [#tpu.dimension_semantics<parallel>], iteration_bounds = array<i64: 2>, scalar_prefetch = 0 : i64, scratch_operands = 1 : i64, tpu.core_type = #tpu.core_type<tc>, window_params = [{transform_indices = @transform_0, window_bounds = array<i64: 16, 32>}, {transform_indices = @transform_1, window_bounds = array<i64: 1, 1, 16>}, {pipeline_mode = #tpu.pipeline_mode<synchronous>, transform_indices = @transform_2, window_bounds = array<i64: 32, 96>}, {pipeline_mode = #tpu.pipeline_mode<synchronous>, transform_indices = @transform_3, window_bounds = array<i64: 1, 96>}, {pipeline_mode = #tpu.pipeline_mode<synchronous>, transform_indices = @transform_4, window_bounds = array<i64: 32, 32>}, {pipeline_mode = #tpu.pipeline_mode<synchronous>, transform_indices = @transform_5, window_bounds = array<i64: 1, 32>}, {pipeline_mode = #tpu.pipeline_mode<synchronous>, transform_indices = @transform_6, window_bounds = array<i64: 1, 32>}, {pipeline_mode = #tpu.pipeline_mode<synchronous>, transform_indices = @transform_7, window_bounds = array<i64: 1, 32>}, {transform_indices = @transform_8, window_bounds = array<i64: 16, 32>}]} {
    %c0 = arith.constant 0 : index
    %c0_0 = arith.constant 0 : index
    %0 = vector.load %arg1[%c0, %c0_0] : memref<16x32xf32, #tpu.memory_space<vmem>>, vector<16x32xf32>
    %1 = arith.truncf %0 : vector<16x32xf32> to vector<16x32xbf16>
    %c0_1 = arith.constant 0 : index
    %c0_2 = arith.constant 0 : index
    %2 = vector.load %arg3[%c0_1, %c0_2] : memref<32x96xbf16, #tpu.memory_space<vmem>>, vector<32x96xbf16>
    %cst = arith.constant dense<0.000000e+00> : vector<16x96xf32>
    %3 = tpu.matmul %1, %2, %cst {dimension_numbers = #tpu.dot_dimension_numbers<[1], [0], [0], [1], [0, 0, 1, 1], [], []>} : vector<16x32xbf16>, vector<32x96xbf16>, vector<16x96xf32> -> vector<16x96xf32>
    %c0_3 = arith.constant 0 : index
    %c0_4 = arith.constant 0 : index
    %4 = vector.load %arg4[%c0_3, %c0_4] : memref<1x96xf32, #tpu.memory_space<vmem>>, vector<1x96xf32>
    %5 = vector.broadcast %4 : vector<1x96xf32> to vector<16x96xf32>
    %6 = arith.addf %3, %5 : vector<16x96xf32>
    %7 = vector.extract_strided_slice %6 {offsets = [0, 0], sizes = [16, 32], strides = [1, 1]} : vector<16x96xf32> to vector<16x32xf32>
    %8 = vector.extract_strided_slice %6 {offsets = [0, 32], sizes = [16, 32], strides = [1, 1]} : vector<16x96xf32> to vector<16x32xf32>
    %9 = vector.extract_strided_slice %6 {offsets = [0, 64], sizes = [16, 32], strides = [1, 1]} : vector<16x96xf32> to vector<16x32xf32>
    %c0_5 = arith.constant 0 : index
    %c0_6 = arith.constant 0 : index
    %c0_7 = arith.constant 0 : index
    %10 = vector.load %arg2[%c0_5, %c0_6, %c0_7] : memref<1x1x16xf32, #tpu.memory_space<vmem>>, vector<1x1x16xf32>
    %11 = vector.shape_cast %10 : vector<1x1x16xf32> to vector<1x16xf32>
    %12 = vector.extract_strided_slice %7 {offsets = [0, 0], sizes = [16, 8], strides = [1, 1]} : vector<16x32xf32> to vector<16x8xf32>
    %13 = arith.truncf %12 : vector<16x8xf32> to vector<16x8xbf16>
    %14 = vector.extract_strided_slice %8 {offsets = [0, 0], sizes = [16, 8], strides = [1, 1]} : vector<16x32xf32> to vector<16x8xf32>
    %15 = arith.truncf %14 : vector<16x8xf32> to vector<16x8xbf16>
    %16 = vector.extract_strided_slice %9 {offsets = [0, 0], sizes = [16, 8], strides = [1, 1]} : vector<16x32xf32> to vector<16x8xf32>
    %17 = arith.truncf %16 : vector<16x8xf32> to vector<16x8xbf16>
    %cst_8 = arith.constant dense<0.000000e+00> : vector<16x16xf32>
    %18 = tpu.matmul %13, %15, %cst_8 {dimension_numbers = #tpu.dot_dimension_numbers<[1], [1], [0], [0], [0, 0, 1, 0], [], []>} : vector<16x8xbf16>, vector<16x8xbf16>, vector<16x16xf32> -> vector<16x16xf32>
    %cst_9 = arith.constant 0.353553385 : f32
    %19 = vector.broadcast %cst_9 : f32 to vector<16x16xf32>
    %20 = arith.mulf %18, %19 : vector<16x16xf32>
    %21 = vector.broadcast %11 : vector<1x16xf32> to vector<16x16xf32>
    %22 = arith.addf %20, %21 : vector<16x16xf32>
    %cst_10 = arith.constant dense<0xFF800000> : vector<16xf32>
    %23 = vector.multi_reduction <maximumf>, %22, %cst_10 [1] : vector<16x16xf32> to vector<16xf32>
    %24 = vector.shape_cast %23 : vector<16xf32> to vector<16x1xf32>
    %25 = vector.broadcast %24 : vector<16x1xf32> to vector<16x16xf32>
    %26 = arith.subf %22, %25 : vector<16x16xf32>
    %27 = math.exp %26 : vector<16x16xf32>
    %cst_11 = arith.constant dense<0.000000e+00> : vector<16xf32>
    %28 = vector.multi_reduction <add>, %27, %cst_11 [1] : vector<16x16xf32> to vector<16xf32>
    %29 = vector.shape_cast %28 : vector<16xf32> to vector<16x1xf32>
    %30 = tpu.reciprocal %29 {approx = true} : vector<16x1xf32> -> vector<16x1xf32>
    %31 = vector.broadcast %30 : vector<16x1xf32> to vector<16x16xf32>
    %32 = arith.mulf %27, %31 : vector<16x16xf32>
    %33 = arith.truncf %32 : vector<16x16xf32> to vector<16x16xbf16>
    %cst_12 = arith.constant dense<0.000000e+00> : vector<16x8xf32>
    %34 = tpu.matmul %33, %17, %cst_12 {dimension_numbers = #tpu.dot_dimension_numbers<[1], [0], [0], [1], [0, 0, 1, 1], [], []>} : vector<16x16xbf16>, vector<16x8xbf16>, vector<16x8xf32> -> vector<16x8xf32>
    %c0_13 = arith.constant 0 : index
    %c0_14 = arith.constant 0 : index
    %35 = vector.load %arg10[%c0_13, %c0_14] : memref<16x32xf32, #tpu.memory_space<vmem>>, vector<16x8xf32>
    tpu.vector_store %arg10[%c0_13, %c0_14], %34 {strides = array<i32>} : memref<16x32xf32, #tpu.memory_space<vmem>>, vector<16x8xf32>,
    %36 = vector.extract_strided_slice %7 {offsets = [0, 8], sizes = [16, 8], strides = [1, 1]} : vector<16x32xf32> to vector<16x8xf32>
    %37 = arith.truncf %36 : vector<16x8xf32> to vector<16x8xbf16>
    %38 = vector.extract_strided_slice %8 {offsets = [0, 8], sizes = [16, 8], strides = [1, 1]} : vector<16x32xf32> to vector<16x8xf32>
    %39 = arith.truncf %38 : vector<16x8xf32> to vector<16x8xbf16>
    %40 = vector.extract_strided_slice %9 {offsets = [0, 8], sizes = [16, 8], strides = [1, 1]} : vector<16x32xf32> to vector<16x8xf32>
    %41 = arith.truncf %40 : vector<16x8xf32> to vector<16x8xbf16>
    %cst_15 = arith.constant dense<0.000000e+00> : vector<16x16xf32>
    %42 = tpu.matmul %37, %39, %cst_15 {dimension_numbers = #tpu.dot_dimension_numbers<[1], [1], [0], [0], [0, 0, 1, 0], [], []>} : vector<16x8xbf16>, vector<16x8xbf16>, vector<16x16xf32> -> vector<16x16xf32>
    %cst_16 = arith.constant 0.353553385 : f32
    %43 = vector.broadcast %cst_16 : f32 to vector<16x16xf32>
    %44 = arith.mulf %42, %43 : vector<16x16xf32>
    %45 = vector.broadcast %11 : vector<1x16xf32> to vector<16x16xf32>
    %46 = arith.addf %44, %45 : vector<16x16xf32>
    %cst_17 = arith.constant dense<0xFF800000> : vector<16xf32>
    %47 = vector.multi_reduction <maximumf>, %46, %cst_17 [1] : vector<16x16xf32> to vector<16xf32>
    %48 = vector.shape_cast %47 : vector<16xf32> to vector<16x1xf32>
    %49 = vector.broadcast %48 : vector<16x1xf32> to vector<16x16xf32>
    %50 = arith.subf %46, %49 : vector<16x16xf32>
    %51 = math.exp %50 : vector<16x16xf32>
    %cst_18 = arith.constant dense<0.000000e+00> : vector<16xf32>
    %52 = vector.multi_reduction <add>, %51, %cst_18 [1] : vector<16x16xf32> to vector<16xf32>
    %53 = vector.shape_cast %52 : vector<16xf32> to vector<16x1xf32>
    %54 = tpu.reciprocal %53 {approx = true} : vector<16x1xf32> -> vector<16x1xf32>
    %55 = vector.broadcast %54 : vector<16x1xf32> to vector<16x16xf32>
    %56 = arith.mulf %51, %55 : vector<16x16xf32>
    %57 = arith.truncf %56 : vector<16x16xf32> to vector<16x16xbf16>
    %cst_19 = arith.constant dense<0.000000e+00> : vector<16x8xf32>
    %58 = tpu.matmul %57, %41, %cst_19 {dimension_numbers = #tpu.dot_dimension_numbers<[1], [0], [0], [1], [0, 0, 1, 1], [], []>} : vector<16x16xbf16>, vector<16x8xbf16>, vector<16x8xf32> -> vector<16x8xf32>
    %c0_20 = arith.constant 0 : index
    %c8 = arith.constant 8 : index
    %59 = vector.load %arg10[%c0_20, %c8] : memref<16x32xf32, #tpu.memory_space<vmem>>, vector<16x8xf32>
    tpu.vector_store %arg10[%c0_20, %c8], %58 {strides = array<i32>} : memref<16x32xf32, #tpu.memory_space<vmem>>, vector<16x8xf32>,
    %60 = vector.extract_strided_slice %7 {offsets = [0, 16], sizes = [16, 8], strides = [1, 1]} : vector<16x32xf32> to vector<16x8xf32>
    %61 = arith.truncf %60 : vector<16x8xf32> to vector<16x8xbf16>
    %62 = vector.extract_strided_slice %8 {offsets = [0, 16], sizes = [16, 8], strides = [1, 1]} : vector<16x32xf32> to vector<16x8xf32>
    %63 = arith.truncf %62 : vector<16x8xf32> to vector<16x8xbf16>
    %64 = vector.extract_strided_slice %9 {offsets = [0, 16], sizes = [16, 8], strides = [1, 1]} : vector<16x32xf32> to vector<16x8xf32>
    %65 = arith.truncf %64 : vector<16x8xf32> to vector<16x8xbf16>
    %cst_21 = arith.constant dense<0.000000e+00> : vector<16x16xf32>
    %66 = tpu.matmul %61, %63, %cst_21 {dimension_numbers = #tpu.dot_dimension_numbers<[1], [1], [0], [0], [0, 0, 1, 0], [], []>} : vector<16x8xbf16>, vector<16x8xbf16>, vector<16x16xf32> -> vector<16x16xf32>
    %cst_22 = arith.constant 0.353553385 : f32
    %67 = vector.broadcast %cst_22 : f32 to vector<16x16xf32>
    %68 = arith.mulf %66, %67 : vector<16x16xf32>
    %69 = vector.broadcast %11 : vector<1x16xf32> to vector<16x16xf32>
    %70 = arith.addf %68, %69 : vector<16x16xf32>
    %cst_23 = arith.constant dense<0xFF800000> : vector<16xf32>
    %71 = vector.multi_reduction <maximumf>, %70, %cst_23 [1] : vector<16x16xf32> to vector<16xf32>
    %72 = vector.shape_cast %71 : vector<16xf32> to vector<16x1xf32>
    %73 = vector.broadcast %72 : vector<16x1xf32> to vector<16x16xf32>
    %74 = arith.subf %70, %73 : vector<16x16xf32>
    %75 = math.exp %74 : vector<16x16xf32>
    %cst_24 = arith.constant dense<0.000000e+00> : vector<16xf32>
    %76 = vector.multi_reduction <add>, %75, %cst_24 [1] : vector<16x16xf32> to vector<16xf32>
    %77 = vector.shape_cast %76 : vector<16xf32> to vector<16x1xf32>
    %78 = tpu.reciprocal %77 {approx = true} : vector<16x1xf32> -> vector<16x1xf32>
    %79 = vector.broadcast %78 : vector<16x1xf32> to vector<16x16xf32>
    %80 = arith.mulf %75, %79 : vector<16x16xf32>
    %81 = arith.truncf %80 : vector<16x16xf32> to vector<16x16xbf16>
    %cst_25 = arith.constant dense<0.000000e+00> : vector<16x8xf32>
    %82 = tpu.matmul %81, %65, %cst_25 {dimension_numbers = #tpu.dot_dimension_numbers<[1], [0], [0], [1], [0, 0, 1, 1], [], []>} : vector<16x16xbf16>, vector<16x8xbf16>, vector<16x8xf32> -> vector<16x8xf32>
    %c0_26 = arith.constant 0 : index
    %c16 = arith.constant 16 : index
    %83 = vector.load %arg10[%c0_26, %c16] : memref<16x32xf32, #tpu.memory_space<vmem>>, vector<16x8xf32>
    tpu.vector_store %arg10[%c0_26, %c16], %82 {strides = array<i32>} : memref<16x32xf32, #tpu.memory_space<vmem>>, vector<16x8xf32>,
    %84 = vector.extract_strided_slice %7 {offsets = [0, 24], sizes = [16, 8], strides = [1, 1]} : vector<16x32xf32> to vector<16x8xf32>
    %85 = arith.truncf %84 : vector<16x8xf32> to vector<16x8xbf16>
    %86 = vector.extract_strided_slice %8 {offsets = [0, 24], sizes = [16, 8], strides = [1, 1]} : vector<16x32xf32> to vector<16x8xf32>
    %87 = arith.truncf %86 : vector<16x8xf32> to vector<16x8xbf16>
    %88 = vector.extract_strided_slice %9 {offsets = [0, 24], sizes = [16, 8], strides = [1, 1]} : vector<16x32xf32> to vector<16x8xf32>
    %89 = arith.truncf %88 : vector<16x8xf32> to vector<16x8xbf16>
    %cst_27 = arith.constant dense<0.000000e+00> : vector<16x16xf32>
    %90 = tpu.matmul %85, %87, %cst_27 {dimension_numbers = #tpu.dot_dimension_numbers<[1], [1], [0], [0], [0, 0, 1, 0], [], []>} : vector<16x8xbf16>, vector<16x8xbf16>, vector<16x16xf32> -> vector<16x16xf32>
    %cst_28 = arith.constant 0.353553385 : f32
    %91 = vector.broadcast %cst_28 : f32 to vector<16x16xf32>
    %92 = arith.mulf %90, %91 : vector<16x16xf32>
    %93 = vector.broadcast %11 : vector<1x16xf32> to vector<16x16xf32>
    %94 = arith.addf %92, %93 : vector<16x16xf32>
    %cst_29 = arith.constant dense<0xFF800000> : vector<16xf32>
    %95 = vector.multi_reduction <maximumf>, %94, %cst_29 [1] : vector<16x16xf32> to vector<16xf32>
    %96 = vector.shape_cast %95 : vector<16xf32> to vector<16x1xf32>
    %97 = vector.broadcast %96 : vector<16x1xf32> to vector<16x16xf32>
    %98 = arith.subf %94, %97 : vector<16x16xf32>
    %99 = math.exp %98 : vector<16x16xf32>
    %cst_30 = arith.constant dense<0.000000e+00> : vector<16xf32>
    %100 = vector.multi_reduction <add>, %99, %cst_30 [1] : vector<16x16xf32> to vector<16xf32>
    %101 = vector.shape_cast %100 : vector<16xf32> to vector<16x1xf32>
    %102 = tpu.reciprocal %101 {approx = true} : vector<16x1xf32> -> vector<16x1xf32>
    %103 = vector.broadcast %102 : vector<16x1xf32> to vector<16x16xf32>
    %104 = arith.mulf %99, %103 : vector<16x16xf32>
    %105 = arith.truncf %104 : vector<16x16xf32> to vector<16x16xbf16>
    %cst_31 = arith.constant dense<0.000000e+00> : vector<16x8xf32>
    %106 = tpu.matmul %105, %89, %cst_31 {dimension_numbers = #tpu.dot_dimension_numbers<[1], [0], [0], [1], [0, 0, 1, 1], [], []>} : vector<16x16xbf16>, vector<16x8xbf16>, vector<16x8xf32> -> vector<16x8xf32>
    %c0_32 = arith.constant 0 : index
    %c24 = arith.constant 24 : index
    %107 = vector.load %arg10[%c0_32, %c24] : memref<16x32xf32, #tpu.memory_space<vmem>>, vector<16x8xf32>
    tpu.vector_store %arg10[%c0_32, %c24], %106 {strides = array<i32>} : memref<16x32xf32, #tpu.memory_space<vmem>>, vector<16x8xf32>,
    %c0_33 = arith.constant 0 : index
    %c0_34 = arith.constant 0 : index
    %108 = vector.load %arg10[%c0_33, %c0_34] : memref<16x32xf32, #tpu.memory_space<vmem>>, vector<16x32xf32>
    %109 = arith.truncf %108 : vector<16x32xf32> to vector<16x32xbf16>
    %c0_35 = arith.constant 0 : index
    %c0_36 = arith.constant 0 : index
    %110 = vector.load %arg5[%c0_35, %c0_36] : memref<32x32xbf16, #tpu.memory_space<vmem>>, vector<32x32xbf16>
    %cst_37 = arith.constant dense<0.000000e+00> : vector<16x32xf32>
    %111 = tpu.matmul %109, %110, %cst_37 {dimension_numbers = #tpu.dot_dimension_numbers<[1], [0], [0], [1], [0, 0, 1, 1], [], []>} : vector<16x32xbf16>, vector<32x32xbf16>, vector<16x32xf32> -> vector<16x32xf32>
    %c0_38 = arith.constant 0 : index
    %c0_39 = arith.constant 0 : index
    %112 = vector.load %arg6[%c0_38, %c0_39] : memref<1x32xf32, #tpu.memory_space<vmem>>, vector<1x32xf32>
    %113 = vector.broadcast %112 : vector<1x32xf32> to vector<16x32xf32>
    %114 = arith.addf %111, %113 : vector<16x32xf32>
    %115 = arith.addf %114, %0 : vector<16x32xf32>
    %c0_40 = arith.constant 0 : index
    %c0_41 = arith.constant 0 : index
    %116 = vector.load %arg7[%c0_40, %c0_41] : memref<1x32xf32, #tpu.memory_space<vmem>>, vector<1x32xf32>
    %c0_42 = arith.constant 0 : index
    %c0_43 = arith.constant 0 : index
    %117 = vector.load %arg8[%c0_42, %c0_43] : memref<1x32xf32, #tpu.memory_space<vmem>>, vector<1x32xf32>
    %cst_44 = arith.constant dense<0.000000e+00> : vector<16xf32>
    %118 = vector.multi_reduction <add>, %115, %cst_44 [1] : vector<16x32xf32> to vector<16xf32>
    %119 = vector.shape_cast %118 : vector<16xf32> to vector<16x1xf32>
    %cst_45 = arith.constant 3.200000e+01 : f32
    %120 = vector.broadcast %cst_45 : f32 to vector<16x1xf32>
    %121 = arith.divf %119, %120 : vector<16x1xf32>
    %122 = vector.broadcast %121 : vector<16x1xf32> to vector<16x32xf32>
    %123 = arith.subf %115, %122 : vector<16x32xf32>
    %124 = arith.mulf %123, %123 : vector<16x32xf32>
    %cst_46 = arith.constant dense<0.000000e+00> : vector<16xf32>
    %125 = vector.multi_reduction <add>, %124, %cst_46 [1] : vector<16x32xf32> to vector<16xf32>
    %126 = vector.shape_cast %125 : vector<16xf32> to vector<16x1xf32>
    %cst_47 = arith.constant 3.100000e+01 : f32
    %127 = vector.broadcast %cst_47 : f32 to vector<16x1xf32>
    %128 = arith.divf %126, %127 : vector<16x1xf32>
    %129 = math.sqrt %128 : vector<16x1xf32>
    %cst_48 = arith.constant 9.99999997E-7 : f32
    %130 = vector.broadcast %cst_48 : f32 to vector<16x1xf32>
    %131 = arith.addf %129, %130 : vector<16x1xf32>
    %132 = tpu.reciprocal %131 {approx = true} : vector<16x1xf32> -> vector<16x1xf32>
    %133 = vector.broadcast %132 : vector<16x1xf32> to vector<16x32xf32>
    %134 = arith.mulf %123, %133 : vector<16x32xf32>
    %135 = vector.broadcast %116 : vector<1x32xf32> to vector<16x32xf32>
    %136 = arith.mulf %135, %134 : vector<16x32xf32>
    %137 = vector.broadcast %117 : vector<1x32xf32> to vector<16x32xf32>
    %138 = arith.addf %136, %137 : vector<16x32xf32>
    %c0_49 = arith.constant 0 : index
    %c0_50 = arith.constant 0 : index
    %139 = vector.load %arg9[%c0_49, %c0_50] : memref<16x32xf32, #tpu.memory_space<vmem>>, vector<16x32xf32>
    tpu.vector_store %arg9[%c0_49, %c0_50], %138 {strides = array<i32>} : memref<16x32xf32, #tpu.memory_space<vmem>>, vector<16x32xf32>,
    return
  }
  func.func @transform_0(%arg0: i32) -> (i32, i32) {
    %c0_i32 = arith.constant 0 : i32
    %c0_i32_0 = arith.constant 0 : i32
    return %arg0, %c0_i32 : i32, i32
  }
  func.func @transform_1(%arg0: i32) -> (i32, i32, i32) {
    %c0_i32 = arith.constant 0 : i32
    %c0_i32_0 = arith.constant 0 : i32
    %c0_i32_1 = arith.constant 0 : i32
    return %arg0, %c0_i32, %c0_i32_0 : i32, i32, i32
  }
  func.func @transform_2(%arg0: i32) -> (i32, i32) {
    %c0_i32 = arith.constant 0 : i32
    %c0_i32_0 = arith.constant 0 : i32
    %c0_i32_1 = arith.constant 0 : i32
    return %c0_i32, %c0_i32_0 : i32, i32
  }
  func.func @transform_3(%arg0: i32) -> (i32, i32) {
    %c0_i32 = arith.constant 0 : i32
    %c0_i32_0 = arith.constant 0 : i32
    %c0_i32_1 = arith.constant 0 : i32
    return %c0_i32, %c0_i32_0 : i32, i32
  }
  func.func @transform_4(%arg0: i32) -> (i32, i32) {
    %c0_i32 = arith.constant 0 : i32
    %c0_i32_0 = arith.constant 0 : i32
    %c0_i32_1 = arith.constant 0 : i32
    return %c0_i32, %c0_i32_0 : i32, i32
  }
  func.func @transform_5(%arg0: i32) -> (i32, i32) {
    %c0_i32 = arith.constant 0 : i32
    %c0_i32_0 = arith.constant 0 : i32
    %c0_i32_1 = arith.constant 0 : i32
    return %c0_i32, %c0_i32_0 : i32, i32
  }
  func.func @transform_6(%arg0: i32) -> (i32, i32) {
    %c0_i32 = arith.constant 0 : i32
    %c0_i32_0 = arith.constant 0 : i32
    %c0_i32_1 = arith.constant 0 : i32
    return %c0_i32, %c0_i32_0 : i32, i32
  }
  func.func @transform_7(%arg0: i32) -> (i32, i32) {
    %c0_i32 = arith.constant 0 : i32
    %c0_i32_0 = arith.constant 0 : i32
    %c0_i32_1 = arith.constant 0 : i32
    return %c0_i32, %c0_i32_0 : i32, i32
  }
  func.func @transform_8(%arg0: i32) -> (i32, i32) {
    %c0_i32 = arith.constant 0 : i32
    %c0_i32_0 = arith.constant 0 : i32
    return %arg0, %c0_i32 : i32, i32
  }
}

module attributes {stable_mosaic.version = 11 : i64} {
  func.func @_cross_attn_kernel(%arg0: i32, %arg1: memref<16x32xf32, #tpu.memory_space<vmem>>, %arg2: memref<8x32xf32, #tpu.memory_space<vmem>>, %arg3: memref<1x1x8xf32, #tpu.memory_space<vmem>>, %arg4: memref<32x32xbf16, #tpu.memory_space<vmem>>, %arg5: memref<1x32xf32, #tpu.memory_space<vmem>>, %arg6: memref<32x64xbf16, #tpu.memory_space<vmem>>, %arg7: memref<1x64xf32, #tpu.memory_space<vmem>>, %arg8: memref<32x32xbf16, #tpu.memory_space<vmem>>, %arg9: memref<1x32xf32, #tpu.memory_space<vmem>>, %arg10: memref<1x32xf32, #tpu.memory_space<vmem>>, %arg11: memref<1x32xf32, #tpu.memory_space<vmem>>, %arg12: memref<16x32xf32, #tpu.memory_space<vmem>>, %arg13: memref<16x32xf32, #tpu.memory_space<vmem>>) attributes {dimension_semantics = [#tpu.dimension_semantics<parallel>], iteration_bounds = array<i64: 2>, scalar_prefetch = 0 : i64, scratch_operands = 1 : i64, tpu.core_type = #tpu.core_type<tc>, window_params = [{transform_indices = @transform_0, window_bounds = array<i64: 16, 32>}, {transform_indices = @transform_1, window_bounds = array<i64: 8, 32>}, {transform_indices = @transform_2, window_bounds = array<i64: 1, 1, 8>}, {pipeline_mode = #tpu.pipeline_mode<synchronous>, transform_indices = @transform_3, window_bounds = array<i64: 32, 32>}, {pipeline_mode = #tpu.pipeline_mode<synchronous>, transform_indices = @transform_4, window_bounds = array<i64: 1, 32>}, {pipeline_mode = #tpu.pipeline_mode<synchronous>, transform_indices = @transform_5, window_bounds = array<i64: 32, 64>}, {pipeline_mode = #tpu.pipeline_mode<synchronous>, transform_indices = @transform_6, window_bounds = array<i64: 1, 64>}, {pipeline_mode = #tpu.pipeline_mode<synchronous>, transform_indices = @transform_7, window_bounds = array<i64: 32, 32>}, {pipeline_mode = #tpu.pipeline_mode<synchronous>, transform_indices = @transform_8, window_bounds = array<i64: 1, 32>}, {pipeline_mode = #tpu.pipeline_mode<synchronous>, transform_indices = @transform_9, window_bounds = array<i64: 1, 32>}, {pipeline_mode = #tpu.pipeline_mode<synchronous>, transform_indices = @transform_10, window_bounds = array<i64: 1, 32>}, {transform_indices = @transform_11, window_bounds = array<i64: 16, 32>}]} {
    %c0 = arith.constant 0 : index
    %c0_0 = arith.constant 0 : index
    %0 = vector.load %arg1[%c0, %c0_0] : memref<16x32xf32, #tpu.memory_space<vmem>>, vector<16x32xf32>
    %c0_1 = arith.constant 0 : index
    %c0_2 = arith.constant 0 : index
    %1 = vector.load %arg2[%c0_1, %c0_2] : memref<8x32xf32, #tpu.memory_space<vmem>>, vector<8x32xf32>
    %2 = arith.truncf %0 : vector<16x32xf32> to vector<16x32xbf16>
    %c0_3 = arith.constant 0 : index
    %c0_4 = arith.constant 0 : index
    %3 = vector.load %arg4[%c0_3, %c0_4] : memref<32x32xbf16, #tpu.memory_space<vmem>>, vector<32x32xbf16>
    %cst = arith.constant dense<0.000000e+00> : vector<16x32xf32>
    %4 = tpu.matmul %2, %3, %cst {dimension_numbers = #tpu.dot_dimension_numbers<[1], [0], [0], [1], [0, 0, 1, 1], [], []>} : vector<16x32xbf16>, vector<32x32xbf16>, vector<16x32xf32> -> vector<16x32xf32>
    %c0_5 = arith.constant 0 : index
    %c0_6 = arith.constant 0 : index
    %5 = vector.load %arg5[%c0_5, %c0_6] : memref<1x32xf32, #tpu.memory_space<vmem>>, vector<1x32xf32>
    %6 = vector.broadcast %5 : vector<1x32xf32> to vector<16x32xf32>
    %7 = arith.addf %4, %6 : vector<16x32xf32>
    %8 = arith.truncf %1 : vector<8x32xf32> to vector<8x32xbf16>
    %c0_7 = arith.constant 0 : index
    %c0_8 = arith.constant 0 : index
    %9 = vector.load %arg6[%c0_7, %c0_8] : memref<32x64xbf16, #tpu.memory_space<vmem>>, vector<32x64xbf16>
    %cst_9 = arith.constant dense<0.000000e+00> : vector<8x64xf32>
    %10 = tpu.matmul %8, %9, %cst_9 {dimension_numbers = #tpu.dot_dimension_numbers<[1], [0], [0], [1], [0, 0, 1, 1], [], []>} : vector<8x32xbf16>, vector<32x64xbf16>, vector<8x64xf32> -> vector<8x64xf32>
    %c0_10 = arith.constant 0 : index
    %c0_11 = arith.constant 0 : index
    %11 = vector.load %arg7[%c0_10, %c0_11] : memref<1x64xf32, #tpu.memory_space<vmem>>, vector<1x64xf32>
    %12 = vector.broadcast %11 : vector<1x64xf32> to vector<8x64xf32>
    %13 = arith.addf %10, %12 : vector<8x64xf32>
    %14 = vector.extract_strided_slice %13 {offsets = [0, 0], sizes = [8, 32], strides = [1, 1]} : vector<8x64xf32> to vector<8x32xf32>
    %15 = vector.extract_strided_slice %13 {offsets = [0, 32], sizes = [8, 32], strides = [1, 1]} : vector<8x64xf32> to vector<8x32xf32>
    %c0_12 = arith.constant 0 : index
    %c0_13 = arith.constant 0 : index
    %c0_14 = arith.constant 0 : index
    %16 = vector.load %arg3[%c0_12, %c0_13, %c0_14] : memref<1x1x8xf32, #tpu.memory_space<vmem>>, vector<1x1x8xf32>
    %17 = vector.shape_cast %16 : vector<1x1x8xf32> to vector<1x8xf32>
    %18 = vector.extract_strided_slice %7 {offsets = [0, 0], sizes = [16, 8], strides = [1, 1]} : vector<16x32xf32> to vector<16x8xf32>
    %19 = arith.truncf %18 : vector<16x8xf32> to vector<16x8xbf16>
    %20 = vector.extract_strided_slice %14 {offsets = [0, 0], sizes = [8, 8], strides = [1, 1]} : vector<8x32xf32> to vector<8x8xf32>
    %21 = arith.truncf %20 : vector<8x8xf32> to vector<8x8xbf16>
    %22 = vector.extract_strided_slice %15 {offsets = [0, 0], sizes = [8, 8], strides = [1, 1]} : vector<8x32xf32> to vector<8x8xf32>
    %23 = arith.truncf %22 : vector<8x8xf32> to vector<8x8xbf16>
    %cst_15 = arith.constant dense<0.000000e+00> : vector<16x8xf32>
    %24 = tpu.matmul %19, %21, %cst_15 {dimension_numbers = #tpu.dot_dimension_numbers<[1], [1], [0], [0], [0, 0, 1, 0], [], []>} : vector<16x8xbf16>, vector<8x8xbf16>, vector<16x8xf32> -> vector<16x8xf32>
    %cst_16 = arith.constant 0.353553385 : f32
    %25 = vector.broadcast %cst_16 : f32 to vector<16x8xf32>
    %26 = arith.mulf %24, %25 : vector<16x8xf32>
    %27 = vector.broadcast %17 : vector<1x8xf32> to vector<16x8xf32>
    %28 = arith.addf %26, %27 : vector<16x8xf32>
    %cst_17 = arith.constant dense<0xFF800000> : vector<16xf32>
    %29 = vector.multi_reduction <maximumf>, %28, %cst_17 [1] : vector<16x8xf32> to vector<16xf32>
    %30 = vector.shape_cast %29 : vector<16xf32> to vector<16x1xf32>
    %31 = vector.broadcast %30 : vector<16x1xf32> to vector<16x8xf32>
    %32 = arith.subf %28, %31 : vector<16x8xf32>
    %33 = math.exp %32 : vector<16x8xf32>
    %cst_18 = arith.constant dense<0.000000e+00> : vector<16xf32>
    %34 = vector.multi_reduction <add>, %33, %cst_18 [1] : vector<16x8xf32> to vector<16xf32>
    %35 = vector.shape_cast %34 : vector<16xf32> to vector<16x1xf32>
    %36 = tpu.reciprocal %35 {approx = true} : vector<16x1xf32> -> vector<16x1xf32>
    %37 = vector.broadcast %36 : vector<16x1xf32> to vector<16x8xf32>
    %38 = arith.mulf %33, %37 : vector<16x8xf32>
    %39 = arith.truncf %38 : vector<16x8xf32> to vector<16x8xbf16>
    %cst_19 = arith.constant dense<0.000000e+00> : vector<16x8xf32>
    %40 = tpu.matmul %39, %23, %cst_19 {dimension_numbers = #tpu.dot_dimension_numbers<[1], [0], [0], [1], [0, 0, 1, 1], [], []>} : vector<16x8xbf16>, vector<8x8xbf16>, vector<16x8xf32> -> vector<16x8xf32>
    %c0_20 = arith.constant 0 : index
    %c0_21 = arith.constant 0 : index
    %41 = vector.load %arg13[%c0_20, %c0_21] : memref<16x32xf32, #tpu.memory_space<vmem>>, vector<16x8xf32>
    tpu.vector_store %arg13[%c0_20, %c0_21], %40 {strides = array<i32>} : memref<16x32xf32, #tpu.memory_space<vmem>>, vector<16x8xf32>,
    %42 = vector.extract_strided_slice %7 {offsets = [0, 8], sizes = [16, 8], strides = [1, 1]} : vector<16x32xf32> to vector<16x8xf32>
    %43 = arith.truncf %42 : vector<16x8xf32> to vector<16x8xbf16>
    %44 = vector.extract_strided_slice %14 {offsets = [0, 8], sizes = [8, 8], strides = [1, 1]} : vector<8x32xf32> to vector<8x8xf32>
    %45 = arith.truncf %44 : vector<8x8xf32> to vector<8x8xbf16>
    %46 = vector.extract_strided_slice %15 {offsets = [0, 8], sizes = [8, 8], strides = [1, 1]} : vector<8x32xf32> to vector<8x8xf32>
    %47 = arith.truncf %46 : vector<8x8xf32> to vector<8x8xbf16>
    %cst_22 = arith.constant dense<0.000000e+00> : vector<16x8xf32>
    %48 = tpu.matmul %43, %45, %cst_22 {dimension_numbers = #tpu.dot_dimension_numbers<[1], [1], [0], [0], [0, 0, 1, 0], [], []>} : vector<16x8xbf16>, vector<8x8xbf16>, vector<16x8xf32> -> vector<16x8xf32>
    %cst_23 = arith.constant 0.353553385 : f32
    %49 = vector.broadcast %cst_23 : f32 to vector<16x8xf32>
    %50 = arith.mulf %48, %49 : vector<16x8xf32>
    %51 = vector.broadcast %17 : vector<1x8xf32> to vector<16x8xf32>
    %52 = arith.addf %50, %51 : vector<16x8xf32>
    %cst_24 = arith.constant dense<0xFF800000> : vector<16xf32>
    %53 = vector.multi_reduction <maximumf>, %52, %cst_24 [1] : vector<16x8xf32> to vector<16xf32>
    %54 = vector.shape_cast %53 : vector<16xf32> to vector<16x1xf32>
    %55 = vector.broadcast %54 : vector<16x1xf32> to vector<16x8xf32>
    %56 = arith.subf %52, %55 : vector<16x8xf32>
    %57 = math.exp %56 : vector<16x8xf32>
    %cst_25 = arith.constant dense<0.000000e+00> : vector<16xf32>
    %58 = vector.multi_reduction <add>, %57, %cst_25 [1] : vector<16x8xf32> to vector<16xf32>
    %59 = vector.shape_cast %58 : vector<16xf32> to vector<16x1xf32>
    %60 = tpu.reciprocal %59 {approx = true} : vector<16x1xf32> -> vector<16x1xf32>
    %61 = vector.broadcast %60 : vector<16x1xf32> to vector<16x8xf32>
    %62 = arith.mulf %57, %61 : vector<16x8xf32>
    %63 = arith.truncf %62 : vector<16x8xf32> to vector<16x8xbf16>
    %cst_26 = arith.constant dense<0.000000e+00> : vector<16x8xf32>
    %64 = tpu.matmul %63, %47, %cst_26 {dimension_numbers = #tpu.dot_dimension_numbers<[1], [0], [0], [1], [0, 0, 1, 1], [], []>} : vector<16x8xbf16>, vector<8x8xbf16>, vector<16x8xf32> -> vector<16x8xf32>
    %c0_27 = arith.constant 0 : index
    %c8 = arith.constant 8 : index
    %65 = vector.load %arg13[%c0_27, %c8] : memref<16x32xf32, #tpu.memory_space<vmem>>, vector<16x8xf32>
    tpu.vector_store %arg13[%c0_27, %c8], %64 {strides = array<i32>} : memref<16x32xf32, #tpu.memory_space<vmem>>, vector<16x8xf32>,
    %66 = vector.extract_strided_slice %7 {offsets = [0, 16], sizes = [16, 8], strides = [1, 1]} : vector<16x32xf32> to vector<16x8xf32>
    %67 = arith.truncf %66 : vector<16x8xf32> to vector<16x8xbf16>
    %68 = vector.extract_strided_slice %14 {offsets = [0, 16], sizes = [8, 8], strides = [1, 1]} : vector<8x32xf32> to vector<8x8xf32>
    %69 = arith.truncf %68 : vector<8x8xf32> to vector<8x8xbf16>
    %70 = vector.extract_strided_slice %15 {offsets = [0, 16], sizes = [8, 8], strides = [1, 1]} : vector<8x32xf32> to vector<8x8xf32>
    %71 = arith.truncf %70 : vector<8x8xf32> to vector<8x8xbf16>
    %cst_28 = arith.constant dense<0.000000e+00> : vector<16x8xf32>
    %72 = tpu.matmul %67, %69, %cst_28 {dimension_numbers = #tpu.dot_dimension_numbers<[1], [1], [0], [0], [0, 0, 1, 0], [], []>} : vector<16x8xbf16>, vector<8x8xbf16>, vector<16x8xf32> -> vector<16x8xf32>
    %cst_29 = arith.constant 0.353553385 : f32
    %73 = vector.broadcast %cst_29 : f32 to vector<16x8xf32>
    %74 = arith.mulf %72, %73 : vector<16x8xf32>
    %75 = vector.broadcast %17 : vector<1x8xf32> to vector<16x8xf32>
    %76 = arith.addf %74, %75 : vector<16x8xf32>
    %cst_30 = arith.constant dense<0xFF800000> : vector<16xf32>
    %77 = vector.multi_reduction <maximumf>, %76, %cst_30 [1] : vector<16x8xf32> to vector<16xf32>
    %78 = vector.shape_cast %77 : vector<16xf32> to vector<16x1xf32>
    %79 = vector.broadcast %78 : vector<16x1xf32> to vector<16x8xf32>
    %80 = arith.subf %76, %79 : vector<16x8xf32>
    %81 = math.exp %80 : vector<16x8xf32>
    %cst_31 = arith.constant dense<0.000000e+00> : vector<16xf32>
    %82 = vector.multi_reduction <add>, %81, %cst_31 [1] : vector<16x8xf32> to vector<16xf32>
    %83 = vector.shape_cast %82 : vector<16xf32> to vector<16x1xf32>
    %84 = tpu.reciprocal %83 {approx = true} : vector<16x1xf32> -> vector<16x1xf32>
    %85 = vector.broadcast %84 : vector<16x1xf32> to vector<16x8xf32>
    %86 = arith.mulf %81, %85 : vector<16x8xf32>
    %87 = arith.truncf %86 : vector<16x8xf32> to vector<16x8xbf16>
    %cst_32 = arith.constant dense<0.000000e+00> : vector<16x8xf32>
    %88 = tpu.matmul %87, %71, %cst_32 {dimension_numbers = #tpu.dot_dimension_numbers<[1], [0], [0], [1], [0, 0, 1, 1], [], []>} : vector<16x8xbf16>, vector<8x8xbf16>, vector<16x8xf32> -> vector<16x8xf32>
    %c0_33 = arith.constant 0 : index
    %c16 = arith.constant 16 : index
    %89 = vector.load %arg13[%c0_33, %c16] : memref<16x32xf32, #tpu.memory_space<vmem>>, vector<16x8xf32>
    tpu.vector_store %arg13[%c0_33, %c16], %88 {strides = array<i32>} : memref<16x32xf32, #tpu.memory_space<vmem>>, vector<16x8xf32>,
    %90 = vector.extract_strided_slice %7 {offsets = [0, 24], sizes = [16, 8], strides = [1, 1]} : vector<16x32xf32> to vector<16x8xf32>
    %91 = arith.truncf %90 : vector<16x8xf32> to vector<16x8xbf16>
    %92 = vector.extract_strided_slice %14 {offsets = [0, 24], sizes = [8, 8], strides = [1, 1]} : vector<8x32xf32> to vector<8x8xf32>
    %93 = arith.truncf %92 : vector<8x8xf32> to vector<8x8xbf16>
    %94 = vector.extract_strided_slice %15 {offsets = [0, 24], sizes = [8, 8], strides = [1, 1]} : vector<8x32xf32> to vector<8x8xf32>
    %95 = arith.truncf %94 : vector<8x8xf32> to vector<8x8xbf16>
    %cst_34 = arith.constant dense<0.000000e+00> : vector<16x8xf32>
    %96 = tpu.matmul %91, %93, %cst_34 {dimension_numbers = #tpu.dot_dimension_numbers<[1], [1], [0], [0], [0, 0, 1, 0], [], []>} : vector<16x8xbf16>, vector<8x8xbf16>, vector<16x8xf32> -> vector<16x8xf32>
    %cst_35 = arith.constant 0.353553385 : f32
    %97 = vector.broadcast %cst_35 : f32 to vector<16x8xf32>
    %98 = arith.mulf %96, %97 : vector<16x8xf32>
    %99 = vector.broadcast %17 : vector<1x8xf32> to vector<16x8xf32>
    %100 = arith.addf %98, %99 : vector<16x8xf32>
    %cst_36 = arith.constant dense<0xFF800000> : vector<16xf32>
    %101 = vector.multi_reduction <maximumf>, %100, %cst_36 [1] : vector<16x8xf32> to vector<16xf32>
    %102 = vector.shape_cast %101 : vector<16xf32> to vector<16x1xf32>
    %103 = vector.broadcast %102 : vector<16x1xf32> to vector<16x8xf32>
    %104 = arith.subf %100, %103 : vector<16x8xf32>
    %105 = math.exp %104 : vector<16x8xf32>
    %cst_37 = arith.constant dense<0.000000e+00> : vector<16xf32>
    %106 = vector.multi_reduction <add>, %105, %cst_37 [1] : vector<16x8xf32> to vector<16xf32>
    %107 = vector.shape_cast %106 : vector<16xf32> to vector<16x1xf32>
    %108 = tpu.reciprocal %107 {approx = true} : vector<16x1xf32> -> vector<16x1xf32>
    %109 = vector.broadcast %108 : vector<16x1xf32> to vector<16x8xf32>
    %110 = arith.mulf %105, %109 : vector<16x8xf32>
    %111 = arith.truncf %110 : vector<16x8xf32> to vector<16x8xbf16>
    %cst_38 = arith.constant dense<0.000000e+00> : vector<16x8xf32>
    %112 = tpu.matmul %111, %95, %cst_38 {dimension_numbers = #tpu.dot_dimension_numbers<[1], [0], [0], [1], [0, 0, 1, 1], [], []>} : vector<16x8xbf16>, vector<8x8xbf16>, vector<16x8xf32> -> vector<16x8xf32>
    %c0_39 = arith.constant 0 : index
    %c24 = arith.constant 24 : index
    %113 = vector.load %arg13[%c0_39, %c24] : memref<16x32xf32, #tpu.memory_space<vmem>>, vector<16x8xf32>
    tpu.vector_store %arg13[%c0_39, %c24], %112 {strides = array<i32>} : memref<16x32xf32, #tpu.memory_space<vmem>>, vector<16x8xf32>,
    %c0_40 = arith.constant 0 : index
    %c0_41 = arith.constant 0 : index
    %114 = vector.load %arg13[%c0_40, %c0_41] : memref<16x32xf32, #tpu.memory_space<vmem>>, vector<16x32xf32>
    %115 = arith.truncf %114 : vector<16x32xf32> to vector<16x32xbf16>
    %c0_42 = arith.constant 0 : index
    %c0_43 = arith.constant 0 : index
    %116 = vector.load %arg8[%c0_42, %c0_43] : memref<32x32xbf16, #tpu.memory_space<vmem>>, vector<32x32xbf16>
    %cst_44 = arith.constant dense<0.000000e+00> : vector<16x32xf32>
    %117 = tpu.matmul %115, %116, %cst_44 {dimension_numbers = #tpu.dot_dimension_numbers<[1], [0], [0], [1], [0, 0, 1, 1], [], []>} : vector<16x32xbf16>, vector<32x32xbf16>, vector<16x32xf32> -> vector<16x32xf32>
    %c0_45 = arith.constant 0 : index
    %c0_46 = arith.constant 0 : index
    %118 = vector.load %arg9[%c0_45, %c0_46] : memref<1x32xf32, #tpu.memory_space<vmem>>, vector<1x32xf32>
    %119 = vector.broadcast %118 : vector<1x32xf32> to vector<16x32xf32>
    %120 = arith.addf %117, %119 : vector<16x32xf32>
    %121 = arith.addf %120, %0 : vector<16x32xf32>
    %c0_47 = arith.constant 0 : index
    %c0_48 = arith.constant 0 : index
    %122 = vector.load %arg10[%c0_47, %c0_48] : memref<1x32xf32, #tpu.memory_space<vmem>>, vector<1x32xf32>
    %c0_49 = arith.constant 0 : index
    %c0_50 = arith.constant 0 : index
    %123 = vector.load %arg11[%c0_49, %c0_50] : memref<1x32xf32, #tpu.memory_space<vmem>>, vector<1x32xf32>
    %cst_51 = arith.constant dense<0.000000e+00> : vector<16xf32>
    %124 = vector.multi_reduction <add>, %121, %cst_51 [1] : vector<16x32xf32> to vector<16xf32>
    %125 = vector.shape_cast %124 : vector<16xf32> to vector<16x1xf32>
    %cst_52 = arith.constant 3.200000e+01 : f32
    %126 = vector.broadcast %cst_52 : f32 to vector<16x1xf32>
    %127 = arith.divf %125, %126 : vector<16x1xf32>
    %128 = vector.broadcast %127 : vector<16x1xf32> to vector<16x32xf32>
    %129 = arith.subf %121, %128 : vector<16x32xf32>
    %130 = arith.mulf %129, %129 : vector<16x32xf32>
    %cst_53 = arith.constant dense<0.000000e+00> : vector<16xf32>
    %131 = vector.multi_reduction <add>, %130, %cst_53 [1] : vector<16x32xf32> to vector<16xf32>
    %132 = vector.shape_cast %131 : vector<16xf32> to vector<16x1xf32>
    %cst_54 = arith.constant 3.100000e+01 : f32
    %133 = vector.broadcast %cst_54 : f32 to vector<16x1xf32>
    %134 = arith.divf %132, %133 : vector<16x1xf32>
    %135 = math.sqrt %134 : vector<16x1xf32>
    %cst_55 = arith.constant 9.99999997E-7 : f32
    %136 = vector.broadcast %cst_55 : f32 to vector<16x1xf32>
    %137 = arith.addf %135, %136 : vector<16x1xf32>
    %138 = tpu.reciprocal %137 {approx = true} : vector<16x1xf32> -> vector<16x1xf32>
    %139 = vector.broadcast %138 : vector<16x1xf32> to vector<16x32xf32>
    %140 = arith.mulf %129, %139 : vector<16x32xf32>
    %141 = vector.broadcast %122 : vector<1x32xf32> to vector<16x32xf32>
    %142 = arith.mulf %141, %140 : vector<16x32xf32>
    %143 = vector.broadcast %123 : vector<1x32xf32> to vector<16x32xf32>
    %144 = arith.addf %142, %143 : vector<16x32xf32>
    %c0_56 = arith.constant 0 : index
    %c0_57 = arith.constant 0 : index
    %145 = vector.load %arg12[%c0_56, %c0_57] : memref<16x32xf32, #tpu.memory_space<vmem>>, vector<16x32xf32>
    tpu.vector_store %arg12[%c0_56, %c0_57], %144 {strides = array<i32>} : memref<16x32xf32, #tpu.memory_space<vmem>>, vector<16x32xf32>,
    return
  }
  func.func @transform_0(%arg0: i32) -> (i32, i32) {
    %c0_i32 = arith.constant 0 : i32
    %c0_i32_0 = arith.constant 0 : i32
    return %arg0, %c0_i32 : i32, i32
  }
  func.func @transform_1(%arg0: i32) -> (i32, i32) {
    %c0_i32 = arith.constant 0 : i32
    %c0_i32_0 = arith.constant 0 : i32
    return %arg0, %c0_i32 : i32, i32
  }
  func.func @transform_2(%arg0: i32) -> (i32, i32, i32) {
    %c0_i32 = arith.constant 0 : i32
    %c0_i32_0 = arith.constant 0 : i32
    %c0_i32_1 = arith.constant 0 : i32
    return %arg0, %c0_i32, %c0_i32_0 : i32, i32, i32
  }
  func.func @transform_3(%arg0: i32) -> (i32, i32) {
    %c0_i32 = arith.constant 0 : i32
    %c0_i32_0 = arith.constant 0 : i32
    %c0_i32_1 = arith.constant 0 : i32
    return %c0_i32, %c0_i32_0 : i32, i32
  }
  func.func @transform_4(%arg0: i32) -> (i32, i32) {
    %c0_i32 = arith.constant 0 : i32
    %c0_i32_0 = arith.constant 0 : i32
    %c0_i32_1 = arith.constant 0 : i32
    return %c0_i32, %c0_i32_0 : i32, i32
  }
  func.func @transform_5(%arg0: i32) -> (i32, i32) {
    %c0_i32 = arith.constant 0 : i32
    %c0_i32_0 = arith.constant 0 : i32
    %c0_i32_1 = arith.constant 0 : i32
    return %c0_i32, %c0_i32_0 : i32, i32
  }
  func.func @transform_6(%arg0: i32) -> (i32, i32) {
    %c0_i32 = arith.constant 0 : i32
    %c0_i32_0 = arith.constant 0 : i32
    %c0_i32_1 = arith.constant 0 : i32
    return %c0_i32, %c0_i32_0 : i32, i32
  }
  func.func @transform_7(%arg0: i32) -> (i32, i32) {
    %c0_i32 = arith.constant 0 : i32
    %c0_i32_0 = arith.constant 0 : i32
    %c0_i32_1 = arith.constant 0 : i32
    return %c0_i32, %c0_i32_0 : i32, i32
  }
  func.func @transform_8(%arg0: i32) -> (i32, i32) {
    %c0_i32 = arith.constant 0 : i32
    %c0_i32_0 = arith.constant 0 : i32
    %c0_i32_1 = arith.constant 0 : i32
    return %c0_i32, %c0_i32_0 : i32, i32
  }
  func.func @transform_9(%arg0: i32) -> (i32, i32) {
    %c0_i32 = arith.constant 0 : i32
    %c0_i32_0 = arith.constant 0 : i32
    %c0_i32_1 = arith.constant 0 : i32
    return %c0_i32, %c0_i32_0 : i32, i32
  }
  func.func @transform_10(%arg0: i32) -> (i32, i32) {
    %c0_i32 = arith.constant 0 : i32
    %c0_i32_0 = arith.constant 0 : i32
    %c0_i32_1 = arith.constant 0 : i32
    return %c0_i32, %c0_i32_0 : i32, i32
  }
  func.func @transform_11(%arg0: i32) -> (i32, i32) {
    %c0_i32 = arith.constant 0 : i32
    %c0_i32_0 = arith.constant 0 : i32
    return %arg0, %c0_i32 : i32, i32
  }
}

module attributes {stable_mosaic.version = 11 : i64} {
  func.func @_ffn_block_kernel(%arg0: i32, %arg1: memref<16x32xf32, #tpu.memory_space<vmem>>, %arg2: memref<32x64xbf16, #tpu.memory_space<vmem>>, %arg3: memref<1x64xf32, #tpu.memory_space<vmem>>, %arg4: memref<64x32xbf16, #tpu.memory_space<vmem>>, %arg5: memref<1x32xf32, #tpu.memory_space<vmem>>, %arg6: memref<1x32xf32, #tpu.memory_space<vmem>>, %arg7: memref<1x32xf32, #tpu.memory_space<vmem>>, %arg8: memref<16x32xf32, #tpu.memory_space<vmem>>) attributes {dimension_semantics = [#tpu.dimension_semantics<parallel>], iteration_bounds = array<i64: 2>, scalar_prefetch = 0 : i64, scratch_operands = 0 : i64, tpu.core_type = #tpu.core_type<tc>, window_params = [{transform_indices = @transform_0, window_bounds = array<i64: 16, 32>}, {pipeline_mode = #tpu.pipeline_mode<synchronous>, transform_indices = @transform_1, window_bounds = array<i64: 32, 64>}, {pipeline_mode = #tpu.pipeline_mode<synchronous>, transform_indices = @transform_2, window_bounds = array<i64: 1, 64>}, {pipeline_mode = #tpu.pipeline_mode<synchronous>, transform_indices = @transform_3, window_bounds = array<i64: 64, 32>}, {pipeline_mode = #tpu.pipeline_mode<synchronous>, transform_indices = @transform_4, window_bounds = array<i64: 1, 32>}, {pipeline_mode = #tpu.pipeline_mode<synchronous>, transform_indices = @transform_5, window_bounds = array<i64: 1, 32>}, {pipeline_mode = #tpu.pipeline_mode<synchronous>, transform_indices = @transform_6, window_bounds = array<i64: 1, 32>}, {transform_indices = @transform_7, window_bounds = array<i64: 16, 32>}]} {
    %c0 = arith.constant 0 : index
    %c0_0 = arith.constant 0 : index
    %0 = vector.load %arg1[%c0, %c0_0] : memref<16x32xf32, #tpu.memory_space<vmem>>, vector<16x32xf32>
    %1 = arith.truncf %0 : vector<16x32xf32> to vector<16x32xbf16>
    %c0_1 = arith.constant 0 : index
    %c0_2 = arith.constant 0 : index
    %2 = vector.load %arg2[%c0_1, %c0_2] : memref<32x64xbf16, #tpu.memory_space<vmem>>, vector<32x64xbf16>
    %cst = arith.constant dense<0.000000e+00> : vector<16x64xf32>
    %3 = tpu.matmul %1, %2, %cst {dimension_numbers = #tpu.dot_dimension_numbers<[1], [0], [0], [1], [0, 0, 1, 1], [], []>} : vector<16x32xbf16>, vector<32x64xbf16>, vector<16x64xf32> -> vector<16x64xf32>
    %c0_3 = arith.constant 0 : index
    %c0_4 = arith.constant 0 : index
    %4 = vector.load %arg3[%c0_3, %c0_4] : memref<1x64xf32, #tpu.memory_space<vmem>>, vector<1x64xf32>
    %5 = vector.broadcast %4 : vector<1x64xf32> to vector<16x64xf32>
    %6 = arith.addf %3, %5 : vector<16x64xf32>
    %cst_5 = arith.constant 0.000000e+00 : f32
    %7 = vector.broadcast %cst_5 : f32 to vector<16x64xf32>
    %8 = arith.maximumf %6, %7 : vector<16x64xf32>
    %9 = arith.truncf %8 : vector<16x64xf32> to vector<16x64xbf16>
    %c0_6 = arith.constant 0 : index
    %c0_7 = arith.constant 0 : index
    %10 = vector.load %arg4[%c0_6, %c0_7] : memref<64x32xbf16, #tpu.memory_space<vmem>>, vector<64x32xbf16>
    %cst_8 = arith.constant dense<0.000000e+00> : vector<16x32xf32>
    %11 = tpu.matmul %9, %10, %cst_8 {dimension_numbers = #tpu.dot_dimension_numbers<[1], [0], [0], [1], [0, 0, 1, 1], [], []>} : vector<16x64xbf16>, vector<64x32xbf16>, vector<16x32xf32> -> vector<16x32xf32>
    %c0_9 = arith.constant 0 : index
    %c0_10 = arith.constant 0 : index
    %12 = vector.load %arg5[%c0_9, %c0_10] : memref<1x32xf32, #tpu.memory_space<vmem>>, vector<1x32xf32>
    %13 = vector.broadcast %12 : vector<1x32xf32> to vector<16x32xf32>
    %14 = arith.addf %11, %13 : vector<16x32xf32>
    %15 = arith.addf %14, %0 : vector<16x32xf32>
    %c0_11 = arith.constant 0 : index
    %c0_12 = arith.constant 0 : index
    %16 = vector.load %arg6[%c0_11, %c0_12] : memref<1x32xf32, #tpu.memory_space<vmem>>, vector<1x32xf32>
    %c0_13 = arith.constant 0 : index
    %c0_14 = arith.constant 0 : index
    %17 = vector.load %arg7[%c0_13, %c0_14] : memref<1x32xf32, #tpu.memory_space<vmem>>, vector<1x32xf32>
    %cst_15 = arith.constant dense<0.000000e+00> : vector<16xf32>
    %18 = vector.multi_reduction <add>, %15, %cst_15 [1] : vector<16x32xf32> to vector<16xf32>
    %19 = vector.shape_cast %18 : vector<16xf32> to vector<16x1xf32>
    %cst_16 = arith.constant 3.200000e+01 : f32
    %20 = vector.broadcast %cst_16 : f32 to vector<16x1xf32>
    %21 = arith.divf %19, %20 : vector<16x1xf32>
    %22 = vector.broadcast %21 : vector<16x1xf32> to vector<16x32xf32>
    %23 = arith.subf %15, %22 : vector<16x32xf32>
    %24 = arith.mulf %23, %23 : vector<16x32xf32>
    %cst_17 = arith.constant dense<0.000000e+00> : vector<16xf32>
    %25 = vector.multi_reduction <add>, %24, %cst_17 [1] : vector<16x32xf32> to vector<16xf32>
    %26 = vector.shape_cast %25 : vector<16xf32> to vector<16x1xf32>
    %cst_18 = arith.constant 3.100000e+01 : f32
    %27 = vector.broadcast %cst_18 : f32 to vector<16x1xf32>
    %28 = arith.divf %26, %27 : vector<16x1xf32>
    %29 = math.sqrt %28 : vector<16x1xf32>
    %cst_19 = arith.constant 9.99999997E-7 : f32
    %30 = vector.broadcast %cst_19 : f32 to vector<16x1xf32>
    %31 = arith.addf %29, %30 : vector<16x1xf32>
    %32 = tpu.reciprocal %31 {approx = true} : vector<16x1xf32> -> vector<16x1xf32>
    %33 = vector.broadcast %32 : vector<16x1xf32> to vector<16x32xf32>
    %34 = arith.mulf %23, %33 : vector<16x32xf32>
    %35 = vector.broadcast %16 : vector<1x32xf32> to vector<16x32xf32>
    %36 = arith.mulf %35, %34 : vector<16x32xf32>
    %37 = vector.broadcast %17 : vector<1x32xf32> to vector<16x32xf32>
    %38 = arith.addf %36, %37 : vector<16x32xf32>
    %c0_20 = arith.constant 0 : index
    %c0_21 = arith.constant 0 : index
    %39 = vector.load %arg8[%c0_20, %c0_21] : memref<16x32xf32, #tpu.memory_space<vmem>>, vector<16x32xf32>
    tpu.vector_store %arg8[%c0_20, %c0_21], %38 {strides = array<i32>} : memref<16x32xf32, #tpu.memory_space<vmem>>, vector<16x32xf32>,
    return
  }
  func.func @transform_0(%arg0: i32) -> (i32, i32) {
    %c0_i32 = arith.constant 0 : i32
    %c0_i32_0 = arith.constant 0 : i32
    return %arg0, %c0_i32 : i32, i32
  }
  func.func @transform_1(%arg0: i32) -> (i32, i32) {
    %c0_i32 = arith.constant 0 : i32
    %c0_i32_0 = arith.constant 0 : i32
    %c0_i32_1 = arith.constant 0 : i32
    return %c0_i32, %c0_i32_0 : i32, i32
  }
  func.func @transform_2(%arg0: i32) -> (i32, i32) {
    %c0_i32 = arith.constant 0 : i32
    %c0_i32_0 = arith.constant 0 : i32
    %c0_i32_1 = arith.constant 0 : i32
    return %c0_i32, %c0_i32_0 : i32, i32
  }
  func.func @transform_3(%arg0: i32) -> (i32, i32) {
    %c0_i32 = arith.constant 0 : i32
    %c0_i32_0 = arith.constant 0 : i32
    %c0_i32_1 = arith.constant 0 : i32
    return %c0_i32, %c0_i32_0 : i32, i32
  }
  func.func @transform_4(%arg0: i32) -> (i32, i32) {
    %c0_i32 = arith.constant 0 : i32
    %c0_i32_0 = arith.constant 0 : i32
    %c0_i32_1 = arith.constant 0 : i32
    return %c0_i32, %c0_i32_0 : i32, i32
  }
  func.func @transform_5(%arg0: i32) -> (i32, i32) {
    %c0_i32 = arith.constant 0 : i32
    %c0_i32_0 = arith.constant 0 : i32
    %c0_i32_1 = arith.constant 0 : i32
    return %c0_i32, %c0_i32_0 : i32, i32
  }
  func.func @transform_6(%arg0: i32) -> (i32, i32) {
    %c0_i32 = arith.constant 0 : i32
    %c0_i32_0 = arith.constant 0 : i32
    %c0_i32_1 = arith.constant 0 : i32
    return %c0_i32, %c0_i32_0 : i32, i32
  }
  func.func @transform_7(%arg0: i32) -> (i32, i32) {
    %c0_i32 = arith.constant 0 : i32
    %c0_i32_0 = arith.constant 0 : i32
    return %arg0, %c0_i32 : i32, i32
  }
}

module attributes {stable_mosaic.version = 11 : i64} {
  func.func @_ffn_block_kernel(%arg0: i32, %arg1: memref<8x32xf32, #tpu.memory_space<vmem>>, %arg2: memref<32x64xbf16, #tpu.memory_space<vmem>>, %arg3: memref<1x64xf32, #tpu.memory_space<vmem>>, %arg4: memref<64x32xbf16, #tpu.memory_space<vmem>>, %arg5: memref<1x32xf32, #tpu.memory_space<vmem>>, %arg6: memref<1x32xf32, #tpu.memory_space<vmem>>, %arg7: memref<1x32xf32, #tpu.memory_space<vmem>>, %arg8: memref<8x32xf32, #tpu.memory_space<vmem>>) attributes {dimension_semantics = [#tpu.dimension_semantics<parallel>], iteration_bounds = array<i64: 2>, scalar_prefetch = 0 : i64, scratch_operands = 0 : i64, tpu.core_type = #tpu.core_type<tc>, window_params = [{transform_indices = @transform_0, window_bounds = array<i64: 8, 32>}, {pipeline_mode = #tpu.pipeline_mode<synchronous>, transform_indices = @transform_1, window_bounds = array<i64: 32, 64>}, {pipeline_mode = #tpu.pipeline_mode<synchronous>, transform_indices = @transform_2, window_bounds = array<i64: 1, 64>}, {pipeline_mode = #tpu.pipeline_mode<synchronous>, transform_indices = @transform_3, window_bounds = array<i64: 64, 32>}, {pipeline_mode = #tpu.pipeline_mode<synchronous>, transform_indices = @transform_4, window_bounds = array<i64: 1, 32>}, {pipeline_mode = #tpu.pipeline_mode<synchronous>, transform_indices = @transform_5, window_bounds = array<i64: 1, 32>}, {pipeline_mode = #tpu.pipeline_mode<synchronous>, transform_indices = @transform_6, window_bounds = array<i64: 1, 32>}, {transform_indices = @transform_7, window_bounds = array<i64: 8, 32>}]} {
    %c0 = arith.constant 0 : index
    %c0_0 = arith.constant 0 : index
    %0 = vector.load %arg1[%c0, %c0_0] : memref<8x32xf32, #tpu.memory_space<vmem>>, vector<8x32xf32>
    %1 = arith.truncf %0 : vector<8x32xf32> to vector<8x32xbf16>
    %c0_1 = arith.constant 0 : index
    %c0_2 = arith.constant 0 : index
    %2 = vector.load %arg2[%c0_1, %c0_2] : memref<32x64xbf16, #tpu.memory_space<vmem>>, vector<32x64xbf16>
    %cst = arith.constant dense<0.000000e+00> : vector<8x64xf32>
    %3 = tpu.matmul %1, %2, %cst {dimension_numbers = #tpu.dot_dimension_numbers<[1], [0], [0], [1], [0, 0, 1, 1], [], []>} : vector<8x32xbf16>, vector<32x64xbf16>, vector<8x64xf32> -> vector<8x64xf32>
    %c0_3 = arith.constant 0 : index
    %c0_4 = arith.constant 0 : index
    %4 = vector.load %arg3[%c0_3, %c0_4] : memref<1x64xf32, #tpu.memory_space<vmem>>, vector<1x64xf32>
    %5 = vector.broadcast %4 : vector<1x64xf32> to vector<8x64xf32>
    %6 = arith.addf %3, %5 : vector<8x64xf32>
    %cst_5 = arith.constant 0.000000e+00 : f32
    %7 = vector.broadcast %cst_5 : f32 to vector<8x64xf32>
    %8 = arith.maximumf %6, %7 : vector<8x64xf32>
    %9 = arith.truncf %8 : vector<8x64xf32> to vector<8x64xbf16>
    %c0_6 = arith.constant 0 : index
    %c0_7 = arith.constant 0 : index
    %10 = vector.load %arg4[%c0_6, %c0_7] : memref<64x32xbf16, #tpu.memory_space<vmem>>, vector<64x32xbf16>
    %cst_8 = arith.constant dense<0.000000e+00> : vector<8x32xf32>
    %11 = tpu.matmul %9, %10, %cst_8 {dimension_numbers = #tpu.dot_dimension_numbers<[1], [0], [0], [1], [0, 0, 1, 1], [], []>} : vector<8x64xbf16>, vector<64x32xbf16>, vector<8x32xf32> -> vector<8x32xf32>
    %c0_9 = arith.constant 0 : index
    %c0_10 = arith.constant 0 : index
    %12 = vector.load %arg5[%c0_9, %c0_10] : memref<1x32xf32, #tpu.memory_space<vmem>>, vector<1x32xf32>
    %13 = vector.broadcast %12 : vector<1x32xf32> to vector<8x32xf32>
    %14 = arith.addf %11, %13 : vector<8x32xf32>
    %c0_11 = arith.constant 0 : index
    %c0_12 = arith.constant 0 : index
    %15 = vector.load %arg6[%c0_11, %c0_12] : memref<1x32xf32, #tpu.memory_space<vmem>>, vector<1x32xf32>
    %c0_13 = arith.constant 0 : index
    %c0_14 = arith.constant 0 : index
    %16 = vector.load %arg7[%c0_13, %c0_14] : memref<1x32xf32, #tpu.memory_space<vmem>>, vector<1x32xf32>
    %cst_15 = arith.constant dense<0.000000e+00> : vector<8xf32>
    %17 = vector.multi_reduction <add>, %14, %cst_15 [1] : vector<8x32xf32> to vector<8xf32>
    %18 = vector.shape_cast %17 : vector<8xf32> to vector<8x1xf32>
    %cst_16 = arith.constant 3.200000e+01 : f32
    %19 = vector.broadcast %cst_16 : f32 to vector<8x1xf32>
    %20 = arith.divf %18, %19 : vector<8x1xf32>
    %21 = vector.broadcast %20 : vector<8x1xf32> to vector<8x32xf32>
    %22 = arith.subf %14, %21 : vector<8x32xf32>
    %23 = arith.mulf %22, %22 : vector<8x32xf32>
    %cst_17 = arith.constant dense<0.000000e+00> : vector<8xf32>
    %24 = vector.multi_reduction <add>, %23, %cst_17 [1] : vector<8x32xf32> to vector<8xf32>
    %25 = vector.shape_cast %24 : vector<8xf32> to vector<8x1xf32>
    %cst_18 = arith.constant 3.100000e+01 : f32
    %26 = vector.broadcast %cst_18 : f32 to vector<8x1xf32>
    %27 = arith.divf %25, %26 : vector<8x1xf32>
    %28 = math.sqrt %27 : vector<8x1xf32>
    %cst_19 = arith.constant 9.99999997E-7 : f32
    %29 = vector.broadcast %cst_19 : f32 to vector<8x1xf32>
    %30 = arith.addf %28, %29 : vector<8x1xf32>
    %31 = tpu.reciprocal %30 {approx = true} : vector<8x1xf32> -> vector<8x1xf32>
    %32 = vector.broadcast %31 : vector<8x1xf32> to vector<8x32xf32>
    %33 = arith.mulf %22, %32 : vector<8x32xf32>
    %34 = vector.broadcast %15 : vector<1x32xf32> to vector<8x32xf32>
    %35 = arith.mulf %34, %33 : vector<8x32xf32>
    %36 = vector.broadcast %16 : vector<1x32xf32> to vector<8x32xf32>
    %37 = arith.addf %35, %36 : vector<8x32xf32>
    %c0_20 = arith.constant 0 : index
    %c0_21 = arith.constant 0 : index
    %38 = vector.load %arg8[%c0_20, %c0_21] : memref<8x32xf32, #tpu.memory_space<vmem>>, vector<8x32xf32>
    tpu.vector_store %arg8[%c0_20, %c0_21], %37 {strides = array<i32>} : memref<8x32xf32, #tpu.memory_space<vmem>>, vector<8x32xf32>,
    return
  }
  func.func @transform_0(%arg0: i32) -> (i32, i32) {
    %c0_i32 = arith.constant 0 : i32
    %c0_i32_0 = arith.constant 0 : i32
    return %arg0, %c0_i32 : i32, i32
  }
  func.func @transform_1(%arg0: i32) -> (i32, i32) {
    %c0_i32 = arith.constant 0 : i32
    %c0_i32_0 = arith.constant 0 : i32
    %c0_i32_1 = arith.constant 0 : i32
    return %c0_i32, %c0_i32_0 : i32, i32
  }
  func.func @transform_2(%arg0: i32) -> (i32, i32) {
    %c0_i32 = arith.constant 0 : i32
    %c0_i32_0 = arith.constant 0 : i32
    %c0_i32_1 = arith.constant 0 : i32
    return %c0_i32, %c0_i32_0 : i32, i32
  }
  func.func @transform_3(%arg0: i32) -> (i32, i32) {
    %c0_i32 = arith.constant 0 : i32
    %c0_i32_0 = arith.constant 0 : i32
    %c0_i32_1 = arith.constant 0 : i32
    return %c0_i32, %c0_i32_0 : i32, i32
  }
  func.func @transform_4(%arg0: i32) -> (i32, i32) {
    %c0_i32 = arith.constant 0 : i32
    %c0_i32_0 = arith.constant 0 : i32
    %c0_i32_1 = arith.constant 0 : i32
    return %c0_i32, %c0_i32_0 : i32, i32
  }
  func.func @transform_5(%arg0: i32) -> (i32, i32) {
    %c0_i32 = arith.constant 0 : i32
    %c0_i32_0 = arith.constant 0 : i32
    %c0_i32_1 = arith.constant 0 : i32
    return %c0_i32, %c0_i32_0 : i32, i32
  }
  func.func @transform_6(%arg0: i32) -> (i32, i32) {
    %c0_i32 = arith.constant 0 : i32
    %c0_i32_0 = arith.constant 0 : i32
    %c0_i32_1 = arith.constant 0 : i32
    return %c0_i32, %c0_i32_0 : i32, i32
  }
  func.func @transform_7(%arg0: i32) -> (i32, i32) {
    %c0_i32 = arith.constant 0 : i32
    %c0_i32_0 = arith.constant 0 : i32
    return %arg0, %c0_i32 : i32, i32
  }
}

module attributes {stable_mosaic.version = 11 : i64} {
  func.func @_cross_attn_kernel(%arg0: i32, %arg1: memref<8x32xf32, #tpu.memory_space<vmem>>, %arg2: memref<16x32xf32, #tpu.memory_space<vmem>>, %arg3: memref<1x1x16xf32, #tpu.memory_space<vmem>>, %arg4: memref<32x32xbf16, #tpu.memory_space<vmem>>, %arg5: memref<1x32xf32, #tpu.memory_space<vmem>>, %arg6: memref<32x64xbf16, #tpu.memory_space<vmem>>, %arg7: memref<1x64xf32, #tpu.memory_space<vmem>>, %arg8: memref<32x32xbf16, #tpu.memory_space<vmem>>, %arg9: memref<1x32xf32, #tpu.memory_space<vmem>>, %arg10: memref<1x32xf32, #tpu.memory_space<vmem>>, %arg11: memref<1x32xf32, #tpu.memory_space<vmem>>, %arg12: memref<8x32xf32, #tpu.memory_space<vmem>>, %arg13: memref<8x32xf32, #tpu.memory_space<vmem>>) attributes {dimension_semantics = [#tpu.dimension_semantics<parallel>], iteration_bounds = array<i64: 2>, scalar_prefetch = 0 : i64, scratch_operands = 1 : i64, tpu.core_type = #tpu.core_type<tc>, window_params = [{transform_indices = @transform_0, window_bounds = array<i64: 8, 32>}, {transform_indices = @transform_1, window_bounds = array<i64: 16, 32>}, {transform_indices = @transform_2, window_bounds = array<i64: 1, 1, 16>}, {pipeline_mode = #tpu.pipeline_mode<synchronous>, transform_indices = @transform_3, window_bounds = array<i64: 32, 32>}, {pipeline_mode = #tpu.pipeline_mode<synchronous>, transform_indices = @transform_4, window_bounds = array<i64: 1, 32>}, {pipeline_mode = #tpu.pipeline_mode<synchronous>, transform_indices = @transform_5, window_bounds = array<i64: 32, 64>}, {pipeline_mode = #tpu.pipeline_mode<synchronous>, transform_indices = @transform_6, window_bounds = array<i64: 1, 64>}, {pipeline_mode = #tpu.pipeline_mode<synchronous>, transform_indices = @transform_7, window_bounds = array<i64: 32, 32>}, {pipeline_mode = #tpu.pipeline_mode<synchronous>, transform_indices = @transform_8, window_bounds = array<i64: 1, 32>}, {pipeline_mode = #tpu.pipeline_mode<synchronous>, transform_indices = @transform_9, window_bounds = array<i64: 1, 32>}, {pipeline_mode = #tpu.pipeline_mode<synchronous>, transform_indices = @transform_10, window_bounds = array<i64: 1, 32>}, {transform_indices = @transform_11, window_bounds = array<i64: 8, 32>}]} {
    %c0 = arith.constant 0 : index
    %c0_0 = arith.constant 0 : index
    %0 = vector.load %arg1[%c0, %c0_0] : memref<8x32xf32, #tpu.memory_space<vmem>>, vector<8x32xf32>
    %c0_1 = arith.constant 0 : index
    %c0_2 = arith.constant 0 : index
    %1 = vector.load %arg2[%c0_1, %c0_2] : memref<16x32xf32, #tpu.memory_space<vmem>>, vector<16x32xf32>
    %2 = arith.truncf %0 : vector<8x32xf32> to vector<8x32xbf16>
    %c0_3 = arith.constant 0 : index
    %c0_4 = arith.constant 0 : index
    %3 = vector.load %arg4[%c0_3, %c0_4] : memref<32x32xbf16, #tpu.memory_space<vmem>>, vector<32x32xbf16>
    %cst = arith.constant dense<0.000000e+00> : vector<8x32xf32>
    %4 = tpu.matmul %2, %3, %cst {dimension_numbers = #tpu.dot_dimension_numbers<[1], [0], [0], [1], [0, 0, 1, 1], [], []>} : vector<8x32xbf16>, vector<32x32xbf16>, vector<8x32xf32> -> vector<8x32xf32>
    %c0_5 = arith.constant 0 : index
    %c0_6 = arith.constant 0 : index
    %5 = vector.load %arg5[%c0_5, %c0_6] : memref<1x32xf32, #tpu.memory_space<vmem>>, vector<1x32xf32>
    %6 = vector.broadcast %5 : vector<1x32xf32> to vector<8x32xf32>
    %7 = arith.addf %4, %6 : vector<8x32xf32>
    %8 = arith.truncf %1 : vector<16x32xf32> to vector<16x32xbf16>
    %c0_7 = arith.constant 0 : index
    %c0_8 = arith.constant 0 : index
    %9 = vector.load %arg6[%c0_7, %c0_8] : memref<32x64xbf16, #tpu.memory_space<vmem>>, vector<32x64xbf16>
    %cst_9 = arith.constant dense<0.000000e+00> : vector<16x64xf32>
    %10 = tpu.matmul %8, %9, %cst_9 {dimension_numbers = #tpu.dot_dimension_numbers<[1], [0], [0], [1], [0, 0, 1, 1], [], []>} : vector<16x32xbf16>, vector<32x64xbf16>, vector<16x64xf32> -> vector<16x64xf32>
    %c0_10 = arith.constant 0 : index
    %c0_11 = arith.constant 0 : index
    %11 = vector.load %arg7[%c0_10, %c0_11] : memref<1x64xf32, #tpu.memory_space<vmem>>, vector<1x64xf32>
    %12 = vector.broadcast %11 : vector<1x64xf32> to vector<16x64xf32>
    %13 = arith.addf %10, %12 : vector<16x64xf32>
    %14 = vector.extract_strided_slice %13 {offsets = [0, 0], sizes = [16, 32], strides = [1, 1]} : vector<16x64xf32> to vector<16x32xf32>
    %15 = vector.extract_strided_slice %13 {offsets = [0, 32], sizes = [16, 32], strides = [1, 1]} : vector<16x64xf32> to vector<16x32xf32>
    %c0_12 = arith.constant 0 : index
    %c0_13 = arith.constant 0 : index
    %c0_14 = arith.constant 0 : index
    %16 = vector.load %arg3[%c0_12, %c0_13, %c0_14] : memref<1x1x16xf32, #tpu.memory_space<vmem>>, vector<1x1x16xf32>
    %17 = vector.shape_cast %16 : vector<1x1x16xf32> to vector<1x16xf32>
    %18 = vector.extract_strided_slice %7 {offsets = [0, 0], sizes = [8, 8], strides = [1, 1]} : vector<8x32xf32> to vector<8x8xf32>
    %19 = arith.truncf %18 : vector<8x8xf32> to vector<8x8xbf16>
    %20 = vector.extract_strided_slice %14 {offsets = [0, 0], sizes = [16, 8], strides = [1, 1]} : vector<16x32xf32> to vector<16x8xf32>
    %21 = arith.truncf %20 : vector<16x8xf32> to vector<16x8xbf16>
    %22 = vector.extract_strided_slice %15 {offsets = [0, 0], sizes = [16, 8], strides = [1, 1]} : vector<16x32xf32> to vector<16x8xf32>
    %23 = arith.truncf %22 : vector<16x8xf32> to vector<16x8xbf16>
    %cst_15 = arith.constant dense<0.000000e+00> : vector<8x16xf32>
    %24 = tpu.matmul %19, %21, %cst_15 {dimension_numbers = #tpu.dot_dimension_numbers<[1], [1], [0], [0], [0, 0, 1, 0], [], []>} : vector<8x8xbf16>, vector<16x8xbf16>, vector<8x16xf32> -> vector<8x16xf32>
    %cst_16 = arith.constant 0.353553385 : f32
    %25 = vector.broadcast %cst_16 : f32 to vector<8x16xf32>
    %26 = arith.mulf %24, %25 : vector<8x16xf32>
    %27 = vector.broadcast %17 : vector<1x16xf32> to vector<8x16xf32>
    %28 = arith.addf %26, %27 : vector<8x16xf32>
    %cst_17 = arith.constant dense<0xFF800000> : vector<8xf32>
    %29 = vector.multi_reduction <maximumf>, %28, %cst_17 [1] : vector<8x16xf32> to vector<8xf32>
    %30 = vector.shape_cast %29 : vector<8xf32> to vector<8x1xf32>
    %31 = vector.broadcast %30 : vector<8x1xf32> to vector<8x16xf32>
    %32 = arith.subf %28, %31 : vector<8x16xf32>
    %33 = math.exp %32 : vector<8x16xf32>
    %cst_18 = arith.constant dense<0.000000e+00> : vector<8xf32>
    %34 = vector.multi_reduction <add>, %33, %cst_18 [1] : vector<8x16xf32> to vector<8xf32>
    %35 = vector.shape_cast %34 : vector<8xf32> to vector<8x1xf32>
    %36 = tpu.reciprocal %35 {approx = true} : vector<8x1xf32> -> vector<8x1xf32>
    %37 = vector.broadcast %36 : vector<8x1xf32> to vector<8x16xf32>
    %38 = arith.mulf %33, %37 : vector<8x16xf32>
    %39 = arith.truncf %38 : vector<8x16xf32> to vector<8x16xbf16>
    %cst_19 = arith.constant dense<0.000000e+00> : vector<8x8xf32>
    %40 = tpu.matmul %39, %23, %cst_19 {dimension_numbers = #tpu.dot_dimension_numbers<[1], [0], [0], [1], [0, 0, 1, 1], [], []>} : vector<8x16xbf16>, vector<16x8xbf16>, vector<8x8xf32> -> vector<8x8xf32>
    %c0_20 = arith.constant 0 : index
    %c0_21 = arith.constant 0 : index
    %41 = vector.load %arg13[%c0_20, %c0_21] : memref<8x32xf32, #tpu.memory_space<vmem>>, vector<8x8xf32>
    tpu.vector_store %arg13[%c0_20, %c0_21], %40 {strides = array<i32>} : memref<8x32xf32, #tpu.memory_space<vmem>>, vector<8x8xf32>,
    %42 = vector.extract_strided_slice %7 {offsets = [0, 8], sizes = [8, 8], strides = [1, 1]} : vector<8x32xf32> to vector<8x8xf32>
    %43 = arith.truncf %42 : vector<8x8xf32> to vector<8x8xbf16>
    %44 = vector.extract_strided_slice %14 {offsets = [0, 8], sizes = [16, 8], strides = [1, 1]} : vector<16x32xf32> to vector<16x8xf32>
    %45 = arith.truncf %44 : vector<16x8xf32> to vector<16x8xbf16>
    %46 = vector.extract_strided_slice %15 {offsets = [0, 8], sizes = [16, 8], strides = [1, 1]} : vector<16x32xf32> to vector<16x8xf32>
    %47 = arith.truncf %46 : vector<16x8xf32> to vector<16x8xbf16>
    %cst_22 = arith.constant dense<0.000000e+00> : vector<8x16xf32>
    %48 = tpu.matmul %43, %45, %cst_22 {dimension_numbers = #tpu.dot_dimension_numbers<[1], [1], [0], [0], [0, 0, 1, 0], [], []>} : vector<8x8xbf16>, vector<16x8xbf16>, vector<8x16xf32> -> vector<8x16xf32>
    %cst_23 = arith.constant 0.353553385 : f32
    %49 = vector.broadcast %cst_23 : f32 to vector<8x16xf32>
    %50 = arith.mulf %48, %49 : vector<8x16xf32>
    %51 = vector.broadcast %17 : vector<1x16xf32> to vector<8x16xf32>
    %52 = arith.addf %50, %51 : vector<8x16xf32>
    %cst_24 = arith.constant dense<0xFF800000> : vector<8xf32>
    %53 = vector.multi_reduction <maximumf>, %52, %cst_24 [1] : vector<8x16xf32> to vector<8xf32>
    %54 = vector.shape_cast %53 : vector<8xf32> to vector<8x1xf32>
    %55 = vector.broadcast %54 : vector<8x1xf32> to vector<8x16xf32>
    %56 = arith.subf %52, %55 : vector<8x16xf32>
    %57 = math.exp %56 : vector<8x16xf32>
    %cst_25 = arith.constant dense<0.000000e+00> : vector<8xf32>
    %58 = vector.multi_reduction <add>, %57, %cst_25 [1] : vector<8x16xf32> to vector<8xf32>
    %59 = vector.shape_cast %58 : vector<8xf32> to vector<8x1xf32>
    %60 = tpu.reciprocal %59 {approx = true} : vector<8x1xf32> -> vector<8x1xf32>
    %61 = vector.broadcast %60 : vector<8x1xf32> to vector<8x16xf32>
    %62 = arith.mulf %57, %61 : vector<8x16xf32>
    %63 = arith.truncf %62 : vector<8x16xf32> to vector<8x16xbf16>
    %cst_26 = arith.constant dense<0.000000e+00> : vector<8x8xf32>
    %64 = tpu.matmul %63, %47, %cst_26 {dimension_numbers = #tpu.dot_dimension_numbers<[1], [0], [0], [1], [0, 0, 1, 1], [], []>} : vector<8x16xbf16>, vector<16x8xbf16>, vector<8x8xf32> -> vector<8x8xf32>
    %c0_27 = arith.constant 0 : index
    %c8 = arith.constant 8 : index
    %65 = vector.load %arg13[%c0_27, %c8] : memref<8x32xf32, #tpu.memory_space<vmem>>, vector<8x8xf32>
    tpu.vector_store %arg13[%c0_27, %c8], %64 {strides = array<i32>} : memref<8x32xf32, #tpu.memory_space<vmem>>, vector<8x8xf32>,
    %66 = vector.extract_strided_slice %7 {offsets = [0, 16], sizes = [8, 8], strides = [1, 1]} : vector<8x32xf32> to vector<8x8xf32>
    %67 = arith.truncf %66 : vector<8x8xf32> to vector<8x8xbf16>
    %68 = vector.extract_strided_slice %14 {offsets = [0, 16], sizes = [16, 8], strides = [1, 1]} : vector<16x32xf32> to vector<16x8xf32>
    %69 = arith.truncf %68 : vector<16x8xf32> to vector<16x8xbf16>
    %70 = vector.extract_strided_slice %15 {offsets = [0, 16], sizes = [16, 8], strides = [1, 1]} : vector<16x32xf32> to vector<16x8xf32>
    %71 = arith.truncf %70 : vector<16x8xf32> to vector<16x8xbf16>
    %cst_28 = arith.constant dense<0.000000e+00> : vector<8x16xf32>
    %72 = tpu.matmul %67, %69, %cst_28 {dimension_numbers = #tpu.dot_dimension_numbers<[1], [1], [0], [0], [0, 0, 1, 0], [], []>} : vector<8x8xbf16>, vector<16x8xbf16>, vector<8x16xf32> -> vector<8x16xf32>
    %cst_29 = arith.constant 0.353553385 : f32
    %73 = vector.broadcast %cst_29 : f32 to vector<8x16xf32>
    %74 = arith.mulf %72, %73 : vector<8x16xf32>
    %75 = vector.broadcast %17 : vector<1x16xf32> to vector<8x16xf32>
    %76 = arith.addf %74, %75 : vector<8x16xf32>
    %cst_30 = arith.constant dense<0xFF800000> : vector<8xf32>
    %77 = vector.multi_reduction <maximumf>, %76, %cst_30 [1] : vector<8x16xf32> to vector<8xf32>
    %78 = vector.shape_cast %77 : vector<8xf32> to vector<8x1xf32>
    %79 = vector.broadcast %78 : vector<8x1xf32> to vector<8x16xf32>
    %80 = arith.subf %76, %79 : vector<8x16xf32>
    %81 = math.exp %80 : vector<8x16xf32>
    %cst_31 = arith.constant dense<0.000000e+00> : vector<8xf32>
    %82 = vector.multi_reduction <add>, %81, %cst_31 [1] : vector<8x16xf32> to vector<8xf32>
    %83 = vector.shape_cast %82 : vector<8xf32> to vector<8x1xf32>
    %84 = tpu.reciprocal %83 {approx = true} : vector<8x1xf32> -> vector<8x1xf32>
    %85 = vector.broadcast %84 : vector<8x1xf32> to vector<8x16xf32>
    %86 = arith.mulf %81, %85 : vector<8x16xf32>
    %87 = arith.truncf %86 : vector<8x16xf32> to vector<8x16xbf16>
    %cst_32 = arith.constant dense<0.000000e+00> : vector<8x8xf32>
    %88 = tpu.matmul %87, %71, %cst_32 {dimension_numbers = #tpu.dot_dimension_numbers<[1], [0], [0], [1], [0, 0, 1, 1], [], []>} : vector<8x16xbf16>, vector<16x8xbf16>, vector<8x8xf32> -> vector<8x8xf32>
    %c0_33 = arith.constant 0 : index
    %c16 = arith.constant 16 : index
    %89 = vector.load %arg13[%c0_33, %c16] : memref<8x32xf32, #tpu.memory_space<vmem>>, vector<8x8xf32>
    tpu.vector_store %arg13[%c0_33, %c16], %88 {strides = array<i32>} : memref<8x32xf32, #tpu.memory_space<vmem>>, vector<8x8xf32>,
    %90 = vector.extract_strided_slice %7 {offsets = [0, 24], sizes = [8, 8], strides = [1, 1]} : vector<8x32xf32> to vector<8x8xf32>
    %91 = arith.truncf %90 : vector<8x8xf32> to vector<8x8xbf16>
    %92 = vector.extract_strided_slice %14 {offsets = [0, 24], sizes = [16, 8], strides = [1, 1]} : vector<16x32xf32> to vector<16x8xf32>
    %93 = arith.truncf %92 : vector<16x8xf32> to vector<16x8xbf16>
    %94 = vector.extract_strided_slice %15 {offsets = [0, 24], sizes = [16, 8], strides = [1, 1]} : vector<16x32xf32> to vector<16x8xf32>
    %95 = arith.truncf %94 : vector<16x8xf32> to vector<16x8xbf16>
    %cst_34 = arith.constant dense<0.000000e+00> : vector<8x16xf32>
    %96 = tpu.matmul %91, %93, %cst_34 {dimension_numbers = #tpu.dot_dimension_numbers<[1], [1], [0], [0], [0, 0, 1, 0], [], []>} : vector<8x8xbf16>, vector<16x8xbf16>, vector<8x16xf32> -> vector<8x16xf32>
    %cst_35 = arith.constant 0.353553385 : f32
    %97 = vector.broadcast %cst_35 : f32 to vector<8x16xf32>
    %98 = arith.mulf %96, %97 : vector<8x16xf32>
    %99 = vector.broadcast %17 : vector<1x16xf32> to vector<8x16xf32>
    %100 = arith.addf %98, %99 : vector<8x16xf32>
    %cst_36 = arith.constant dense<0xFF800000> : vector<8xf32>
    %101 = vector.multi_reduction <maximumf>, %100, %cst_36 [1] : vector<8x16xf32> to vector<8xf32>
    %102 = vector.shape_cast %101 : vector<8xf32> to vector<8x1xf32>
    %103 = vector.broadcast %102 : vector<8x1xf32> to vector<8x16xf32>
    %104 = arith.subf %100, %103 : vector<8x16xf32>
    %105 = math.exp %104 : vector<8x16xf32>
    %cst_37 = arith.constant dense<0.000000e+00> : vector<8xf32>
    %106 = vector.multi_reduction <add>, %105, %cst_37 [1] : vector<8x16xf32> to vector<8xf32>
    %107 = vector.shape_cast %106 : vector<8xf32> to vector<8x1xf32>
    %108 = tpu.reciprocal %107 {approx = true} : vector<8x1xf32> -> vector<8x1xf32>
    %109 = vector.broadcast %108 : vector<8x1xf32> to vector<8x16xf32>
    %110 = arith.mulf %105, %109 : vector<8x16xf32>
    %111 = arith.truncf %110 : vector<8x16xf32> to vector<8x16xbf16>
    %cst_38 = arith.constant dense<0.000000e+00> : vector<8x8xf32>
    %112 = tpu.matmul %111, %95, %cst_38 {dimension_numbers = #tpu.dot_dimension_numbers<[1], [0], [0], [1], [0, 0, 1, 1], [], []>} : vector<8x16xbf16>, vector<16x8xbf16>, vector<8x8xf32> -> vector<8x8xf32>
    %c0_39 = arith.constant 0 : index
    %c24 = arith.constant 24 : index
    %113 = vector.load %arg13[%c0_39, %c24] : memref<8x32xf32, #tpu.memory_space<vmem>>, vector<8x8xf32>
    tpu.vector_store %arg13[%c0_39, %c24], %112 {strides = array<i32>} : memref<8x32xf32, #tpu.memory_space<vmem>>, vector<8x8xf32>,
    %c0_40 = arith.constant 0 : index
    %c0_41 = arith.constant 0 : index
    %114 = vector.load %arg13[%c0_40, %c0_41] : memref<8x32xf32, #tpu.memory_space<vmem>>, vector<8x32xf32>
    %115 = arith.truncf %114 : vector<8x32xf32> to vector<8x32xbf16>
    %c0_42 = arith.constant 0 : index
    %c0_43 = arith.constant 0 : index
    %116 = vector.load %arg8[%c0_42, %c0_43] : memref<32x32xbf16, #tpu.memory_space<vmem>>, vector<32x32xbf16>
    %cst_44 = arith.constant dense<0.000000e+00> : vector<8x32xf32>
    %117 = tpu.matmul %115, %116, %cst_44 {dimension_numbers = #tpu.dot_dimension_numbers<[1], [0], [0], [1], [0, 0, 1, 1], [], []>} : vector<8x32xbf16>, vector<32x32xbf16>, vector<8x32xf32> -> vector<8x32xf32>
    %c0_45 = arith.constant 0 : index
    %c0_46 = arith.constant 0 : index
    %118 = vector.load %arg9[%c0_45, %c0_46] : memref<1x32xf32, #tpu.memory_space<vmem>>, vector<1x32xf32>
    %119 = vector.broadcast %118 : vector<1x32xf32> to vector<8x32xf32>
    %120 = arith.addf %117, %119 : vector<8x32xf32>
    %c0_47 = arith.constant 0 : index
    %c0_48 = arith.constant 0 : index
    %121 = vector.load %arg10[%c0_47, %c0_48] : memref<1x32xf32, #tpu.memory_space<vmem>>, vector<1x32xf32>
    %c0_49 = arith.constant 0 : index
    %c0_50 = arith.constant 0 : index
    %122 = vector.load %arg11[%c0_49, %c0_50] : memref<1x32xf32, #tpu.memory_space<vmem>>, vector<1x32xf32>
    %cst_51 = arith.constant dense<0.000000e+00> : vector<8xf32>
    %123 = vector.multi_reduction <add>, %120, %cst_51 [1] : vector<8x32xf32> to vector<8xf32>
    %124 = vector.shape_cast %123 : vector<8xf32> to vector<8x1xf32>
    %cst_52 = arith.constant 3.200000e+01 : f32
    %125 = vector.broadcast %cst_52 : f32 to vector<8x1xf32>
    %126 = arith.divf %124, %125 : vector<8x1xf32>
    %127 = vector.broadcast %126 : vector<8x1xf32> to vector<8x32xf32>
    %128 = arith.subf %120, %127 : vector<8x32xf32>
    %129 = arith.mulf %128, %128 : vector<8x32xf32>
    %cst_53 = arith.constant dense<0.000000e+00> : vector<8xf32>
    %130 = vector.multi_reduction <add>, %129, %cst_53 [1] : vector<8x32xf32> to vector<8xf32>
    %131 = vector.shape_cast %130 : vector<8xf32> to vector<8x1xf32>
    %cst_54 = arith.constant 3.100000e+01 : f32
    %132 = vector.broadcast %cst_54 : f32 to vector<8x1xf32>
    %133 = arith.divf %131, %132 : vector<8x1xf32>
    %134 = math.sqrt %133 : vector<8x1xf32>
    %cst_55 = arith.constant 9.99999997E-7 : f32
    %135 = vector.broadcast %cst_55 : f32 to vector<8x1xf32>
    %136 = arith.addf %134, %135 : vector<8x1xf32>
    %137 = tpu.reciprocal %136 {approx = true} : vector<8x1xf32> -> vector<8x1xf32>
    %138 = vector.broadcast %137 : vector<8x1xf32> to vector<8x32xf32>
    %139 = arith.mulf %128, %138 : vector<8x32xf32>
    %140 = vector.broadcast %121 : vector<1x32xf32> to vector<8x32xf32>
    %141 = arith.mulf %140, %139 : vector<8x32xf32>
    %142 = vector.broadcast %122 : vector<1x32xf32> to vector<8x32xf32>
    %143 = arith.addf %141, %142 : vector<8x32xf32>
    %c0_56 = arith.constant 0 : index
    %c0_57 = arith.constant 0 : index
    %144 = vector.load %arg12[%c0_56, %c0_57] : memref<8x32xf32, #tpu.memory_space<vmem>>, vector<8x32xf32>
    tpu.vector_store %arg12[%c0_56, %c0_57], %143 {strides = array<i32>} : memref<8x32xf32, #tpu.memory_space<vmem>>, vector<8x32xf32>,
    return
  }
  func.func @transform_0(%arg0: i32) -> (i32, i32) {
    %c0_i32 = arith.constant 0 : i32
    %c0_i32_0 = arith.constant 0 : i32
    return %arg0, %c0_i32 : i32, i32
  }
  func.func @transform_1(%arg0: i32) -> (i32, i32) {
    %c0_i32 = arith.constant 0 : i32
    %c0_i32_0 = arith.constant 0 : i32
    return %arg0, %c0_i32 : i32, i32
  }
  func.func @transform_2(%arg0: i32) -> (i32, i32, i32) {
    %c0_i32 = arith.constant 0 : i32
    %c0_i32_0 = arith.constant 0 : i32
    %c0_i32_1 = arith.constant 0 : i32
    return %arg0, %c0_i32, %c0_i32_0 : i32, i32, i32
  }
  func.func @transform_3(%arg0: i32) -> (i32, i32) {
    %c0_i32 = arith.constant 0 : i32
    %c0_i32_0 = arith.constant 0 : i32
    %c0_i32_1 = arith.constant 0 : i32
    return %c0_i32, %c0_i32_0 : i32, i32
  }
  func.func @transform_4(%arg0: i32) -> (i32, i32) {
    %c0_i32 = arith.constant 0 : i32
    %c0_i32_0 = arith.constant 0 : i32
    %c0_i32_1 = arith.constant 0 : i32
    return %c0_i32, %c0_i32_0 : i32, i32
  }
  func.func @transform_5(%arg0: i32) -> (i32, i32) {
    %c0_i32 = arith.constant 0 : i32
    %c0_i32_0 = arith.constant 0 : i32
    %c0_i32_1 = arith.constant 0 : i32
    return %c0_i32, %c0_i32_0 : i32, i32
  }
  func.func @transform_6(%arg0: i32) -> (i32, i32) {
    %c0_i32 = arith.constant 0 : i32
    %c0_i32_0 = arith.constant 0 : i32
    %c0_i32_1 = arith.constant 0 : i32
    return %c0_i32, %c0_i32_0 : i32, i32
  }
  func.func @transform_7(%arg0: i32) -> (i32, i32) {
    %c0_i32 = arith.constant 0 : i32
    %c0_i32_0 = arith.constant 0 : i32
    %c0_i32_1 = arith.constant 0 : i32
    return %c0_i32, %c0_i32_0 : i32, i32
  }
  func.func @transform_8(%arg0: i32) -> (i32, i32) {
    %c0_i32 = arith.constant 0 : i32
    %c0_i32_0 = arith.constant 0 : i32
    %c0_i32_1 = arith.constant 0 : i32
    return %c0_i32, %c0_i32_0 : i32, i32
  }
  func.func @transform_9(%arg0: i32) -> (i32, i32) {
    %c0_i32 = arith.constant 0 : i32
    %c0_i32_0 = arith.constant 0 : i32
    %c0_i32_1 = arith.constant 0 : i32
    return %c0_i32, %c0_i32_0 : i32, i32
  }
  func.func @transform_10(%arg0: i32) -> (i32, i32) {
    %c0_i32 = arith.constant 0 : i32
    %c0_i32_0 = arith.constant 0 : i32
    %c0_i32_1 = arith.constant 0 : i32
    return %c0_i32, %c0_i32_0 : i32, i32
  }
  func.func @transform_11(%arg0: i32) -> (i32, i32) {
    %c0_i32 = arith.constant 0 : i32
    %c0_i32_0 = arith.constant 0 : i32
    return %arg0, %c0_i32 : i32, i32
  }
}

</mosaic_0001>

<llo_original>
// kernel: forward.11
$region0: #{forward.11}
  #allocation0 [shape = 'u32[]', space=smem, size = 0x4, offset = 0x4, fixed_abs, tag = 'smem constant byte address 0x4 - core index']
  #allocation1 [shape = 'u32[144,128]{1,0:T(1,128)}', space=vmem, size = 0x12000, scoped, tag = 'internal scratch']
  %s0 = inlined_call_operand.vmem [shape: f32[16,32], index: 0, kind: input, shape index: {}]
  %s1 = inlined_call_operand.vmem [shape: bf16[32,64], index: 1, kind: input, shape index: {}]
  %s2 = inlined_call_operand.vmem [shape: f32[1,64], index: 2, kind: input, shape index: {}]
  %s3 = inlined_call_operand.vmem [shape: bf16[64,32], index: 3, kind: input, shape index: {}]
  %s4 = inlined_call_operand.vmem [shape: f32[1,32], index: 4, kind: input, shape index: {}]
  %s5 = inlined_call_operand.vmem [shape: f32[1,32], index: 5, kind: input, shape index: {}]
  %s6 = inlined_call_operand.vmem [shape: f32[1,32], index: 6, kind: input, shape index: {}]
  %s7 = inlined_call_operand.vmem [shape: f32[16,32], index: 7, kind: output, shape index: {}]
  %s8 = sld [smem:[#allocation0]]
  $region61: #{forward.11} parent=0
    _
  %s10 = ssub.s32 1, %s8
  %s11 = scalar_select 0, %s10, %s8
  loop: start=0, step=1, limit=4
  $region2: #{forward.11} parent=0 // loop_pre_header
    _
  $region3: #{forward.11} parent=0 // loop_header
    %s13 = sphi 0, %s17
    %p14 = scmp.ge.s32.totalorder %s13, 4
    %s23 = sphi 0, %s25
    %s26 = sphi 0, %s23
    %s27 = sphi 0, %s26
    %s43 = sphi 0, %s27
    %s47 = sphi 0, %s47
    %s49 = sphi 0, %s47
    %s50 = sphi 0, %s49
    %s64 = sphi 0, %s50
    %s68 = sphi 0, %s68
    %s70 = sphi 0, %s68
    %s71 = sphi 0, %s70
    %s85 = sphi 0, %s71
    %s89 = sphi 0, %s89
    %s91 = sphi 0, %s89
    %s92 = sphi 0, %s91
    %s106 = sphi 0, %s92
    %s110 = sphi 0, %s110
    %s112 = sphi 0, %s110
    %s113 = sphi 0, %s112
    %s127 = sphi 0, %s113
    %s131 = sphi 0, %s131
    %s133 = sphi 0, %s131
    %s134 = sphi 0, %s133
    %s148 = sphi 0, %s134
    %s152 = sphi 0, %s152
    %s154 = sphi 0, %s152
    %s155 = sphi 0, %s154
    %s169 = sphi 0, %s155
    %s175 = sphi 0, %s177
    %s178 = sphi 0, %s175
    %s179 = sphi 0, %s178
    %s195 = sphi 0, %s179
  $region4: #{forward.11} parent=0 // loop_header_branch
    %16 = sbr.rel (%p14) target = $region8
  $region5: #{forward.11} parent=0 // loop_body
    %s18 = ssub.s32 %s13, 1
    %s19 = ssub.s32 %s13, 2
    %s20 = sadd.s32 %s13, 1
    %s21 = ssub.s32 %s13, %s20
    %p22 = scmp.eq.s32.totalorder %s21, 0
    %s24 = sadd.s32 %s23, 1
    %s25 = scalar_select %p22, %s23, %s24
    %p28 = pneg %p22
    %p29 = scmp.eq.s32.totalorder %s13, 1
    %p30 = por %p28, %p29
    %p31 = scmp.ne.s32.totalorder %s23, %s26
    %p32 = scmp.eq.s32.totalorder %s13, 0
    %p33 = por %p31, %p32
    %p34 = scmp.ne.s32.totalorder %s23, %s26
    %p35 = scmp.eq.s32.totalorder %s18, 1
    %p36 = por %p34, %p35
    %p37 = scmp.ne.s32.totalorder %s26, %s27
    %p38 = scmp.eq.s32.totalorder %s18, 0
    %p39 = por %p37, %p38
    %p40 = scmp.ne.s32.totalorder %s26, %s27
    %p41 = scmp.eq.s32.totalorder %s19, 1
    %p42 = por %p40, %p41
    %p44 = scmp.ne.s32.totalorder %s27, %s43
    %p45 = scmp.eq.s32.totalorder %s19, 0
    %p46 = por %p44, %p45
    %s48 = sadd.s32 %s47, 1
    %p51 = scmp.eq.s32.totalorder %s13, 1
    %p52 = scmp.ne.s32.totalorder %s47, %s49
    %p53 = scmp.eq.s32.totalorder %s13, 0
    %p54 = por %p52, %p53
    %p55 = scmp.ne.s32.totalorder %s47, %s49
    %p56 = scmp.eq.s32.totalorder %s18, 1
    %p57 = por %p55, %p56
    %p58 = scmp.ne.s32.totalorder %s49, %s50
    %p59 = scmp.eq.s32.totalorder %s18, 0
    %p60 = por %p58, %p59
    %p61 = scmp.ne.s32.totalorder %s49, %s50
    %p62 = scmp.eq.s32.totalorder %s19, 1
    %p63 = por %p61, %p62
    %p65 = scmp.ne.s32.totalorder %s50, %s64
    %p66 = scmp.eq.s32.totalorder %s19, 0
    %p67 = por %p65, %p66
    %s69 = sadd.s32 %s68, 1
    %p72 = scmp.eq.s32.totalorder %s13, 1
    %p73 = scmp.ne.s32.totalorder %s68, %s70
    %p74 = scmp.eq.s32.totalorder %s13, 0
    %p75 = por %p73, %p74
    %p76 = scmp.ne.s32.totalorder %s68, %s70
    %p77 = scmp.eq.s32.totalorder %s18, 1
    %p78 = por %p76, %p77
    %p79 = scmp.ne.s32.totalorder %s70, %s71
    %p80 = scmp.eq.s32.totalorder %s18, 0
    %p81 = por %p79, %p80
    %p82 = scmp.ne.s32.totalorder %s70, %s71
    %p83 = scmp.eq.s32.totalorder %s19, 1
    %p84 = por %p82, %p83
    %p86 = scmp.ne.s32.totalorder %s71, %s85
    %p87 = scmp.eq.s32.totalorder %s19, 0
    %p88 = por %p86, %p87
    %s90 = sadd.s32 %s89, 1
    %p93 = scmp.eq.s32.totalorder %s13, 1
    %p94 = scmp.ne.s32.totalorder %s89, %s91
    %p95 = scmp.eq.s32.totalorder %s13, 0
    %p96 = por %p94, %p95
    %p97 = scmp.ne.s32.totalorder %s89, %s91
    %p98 = scmp.eq.s32.totalorder %s18, 1
    %p99 = por %p97, %p98
    %p100 = scmp.ne.s32.totalorder %s91, %s92
    %p101 = scmp.eq.s32.totalorder %s18, 0
    %p102 = por %p100, %p101
    %p103 = scmp.ne.s32.totalorder %s91, %s92
    %p104 = scmp.eq.s32.totalorder %s19, 1
    %p105 = por %p103, %p104
    %p107 = scmp.ne.s32.totalorder %s92, %s106
    %p108 = scmp.eq.s32.totalorder %s19, 0
    %p109 = por %p107, %p108
    %s111 = sadd.s32 %s110, 1
    %p114 = scmp.eq.s32.totalorder %s13, 1
    %p115 = scmp.ne.s32.totalorder %s110, %s112
    %p116 = scmp.eq.s32.totalorder %s13, 0
    %p117 = por %p115, %p116
    %p118 = scmp.ne.s32.totalorder %s110, %s112
    %p119 = scmp.eq.s32.totalorder %s18, 1
    %p120 = por %p118, %p119
    %p121 = scmp.ne.s32.totalorder %s112, %s113
    %p122 = scmp.eq.s32.totalorder %s18, 0
    %p123 = por %p121, %p122
    %p124 = scmp.ne.s32.totalorder %s112, %s113
    %p125 = scmp.eq.s32.totalorder %s19, 1
    %p126 = por %p124, %p125
    %p128 = scmp.ne.s32.totalorder %s113, %s127
    %p129 = scmp.eq.s32.totalorder %s19, 0
    %p130 = por %p128, %p129
    %s132 = sadd.s32 %s131, 1
    %p135 = scmp.eq.s32.totalorder %s13, 1
    %p136 = scmp.ne.s32.totalorder %s131, %s133
    %p137 = scmp.eq.s32.totalorder %s13, 0
    %p138 = por %p136, %p137
    %p139 = scmp.ne.s32.totalorder %s131, %s133
    %p140 = scmp.eq.s32.totalorder %s18, 1
    %p141 = por %p139, %p140
    %p142 = scmp.ne.s32.totalorder %s133, %s134
    %p143 = scmp.eq.s32.totalorder %s18, 0
    %p144 = por %p142, %p143
    %p145 = scmp.ne.s32.totalorder %s133, %s134
    %p146 = scmp.eq.s32.totalorder %s19, 1
    %p147 = por %p145, %p146
    %p149 = scmp.ne.s32.totalorder %s134, %s148
    %p150 = scmp.eq.s32.totalorder %s19, 0
    %p151 = por %p149, %p150
    %s153 = sadd.s32 %s152, 1
    %p156 = scmp.eq.s32.totalorder %s13, 1
    %p157 = scmp.ne.s32.totalorder %s152, %s154
    %p158 = scmp.eq.s32.totalorder %s13, 0
    %p159 = por %p157, %p158
    %p160 = scmp.ne.s32.totalorder %s152, %s154
    %p161 = scmp.eq.s32.totalorder %s18, 1
    %p162 = por %p160, %p161
    %p163 = scmp.ne.s32.totalorder %s154, %s155
    %p164 = scmp.eq.s32.totalorder %s18, 0
    %p165 = por %p163, %p164
    %p166 = scmp.ne.s32.totalorder %s154, %s155
    %p167 = scmp.eq.s32.totalorder %s19, 1
    %p168 = por %p166, %p167
    %p170 = scmp.ne.s32.totalorder %s155, %s169
    %p171 = scmp.eq.s32.totalorder %s19, 0
    %p172 = por %p170, %p171
    %s173 = ssub.s32 %s13, %s20
    %p174 = scmp.eq.s32.totalorder %s173, 0
    %s176 = sadd.s32 %s175, 1
    %s177 = scalar_select %p174, %s175, %s176
    %p180 = pneg %p174
    %p181 = scmp.eq.s32.totalorder %s13, 1
    %p182 = por %p180, %p181
    %p183 = scmp.ne.s32.totalorder %s175, %s178
    %p184 = scmp.eq.s32.totalorder %s13, 0
    %p185 = por %p183, %p184
    %p186 = scmp.ne.s32.totalorder %s175, %s178
    %p187 = scmp.eq.s32.totalorder %s18, 1
    %p188 = por %p186, %p187
    %p189 = scmp.ne.s32.totalorder %s178, %s179
    %p190 = scmp.eq.s32.totalorder %s18, 0
    %p191 = por %p189, %p190
    %p192 = scmp.ne.s32.totalorder %s178, %s179
    %p193 = scmp.eq.s32.totalorder %s19, 1
    %p194 = por %p192, %p193
    %p196 = scmp.ne.s32.totalorder %s179, %s195
    %p197 = scmp.eq.s32.totalorder %s19, 0
    %p198 = por %p196, %p197
    %p199 = scmp.le.s32.totalorder 1, %s13
    %p200 = scmp.lt.s32.totalorder %s13, 3
    %p201 = pnand %p199, %p200
    %p202 = pneg %p201
    // Predicated region
    $region9: #{forward.11} parent=5 // pred_check
      _
    $region10: #{forward.11} parent=5 // pred_check_branch
      %204 = sbr.rel (%p201) target = $region12
    $region11: #{forward.11} parent=5 // pred_region
      %s205 = ssub.s32 %s13, 1
      // Predicated region
      $region13: #{forward.11} parent=11 // pred_check
        %p206 = pneg %p60
      $region14: #{forward.11} parent=11 // pred_check_branch
        %208 = sbr.rel (%p206) target = $region16
      $region15: #{forward.11} parent=11 // pred_region
        _
      $region16: #{forward.11} parent=11 // pred_fallthru
        _
      // Predicated region
      $region17: #{forward.11} parent=11 // pred_check
        %p209 = pneg %p81
      $region18: #{forward.11} parent=11 // pred_check_branch
        %211 = sbr.rel (%p209) target = $region20
      $region19: #{forward.11} parent=11 // pred_region
        _
      $region20: #{forward.11} parent=11 // pred_fallthru
        _
      // Predicated region
      $region21: #{forward.11} parent=11 // pred_check
        %p212 = pneg %p102
      $region22: #{forward.11} parent=11 // pred_check_branch
        %214 = sbr.rel (%p212) target = $region24
      $region23: #{forward.11} parent=11 // pred_region
        _
      $region24: #{forward.11} parent=11 // pred_fallthru
        _
      // Predicated region
      $region25: #{forward.11} parent=11 // pred_check
        %p215 = pneg %p123
      $region26: #{forward.11} parent=11 // pred_check_branch
        %217 = sbr.rel (%p215) target = $region28
      $region27: #{forward.11} parent=11 // pred_region
        _
      $region28: #{forward.11} parent=11 // pred_fallthru
        _
      // Predicated region
      $region29: #{forward.11} parent=11 // pred_check
        %p218 = pneg %p144
      $region30: #{forward.11} parent=11 // pred_check_branch
        %220 = sbr.rel (%p218) target = $region32
      $region31: #{forward.11} parent=11 // pred_region
        _
      $region32: #{forward.11} parent=11 // pred_fallthru
        _
      // Predicated region
      $region33: #{forward.11} parent=11 // pred_check
        %p221 = pneg %p165
      $region34: #{forward.11} parent=11 // pred_check_branch
        %223 = sbr.rel (%p221) target = $region36
      $region35: #{forward.11} parent=11 // pred_region
        _
      $region36: #{forward.11} parent=11 // pred_fallthru
        _
    $region12: #{forward.11} parent=5 // pred_fallthru
      _
    %p224 = scmp.lt.s32.totalorder %s13, 2
    // Predicated region
    $region37: #{forward.11} parent=5 // pred_check
      %p225 = pneg %p224
    $region38: #{forward.11} parent=5 // pred_check_branch
      %227 = sbr.rel (%p225) target = $region40
    $region39: #{forward.11} parent=5 // pred_region
      // Predicated region
      $region41: #{forward.11} parent=39 // pred_check
        %p228 = pneg %p33
      $region42: #{forward.11} parent=39 // pred_check_branch
        %230 = sbr.rel (%p228) target = $region44
      $region43: #{forward.11} parent=39 // pred_region
        %p231 = scmp.lt.s32.totalorder %s13, 1
        %s232 = scalar_select %p231, %s13, 1
        %s233 = smul.addr %s232, 8
        %s234 = scalar_lea.vmem %s0, %s233
      $region44: #{forward.11} parent=39 // pred_fallthru
        _
    $region40: #{forward.11} parent=5 // pred_fallthru
      _
    %p235 = scmp.le.s32.totalorder 1, %s13
    %p236 = scmp.lt.s32.totalorder %s13, 3
    %p237 = pnand %p235, %p236
    %p238 = pneg %p237
    // Predicated region
    $region45: #{forward.11} parent=5 // pred_check
      _
    $region46: #{forward.11} parent=5 // pred_check_branch
      %240 = sbr.rel (%p237) target = $region48
    $region47: #{forward.11} parent=5 // pred_region
      %s241 = ssub.s32 %s13, 1
      %p242 = scmp.lt.s32.totalorder %s18, 1
      %s243 = scalar_select %p242, %s18, 1
      %s244 = smul.addr %s243, 8
      %s245 = scalar_lea.vmem %s0, %s244
      %p246 = pneg %p39
      %p247 = pneg %p36
      %p248 = pneg %p60
      %p249 = pneg %p57
      %p250 = pneg %p81
      %p251 = pneg %p78
      %p252 = pneg %p102
      %p253 = pneg %p99
      %p254 = pneg %p123
      %p255 = pneg %p120
      %p256 = pneg %p144
      %p257 = pneg %p141
      %p258 = pneg %p165
      %p259 = pneg %p162
      %p260 = pneg %p191
      %p261 = pneg %p188
      %p262 = scmp.lt.s32.totalorder %s18, 1
      %s263 = scalar_select %p262, %s18, 1
      %s264 = smul.addr %s263, 8
      %s265 = scalar_lea.vmem %s7, %s264
      %p266 = scmp.lt.s32.totalorder %s18, 1
      %s267 = scalar_select %p266, %s18, 1
      %s268 = smul.addr %s267, 8
      %s269 = scalar_lea.vmem %s0, %s268
      %p270 = scmp.lt.s32.totalorder %s18, 1
      %s271 = scalar_select %p270, %s18, 1
      %s272 = smul.addr %s271, 8
      %s273 = scalar_lea.vmem %s7, %s272
      %v275 = vld [vmem:[%s269] sm:$0xff]
      %v276 = vpack.c.bf16 %v275, %v275
      %v277 = vld [vmem:[%s1] sm:$0xf]
      %v278 = vld [vmem:[%s1 + $0x4] sm:$0xf]
      %v279 = vld [vmem:[%s1 + $0x8] sm:$0xf]
      %v280 = vld [vmem:[%s1 + $0xc] sm:$0xf]
      %v281 = vld [vmem:[%s2] sm:$0x1]
      %v283 = vlaneseq
      %v284 = vshrl.u32 %v283, 7
      %v285 = vsub.s32 0, %v284
      %v286 = vrot.slane %v281, %v285
      %v292 = vunpack.c.l.b16 %v277
      %v293 = vunpack.c.l.b16 %v278
      %v294 = vunpack.c.l.b16 %v279
      %v295 = vunpack.c.l.b16 %v280
      %v296 = vpack.c.b16 %v293, %v292
      %v297 = vpack.c.b16 %v295, %v294
      %vm300 = vcmask 261120
      %v302 = vsel %vm300, %v276, 0
      %304 = vmatprep.subr.bf16.mxu0 0
      %305 = vmatpush1.bf16.msra.mxu0 %v296
      %306 = vmatprep.subr.bf16.mxu0 0
      %307 = vmatpush1.bf16.msra.mxu0 %v297
      %308 = vmatprep.subr.bf16.mxu0 0
      %309 = vmatpush1.bf16.msra.mxu0 0
      %310 = vmatprep.subr.bf16.mxu0 0
      %311 = vmatpush1.bf16.msra.mxu0 0
      %312 = vmatprep.subr.bf16.mxu0 0
      %313 = vmatpush1.bf16.msra.mxu0 0
      %314 = vmatprep.subr.bf16.mxu0 0
      %315 = vmatpush1.bf16.msra.mxu0 0
      %316 = vmatprep.subr.bf16.mxu0 0
      %317 = vmatpush1.bf16.msra.mxu0 0
      %318 = vmatprep.subr.bf16.mxu0 0
      %319 = vmatpush1.bf16.msra.mxu0 0
      %320 = vmatprep.subr.bf16.mxu0 0
      %321 = vmatpush1.bf16.msra.mxu0 0
      %322 = vmatprep.subr.bf16.mxu0 0
      %323 = vmatpush1.bf16.msra.mxu0 0
      %324 = vmatprep.subr.bf16.mxu0 0
      %325 = vmatpush1.bf16.msra.mxu0 0
      %326 = vmatprep.subr.bf16.mxu0 0
      %327 = vmatpush1.bf16.msra.mxu0 0
      %328 = vmatprep.subr.bf16.mxu0 0
      %329 = vmatpush1.bf16.msra.mxu0 0
      %330 = vmatprep.subr.bf16.mxu0 0
      %331 = vmatpush1.bf16.msra.mxu0 0
      %332 = vmatprep.subr.bf16.mxu0 0
      %333 = vmatpush1.bf16.msra.mxu0 0
      %334 = vmatprep.subr.bf16.mxu0 0
      %335 = vmatpush1.bf16.msra.mxu0 0
      %336 = vmatprep.mubr.bf16.mxu0 0
      %337 = vmatmul.mubr.bf16.gmra.mrb[0].mxu0 %v302
      %v338 = vpop.f32.mrb[0].mxu0
      %v339 = vadd.f32 %v286, %v338
      %v340 = vpop.f32.mrb[0].mxu0
      %v341 = vpop.f32.mrb[0].mxu0
      %v342 = vpop.f32.mrb[0].mxu0
      %343 = vdwg.mxu0
      %v344 = vmax.f32 %v339, 0.0
      %v345 = vpack.c.bf16 %v344, %v344
      %v346 = vld [vmem:[%s3] sm:$0xf]
      %v347 = vld [vmem:[%s3 + $0x4] sm:$0xf]
      %v348 = vld [vmem:[%s3 + $0x8] sm:$0xf]
      %v349 = vld [vmem:[%s3 + $0xc] sm:$0xf]
      %v350 = vld [vmem:[%s3 + $0x10] sm:$0xf]
      %v351 = vld [vmem:[%s3 + $0x14] sm:$0xf]
      %v352 = vld [vmem:[%s3 + $0x18] sm:$0xf]
      %v353 = vld [vmem:[%s3 + $0x1c] sm:$0xf]
      %v354 = vld [vmem:[%s4] sm:$0x1]
      %v356 = vlaneseq
      %v357 = vshrl.u32 %v356, 7
      %v358 = vsub.s32 0, %v357
      %v359 = vrot.slane %v354, %v358
      %v369 = vunpack.c.l.b16 %v346
      %v370 = vunpack.c.l.b16 %v347
      %v371 = vunpack.c.l.b16 %v348
      %v372 = vunpack.c.l.b16 %v349
      %v373 = vunpack.c.l.b16 %v350
      %v374 = vunpack.c.l.b16 %v351
      %v375 = vunpack.c.l.b16 %v352
      %v376 = vunpack.c.l.b16 %v353
      %v377 = vpack.c.b16 %v370, %v369
      %v378 = vpack.c.b16 %v372, %v371
      %v379 = vpack.c.b16 %v374, %v373
      %v380 = vpack.c.b16 %v376, %v375
      %vm385 = vcmask 523264
      %v387 = vsel %vm385, %v345, 0
      %389 = vmatprep.subr.bf16.mxu0 0
      %390 = vmatpush1.bf16.msra.mxu0 %v377
      %391 = vmatprep.subr.bf16.mxu0 0
      %392 = vmatpush1.bf16.msra.mxu0 %v378
      %393 = vmatprep.subr.bf16.mxu0 0
      %394 = vmatpush1.bf16.msra.mxu0 %v379
      %395 = vmatprep.subr.bf16.mxu0 0
      %396 = vmatpush1.bf16.msra.mxu0 %v380
      %397 = vmatprep.subr.bf16.mxu0 0
      %398 = vmatpush1.bf16.msra.mxu0 0
      %399 = vmatprep.subr.bf16.mxu0 0
      %400 = vmatpush1.bf16.msra.mxu0 0
      %401 = vmatprep.subr.bf16.mxu0 0
      %402 = vmatpush1.bf16.msra.mxu0 0
      %403 = vmatprep.subr.bf16.mxu0 0
      %404 = vmatpush1.bf16.msra.mxu0 0
      %405 = vmatprep.subr.bf16.mxu0 0
      %406 = vmatpush1.bf16.msra.mxu0 0
      %407 = vmatprep.subr.bf16.mxu0 0
      %408 = vmatpush1.bf16.msra.mxu0 0
      %409 = vmatprep.subr.bf16.mxu0 0
      %410 = vmatpush1.bf16.msra.mxu0 0
      %411 = vmatprep.subr.bf16.mxu0 0
      %412 = vmatpush1.bf16.msra.mxu0 0
      %413 = vmatprep.subr.bf16.mxu0 0
      %414 = vmatpush1.bf16.msra.mxu0 0
      %415 = vmatprep.subr.bf16.mxu0 0
      %416 = vmatpush1.bf16.msra.mxu0 0
      %417 = vmatprep.subr.bf16.mxu0 0
      %418 = vmatpush1.bf16.msra.mxu0 0
      %419 = vmatprep.subr.bf16.mxu0 0
      %420 = vmatpush1.bf16.msra.mxu0 0
      %421 = vmatprep.mubr.bf16.mxu0 0
      %422 = vmatmul.mubr.bf16.gmra.mrb[0].mxu0 %v387
      %v423 = vpop.f32.mrb[0].mxu0
      %v424 = vadd.f32 %v359, %v423
      %v425 = vpop.f32.mrb[0].mxu0
      %v426 = vpop.f32.mrb[0].mxu0
      %v427 = vpop.f32.mrb[0].mxu0
      %428 = vdwg.mxu0
      %v429 = vadd.f32 %v424, %v275
      %v430 = vld [vmem:[%s5] sm:$0x1]
      %v431 = vld [vmem:[%s6] sm:$0x1]
      %v432 = vsel %vm300, %v429, 0.0
      %433 = vadd.xlane.f32.xlu0 %v432
      %v434 = vpop.xlane.xlu0 %433
      %v435 = vrcp.pop 32.0
      %v436 = vmul.f32 %v434, %v435
      %v437 = vsub.f32 %v429, %v436
      %v438 = vmul.f32 %v437, %v437
      %v439 = vsel %vm300, %v438, 0.0
      %440 = vadd.xlane.f32.xlu0 %v439
      %v441 = vpop.xlane.xlu0 %440
      %v442 = vrcp.pop 31.0
      %v443 = vmul.f32 %v441, %v442
      %v444 = vrsqrt.pop %v443
      %v445 = vmul.f32 %v443, %v444
      %vm446 = vcmp.eq.f32.partialorder %v443, inf
      %v447 = vsel %vm446, %v443, %v445
      %vm448 = vcmp.eq.f32.partialorder %v443, 0.0
      %v449 = vand.u32 %v443, 2147483648
      %v450 = vsel %vm448, %v449, %v447
      %v451 = vadd.f32 %v450, 1e-06
      %v452 = vrcp.pop %v451
      %v453 = vmul.f32 %v437, %v452
      %v455 = vlaneseq
      %v456 = vshrl.u32 %v455, 7
      %v457 = vsub.s32 0, %v456
      %v458 = vrot.slane %v430, %v457
      %v460 = vmul.f32 %v458, %v453
      %v462 = vlaneseq
      %v463 = vshrl.u32 %v462, 7
      %v464 = vsub.s32 0, %v463
      %v465 = vrot.slane %v431, %v464
      %v467 = vadd.f32 %v460, %v465
      %468 = vst.msk [vmem:[%s273] sm:$0xff] %vm300, %v467
      %p469 = scmp.lt.s32.totalorder %s18, 1
      %s470 = scalar_select %p469, %s18, 1
      %s471 = smul.addr %s470, 8
      %s472 = scalar_lea.vmem %s7, %s471
      // Predicated region
      $region49: #{forward.11} parent=47 // pred_check
        %p473 = pneg %p188
      $region50: #{forward.11} parent=47 // pred_check_branch
        %475 = sbr.rel (%p473) target = $region52
      $region51: #{forward.11} parent=47 // pred_region
        _
      $region52: #{forward.11} parent=47 // pred_fallthru
        _
    $region48: #{forward.11} parent=5 // pred_fallthru
      _
    %p476 = scmp.le.s32.totalorder 2, %s13
    // Predicated region
    $region53: #{forward.11} parent=5 // pred_check
      %p477 = pneg %p476
    $region54: #{forward.11} parent=5 // pred_check_branch
      %479 = sbr.rel (%p477) target = $region56
    $region55: #{forward.11} parent=5 // pred_region
      %s480 = ssub.s32 %s13, 2
      // Predicated region
      $region57: #{forward.11} parent=55 // pred_check
        %p481 = pneg %p194
      $region58: #{forward.11} parent=55 // pred_check_branch
        %483 = sbr.rel (%p481) target = $region60
      $region59: #{forward.11} parent=55 // pred_region
        %p484 = scmp.lt.s32.totalorder %s19, 1
        %s485 = scalar_select %p484, %s19, 1
        %s486 = smul.addr %s485, 8
        %s487 = scalar_lea.vmem %s7, %s486
      $region60: #{forward.11} parent=55 // pred_fallthru
        _
    $region56: #{forward.11} parent=5 // pred_fallthru
      _
  $region6: #{forward.11} parent=0 // loop_footer
    %s17 = sadd.s32 1, %s13
  $region7: #{forward.11} parent=0 // loop_footer_branch
    %12 = sbr.rel target = $region3
  $region8: #{forward.11} parent=0 // loop_exit
    _

// kernel: forward.10
$region0: #{forward.10}
  #allocation0 [shape = 'u32[]', space=smem, size = 0x4, offset = 0x4, fixed_abs, tag = 'smem constant byte address 0x4 - core index']
  #allocation1 [shape = 'u32[144,128]{1,0:T(1,128)}', space=vmem, size = 0x12000, scoped, tag = 'internal scratch']
  #allocation2 [shape = 'f32[8,32]{1,0:T(8,128)}', space=vmem, size = 0x1000, scoped, tag = 'scratch operand']
  %s0 = inlined_call_operand.vmem [shape: f32[16,32], index: 0, kind: input, shape index: {}]
  %s1 = inlined_call_operand.vmem [shape: f32[2,1,8], index: 1, kind: input, shape index: {}]
  %s2 = inlined_call_operand.vmem [shape: bf16[32,96], index: 2, kind: input, shape index: {}]
  %s3 = inlined_call_operand.vmem [shape: f32[1,96], index: 3, kind: input, shape index: {}]
  %s4 = inlined_call_operand.vmem [shape: bf16[32,32], index: 4, kind: input, shape index: {}]
  %s5 = inlined_call_operand.vmem [shape: f32[1,32], index: 5, kind: input, shape index: {}]
  %s6 = inlined_call_operand.vmem [shape: f32[1,32], index: 6, kind: input, shape index: {}]
  %s7 = inlined_call_operand.vmem [shape: f32[1,32], index: 7, kind: input, shape index: {}]
  %s8 = inlined_call_operand.vmem [shape: f32[16,32], index: 8, kind: output, shape index: {}]
  %s9 = sld [smem:[#allocation0]]
  $region65: #{forward.10} parent=0
    _
  %s11 = ssub.s32 1, %s9
  %s12 = scalar_select 0, %s11, %s9
  loop: start=0, step=1, limit=4
  $region2: #{forward.10} parent=0 // loop_pre_header
    _
  $region3: #{forward.10} parent=0 // loop_header
    %s14 = sphi 0, %s18
    %p15 = scmp.ge.s32.totalorder %s14, 4
    %s24 = sphi 0, %s26
    %s27 = sphi 0, %s24
    %s28 = sphi 0, %s27
    %s44 = sphi 0, %s28
    %s50 = sphi 0, %s52
    %s53 = sphi 0, %s50
    %s54 = sphi 0, %s53
    %s70 = sphi 0, %s54
    %s74 = sphi 0, %s74
    %s76 = sphi 0, %s74
    %s77 = sphi 0, %s76
    %s91 = sphi 0, %s77
    %s95 = sphi 0, %s95
    %s97 = sphi 0, %s95
    %s98 = sphi 0, %s97
    %s112 = sphi 0, %s98
    %s116 = sphi 0, %s116
    %s118 = sphi 0, %s116
    %s119 = sphi 0, %s118
    %s133 = sphi 0, %s119
    %s137 = sphi 0, %s137
    %s139 = sphi 0, %s137
    %s140 = sphi 0, %s139
    %s154 = sphi 0, %s140
    %s158 = sphi 0, %s158
    %s160 = sphi 0, %s158
    %s161 = sphi 0, %s160
    %s175 = sphi 0, %s161
    %s179 = sphi 0, %s179
    %s181 = sphi 0, %s179
    %s182 = sphi 0, %s181
    %s196 = sphi 0, %s182
    %s202 = sphi 0, %s204
    %s205 = sphi 0, %s202
    %s206 = sphi 0, %s205
    %s222 = sphi 0, %s206
  $region4: #{forward.10} parent=0 // loop_header_branch
    %17 = sbr.rel (%p15) target = $region8
  $region5: #{forward.10} parent=0 // loop_body
    %s19 = ssub.s32 %s14, 1
    %s20 = ssub.s32 %s14, 2
    %s21 = sadd.s32 %s14, 1
    %s22 = ssub.s32 %s14, %s21
    %p23 = scmp.eq.s32.totalorder %s22, 0
    %s25 = sadd.s32 %s24, 1
    %s26 = scalar_select %p23, %s24, %s25
    %p29 = pneg %p23
    %p30 = scmp.eq.s32.totalorder %s14, 1
    %p31 = por %p29, %p30
    %p32 = scmp.ne.s32.totalorder %s24, %s27
    %p33 = scmp.eq.s32.totalorder %s14, 0
    %p34 = por %p32, %p33
    %p35 = scmp.ne.s32.totalorder %s24, %s27
    %p36 = scmp.eq.s32.totalorder %s19, 1
    %p37 = por %p35, %p36
    %p38 = scmp.ne.s32.totalorder %s27, %s28
    %p39 = scmp.eq.s32.totalorder %s19, 0
    %p40 = por %p38, %p39
    %p41 = scmp.ne.s32.totalorder %s27, %s28
    %p42 = scmp.eq.s32.totalorder %s20, 1
    %p43 = por %p41, %p42
    %p45 = scmp.ne.s32.totalorder %s28, %s44
    %p46 = scmp.eq.s32.totalorder %s20, 0
    %p47 = por %p45, %p46
    %s48 = ssub.s32 %s14, %s21
    %p49 = scmp.eq.s32.totalorder %s48, 0
    %s51 = sadd.s32 %s50, 1
    %s52 = scalar_select %p49, %s50, %s51
    %p55 = pneg %p49
    %p56 = scmp.eq.s32.totalorder %s14, 1
    %p57 = por %p55, %p56
    %p58 = scmp.ne.s32.totalorder %s50, %s53
    %p59 = scmp.eq.s32.totalorder %s14, 0
    %p60 = por %p58, %p59
    %p61 = scmp.ne.s32.totalorder %s50, %s53
    %p62 = scmp.eq.s32.totalorder %s19, 1
    %p63 = por %p61, %p62
    %p64 = scmp.ne.s32.totalorder %s53, %s54
    %p65 = scmp.eq.s32.totalorder %s19, 0
    %p66 = por %p64, %p65
    %p67 = scmp.ne.s32.totalorder %s53, %s54
    %p68 = scmp.eq.s32.totalorder %s20, 1
    %p69 = por %p67, %p68
    %p71 = scmp.ne.s32.totalorder %s54, %s70
    %p72 = scmp.eq.s32.totalorder %s20, 0
    %p73 = por %p71, %p72
    %s75 = sadd.s32 %s74, 1
    %p78 = scmp.eq.s32.totalorder %s14, 1
    %p79 = scmp.ne.s32.totalorder %s74, %s76
    %p80 = scmp.eq.s32.totalorder %s14, 0
    %p81 = por %p79, %p80
    %p82 = scmp.ne.s32.totalorder %s74, %s76
    %p83 = scmp.eq.s32.totalorder %s19, 1
    %p84 = por %p82, %p83
    %p85 = scmp.ne.s32.totalorder %s76, %s77
    %p86 = scmp.eq.s32.totalorder %s19, 0
    %p87 = por %p85, %p86
    %p88 = scmp.ne.s32.totalorder %s76, %s77
    %p89 = scmp.eq.s32.totalorder %s20, 1
    %p90 = por %p88, %p89
    %p92 = scmp.ne.s32.totalorder %s77, %s91
    %p93 = scmp.eq.s32.totalorder %s20, 0
    %p94 = por %p92, %p93
    %s96 = sadd.s32 %s95, 1
    %p99 = scmp.eq.s32.totalorder %s14, 1
    %p100 = scmp.ne.s32.totalorder %s95, %s97
    %p101 = scmp.eq.s32.totalorder %s14, 0
    %p102 = por %p100, %p101
    %p103 = scmp.ne.s32.totalorder %s95, %s97
    %p104 = scmp.eq.s32.totalorder %s19, 1
    %p105 = por %p103, %p104
    %p106 = scmp.ne.s32.totalorder %s97, %s98
    %p107 = scmp.eq.s32.totalorder %s19, 0
    %p108 = por %p106, %p107
    %p109 = scmp.ne.s32.totalorder %s97, %s98
    %p110 = scmp.eq.s32.totalorder %s20, 1
    %p111 = por %p109, %p110
    %p113 = scmp.ne.s32.totalorder %s98, %s112
    %p114 = scmp.eq.s32.totalorder %s20, 0
    %p115 = por %p113, %p114
    %s117 = sadd.s32 %s116, 1
    %p120 = scmp.eq.s32.totalorder %s14, 1
    %p121 = scmp.ne.s32.totalorder %s116, %s118
    %p122 = scmp.eq.s32.totalorder %s14, 0
    %p123 = por %p121, %p122
    %p124 = scmp.ne.s32.totalorder %s116, %s118
    %p125 = scmp.eq.s32.totalorder %s19, 1
    %p126 = por %p124, %p125
    %p127 = scmp.ne.s32.totalorder %s118, %s119
    %p128 = scmp.eq.s32.totalorder %s19, 0
    %p129 = por %p127, %p128
    %p130 = scmp.ne.s32.totalorder %s118, %s119
    %p131 = scmp.eq.s32.totalorder %s20, 1
    %p132 = por %p130, %p131
    %p134 = scmp.ne.s32.totalorder %s119, %s133
    %p135 = scmp.eq.s32.totalorder %s20, 0
    %p136 = por %p134, %p135
    %s138 = sadd.s32 %s137, 1
    %p141 = scmp.eq.s32.totalorder %s14, 1
    %p142 = scmp.ne.s32.totalorder %s137, %s139
    %p143 = scmp.eq.s32.totalorder %s14, 0
    %p144 = por %p142, %p143
    %p145 = scmp.ne.s32.totalorder %s137, %s139
    %p146 = scmp.eq.s32.totalorder %s19, 1
    %p147 = por %p145, %p146
    %p148 = scmp.ne.s32.totalorder %s139, %s140
    %p149 = scmp.eq.s32.totalorder %s19, 0
    %p150 = por %p148, %p149
    %p151 = scmp.ne.s32.totalorder %s139, %s140
    %p152 = scmp.eq.s32.totalorder %s20, 1
    %p153 = por %p151, %p152
    %p155 = scmp.ne.s32.totalorder %s140, %s154
    %p156 = scmp.eq.s32.totalorder %s20, 0
    %p157 = por %p155, %p156
    %s159 = sadd.s32 %s158, 1
    %p162 = scmp.eq.s32.totalorder %s14, 1
    %p163 = scmp.ne.s32.totalorder %s158, %s160
    %p164 = scmp.eq.s32.totalorder %s14, 0
    %p165 = por %p163, %p164
    %p166 = scmp.ne.s32.totalorder %s158, %s160
    %p167 = scmp.eq.s32.totalorder %s19, 1
    %p168 = por %p166, %p167
    %p169 = scmp.ne.s32.totalorder %s160, %s161
    %p170 = scmp.eq.s32.totalorder %s19, 0
    %p171 = por %p169, %p170
    %p172 = scmp.ne.s32.totalorder %s160, %s161
    %p173 = scmp.eq.s32.totalorder %s20, 1
    %p174 = por %p172, %p173
    %p176 = scmp.ne.s32.totalorder %s161, %s175
    %p177 = scmp.eq.s32.totalorder %s20, 0
    %p178 = por %p176, %p177
    %s180 = sadd.s32 %s179, 1
    %p183 = scmp.eq.s32.totalorder %s14, 1
    %p184 = scmp.ne.s32.totalorder %s179, %s181
    %p185 = scmp.eq.s32.totalorder %s14, 0
    %p186 = por %p184, %p185
    %p187 = scmp.ne.s32.totalorder %s179, %s181
    %p188 = scmp.eq.s32.totalorder %s19, 1
    %p189 = por %p187, %p188
    %p190 = scmp.ne.s32.totalorder %s181, %s182
    %p191 = scmp.eq.s32.totalorder %s19, 0
    %p192 = por %p190, %p191
    %p193 = scmp.ne.s32.totalorder %s181, %s182
    %p194 = scmp.eq.s32.totalorder %s20, 1
    %p195 = por %p193, %p194
    %p197 = scmp.ne.s32.totalorder %s182, %s196
    %p198 = scmp.eq.s32.totalorder %s20, 0
    %p199 = por %p197, %p198
    %s200 = ssub.s32 %s14, %s21
    %p201 = scmp.eq.s32.totalorder %s200, 0
    %s203 = sadd.s32 %s202, 1
    %s204 = scalar_select %p201, %s202, %s203
    %p207 = pneg %p201
    %p208 = scmp.eq.s32.totalorder %s14, 1
    %p209 = por %p207, %p208
    %p210 = scmp.ne.s32.totalorder %s202, %s205
    %p211 = scmp.eq.s32.totalorder %s14, 0
    %p212 = por %p210, %p211
    %p213 = scmp.ne.s32.totalorder %s202, %s205
    %p214 = scmp.eq.s32.totalorder %s19, 1
    %p215 = por %p213, %p214
    %p216 = scmp.ne.s32.totalorder %s205, %s206
    %p217 = scmp.eq.s32.totalorder %s19, 0
    %p218 = por %p216, %p217
    %p219 = scmp.ne.s32.totalorder %s205, %s206
    %p220 = scmp.eq.s32.totalorder %s20, 1
    %p221 = por %p219, %p220
    %p223 = scmp.ne.s32.totalorder %s206, %s222
    %p224 = scmp.eq.s32.totalorder %s20, 0
    %p225 = por %p223, %p224
    %p226 = scmp.le.s32.totalorder 1, %s14
    %p227 = scmp.lt.s32.totalorder %s14, 3
    %p228 = pnand %p226, %p227
    %p229 = pneg %p228
    // Predicated region
    $region9: #{forward.10} parent=5 // pred_check
      _
    $region10: #{forward.10} parent=5 // pred_check_branch
      %231 = sbr.rel (%p228) target = $region12
    $region11: #{forward.10} parent=5 // pred_region
      %s232 = ssub.s32 %s14, 1
      // Predicated region
      $region13: #{forward.10} parent=11 // pred_check
        %p233 = pneg %p87
      $region14: #{forward.10} parent=11 // pred_check_branch
        %235 = sbr.rel (%p233) target = $region16
      $region15: #{forward.10} parent=11 // pred_region
        _
      $region16: #{forward.10} parent=11 // pred_fallthru
        _
      // Predicated region
      $region17: #{forward.10} parent=11 // pred_check
        %p236 = pneg %p108
      $region18: #{forward.10} parent=11 // pred_check_branch
        %238 = sbr.rel (%p236) target = $region20
      $region19: #{forward.10} parent=11 // pred_region
        _
      $region20: #{forward.10} parent=11 // pred_fallthru
        _
      // Predicated region
      $region21: #{forward.10} parent=11 // pred_check
        %p239 = pneg %p129
      $region22: #{forward.10} parent=11 // pred_check_branch
        %241 = sbr.rel (%p239) target = $region24
      $region23: #{forward.10} parent=11 // pred_region
        _
      $region24: #{forward.10} parent=11 // pred_fallthru
        _
      // Predicated region
      $region25: #{forward.10} parent=11 // pred_check
        %p242 = pneg %p150
      $region26: #{forward.10} parent=11 // pred_check_branch
        %244 = sbr.rel (%p242) target = $region28
      $region27: #{forward.10} parent=11 // pred_region
        _
      $region28: #{forward.10} parent=11 // pred_fallthru
        _
      // Predicated region
      $region29: #{forward.10} parent=11 // pred_check
        %p245 = pneg %p171
      $region30: #{forward.10} parent=11 // pred_check_branch
        %247 = sbr.rel (%p245) target = $region32
      $region31: #{forward.10} parent=11 // pred_region
        _
      $region32: #{forward.10} parent=11 // pred_fallthru
        _
      // Predicated region
      $region33: #{forward.10} parent=11 // pred_check
        %p248 = pneg %p192
      $region34: #{forward.10} parent=11 // pred_check_branch
        %250 = sbr.rel (%p248) target = $region36
      $region35: #{forward.10} parent=11 // pred_region
        _
      $region36: #{forward.10} parent=11 // pred_fallthru
        _
    $region12: #{forward.10} parent=5 // pred_fallthru
      _
    %p251 = scmp.lt.s32.totalorder %s14, 2
    // Predicated region
    $region37: #{forward.10} parent=5 // pred_check
      %p252 = pneg %p251
    $region38: #{forward.10} parent=5 // pred_check_branch
      %254 = sbr.rel (%p252) target = $region40
    $region39: #{forward.10} parent=5 // pred_region
      // Predicated region
      $region41: #{forward.10} parent=39 // pred_check
        %p255 = pneg %p34
      $region42: #{forward.10} parent=39 // pred_check_branch
        %257 = sbr.rel (%p255) target = $region44
      $region43: #{forward.10} parent=39 // pred_region
        %p258 = scmp.lt.s32.totalorder %s14, 1
        %s259 = scalar_select %p258, %s14, 1
        %s260 = smul.addr %s259, 8
        %s261 = scalar_lea.vmem %s0, %s260
      $region44: #{forward.10} parent=39 // pred_fallthru
        _
      // Predicated region
      $region45: #{forward.10} parent=39 // pred_check
        %p262 = pneg %p60
      $region46: #{forward.10} parent=39 // pred_check_branch
        %264 = sbr.rel (%p262) target = $region48
      $region47: #{forward.10} parent=39 // pred_region
        %p265 = scmp.lt.s32.totalorder %s14, 1
        %s266 = scalar_select %p265, %s14, 1
        %s267 = scalar_lea.vmem %s1, %s266
      $region48: #{forward.10} parent=39 // pred_fallthru
        _
    $region40: #{forward.10} parent=5 // pred_fallthru
      _
    %p268 = scmp.le.s32.totalorder 1, %s14
    %p269 = scmp.lt.s32.totalorder %s14, 3
    %p270 = pnand %p268, %p269
    %p271 = pneg %p270
    // Predicated region
    $region49: #{forward.10} parent=5 // pred_check
      _
    $region50: #{forward.10} parent=5 // pred_check_branch
      %273 = sbr.rel (%p270) target = $region52
    $region51: #{forward.10} parent=5 // pred_region
      %s274 = ssub.s32 %s14, 1
      %p275 = scmp.lt.s32.totalorder %s19, 1
      %s276 = scalar_select %p275, %s19, 1
      %s277 = smul.addr %s276, 8
      %s278 = scalar_lea.vmem %s0, %s277
      %p279 = pneg %p40
      %p280 = pneg %p37
      %p281 = scmp.lt.s32.totalorder %s19, 1
      %s282 = scalar_select %p281, %s19, 1
      %s283 = scalar_lea.vmem %s1, %s282
      %p284 = pneg %p66
      %p285 = pneg %p63
      %p286 = pneg %p87
      %p287 = pneg %p84
      %p288 = pneg %p108
      %p289 = pneg %p105
      %p290 = pneg %p129
      %p291 = pneg %p126
      %p292 = pneg %p150
      %p293 = pneg %p147
      %p294 = pneg %p171
      %p295 = pneg %p168
      %p296 = pneg %p192
      %p297 = pneg %p189
      %p298 = pneg %p218
      %p299 = pneg %p215
      %p300 = scmp.lt.s32.totalorder %s19, 1
      %s301 = scalar_select %p300, %s19, 1
      %s302 = smul.addr %s301, 8
      %s303 = scalar_lea.vmem %s8, %s302
      %p304 = scmp.lt.s32.totalorder %s19, 1
      %s305 = scalar_select %p304, %s19, 1
      %s306 = smul.addr %s305, 8
      %s307 = scalar_lea.vmem %s0, %s306
      %p308 = scmp.lt.s32.totalorder %s19, 1
      %s309 = scalar_select %p308, %s19, 1
      %s310 = scalar_lea.vmem %s1, %s309
      %p311 = scmp.lt.s32.totalorder %s19, 1
      %s312 = scalar_select %p311, %s19, 1
      %s313 = smul.addr %s312, 8
      %s314 = scalar_lea.vmem %s8, %s313
      %v316 = vld [vmem:[%s307] sm:$0xff]
      %v317 = vpack.c.bf16 %v316, %v316
      %v318 = vld [vmem:[%s2] sm:$0xf]
      %v319 = vld [vmem:[%s2 + $0x4] sm:$0xf]
      %v320 = vld [vmem:[%s2 + $0x8] sm:$0xf]
      %v321 = vld [vmem:[%s2 + $0xc] sm:$0xf]
      %v322 = vld [vmem:[%s3] sm:$0x1]
      %v324 = vlaneseq
      %v325 = vshrl.u32 %v324, 7
      %v326 = vsub.s32 0, %v325
      %v327 = vrot.slane %v322, %v326
      %v333 = vunpack.c.l.b16 %v318
      %v334 = vunpack.c.l.b16 %v319
      %v335 = vunpack.c.l.b16 %v320
      %v336 = vunpack.c.l.b16 %v321
      %v337 = vpack.c.b16 %v334, %v333
      %v338 = vpack.c.b16 %v336, %v335
      %vm341 = vcmask 261120
      %v343 = vsel %vm341, %v317, 0
      %345 = vmatprep.subr.bf16.mxu0 0
      %346 = vmatpush1.bf16.msra.mxu0 %v337
      %347 = vmatprep.subr.bf16.mxu0 0
      %348 = vmatpush1.bf16.msra.mxu0 %v338
      %349 = vmatprep.subr.bf16.mxu0 0
      %350 = vmatpush1.bf16.msra.mxu0 0
      %351 = vmatprep.subr.bf16.mxu0 0
      %352 = vmatpush1.bf16.msra.mxu0 0
      %353 = vmatprep.subr.bf16.mxu0 0
      %354 = vmatpush1.bf16.msra.mxu0 0
      %355 = vmatprep.subr.bf16.mxu0 0
      %356 = vmatpush1.bf16.msra.mxu0 0
      %357 = vmatprep.subr.bf16.mxu0 0
      %358 = vmatpush1.bf16.msra.mxu0 0
      %359 = vmatprep.subr.bf16.mxu0 0
      %360 = vmatpush1.bf16.msra.mxu0 0
      %361 = vmatprep.subr.bf16.mxu0 0
      %362 = vmatpush1.bf16.msra.mxu0 0
      %363 = vmatprep.subr.bf16.mxu0 0
      %364 = vmatpush1.bf16.msra.mxu0 0
      %365 = vmatprep.subr.bf16.mxu0 0
      %366 = vmatpush1.bf16.msra.mxu0 0
      %367 = vmatprep.subr.bf16.mxu0 0
      %368 = vmatpush1.bf16.msra.mxu0 0
      %369 = vmatprep.subr.bf16.mxu0 0
      %370 = vmatpush1.bf16.msra.mxu0 0
      %371 = vmatprep.subr.bf16.mxu0 0
      %372 = vmatpush1.bf16.msra.mxu0 0
      %373 = vmatprep.subr.bf16.mxu0 0
      %374 = vmatpush1.bf16.msra.mxu0 0
      %375 = vmatprep.subr.bf16.mxu0 0
      %376 = vmatpush1.bf16.msra.mxu0 0
      %377 = vmatprep.mubr.bf16.mxu0 0
      %378 = vmatmul.mubr.bf16.gmra.mrb[0].mxu0 %v343
      %v379 = vpop.f32.mrb[0].mxu0
      %v380 = vadd.f32 %v327, %v379
      %v381 = vpop.f32.mrb[0].mxu0
      %v382 = vpop.f32.mrb[0].mxu0
      %v383 = vpop.f32.mrb[0].mxu0
      %384 = vdwg.mxu0
      %v385 = vld [vmem:[%s310] sm:$0x1]
      %v386 = vpack.c.bf16 %v380, %v380
      %388 = vrot.lane.b32.xlu0 %v386, 96
      %v389 = vpop.permute.xlu0 %388
      %vm390 = vcmask 64512
      %v392 = vsel %vm390, %v386, 0
      %v395 = vsel %vm390, %v389, 0
      %397 = vmatprep.subr.bf16.mxu0 0
      %398 = vmatpush1.bf16.xpose.msra.mxu0 %v395
      %399 = vmatprep.subr.bf16.mxu0 0
      %400 = vmatpush1.bf16.xpose.msra.mxu0 0
      %401 = vmatprep.subr.bf16.mxu0 0
      %402 = vmatpush1.bf16.xpose.msra.mxu0 0
      %403 = vmatprep.subr.bf16.mxu0 0
      %404 = vmatpush1.bf16.xpose.msra.mxu0 0
      %405 = vmatprep.subr.bf16.mxu0 0
      %406 = vmatpush1.bf16.xpose.msra.mxu0 0
      %407 = vmatprep.subr.bf16.mxu0 0
      %408 = vmatpush1.bf16.xpose.msra.mxu0 0
      %409 = vmatprep.subr.bf16.mxu0 0
      %410 = vmatpush1.bf16.xpose.msra.mxu0 0
      %411 = vmatprep.subr.bf16.mxu0 0
      %412 = vmatpush1.bf16.xpose.msra.mxu0 0
      %413 = vmatprep.subr.bf16.mxu0 0
      %414 = vmatpush1.bf16.xpose.msra.mxu0 0
      %415 = vmatprep.subr.bf16.mxu0 0
      %416 = vmatpush1.bf16.xpose.msra.mxu0 0
      %417 = vmatprep.subr.bf16.mxu0 0
      %418 = vmatpush1.bf16.xpose.msra.mxu0 0
      %419 = vmatprep.subr.bf16.mxu0 0
      %420 = vmatpush1.bf16.xpose.msra.mxu0 0
      %421 = vmatprep.subr.bf16.mxu0 0
      %422 = vmatpush1.bf16.xpose.msra.mxu0 0
      %423 = vmatprep.subr.bf16.mxu0 0
      %424 = vmatpush1.bf16.xpose.msra.mxu0 0
      %425 = vmatprep.subr.bf16.mxu0 0
      %426 = vmatpush1.bf16.xpose.msra.mxu0 0
      %427 = vmatprep.subr.bf16.mxu0 0
      %428 = vmatpush1.bf16.xpose.msra.mxu0 0
      %429 = vmatprep.mubr.bf16.mxu0 0
      %430 = vmatmul.mubr.bf16.gmra.mrb[0].mxu0 %v392
      %v431 = vpop.f32.mrb[0].mxu0
      %v432 = vadd.f32 0.0, %v431
      %v433 = vpop.f32.mrb[0].mxu0
      %v434 = vpop.f32.mrb[0].mxu0
      %v435 = vpop.f32.mrb[0].mxu0
      %436 = vdwg.mxu0
      %v437 = vmul.f32 %v432, 0.35355338
      %v439 = vlaneseq
      %v440 = vshrl.u32 %v439, 7
      %v441 = vsub.s32 0, %v440
      %v442 = vrot.slane %v385, %v441
      %v444 = vadd.f32 %v437, %v442
      %v445 = vsel %vm390, %v444, -inf
      %446 = vmax.xlane.f32.xlu0 %v445
      %v447 = vpop.xlane.xlu0 %446
      %v448 = vsub.f32 %v444, %v447
      %v449 = vmul.f32 %v448, 1.442695
      %v450 = vpow.pop %v449
      %v451 = vsel %vm390, %v450, 0.0
      %452 = vadd.xlane.f32.xlu0 %v451
      %v453 = vpop.xlane.xlu0 %452
      %v454 = vrcp.pop %v453
      %v455 = vmul.f32 %v450, %v454
      %v456 = vpack.c.bf16 %v455, %v455
      %457 = vrot.lane.b32.xlu0 %v386, 64
      %v458 = vpop.permute.xlu0 %457
      %v460 = vsel %vm390, %v456, 0
      %vm462 = vcmask 1043456
      %v464 = vsel %vm462, %v458, 0
      %466 = vmatprep.subr.bf16.mxu0 0
      %467 = vmatpush1.bf16.msra.mxu0 %v464
      %468 = vmatprep.subr.bf16.mxu0 0
      %469 = vmatpush1.bf16.msra.mxu0 0
      %470 = vmatprep.subr.bf16.mxu0 0
      %471 = vmatpush1.bf16.msra.mxu0 0
      %472 = vmatprep.subr.bf16.mxu0 0
      %473 = vmatpush1.bf16.msra.mxu0 0
      %474 = vmatprep.subr.bf16.mxu0 0
      %475 = vmatpush1.bf16.msra.mxu0 0
      %476 = vmatprep.subr.bf16.mxu0 0
      %477 = vmatpush1.bf16.msra.mxu0 0
      %478 = vmatprep.subr.bf16.mxu0 0
      %479 = vmatpush1.bf16.msra.mxu0 0
      %480 = vmatprep.subr.bf16.mxu0 0
      %481 = vmatpush1.bf16.msra.mxu0 0
      %482 = vmatprep.subr.bf16.mxu0 0
      %483 = vmatpush1.bf16.msra.mxu0 0
      %484 = vmatprep.subr.bf16.mxu0 0
      %485 = vmatpush1.bf16.msra.mxu0 0
      %486 = vmatprep.subr.bf16.mxu0 0
      %487 = vmatpush1.bf16.msra.mxu0 0
      %488 = vmatprep.subr.bf16.mxu0 0
      %489 = vmatpush1.bf16.msra.mxu0 0
      %490 = vmatprep.subr.bf16.mxu0 0
      %491 = vmatpush1.bf16.msra.mxu0 0
      %492 = vmatprep.subr.bf16.mxu0 0
      %493 = vmatpush1.bf16.msra.mxu0 0
      %494 = vmatprep.subr.bf16.mxu0 0
      %495 = vmatpush1.bf16.msra.mxu0 0
      %496 = vmatprep.subr.bf16.mxu0 0
      %497 = vmatpush1.bf16.msra.mxu0 0
      %498 = vmatprep.mubr.bf16.mxu0 0
      %499 = vmatmul.mubr.bf16.gmra.mrb[0].mxu0 %v460
      %v500 = vpop.f32.mrb[0].mxu0
      %v501 = vadd.f32 0.0, %v500
      %v502 = vpop.f32.mrb[0].mxu0
      %v503 = vpop.f32.mrb[0].mxu0
      %v504 = vpop.f32.mrb[0].mxu0
      %505 = vdwg.mxu0
      %506 = vst.msk [vmem:[#allocation2] sm:$0xff] %vm390, %v501
      %507 = vrot.lane.b32.xlu0 %v386, 120
      %v508 = vpop.permute.xlu0 %507
      %509 = vrot.lane.b32.xlu0 %v386, 88
      %v510 = vpop.permute.xlu0 %509
      %v512 = vsel %vm390, %v508, 0
      %v515 = vsel %vm390, %v510, 0
      %517 = vmatprep.subr.bf16.mxu0 0
      %518 = vmatpush1.bf16.xpose.msra.mxu0 %v515
      %519 = vmatprep.subr.bf16.mxu0 0
      %520 = vmatpush1.bf16.xpose.msra.mxu0 0
      %521 = vmatprep.subr.bf16.mxu0 0
      %522 = vmatpush1.bf16.xpose.msra.mxu0 0
      %523 = vmatprep.subr.bf16.mxu0 0
      %524 = vmatpush1.bf16.xpose.msra.mxu0 0
      %525 = vmatprep.subr.bf16.mxu0 0
      %526 = vmatpush1.bf16.xpose.msra.mxu0 0
      %527 = vmatprep.subr.bf16.mxu0 0
      %528 = vmatpush1.bf16.xpose.msra.mxu0 0
      %529 = vmatprep.subr.bf16.mxu0 0
      %530 = vmatpush1.bf16.xpose.msra.mxu0 0
      %531 = vmatprep.subr.bf16.mxu0 0
      %532 = vmatpush1.bf16.xpose.msra.mxu0 0
      %533 = vmatprep.subr.bf16.mxu0 0
      %534 = vmatpush1.bf16.xpose.msra.mxu0 0
      %535 = vmatprep.subr.bf16.mxu0 0
      %536 = vmatpush1.bf16.xpose.msra.mxu0 0
      %537 = vmatprep.subr.bf16.mxu0 0
      %538 = vmatpush1.bf16.xpose.msra.mxu0 0
      %539 = vmatprep.subr.bf16.mxu0 0
      %540 = vmatpush1.bf16.xpose.msra.mxu0 0
      %541 = vmatprep.subr.bf16.mxu0 0
      %542 = vmatpush1.bf16.xpose.msra.mxu0 0
      %543 = vmatprep.subr.bf16.mxu0 0
      %544 = vmatpush1.bf16.xpose.msra.mxu0 0
      %545 = vmatprep.subr.bf16.mxu0 0
      %546 = vmatpush1.bf16.xpose.msra.mxu0 0
      %547 = vmatprep.subr.bf16.mxu0 0
      %548 = vmatpush1.bf16.xpose.msra.mxu0 0
      %549 = vmatprep.mubr.bf16.mxu0 0
      %550 = vmatmul.mubr.bf16.gmra.mrb[0].mxu0 %v512
      %v551 = vpop.f32.mrb[0].mxu0
      %v552 = vadd.f32 0.0, %v551
      %v553 = vpop.f32.mrb[0].mxu0
      %v554 = vpop.f32.mrb[0].mxu0
      %v555 = vpop.f32.mrb[0].mxu0
      %556 = vdwg.mxu0
      %v557 = vmul.f32 %v552, 0.35355338
      %v558 = vadd.f32 %v557, %v442
      %v559 = vsel %vm390, %v558, -inf
      %560 = vmax.xlane.f32.xlu0 %v559
      %v561 = vpop.xlane.xlu0 %560
      %v562 = vsub.f32 %v558, %v561
      %v563 = vmul.f32 %v562, 1.442695
      %v564 = vpow.pop %v563
      %v565 = vsel %vm390, %v564, 0.0
      %566 = vadd.xlane.f32.xlu0 %v565
      %v567 = vpop.xlane.xlu0 %566
      %v568 = vrcp.pop %v567
      %v569 = vmul.f32 %v564, %v568
      %v570 = vpack.c.bf16 %v569, %v569
      %571 = vrot.lane.b32.xlu0 %v386, 56
      %v572 = vpop.permute.xlu0 %571
      %v574 = vsel %vm390, %v570, 0
      %v577 = vsel %vm462, %v572, 0
      %579 = vmatprep.subr.bf16.mxu0 0
      %580 = vmatpush1.bf16.msra.mxu0 %v577
      %581 = vmatprep.subr.bf16.mxu0 0
      %582 = vmatpush1.bf16.msra.mxu0 0
      %583 = vmatprep.subr.bf16.mxu0 0
      %584 = vmatpush1.bf16.msra.mxu0 0
      %585 = vmatprep.subr.bf16.mxu0 0
      %586 = vmatpush1.bf16.msra.mxu0 0
      %587 = vmatprep.subr.bf16.mxu0 0
      %588 = vmatpush1.bf16.msra.mxu0 0
      %589 = vmatprep.subr.bf16.mxu0 0
      %590 = vmatpush1.bf16.msra.mxu0 0
      %591 = vmatprep.subr.bf16.mxu0 0
      %592 = vmatpush1.bf16.msra.mxu0 0
      %593 = vmatprep.subr.bf16.mxu0 0
      %594 = vmatpush1.bf16.msra.mxu0 0
      %595 = vmatprep.subr.bf16.mxu0 0
      %596 = vmatpush1.bf16.msra.mxu0 0
      %597 = vmatprep.subr.bf16.mxu0 0
      %598 = vmatpush1.bf16.msra.mxu0 0
      %599 = vmatprep.subr.bf16.mxu0 0
      %600 = vmatpush1.bf16.msra.mxu0 0
      %601 = vmatprep.subr.bf16.mxu0 0
      %602 = vmatpush1.bf16.msra.mxu0 0
      %603 = vmatprep.subr.bf16.mxu0 0
      %604 = vmatpush1.bf16.msra.mxu0 0
      %605 = vmatprep.subr.bf16.mxu0 0
      %606 = vmatpush1.bf16.msra.mxu0 0
      %607 = vmatprep.subr.bf16.mxu0 0
      %608 = vmatpush1.bf16.msra.mxu0 0
      %609 = vmatprep.subr.bf16.mxu0 0
      %610 = vmatpush1.bf16.msra.mxu0 0
      %611 = vmatprep.mubr.bf16.mxu0 0
      %612 = vmatmul.mubr.bf16.gmra.mrb[0].mxu0 %v574
      %v613 = vpop.f32.mrb[0].mxu0
      %v614 = vadd.f32 0.0, %v613
      %v615 = vpop.f32.mrb[0].mxu0
      %v616 = vpop.f32.mrb[0].mxu0
      %v617 = vpop.f32.mrb[0].mxu0
      %618 = vdwg.mxu0
      %620 = vrot.lane.b32.xlu0 %v614, 8
      %v621 = vpop.permute.xlu0 %620
      %vm623 = vcmask 130112
      %624 = vst.msk [vmem:[#allocation2] sm:$0xff] %vm623, %v621
      %625 = vrot.lane.b32.xlu0 %v386, 112
      %v626 = vpop.permute.xlu0 %625
      %627 = vrot.lane.b32.xlu0 %v386, 80
      %v628 = vpop.permute.xlu0 %627
      %v630 = vsel %vm390, %v626, 0
      %v633 = vsel %vm390, %v628, 0
      %635 = vmatprep.subr.bf16.mxu0 0
      %636 = vmatpush1.bf16.xpose.msra.mxu0 %v633
      %637 = vmatprep.subr.bf16.mxu0 0
      %638 = vmatpush1.bf16.xpose.msra.mxu0 0
      %639 = vmatprep.subr.bf16.mxu0 0
      %640 = vmatpush1.bf16.xpose.msra.mxu0 0
      %641 = vmatprep.subr.bf16.mxu0 0
      %642 = vmatpush1.bf16.xpose.msra.mxu0 0
      %643 = vmatprep.subr.bf16.mxu0 0
      %644 = vmatpush1.bf16.xpose.msra.mxu0 0
      %645 = vmatprep.subr.bf16.mxu0 0
      %646 = vmatpush1.bf16.xpose.msra.mxu0 0
      %647 = vmatprep.subr.bf16.mxu0 0
      %648 = vmatpush1.bf16.xpose.msra.mxu0 0
      %649 = vmatprep.subr.bf16.mxu0 0
      %650 = vmatpush1.bf16.xpose.msra.mxu0 0
      %651 = vmatprep.subr.bf16.mxu0 0
      %652 = vmatpush1.bf16.xpose.msra.mxu0 0
      %653 = vmatprep.subr.bf16.mxu0 0
      %654 = vmatpush1.bf16.xpose.msra.mxu0 0
      %655 = vmatprep.subr.bf16.mxu0 0
      %656 = vmatpush1.bf16.xpose.msra.mxu0 0
      %657 = vmatprep.subr.bf16.mxu0 0
      %658 = vmatpush1.bf16.xpose.msra.mxu0 0
      %659 = vmatprep.subr.bf16.mxu0 0
      %660 = vmatpush1.bf16.xpose.msra.mxu0 0
      %661 = vmatprep.subr.bf16.mxu0 0
      %662 = vmatpush1.bf16.xpose.msra.mxu0 0
      %663 = vmatprep.subr.bf16.mxu0 0
      %664 = vmatpush1.bf16.xpose.msra.mxu0 0
      %665 = vmatprep.subr.bf16.mxu0 0
      %666 = vmatpush1.bf16.xpose.msra.mxu0 0
      %667 = vmatprep.mubr.bf16.mxu0 0
      %668 = vmatmul.mubr.bf16.gmra.mrb[0].mxu0 %v630
      %v669 = vpop.f32.mrb[0].mxu0
      %v670 = vadd.f32 0.0, %v669
      %v671 = vpop.f32.mrb[0].mxu0
      %v672 = vpop.f32.mrb[0].mxu0
      %v673 = vpop.f32.mrb[0].mxu0
      %674 = vdwg.mxu0
      %v675 = vmul.f32 %v670, 0.35355338
      %v676 = vadd.f32 %v675, %v442
      %v677 = vsel %vm390, %v676, -inf
      %678 = vmax.xlane.f32.xlu0 %v677
      %v679 = vpop.xlane.xlu0 %678
      %v680 = vsub.f32 %v676, %v679
      %v681 = vmul.f32 %v680, 1.442695
      %v682 = vpow.pop %v681
      %v683 = vsel %vm390, %v682, 0.0
      %684 = vadd.xlane.f32.xlu0 %v683
      %v685 = vpop.xlane.xlu0 %684
      %v686 = vrcp.pop %v685
      %v687 = vmul.f32 %v682, %v686
      %v688 = vpack.c.bf16 %v687, %v687
      %689 = vrot.lane.b32.xlu0 %v386, 48
      %v690 = vpop.permute.xlu0 %689
      %v692 = vsel %vm390, %v688, 0
      %v695 = vsel %vm462, %v690, 0
      %697 = vmatprep.subr.bf16.mxu0 0
      %698 = vmatpush1.bf16.msra.mxu0 %v695
      %699 = vmatprep.subr.bf16.mxu0 0
      %700 = vmatpush1.bf16.msra.mxu0 0
      %701 = vmatprep.subr.bf16.mxu0 0
      %702 = vmatpush1.bf16.msra.mxu0 0
      %703 = vmatprep.subr.bf16.mxu0 0
      %704 = vmatpush1.bf16.msra.mxu0 0
      %705 = vmatprep.subr.bf16.mxu0 0
      %706 = vmatpush1.bf16.msra.mxu0 0
      %707 = vmatprep.subr.bf16.mxu0 0
      %708 = vmatpush1.bf16.msra.mxu0 0
      %709 = vmatprep.subr.bf16.mxu0 0
      %710 = vmatpush1.bf16.msra.mxu0 0
      %711 = vmatprep.subr.bf16.mxu0 0
      %712 = vmatpush1.bf16.msra.mxu0 0
      %713 = vmatprep.subr.bf16.mxu0 0
      %714 = vmatpush1.bf16.msra.mxu0 0
      %715 = vmatprep.subr.bf16.mxu0 0
      %716 = vmatpush1.bf16.msra.mxu0 0
      %717 = vmatprep.subr.bf16.mxu0 0
      %718 = vmatpush1.bf16.msra.mxu0 0
      %719 = vmatprep.subr.bf16.mxu0 0
      %720 = vmatpush1.bf16.msra.mxu0 0
      %721 = vmatprep.subr.bf16.mxu0 0
      %722 = vmatpush1.bf16.msra.mxu0 0
      %723 = vmatprep.subr.bf16.mxu0 0
      %724 = vmatpush1.bf16.msra.mxu0 0
      %725 = vmatprep.subr.bf16.mxu0 0
      %726 = vmatpush1.bf16.msra.mxu0 0
      %727 = vmatprep.subr.bf16.mxu0 0
      %728 = vmatpush1.bf16.msra.mxu0 0
      %729 = vmatprep.mubr.bf16.mxu0 0
      %730 = vmatmul.mubr.bf16.gmra.mrb[0].mxu0 %v692
      %v731 = vpop.f32.mrb[0].mxu0
      %v732 = vadd.f32 0.0, %v731
      %v733 = vpop.f32.mrb[0].mxu0
      %v734 = vpop.f32.mrb[0].mxu0
      %v735 = vpop.f32.mrb[0].mxu0
      %736 = vdwg.mxu0
      %738 = vrot.lane.b32.xlu0 %v732, 16
      %v739 = vpop.permute.xlu0 %738
      %vm741 = vcmask 195712
      %742 = vst.msk [vmem:[#allocation2] sm:$0xff] %vm741, %v739
      %743 = vrot.lane.b32.xlu0 %v386, 104
      %v744 = vpop.permute.xlu0 %743
      %745 = vrot.lane.b32.xlu0 %v386, 72
      %v746 = vpop.permute.xlu0 %745
      %v748 = vsel %vm390, %v744, 0
      %v751 = vsel %vm390, %v746, 0
      %753 = vmatprep.subr.bf16.mxu0 0
      %754 = vmatpush1.bf16.xpose.msra.mxu0 %v751
      %755 = vmatprep.subr.bf16.mxu0 0
      %756 = vmatpush1.bf16.xpose.msra.mxu0 0
      %757 = vmatprep.subr.bf16.mxu0 0
      %758 = vmatpush1.bf16.xpose.msra.mxu0 0
      %759 = vmatprep.subr.bf16.mxu0 0
      %760 = vmatpush1.bf16.xpose.msra.mxu0 0
      %761 = vmatprep.subr.bf16.mxu0 0
      %762 = vmatpush1.bf16.xpose.msra.mxu0 0
      %763 = vmatprep.subr.bf16.mxu0 0
      %764 = vmatpush1.bf16.xpose.msra.mxu0 0
      %765 = vmatprep.subr.bf16.mxu0 0
      %766 = vmatpush1.bf16.xpose.msra.mxu0 0
      %767 = vmatprep.subr.bf16.mxu0 0
      %768 = vmatpush1.bf16.xpose.msra.mxu0 0
      %769 = vmatprep.subr.bf16.mxu0 0
      %770 = vmatpush1.bf16.xpose.msra.mxu0 0
      %771 = vmatprep.subr.bf16.mxu0 0
      %772 = vmatpush1.bf16.xpose.msra.mxu0 0
      %773 = vmatprep.subr.bf16.mxu0 0
      %774 = vmatpush1.bf16.xpose.msra.mxu0 0
      %775 = vmatprep.subr.bf16.mxu0 0
      %776 = vmatpush1.bf16.xpose.msra.mxu0 0
      %777 = vmatprep.subr.bf16.mxu0 0
      %778 = vmatpush1.bf16.xpose.msra.mxu0 0
      %779 = vmatprep.subr.bf16.mxu0 0
      %780 = vmatpush1.bf16.xpose.msra.mxu0 0
      %781 = vmatprep.subr.bf16.mxu0 0
      %782 = vmatpush1.bf16.xpose.msra.mxu0 0
      %783 = vmatprep.subr.bf16.mxu0 0
      %784 = vmatpush1.bf16.xpose.msra.mxu0 0
      %785 = vmatprep.mubr.bf16.mxu0 0
      %786 = vmatmul.mubr.bf16.gmra.mrb[0].mxu0 %v748
      %v787 = vpop.f32.mrb[0].mxu0
      %v788 = vadd.f32 0.0, %v787
      %v789 = vpop.f32.mrb[0].mxu0
      %v790 = vpop.f32.mrb[0].mxu0
      %v791 = vpop.f32.mrb[0].mxu0
      %792 = vdwg.mxu0
      %v793 = vmul.f32 %v788, 0.35355338
      %v794 = vadd.f32 %v793, %v442
      %v795 = vsel %vm390, %v794, -inf
      %796 = vmax.xlane.f32.xlu0 %v795
      %v797 = vpop.xlane.xlu0 %796
      %v798 = vsub.f32 %v794, %v797
      %v799 = vmul.f32 %v798, 1.442695
      %v800 = vpow.pop %v799
      %v801 = vsel %vm390, %v800, 0.0
      %802 = vadd.xlane.f32.xlu0 %v801
      %v803 = vpop.xlane.xlu0 %802
      %v804 = vrcp.pop %v803
      %v805 = vmul.f32 %v800, %v804
      %v806 = vpack.c.bf16 %v805, %v805
      %807 = vrot.lane.b32.xlu0 %v386, 40
      %v808 = vpop.permute.xlu0 %807
      %v810 = vsel %vm390, %v806, 0
      %v813 = vsel %vm462, %v808, 0
      %815 = vmatprep.subr.bf16.mxu0 0
      %816 = vmatpush1.bf16.msra.mxu0 %v813
      %817 = vmatprep.subr.bf16.mxu0 0
      %818 = vmatpush1.bf16.msra.mxu0 0
      %819 = vmatprep.subr.bf16.mxu0 0
      %820 = vmatpush1.bf16.msra.mxu0 0
      %821 = vmatprep.subr.bf16.mxu0 0
      %822 = vmatpush1.bf16.msra.mxu0 0
      %823 = vmatprep.subr.bf16.mxu0 0
      %824 = vmatpush1.bf16.msra.mxu0 0
      %825 = vmatprep.subr.bf16.mxu0 0
      %826 = vmatpush1.bf16.msra.mxu0 0
      %827 = vmatprep.subr.bf16.mxu0 0
      %828 = vmatpush1.bf16.msra.mxu0 0
      %829 = vmatprep.subr.bf16.mxu0 0
      %830 = vmatpush1.bf16.msra.mxu0 0
      %831 = vmatprep.subr.bf16.mxu0 0
      %832 = vmatpush1.bf16.msra.mxu0 0
      %833 = vmatprep.subr.bf16.mxu0 0
      %834 = vmatpush1.bf16.msra.mxu0 0
      %835 = vmatprep.subr.bf16.mxu0 0
      %836 = vmatpush1.bf16.msra.mxu0 0
      %837 = vmatprep.subr.bf16.mxu0 0
      %838 = vmatpush1.bf16.msra.mxu0 0
      %839 = vmatprep.subr.bf16.mxu0 0
      %840 = vmatpush1.bf16.msra.mxu0 0
      %841 = vmatprep.subr.bf16.mxu0 0
      %842 = vmatpush1.bf16.msra.mxu0 0
      %843 = vmatprep.subr.bf16.mxu0 0
      %844 = vmatpush1.bf16.msra.mxu0 0
      %845 = vmatprep.subr.bf16.mxu0 0
      %846 = vmatpush1.bf16.msra.mxu0 0
      %847 = vmatprep.mubr.bf16.mxu0 0
      %848 = vmatmul.mubr.bf16.gmra.mrb[0].mxu0 %v810
      %v849 = vpop.f32.mrb[0].mxu0
      %v850 = vadd.f32 0.0, %v849
      %v851 = vpop.f32.mrb[0].mxu0
      %v852 = vpop.f32.mrb[0].mxu0
      %v853 = vpop.f32.mrb[0].mxu0
      %854 = vdwg.mxu0
      %856 = vrot.lane.b32.xlu0 %v850, 24
      %v857 = vpop.permute.xlu0 %856
      %vm859 = vcmask 261312
      %860 = vst.msk [vmem:[#allocation2] sm:$0xff] %vm859, %v857
      %v861 = vld [vmem:[#allocation2] sm:$0xff]
      %v862 = vpack.c.bf16 %v861, %v861
      %v863 = vld [vmem:[%s4] sm:$0xf]
      %v864 = vld [vmem:[%s4 + $0x4] sm:$0xf]
      %v865 = vld [vmem:[%s4 + $0x8] sm:$0xf]
      %v866 = vld [vmem:[%s4 + $0xc] sm:$0xf]
      %v867 = vld [vmem:[%s5] sm:$0x1]
      %v869 = vlaneseq
      %v870 = vshrl.u32 %v869, 7
      %v871 = vsub.s32 0, %v870
      %v872 = vrot.slane %v867, %v871
      %v878 = vunpack.c.l.b16 %v863
      %v879 = vunpack.c.l.b16 %v864
      %v880 = vunpack.c.l.b16 %v865
      %v881 = vunpack.c.l.b16 %v866
      %v882 = vpack.c.b16 %v879, %v878
      %v883 = vpack.c.b16 %v881, %v880
      %v887 = vsel %vm341, %v862, 0
      %889 = vmatprep.subr.bf16.mxu0 0
      %890 = vmatpush1.bf16.msra.mxu0 %v882
      %891 = vmatprep.subr.bf16.mxu0 0
      %892 = vmatpush1.bf16.msra.mxu0 %v883
      %893 = vmatprep.subr.bf16.mxu0 0
      %894 = vmatpush1.bf16.msra.mxu0 0
      %895 = vmatprep.subr.bf16.mxu0 0
      %896 = vmatpush1.bf16.msra.mxu0 0
      %897 = vmatprep.subr.bf16.mxu0 0
      %898 = vmatpush1.bf16.msra.mxu0 0
      %899 = vmatprep.subr.bf16.mxu0 0
      %900 = vmatpush1.bf16.msra.mxu0 0
      %901 = vmatprep.subr.bf16.mxu0 0
      %902 = vmatpush1.bf16.msra.mxu0 0
      %903 = vmatprep.subr.bf16.mxu0 0
      %904 = vmatpush1.bf16.msra.mxu0 0
      %905 = vmatprep.subr.bf16.mxu0 0
      %906 = vmatpush1.bf16.msra.mxu0 0
      %907 = vmatprep.subr.bf16.mxu0 0
      %908 = vmatpush1.bf16.msra.mxu0 0
      %909 = vmatprep.subr.bf16.mxu0 0
      %910 = vmatpush1.bf16.msra.mxu0 0
      %911 = vmatprep.subr.bf16.mxu0 0
      %912 = vmatpush1.bf16.msra.mxu0 0
      %913 = vmatprep.subr.bf16.mxu0 0
      %914 = vmatpush1.bf16.msra.mxu0 0
      %915 = vmatprep.subr.bf16.mxu0 0
      %916 = vmatpush1.bf16.msra.mxu0 0
      %917 = vmatprep.subr.bf16.mxu0 0
      %918 = vmatpush1.bf16.msra.mxu0 0
      %919 = vmatprep.subr.bf16.mxu0 0
      %920 = vmatpush1.bf16.msra.mxu0 0
      %921 = vmatprep.mubr.bf16.mxu0 0
      %922 = vmatmul.mubr.bf16.gmra.mrb[0].mxu0 %v887
      %v923 = vpop.f32.mrb[0].mxu0
      %v924 = vadd.f32 %v872, %v923
      %v925 = vpop.f32.mrb[0].mxu0
      %v926 = vpop.f32.mrb[0].mxu0
      %v927 = vpop.f32.mrb[0].mxu0
      %928 = vdwg.mxu0
      %v929 = vadd.f32 %v924, %v316
      %v930 = vld [vmem:[%s6] sm:$0x1]
      %v931 = vld [vmem:[%s7] sm:$0x1]
      %v932 = vsel %vm341, %v929, 0.0
      %933 = vadd.xlane.f32.xlu0 %v932
      %v934 = vpop.xlane.xlu0 %933
      %v935 = vrcp.pop 32.0
      %v936 = vmul.f32 %v934, %v935
      %v937 = vsub.f32 %v929, %v936
      %v938 = vmul.f32 %v937, %v937
      %v939 = vsel %vm341, %v938, 0.0
      %940 = vadd.xlane.f32.xlu0 %v939
      %v941 = vpop.xlane.xlu0 %940
      %v942 = vrcp.pop 31.0
      %v943 = vmul.f32 %v941, %v942
      %v944 = vrsqrt.pop %v943
      %v945 = vmul.f32 %v943, %v944
      %vm946 = vcmp.eq.f32.partialorder %v943, inf
      %v947 = vsel %vm946, %v943, %v945
      %vm948 = vcmp.eq.f32.partialorder %v943, 0.0
      %v949 = vand.u32 %v943, 2147483648
      %v950 = vsel %vm948, %v949, %v947
      %v951 = vadd.f32 %v950, 1e-06
      %v952 = vrcp.pop %v951
      %v953 = vmul.f32 %v937, %v952
      %v955 = vlaneseq
      %v956 = vshrl.u32 %v955, 7
      %v957 = vsub.s32 0, %v956
      %v958 = vrot.slane %v930, %v957
      %v960 = vmul.f32 %v958, %v953
      %v962 = vlaneseq
      %v963 = vshrl.u32 %v962, 7
      %v964 = vsub.s32 0, %v963
      %v965 = vrot.slane %v931, %v964
      %v967 = vadd.f32 %v960, %v965
      %968 = vst.msk [vmem:[%s314] sm:$0xff] %vm341, %v967
      %p969 = scmp.lt.s32.totalorder %s19, 1
      %s970 = scalar_select %p969, %s19, 1
      %s971 = smul.addr %s970, 8
      %s972 = scalar_lea.vmem %s8, %s971
      // Predicated region
      $region53: #{forward.10} parent=51 // pred_check
        %p973 = pneg %p215
      $region54: #{forward.10} parent=51 // pred_check_branch
        %975 = sbr.rel (%p973) target = $region56
      $region55: #{forward.10} parent=51 // pred_region
        _
      $region56: #{forward.10} parent=51 // pred_fallthru
        _
    $region52: #{forward.10} parent=5 // pred_fallthru
      _
    %p976 = scmp.le.s32.totalorder 2, %s14
    // Predicated region
    $region57: #{forward.10} parent=5 // pred_check
      %p977 = pneg %p976
    $region58: #{forward.10} parent=5 // pred_check_branch
      %979 = sbr.rel (%p977) target = $region60
    $region59: #{forward.10} parent=5 // pred_region
      %s980 = ssub.s32 %s14, 2
      // Predicated region
      $region61: #{forward.10} parent=59 // pred_check
        %p981 = pneg %p221
      $region62: #{forward.10} parent=59 // pred_check_branch
        %983 = sbr.rel (%p981) target = $region64
      $region63: #{forward.10} parent=59 // pred_region
        %p984 = scmp.lt.s32.totalorder %s20, 1
        %s985 = scalar_select %p984, %s20, 1
        %s986 = smul.addr %s985, 8
        %s987 = scalar_lea.vmem %s8, %s986
      $region64: #{forward.10} parent=59 // pred_fallthru
        _
    $region60: #{forward.10} parent=5 // pred_fallthru
      _
  $region6: #{forward.10} parent=0 // loop_footer
    %s18 = sadd.s32 1, %s14
  $region7: #{forward.10} parent=0 // loop_footer_branch
    %13 = sbr.rel target = $region3
  $region8: #{forward.10} parent=0 // loop_exit
    _

// kernel: forward.14
$region0: #{forward.14}
  #allocation0 [shape = 'u32[]', space=smem, size = 0x4, offset = 0x4, fixed_abs, tag = 'smem constant byte address 0x4 - core index']
  #allocation1 [shape = 'u32[144,128]{1,0:T(1,128)}', space=vmem, size = 0x12000, scoped, tag = 'internal scratch']
  #allocation2 [shape = 'f32[16,32]{1,0:T(8,128)}', space=vmem, size = 0x2000, scoped, tag = 'scratch operand']
  %s0 = inlined_call_operand.vmem [shape: f32[32,32], index: 0, kind: input, shape index: {}]
  %s1 = inlined_call_operand.vmem [shape: f32[2,1,16], index: 1, kind: input, shape index: {}]
  %s2 = inlined_call_operand.vmem [shape: bf16[32,96], index: 2, kind: input, shape index: {}]
  %s3 = inlined_call_operand.vmem [shape: f32[1,96], index: 3, kind: input, shape index: {}]
  %s4 = inlined_call_operand.vmem [shape: bf16[32,32], index: 4, kind: input, shape index: {}]
  %s5 = inlined_call_operand.vmem [shape: f32[1,32], index: 5, kind: input, shape index: {}]
  %s6 = inlined_call_operand.vmem [shape: f32[1,32], index: 6, kind: input, shape index: {}]
  %s7 = inlined_call_operand.vmem [shape: f32[1,32], index: 7, kind: input, shape index: {}]
  %s8 = inlined_call_operand.vmem [shape: f32[32,32], index: 8, kind: output, shape index: {}]
  %s9 = sld [smem:[#allocation0]]
  $region65: #{forward.14} parent=0
    _
  %s11 = ssub.s32 1, %s9
  %s12 = scalar_select 0, %s11, %s9
  loop: start=0, step=1, limit=4
  $region2: #{forward.14} parent=0 // loop_pre_header
    _
  $region3: #{forward.14} parent=0 // loop_header
    %s14 = sphi 0, %s18
    %p15 = scmp.ge.s32.totalorder %s14, 4
    %s24 = sphi 0, %s26
    %s27 = sphi 0, %s24
    %s28 = sphi 0, %s27
    %s44 = sphi 0, %s28
    %s50 = sphi 0, %s52
    %s53 = sphi 0, %s50
    %s54 = sphi 0, %s53
    %s70 = sphi 0, %s54
    %s74 = sphi 0, %s74
    %s76 = sphi 0, %s74
    %s77 = sphi 0, %s76
    %s91 = sphi 0, %s77
    %s95 = sphi 0, %s95
    %s97 = sphi 0, %s95
    %s98 = sphi 0, %s97
    %s112 = sphi 0, %s98
    %s116 = sphi 0, %s116
    %s118 = sphi 0, %s116
    %s119 = sphi 0, %s118
    %s133 = sphi 0, %s119
    %s137 = sphi 0, %s137
    %s139 = sphi 0, %s137
    %s140 = sphi 0, %s139
    %s154 = sphi 0, %s140
    %s158 = sphi 0, %s158
    %s160 = sphi 0, %s158
    %s161 = sphi 0, %s160
    %s175 = sphi 0, %s161
    %s179 = sphi 0, %s179
    %s181 = sphi 0, %s179
    %s182 = sphi 0, %s181
    %s196 = sphi 0, %s182
    %s202 = sphi 0, %s204
    %s205 = sphi 0, %s202
    %s206 = sphi 0, %s205
    %s222 = sphi 0, %s206
  $region4: #{forward.14} parent=0 // loop_header_branch
    %17 = sbr.rel (%p15) target = $region8
  $region5: #{forward.14} parent=0 // loop_body
    %s19 = ssub.s32 %s14, 1
    %s20 = ssub.s32 %s14, 2
    %s21 = sadd.s32 %s14, 1
    %s22 = ssub.s32 %s14, %s21
    %p23 = scmp.eq.s32.totalorder %s22, 0
    %s25 = sadd.s32 %s24, 1
    %s26 = scalar_select %p23, %s24, %s25
    %p29 = pneg %p23
    %p30 = scmp.eq.s32.totalorder %s14, 1
    %p31 = por %p29, %p30
    %p32 = scmp.ne.s32.totalorder %s24, %s27
    %p33 = scmp.eq.s32.totalorder %s14, 0
    %p34 = por %p32, %p33
    %p35 = scmp.ne.s32.totalorder %s24, %s27
    %p36 = scmp.eq.s32.totalorder %s19, 1
    %p37 = por %p35, %p36
    %p38 = scmp.ne.s32.totalorder %s27, %s28
    %p39 = scmp.eq.s32.totalorder %s19, 0
    %p40 = por %p38, %p39
    %p41 = scmp.ne.s32.totalorder %s27, %s28
    %p42 = scmp.eq.s32.totalorder %s20, 1
    %p43 = por %p41, %p42
    %p45 = scmp.ne.s32.totalorder %s28, %s44
    %p46 = scmp.eq.s32.totalorder %s20, 0
    %p47 = por %p45, %p46
    %s48 = ssub.s32 %s14, %s21
    %p49 = scmp.eq.s32.totalorder %s48, 0
    %s51 = sadd.s32 %s50, 1
    %s52 = scalar_select %p49, %s50, %s51
    %p55 = pneg %p49
    %p56 = scmp.eq.s32.totalorder %s14, 1
    %p57 = por %p55, %p56
    %p58 = scmp.ne.s32.totalorder %s50, %s53
    %p59 = scmp.eq.s32.totalorder %s14, 0
    %p60 = por %p58, %p59
    %p61 = scmp.ne.s32.totalorder %s50, %s53
    %p62 = scmp.eq.s32.totalorder %s19, 1
    %p63 = por %p61, %p62
    %p64 = scmp.ne.s32.totalorder %s53, %s54
    %p65 = scmp.eq.s32.totalorder %s19, 0
    %p66 = por %p64, %p65
    %p67 = scmp.ne.s32.totalorder %s53, %s54
    %p68 = scmp.eq.s32.totalorder %s20, 1
    %p69 = por %p67, %p68
    %p71 = scmp.ne.s32.totalorder %s54, %s70
    %p72 = scmp.eq.s32.totalorder %s20, 0
    %p73 = por %p71, %p72
    %s75 = sadd.s32 %s74, 1
    %p78 = scmp.eq.s32.totalorder %s14, 1
    %p79 = scmp.ne.s32.totalorder %s74, %s76
    %p80 = scmp.eq.s32.totalorder %s14, 0
    %p81 = por %p79, %p80
    %p82 = scmp.ne.s32.totalorder %s74, %s76
    %p83 = scmp.eq.s32.totalorder %s19, 1
    %p84 = por %p82, %p83
    %p85 = scmp.ne.s32.totalorder %s76, %s77
    %p86 = scmp.eq.s32.totalorder %s19, 0
    %p87 = por %p85, %p86
    %p88 = scmp.ne.s32.totalorder %s76, %s77
    %p89 = scmp.eq.s32.totalorder %s20, 1
    %p90 = por %p88, %p89
    %p92 = scmp.ne.s32.totalorder %s77, %s91
    %p93 = scmp.eq.s32.totalorder %s20, 0
    %p94 = por %p92, %p93
    %s96 = sadd.s32 %s95, 1
    %p99 = scmp.eq.s32.totalorder %s14, 1
    %p100 = scmp.ne.s32.totalorder %s95, %s97
    %p101 = scmp.eq.s32.totalorder %s14, 0
    %p102 = por %p100, %p101
    %p103 = scmp.ne.s32.totalorder %s95, %s97
    %p104 = scmp.eq.s32.totalorder %s19, 1
    %p105 = por %p103, %p104
    %p106 = scmp.ne.s32.totalorder %s97, %s98
    %p107 = scmp.eq.s32.totalorder %s19, 0
    %p108 = por %p106, %p107
    %p109 = scmp.ne.s32.totalorder %s97, %s98
    %p110 = scmp.eq.s32.totalorder %s20, 1
    %p111 = por %p109, %p110
    %p113 = scmp.ne.s32.totalorder %s98, %s112
    %p114 = scmp.eq.s32.totalorder %s20, 0
    %p115 = por %p113, %p114
    %s117 = sadd.s32 %s116, 1
    %p120 = scmp.eq.s32.totalorder %s14, 1
    %p121 = scmp.ne.s32.totalorder %s116, %s118
    %p122 = scmp.eq.s32.totalorder %s14, 0
    %p123 = por %p121, %p122
    %p124 = scmp.ne.s32.totalorder %s116, %s118
    %p125 = scmp.eq.s32.totalorder %s19, 1
    %p126 = por %p124, %p125
    %p127 = scmp.ne.s32.totalorder %s118, %s119
    %p128 = scmp.eq.s32.totalorder %s19, 0
    %p129 = por %p127, %p128
    %p130 = scmp.ne.s32.totalorder %s118, %s119
    %p131 = scmp.eq.s32.totalorder %s20, 1
    %p132 = por %p130, %p131
    %p134 = scmp.ne.s32.totalorder %s119, %s133
    %p135 = scmp.eq.s32.totalorder %s20, 0
    %p136 = por %p134, %p135
    %s138 = sadd.s32 %s137, 1
    %p141 = scmp.eq.s32.totalorder %s14, 1
    %p142 = scmp.ne.s32.totalorder %s137, %s139
    %p143 = scmp.eq.s32.totalorder %s14, 0
    %p144 = por %p142, %p143
    %p145 = scmp.ne.s32.totalorder %s137, %s139
    %p146 = scmp.eq.s32.totalorder %s19, 1
    %p147 = por %p145, %p146
    %p148 = scmp.ne.s32.totalorder %s139, %s140
    %p149 = scmp.eq.s32.totalorder %s19, 0
    %p150 = por %p148, %p149
    %p151 = scmp.ne.s32.totalorder %s139, %s140
    %p152 = scmp.eq.s32.totalorder %s20, 1
    %p153 = por %p151, %p152
    %p155 = scmp.ne.s32.totalorder %s140, %s154
    %p156 = scmp.eq.s32.totalorder %s20, 0
    %p157 = por %p155, %p156
    %s159 = sadd.s32 %s158, 1
    %p162 = scmp.eq.s32.totalorder %s14, 1
    %p163 = scmp.ne.s32.totalorder %s158, %s160
    %p164 = scmp.eq.s32.totalorder %s14, 0
    %p165 = por %p163, %p164
    %p166 = scmp.ne.s32.totalorder %s158, %s160
    %p167 = scmp.eq.s32.totalorder %s19, 1
    %p168 = por %p166, %p167
    %p169 = scmp.ne.s32.totalorder %s160, %s161
    %p170 = scmp.eq.s32.totalorder %s19, 0
    %p171 = por %p169, %p170
    %p172 = scmp.ne.s32.totalorder %s160, %s161
    %p173 = scmp.eq.s32.totalorder %s20, 1
    %p174 = por %p172, %p173
    %p176 = scmp.ne.s32.totalorder %s161, %s175
    %p177 = scmp.eq.s32.totalorder %s20, 0
    %p178 = por %p176, %p177
    %s180 = sadd.s32 %s179, 1
    %p183 = scmp.eq.s32.totalorder %s14, 1
    %p184 = scmp.ne.s32.totalorder %s179, %s181
    %p185 = scmp.eq.s32.totalorder %s14, 0
    %p186 = por %p184, %p185
    %p187 = scmp.ne.s32.totalorder %s179, %s181
    %p188 = scmp.eq.s32.totalorder %s19, 1
    %p189 = por %p187, %p188
    %p190 = scmp.ne.s32.totalorder %s181, %s182
    %p191 = scmp.eq.s32.totalorder %s19, 0
    %p192 = por %p190, %p191
    %p193 = scmp.ne.s32.totalorder %s181, %s182
    %p194 = scmp.eq.s32.totalorder %s20, 1
    %p195 = por %p193, %p194
    %p197 = scmp.ne.s32.totalorder %s182, %s196
    %p198 = scmp.eq.s32.totalorder %s20, 0
    %p199 = por %p197, %p198
    %s200 = ssub.s32 %s14, %s21
    %p201 = scmp.eq.s32.totalorder %s200, 0
    %s203 = sadd.s32 %s202, 1
    %s204 = scalar_select %p201, %s202, %s203
    %p207 = pneg %p201
    %p208 = scmp.eq.s32.totalorder %s14, 1
    %p209 = por %p207, %p208
    %p210 = scmp.ne.s32.totalorder %s202, %s205
    %p211 = scmp.eq.s32.totalorder %s14, 0
    %p212 = por %p210, %p211
    %p213 = scmp.ne.s32.totalorder %s202, %s205
    %p214 = scmp.eq.s32.totalorder %s19, 1
    %p215 = por %p213, %p214
    %p216 = scmp.ne.s32.totalorder %s205, %s206
    %p217 = scmp.eq.s32.totalorder %s19, 0
    %p218 = por %p216, %p217
    %p219 = scmp.ne.s32.totalorder %s205, %s206
    %p220 = scmp.eq.s32.totalorder %s20, 1
    %p221 = por %p219, %p220
    %p223 = scmp.ne.s32.totalorder %s206, %s222
    %p224 = scmp.eq.s32.totalorder %s20, 0
    %p225 = por %p223, %p224
    %p226 = scmp.le.s32.totalorder 1, %s14
    %p227 = scmp.lt.s32.totalorder %s14, 3
    %p228 = pnand %p226, %p227
    %p229 = pneg %p228
    // Predicated region
    $region9: #{forward.14} parent=5 // pred_check
      _
    $region10: #{forward.14} parent=5 // pred_check_branch
      %231 = sbr.rel (%p228) target = $region12
    $region11: #{forward.14} parent=5 // pred_region
      %s232 = ssub.s32 %s14, 1
      // Predicated region
      $region13: #{forward.14} parent=11 // pred_check
        %p233 = pneg %p87
      $region14: #{forward.14} parent=11 // pred_check_branch
        %235 = sbr.rel (%p233) target = $region16
      $region15: #{forward.14} parent=11 // pred_region
        _
      $region16: #{forward.14} parent=11 // pred_fallthru
        _
      // Predicated region
      $region17: #{forward.14} parent=11 // pred_check
        %p236 = pneg %p108
      $region18: #{forward.14} parent=11 // pred_check_branch
        %238 = sbr.rel (%p236) target = $region20
      $region19: #{forward.14} parent=11 // pred_region
        _
      $region20: #{forward.14} parent=11 // pred_fallthru
        _
      // Predicated region
      $region21: #{forward.14} parent=11 // pred_check
        %p239 = pneg %p129
      $region22: #{forward.14} parent=11 // pred_check_branch
        %241 = sbr.rel (%p239) target = $region24
      $region23: #{forward.14} parent=11 // pred_region
        _
      $region24: #{forward.14} parent=11 // pred_fallthru
        _
      // Predicated region
      $region25: #{forward.14} parent=11 // pred_check
        %p242 = pneg %p150
      $region26: #{forward.14} parent=11 // pred_check_branch
        %244 = sbr.rel (%p242) target = $region28
      $region27: #{forward.14} parent=11 // pred_region
        _
      $region28: #{forward.14} parent=11 // pred_fallthru
        _
      // Predicated region
      $region29: #{forward.14} parent=11 // pred_check
        %p245 = pneg %p171
      $region30: #{forward.14} parent=11 // pred_check_branch
        %247 = sbr.rel (%p245) target = $region32
      $region31: #{forward.14} parent=11 // pred_region
        _
      $region32: #{forward.14} parent=11 // pred_fallthru
        _
      // Predicated region
      $region33: #{forward.14} parent=11 // pred_check
        %p248 = pneg %p192
      $region34: #{forward.14} parent=11 // pred_check_branch
        %250 = sbr.rel (%p248) target = $region36
      $region35: #{forward.14} parent=11 // pred_region
        _
      $region36: #{forward.14} parent=11 // pred_fallthru
        _
    $region12: #{forward.14} parent=5 // pred_fallthru
      _
    %p251 = scmp.lt.s32.totalorder %s14, 2
    // Predicated region
    $region37: #{forward.14} parent=5 // pred_check
      %p252 = pneg %p251
    $region38: #{forward.14} parent=5 // pred_check_branch
      %254 = sbr.rel (%p252) target = $region40
    $region39: #{forward.14} parent=5 // pred_region
      // Predicated region
      $region41: #{forward.14} parent=39 // pred_check
        %p255 = pneg %p34
      $region42: #{forward.14} parent=39 // pred_check_branch
        %257 = sbr.rel (%p255) target = $region44
      $region43: #{forward.14} parent=39 // pred_region
        %s258 = smul.u32 2, %s14
        %p259 = scmp.lt.s32.totalorder %s258, 3
        %s260 = scalar_select %p259, %s258, 3
        %s261 = smul.addr %s260, 8
        %s262 = scalar_lea.vmem %s0, %s261
        %s263 = smul.u32 2, %s14
      $region44: #{forward.14} parent=39 // pred_fallthru
        _
      // Predicated region
      $region45: #{forward.14} parent=39 // pred_check
        %p264 = pneg %p60
      $region46: #{forward.14} parent=39 // pred_check_branch
        %266 = sbr.rel (%p264) target = $region48
      $region47: #{forward.14} parent=39 // pred_region
        %p267 = scmp.lt.s32.totalorder %s14, 1
        %s268 = scalar_select %p267, %s14, 1
        %s269 = scalar_lea.vmem %s1, %s268
      $region48: #{forward.14} parent=39 // pred_fallthru
        _
    $region40: #{forward.14} parent=5 // pred_fallthru
      _
    %p270 = scmp.le.s32.totalorder 1, %s14
    %p271 = scmp.lt.s32.totalorder %s14, 3
    %p272 = pnand %p270, %p271
    %p273 = pneg %p272
    // Predicated region
    $region49: #{forward.14} parent=5 // pred_check
      _
    $region50: #{forward.14} parent=5 // pred_check_branch
      %275 = sbr.rel (%p272) target = $region52
    $region51: #{forward.14} parent=5 // pred_region
      %s276 = ssub.s32 %s14, 1
      %s277 = smul.u32 2, %s19
      %p278 = scmp.lt.s32.totalorder %s277, 3
      %s279 = scalar_select %p278, %s277, 3
      %s280 = smul.addr %s279, 8
      %s281 = scalar_lea.vmem %s0, %s280
      %p282 = pneg %p40
      %p283 = pneg %p37
      %p284 = scmp.lt.s32.totalorder %s19, 1
      %s285 = scalar_select %p284, %s19, 1
      %s286 = scalar_lea.vmem %s1, %s285
      %p287 = pneg %p66
      %p288 = pneg %p63
      %p289 = pneg %p87
      %p290 = pneg %p84
      %p291 = pneg %p108
      %p292 = pneg %p105
      %p293 = pneg %p129
      %p294 = pneg %p126
      %p295 = pneg %p150
      %p296 = pneg %p147
      %p297 = pneg %p171
      %p298 = pneg %p168
      %p299 = pneg %p192
      %p300 = pneg %p189
      %p301 = pneg %p218
      %p302 = pneg %p215
      %s303 = smul.u32 2, %s19
      %p304 = scmp.lt.s32.totalorder %s303, 3
      %s305 = scalar_select %p304, %s303, 3
      %s306 = smul.addr %s305, 8
      %s307 = scalar_lea.vmem %s8, %s306
      %s308 = smul.u32 2, %s19
      %p309 = scmp.lt.s32.totalorder %s308, 3
      %s310 = scalar_select %p309, %s308, 3
      %s311 = smul.addr %s310, 8
      %s312 = scalar_lea.vmem %s0, %s311
      %s313 = smul.u32 2, %s19
      %p314 = scmp.lt.s32.totalorder %s19, 1
      %s315 = scalar_select %p314, %s19, 1
      %s316 = scalar_lea.vmem %s1, %s315
      %s317 = smul.u32 2, %s19
      %p318 = scmp.lt.s32.totalorder %s317, 3
      %s319 = scalar_select %p318, %s317, 3
      %s320 = smul.addr %s319, 8
      %s321 = scalar_lea.vmem %s8, %s320
      %s322 = smul.u32 2, %s19
      %v324 = vld [vmem:[%s312] sm:$0xff]
      %v325 = vld [vmem:[%s312 + $0x8] sm:$0xff]
      %v326 = vpack.c.bf16 %v325, %v324
      %v327 = vld [vmem:[%s2] sm:$0xf]
      %v328 = vld [vmem:[%s2 + $0x4] sm:$0xf]
      %v329 = vld [vmem:[%s2 + $0x8] sm:$0xf]
      %v330 = vld [vmem:[%s2 + $0xc] sm:$0xf]
      %v331 = vld [vmem:[%s3] sm:$0x1]
      %v333 = vlaneseq
      %v334 = vshrl.u32 %v333, 7
      %v335 = vsub.s32 0, %v334
      %v336 = vrot.slane %v331, %v335
      %v342 = vunpack.c.l.b16 %v327
      %v343 = vunpack.c.l.b16 %v328
      %v344 = vunpack.c.l.b16 %v329
      %v345 = vunpack.c.l.b16 %v330
      %v346 = vpack.c.b16 %v343, %v342
      %v347 = vpack.c.b16 %v345, %v344
      %vm350 = vcmask 261120
      %v352 = vsel %vm350, %v326, 0
      %354 = vmatprep.subr.bf16.mxu0 0
      %355 = vmatpush1.bf16.msra.mxu0 %v346
      %356 = vmatprep.subr.bf16.mxu0 0
      %357 = vmatpush1.bf16.msra.mxu0 %v347
      %358 = vmatprep.subr.bf16.mxu0 0
      %359 = vmatpush1.bf16.msra.mxu0 0
      %360 = vmatprep.subr.bf16.mxu0 0
      %361 = vmatpush1.bf16.msra.mxu0 0
      %362 = vmatprep.subr.bf16.mxu0 0
      %363 = vmatpush1.bf16.msra.mxu0 0
      %364 = vmatprep.subr.bf16.mxu0 0
      %365 = vmatpush1.bf16.msra.mxu0 0
      %366 = vmatprep.subr.bf16.mxu0 0
      %367 = vmatpush1.bf16.msra.mxu0 0
      %368 = vmatprep.subr.bf16.mxu0 0
      %369 = vmatpush1.bf16.msra.mxu0 0
      %370 = vmatprep.subr.bf16.mxu0 0
      %371 = vmatpush1.bf16.msra.mxu0 0
      %372 = vmatprep.subr.bf16.mxu0 0
      %373 = vmatpush1.bf16.msra.mxu0 0
      %374 = vmatprep.subr.bf16.mxu0 0
      %375 = vmatpush1.bf16.msra.mxu0 0
      %376 = vmatprep.subr.bf16.mxu0 0
      %377 = vmatpush1.bf16.msra.mxu0 0
      %378 = vmatprep.subr.bf16.mxu0 0
      %379 = vmatpush1.bf16.msra.mxu0 0
      %380 = vmatprep.subr.bf16.mxu0 0
      %381 = vmatpush1.bf16.msra.mxu0 0
      %382 = vmatprep.subr.bf16.mxu0 0
      %383 = vmatpush1.bf16.msra.mxu0 0
      %384 = vmatprep.subr.bf16.mxu0 0
      %385 = vmatpush1.bf16.msra.mxu0 0
      %386 = vmatprep.mubr.bf16.mxu0 0
      %387 = vmatmul.mubr.bf16.gmra.mrb[0].mxu0 %v352
      %v388 = vpop.f32.mrb[0].mxu0
      %v389 = vadd.f32 %v336, %v388
      %v390 = vpop.f32.mrb[0].mxu0
      %v391 = vpop.f32.mrb[0].mxu0
      %v392 = vadd.f32 %v336, %v391
      %v393 = vpop.f32.mrb[0].mxu0
      %394 = vdwg.mxu0
      %v395 = vld [vmem:[%s316] sm:$0x1]
      %v396 = vpack.c.bf16 %v392, %v389
      %398 = vrot.lane.b32.xlu0 %v396, 96
      %v399 = vpop.permute.xlu0 %398
      %vm400 = vcmask 64512
      %v402 = vsel %vm400, %v396, 0
      %v405 = vsel %vm400, %v399, 0
      %407 = vmatprep.subr.bf16.mxu0 0
      %408 = vmatpush1.bf16.xpose.msra.mxu0 %v405
      %409 = vmatprep.subr.bf16.mxu0 0
      %410 = vmatpush1.bf16.xpose.msra.mxu0 0
      %411 = vmatprep.subr.bf16.mxu0 0
      %412 = vmatpush1.bf16.xpose.msra.mxu0 0
      %413 = vmatprep.subr.bf16.mxu0 0
      %414 = vmatpush1.bf16.xpose.msra.mxu0 0
      %415 = vmatprep.subr.bf16.mxu0 0
      %416 = vmatpush1.bf16.xpose.msra.mxu0 0
      %417 = vmatprep.subr.bf16.mxu0 0
      %418 = vmatpush1.bf16.xpose.msra.mxu0 0
      %419 = vmatprep.subr.bf16.mxu0 0
      %420 = vmatpush1.bf16.xpose.msra.mxu0 0
      %421 = vmatprep.subr.bf16.mxu0 0
      %422 = vmatpush1.bf16.xpose.msra.mxu0 0
      %423 = vmatprep.subr.bf16.mxu0 0
      %424 = vmatpush1.bf16.xpose.msra.mxu0 0
      %425 = vmatprep.subr.bf16.mxu0 0
      %426 = vmatpush1.bf16.xpose.msra.mxu0 0
      %427 = vmatprep.subr.bf16.mxu0 0
      %428 = vmatpush1.bf16.xpose.msra.mxu0 0
      %429 = vmatprep.subr.bf16.mxu0 0
      %430 = vmatpush1.bf16.xpose.msra.mxu0 0
      %431 = vmatprep.subr.bf16.mxu0 0
      %432 = vmatpush1.bf16.xpose.msra.mxu0 0
      %433 = vmatprep.subr.bf16.mxu0 0
      %434 = vmatpush1.bf16.xpose.msra.mxu0 0
      %435 = vmatprep.subr.bf16.mxu0 0
      %436 = vmatpush1.bf16.xpose.msra.mxu0 0
      %437 = vmatprep.subr.bf16.mxu0 0
      %438 = vmatpush1.bf16.xpose.msra.mxu0 0
      %439 = vmatprep.mubr.bf16.mxu0 0
      %440 = vmatmul.mubr.bf16.gmra.mrb[0].mxu0 %v402
      %v441 = vpop.f32.mrb[0].mxu0
      %v442 = vadd.f32 0.0, %v441
      %v443 = vpop.f32.mrb[0].mxu0
      %v444 = vpop.f32.mrb[0].mxu0
      %v445 = vadd.f32 0.0, %v444
      %v446 = vpop.f32.mrb[0].mxu0
      %447 = vdwg.mxu0
      %v448 = vmul.f32 %v442, 0.35355338
      %v449 = vmul.f32 %v445, 0.35355338
      %v451 = vlaneseq
      %v452 = vshrl.u32 %v451, 7
      %v453 = vsub.s32 0, %v452
      %v454 = vrot.slane %v395, %v453
      %v456 = vadd.f32 %v448, %v454
      %v457 = vadd.f32 %v449, %v454
      %vm458 = vcmask 130048
      %v459 = vsel %vm458, %v456, -inf
      %460 = vmax.xlane.f32.xlu0 %v459
      %v461 = vpop.xlane.xlu0 %460
      %v462 = vsel %vm458, %v457, -inf
      %463 = vmax.xlane.f32.xlu0 %v462
      %v464 = vpop.xlane.xlu0 %463
      %v465 = vsub.f32 %v456, %v461
      %v466 = vsub.f32 %v457, %v464
      %v467 = vmul.f32 %v465, 1.442695
      %v468 = vpow.pop %v467
      %v469 = vmul.f32 %v466, 1.442695
      %v470 = vpow.pop %v469
      %v471 = vsel %vm458, %v468, 0.0
      %472 = vadd.xlane.f32.xlu0 %v471
      %v473 = vpop.xlane.xlu0 %472
      %v474 = vsel %vm458, %v470, 0.0
      %475 = vadd.xlane.f32.xlu0 %v474
      %v476 = vpop.xlane.xlu0 %475
      %v477 = vrcp.pop %v473
      %v478 = vrcp.pop %v476
      %v479 = vmul.f32 %v468, %v477
      %v480 = vmul.f32 %v470, %v478
      %v481 = vpack.c.bf16 %v480, %v479
      %482 = vrot.lane.b32.xlu0 %v396, 64
      %v483 = vpop.permute.xlu0 %482
      %v486 = vsel %vm458, %v481, 0
      %488 = vmatprep.subr.bf16.mxu0 0
      %489 = vmatpush1.bf16.msra.mxu0 %v483
      %490 = vmatprep.subr.bf16.mxu0 0
      %491 = vmatpush1.bf16.msra.mxu0 0
      %492 = vmatprep.subr.bf16.mxu0 0
      %493 = vmatpush1.bf16.msra.mxu0 0
      %494 = vmatprep.subr.bf16.mxu0 0
      %495 = vmatpush1.bf16.msra.mxu0 0
      %496 = vmatprep.subr.bf16.mxu0 0
      %497 = vmatpush1.bf16.msra.mxu0 0
      %498 = vmatprep.subr.bf16.mxu0 0
      %499 = vmatpush1.bf16.msra.mxu0 0
      %500 = vmatprep.subr.bf16.mxu0 0
      %501 = vmatpush1.bf16.msra.mxu0 0
      %502 = vmatprep.subr.bf16.mxu0 0
      %503 = vmatpush1.bf16.msra.mxu0 0
      %504 = vmatprep.subr.bf16.mxu0 0
      %505 = vmatpush1.bf16.msra.mxu0 0
      %506 = vmatprep.subr.bf16.mxu0 0
      %507 = vmatpush1.bf16.msra.mxu0 0
      %508 = vmatprep.subr.bf16.mxu0 0
      %509 = vmatpush1.bf16.msra.mxu0 0
      %510 = vmatprep.subr.bf16.mxu0 0
      %511 = vmatpush1.bf16.msra.mxu0 0
      %512 = vmatprep.subr.bf16.mxu0 0
      %513 = vmatpush1.bf16.msra.mxu0 0
      %514 = vmatprep.subr.bf16.mxu0 0
      %515 = vmatpush1.bf16.msra.mxu0 0
      %516 = vmatprep.subr.bf16.mxu0 0
      %517 = vmatpush1.bf16.msra.mxu0 0
      %518 = vmatprep.subr.bf16.mxu0 0
      %519 = vmatpush1.bf16.msra.mxu0 0
      %520 = vmatprep.mubr.bf16.mxu0 0
      %521 = vmatmul.mubr.bf16.gmra.mrb[0].mxu0 %v486
      %v522 = vpop.f32.mrb[0].mxu0
      %v523 = vadd.f32 0.0, %v522
      %v524 = vpop.f32.mrb[0].mxu0
      %v525 = vpop.f32.mrb[0].mxu0
      %v526 = vadd.f32 0.0, %v525
      %v527 = vpop.f32.mrb[0].mxu0
      %528 = vdwg.mxu0
      %529 = vst.msk [vmem:[#allocation2] sm:$0xff] %vm400, %v523
      %530 = vst.msk [vmem:[#allocation2 + $0x8] sm:$0xff] %vm400, %v526
      %531 = vrot.lane.b32.xlu0 %v396, 120
      %v532 = vpop.permute.xlu0 %531
      %533 = vrot.lane.b32.xlu0 %v396, 88
      %v534 = vpop.permute.xlu0 %533
      %v536 = vsel %vm400, %v532, 0
      %v539 = vsel %vm400, %v534, 0
      %541 = vmatprep.subr.bf16.mxu0 0
      %542 = vmatpush1.bf16.xpose.msra.mxu0 %v539
      %543 = vmatprep.subr.bf16.mxu0 0
      %544 = vmatpush1.bf16.xpose.msra.mxu0 0
      %545 = vmatprep.subr.bf16.mxu0 0
      %546 = vmatpush1.bf16.xpose.msra.mxu0 0
      %547 = vmatprep.subr.bf16.mxu0 0
      %548 = vmatpush1.bf16.xpose.msra.mxu0 0
      %549 = vmatprep.subr.bf16.mxu0 0
      %550 = vmatpush1.bf16.xpose.msra.mxu0 0
      %551 = vmatprep.subr.bf16.mxu0 0
      %552 = vmatpush1.bf16.xpose.msra.mxu0 0
      %553 = vmatprep.subr.bf16.mxu0 0
      %554 = vmatpush1.bf16.xpose.msra.mxu0 0
      %555 = vmatprep.subr.bf16.mxu0 0
      %556 = vmatpush1.bf16.xpose.msra.mxu0 0
      %557 = vmatprep.subr.bf16.mxu0 0
      %558 = vmatpush1.bf16.xpose.msra.mxu0 0
      %559 = vmatprep.subr.bf16.mxu0 0
      %560 = vmatpush1.bf16.xpose.msra.mxu0 0
      %561 = vmatprep.subr.bf16.mxu0 0
      %562 = vmatpush1.bf16.xpose.msra.mxu0 0
      %563 = vmatprep.subr.bf16.mxu0 0
      %564 = vmatpush1.bf16.xpose.msra.mxu0 0
      %565 = vmatprep.subr.bf16.mxu0 0
      %566 = vmatpush1.bf16.xpose.msra.mxu0 0
      %567 = vmatprep.subr.bf16.mxu0 0
      %568 = vmatpush1.bf16.xpose.msra.mxu0 0
      %569 = vmatprep.subr.bf16.mxu0 0
      %570 = vmatpush1.bf16.xpose.msra.mxu0 0
      %571 = vmatprep.subr.bf16.mxu0 0
      %572 = vmatpush1.bf16.xpose.msra.mxu0 0
      %573 = vmatprep.mubr.bf16.mxu0 0
      %574 = vmatmul.mubr.bf16.gmra.mrb[0].mxu0 %v536
      %v575 = vpop.f32.mrb[0].mxu0
      %v576 = vadd.f32 0.0, %v575
      %v577 = vpop.f32.mrb[0].mxu0
      %v578 = vpop.f32.mrb[0].mxu0
      %v579 = vadd.f32 0.0, %v578
      %v580 = vpop.f32.mrb[0].mxu0
      %581 = vdwg.mxu0
      %v582 = vmul.f32 %v576, 0.35355338
      %v583 = vmul.f32 %v579, 0.35355338
      %v584 = vadd.f32 %v582, %v454
      %v585 = vadd.f32 %v583, %v454
      %v586 = vsel %vm458, %v584, -inf
      %587 = vmax.xlane.f32.xlu0 %v586
      %v588 = vpop.xlane.xlu0 %587
      %v589 = vsel %vm458, %v585, -inf
      %590 = vmax.xlane.f32.xlu0 %v589
      %v591 = vpop.xlane.xlu0 %590
      %v592 = vsub.f32 %v584, %v588
      %v593 = vsub.f32 %v585, %v591
      %v594 = vmul.f32 %v592, 1.442695
      %v595 = vpow.pop %v594
      %v596 = vmul.f32 %v593, 1.442695
      %v597 = vpow.pop %v596
      %v598 = vsel %vm458, %v595, 0.0
      %599 = vadd.xlane.f32.xlu0 %v598
      %v600 = vpop.xlane.xlu0 %599
      %v601 = vsel %vm458, %v597, 0.0
      %602 = vadd.xlane.f32.xlu0 %v601
      %v603 = vpop.xlane.xlu0 %602
      %v604 = vrcp.pop %v600
      %v605 = vrcp.pop %v603
      %v606 = vmul.f32 %v595, %v604
      %v607 = vmul.f32 %v597, %v605
      %v608 = vpack.c.bf16 %v607, %v606
      %609 = vrot.lane.b32.xlu0 %v396, 56
      %v610 = vpop.permute.xlu0 %609
      %v613 = vsel %vm458, %v608, 0
      %615 = vmatprep.subr.bf16.mxu0 0
      %616 = vmatpush1.bf16.msra.mxu0 %v610
      %617 = vmatprep.subr.bf16.mxu0 0
      %618 = vmatpush1.bf16.msra.mxu0 0
      %619 = vmatprep.subr.bf16.mxu0 0
      %620 = vmatpush1.bf16.msra.mxu0 0
      %621 = vmatprep.subr.bf16.mxu0 0
      %622 = vmatpush1.bf16.msra.mxu0 0
      %623 = vmatprep.subr.bf16.mxu0 0
      %624 = vmatpush1.bf16.msra.mxu0 0
      %625 = vmatprep.subr.bf16.mxu0 0
      %626 = vmatpush1.bf16.msra.mxu0 0
      %627 = vmatprep.subr.bf16.mxu0 0
      %628 = vmatpush1.bf16.msra.mxu0 0
      %629 = vmatprep.subr.bf16.mxu0 0
      %630 = vmatpush1.bf16.msra.mxu0 0
      %631 = vmatprep.subr.bf16.mxu0 0
      %632 = vmatpush1.bf16.msra.mxu0 0
      %633 = vmatprep.subr.bf16.mxu0 0
      %634 = vmatpush1.bf16.msra.mxu0 0
      %635 = vmatprep.subr.bf16.mxu0 0
      %636 = vmatpush1.bf16.msra.mxu0 0
      %637 = vmatprep.subr.bf16.mxu0 0
      %638 = vmatpush1.bf16.msra.mxu0 0
      %639 = vmatprep.subr.bf16.mxu0 0
      %640 = vmatpush1.bf16.msra.mxu0 0
      %641 = vmatprep.subr.bf16.mxu0 0
      %642 = vmatpush1.bf16.msra.mxu0 0
      %643 = vmatprep.subr.bf16.mxu0 0
      %644 = vmatpush1.bf16.msra.mxu0 0
      %645 = vmatprep.subr.bf16.mxu0 0
      %646 = vmatpush1.bf16.msra.mxu0 0
      %647 = vmatprep.mubr.bf16.mxu0 0
      %648 = vmatmul.mubr.bf16.gmra.mrb[0].mxu0 %v613
      %v649 = vpop.f32.mrb[0].mxu0
      %v650 = vadd.f32 0.0, %v649
      %v651 = vpop.f32.mrb[0].mxu0
      %v652 = vpop.f32.mrb[0].mxu0
      %v653 = vadd.f32 0.0, %v652
      %v654 = vpop.f32.mrb[0].mxu0
      %655 = vdwg.mxu0
      %658 = vrot.lane.b32.xlu0 %v650, 8
      %v659 = vpop.permute.xlu0 %658
      %660 = vrot.lane.b32.xlu0 %v653, 8
      %v661 = vpop.permute.xlu0 %660
      %vm664 = vcmask 130112
      %665 = vst.msk [vmem:[#allocation2] sm:$0xff] %vm664, %v659
      %666 = vst.msk [vmem:[#allocation2 + $0x8] sm:$0xff] %vm664, %v661
      %667 = vrot.lane.b32.xlu0 %v396, 112
      %v668 = vpop.permute.xlu0 %667
      %669 = vrot.lane.b32.xlu0 %v396, 80
      %v670 = vpop.permute.xlu0 %669
      %v672 = vsel %vm400, %v668, 0
      %v675 = vsel %vm400, %v670, 0
      %677 = vmatprep.subr.bf16.mxu0 0
      %678 = vmatpush1.bf16.xpose.msra.mxu0 %v675
      %679 = vmatprep.subr.bf16.mxu0 0
      %680 = vmatpush1.bf16.xpose.msra.mxu0 0
      %681 = vmatprep.subr.bf16.mxu0 0
      %682 = vmatpush1.bf16.xpose.msra.mxu0 0
      %683 = vmatprep.subr.bf16.mxu0 0
      %684 = vmatpush1.bf16.xpose.msra.mxu0 0
      %685 = vmatprep.subr.bf16.mxu0 0
      %686 = vmatpush1.bf16.xpose.msra.mxu0 0
      %687 = vmatprep.subr.bf16.mxu0 0
      %688 = vmatpush1.bf16.xpose.msra.mxu0 0
      %689 = vmatprep.subr.bf16.mxu0 0
      %690 = vmatpush1.bf16.xpose.msra.mxu0 0
      %691 = vmatprep.subr.bf16.mxu0 0
      %692 = vmatpush1.bf16.xpose.msra.mxu0 0
      %693 = vmatprep.subr.bf16.mxu0 0
      %694 = vmatpush1.bf16.xpose.msra.mxu0 0
      %695 = vmatprep.subr.bf16.mxu0 0
      %696 = vmatpush1.bf16.xpose.msra.mxu0 0
      %697 = vmatprep.subr.bf16.mxu0 0
      %698 = vmatpush1.bf16.xpose.msra.mxu0 0
      %699 = vmatprep.subr.bf16.mxu0 0
      %700 = vmatpush1.bf16.xpose.msra.mxu0 0
      %701 = vmatprep.subr.bf16.mxu0 0
      %702 = vmatpush1.bf16.xpose.msra.mxu0 0
      %703 = vmatprep.subr.bf16.mxu0 0
      %704 = vmatpush1.bf16.xpose.msra.mxu0 0
      %705 = vmatprep.subr.bf16.mxu0 0
      %706 = vmatpush1.bf16.xpose.msra.mxu0 0
      %707 = vmatprep.subr.bf16.mxu0 0
      %708 = vmatpush1.bf16.xpose.msra.mxu0 0
      %709 = vmatprep.mubr.bf16.mxu0 0
      %710 = vmatmul.mubr.bf16.gmra.mrb[0].mxu0 %v672
      %v711 = vpop.f32.mrb[0].mxu0
      %v712 = vadd.f32 0.0, %v711
      %v713 = vpop.f32.mrb[0].mxu0
      %v714 = vpop.f32.mrb[0].mxu0
      %v715 = vadd.f32 0.0, %v714
      %v716 = vpop.f32.mrb[0].mxu0
      %717 = vdwg.mxu0
      %v718 = vmul.f32 %v712, 0.35355338
      %v719 = vmul.f32 %v715, 0.35355338
      %v720 = vadd.f32 %v718, %v454
      %v721 = vadd.f32 %v719, %v454
      %v722 = vsel %vm458, %v720, -inf
      %723 = vmax.xlane.f32.xlu0 %v722
      %v724 = vpop.xlane.xlu0 %723
      %v725 = vsel %vm458, %v721, -inf
      %726 = vmax.xlane.f32.xlu0 %v725
      %v727 = vpop.xlane.xlu0 %726
      %v728 = vsub.f32 %v720, %v724
      %v729 = vsub.f32 %v721, %v727
      %v730 = vmul.f32 %v728, 1.442695
      %v731 = vpow.pop %v730
      %v732 = vmul.f32 %v729, 1.442695
      %v733 = vpow.pop %v732
      %v734 = vsel %vm458, %v731, 0.0
      %735 = vadd.xlane.f32.xlu0 %v734
      %v736 = vpop.xlane.xlu0 %735
      %v737 = vsel %vm458, %v733, 0.0
      %738 = vadd.xlane.f32.xlu0 %v737
      %v739 = vpop.xlane.xlu0 %738
      %v740 = vrcp.pop %v736
      %v741 = vrcp.pop %v739
      %v742 = vmul.f32 %v731, %v740
      %v743 = vmul.f32 %v733, %v741
      %v744 = vpack.c.bf16 %v743, %v742
      %745 = vrot.lane.b32.xlu0 %v396, 48
      %v746 = vpop.permute.xlu0 %745
      %v749 = vsel %vm458, %v744, 0
      %751 = vmatprep.subr.bf16.mxu0 0
      %752 = vmatpush1.bf16.msra.mxu0 %v746
      %753 = vmatprep.subr.bf16.mxu0 0
      %754 = vmatpush1.bf16.msra.mxu0 0
      %755 = vmatprep.subr.bf16.mxu0 0
      %756 = vmatpush1.bf16.msra.mxu0 0
      %757 = vmatprep.subr.bf16.mxu0 0
      %758 = vmatpush1.bf16.msra.mxu0 0
      %759 = vmatprep.subr.bf16.mxu0 0
      %760 = vmatpush1.bf16.msra.mxu0 0
      %761 = vmatprep.subr.bf16.mxu0 0
      %762 = vmatpush1.bf16.msra.mxu0 0
      %763 = vmatprep.subr.bf16.mxu0 0
      %764 = vmatpush1.bf16.msra.mxu0 0
      %765 = vmatprep.subr.bf16.mxu0 0
      %766 = vmatpush1.bf16.msra.mxu0 0
      %767 = vmatprep.subr.bf16.mxu0 0
      %768 = vmatpush1.bf16.msra.mxu0 0
      %769 = vmatprep.subr.bf16.mxu0 0
      %770 = vmatpush1.bf16.msra.mxu0 0
      %771 = vmatprep.subr.bf16.mxu0 0
      %772 = vmatpush1.bf16.msra.mxu0 0
      %773 = vmatprep.subr.bf16.mxu0 0
      %774 = vmatpush1.bf16.msra.mxu0 0
      %775 = vmatprep.subr.bf16.mxu0 0
      %776 = vmatpush1.bf16.msra.mxu0 0
      %777 = vmatprep.subr.bf16.mxu0 0
      %778 = vmatpush1.bf16.msra.mxu0 0
      %779 = vmatprep.subr.bf16.mxu0 0
      %780 = vmatpush1.bf16.msra.mxu0 0
      %781 = vmatprep.subr.bf16.mxu0 0
      %782 = vmatpush1.bf16.msra.mxu0 0
      %783 = vmatprep.mubr.bf16.mxu0 0
      %784 = vmatmul.mubr.bf16.gmra.mrb[0].mxu0 %v749
      %v785 = vpop.f32.mrb[0].mxu0
      %v786 = vadd.f32 0.0, %v785
      %v787 = vpop.f32.mrb[0].mxu0
      %v788 = vpop.f32.mrb[0].mxu0
      %v789 = vadd.f32 0.0, %v788
      %v790 = vpop.f32.mrb[0].mxu0
      %791 = vdwg.mxu0
      %794 = vrot.lane.b32.xlu0 %v786, 16
      %v795 = vpop.permute.xlu0 %794
      %796 = vrot.lane.b32.xlu0 %v789, 16
      %v797 = vpop.permute.xlu0 %796
      %vm800 = vcmask 195712
      %801 = vst.msk [vmem:[#allocation2] sm:$0xff] %vm800, %v795
      %802 = vst.msk [vmem:[#allocation2 + $0x8] sm:$0xff] %vm800, %v797
      %803 = vrot.lane.b32.xlu0 %v396, 104
      %v804 = vpop.permute.xlu0 %803
      %805 = vrot.lane.b32.xlu0 %v396, 72
      %v806 = vpop.permute.xlu0 %805
      %v808 = vsel %vm400, %v804, 0
      %v811 = vsel %vm400, %v806, 0
      %813 = vmatprep.subr.bf16.mxu0 0
      %814 = vmatpush1.bf16.xpose.msra.mxu0 %v811
      %815 = vmatprep.subr.bf16.mxu0 0
      %816 = vmatpush1.bf16.xpose.msra.mxu0 0
      %817 = vmatprep.subr.bf16.mxu0 0
      %818 = vmatpush1.bf16.xpose.msra.mxu0 0
      %819 = vmatprep.subr.bf16.mxu0 0
      %820 = vmatpush1.bf16.xpose.msra.mxu0 0
      %821 = vmatprep.subr.bf16.mxu0 0
      %822 = vmatpush1.bf16.xpose.msra.mxu0 0
      %823 = vmatprep.subr.bf16.mxu0 0
      %824 = vmatpush1.bf16.xpose.msra.mxu0 0
      %825 = vmatprep.subr.bf16.mxu0 0
      %826 = vmatpush1.bf16.xpose.msra.mxu0 0
      %827 = vmatprep.subr.bf16.mxu0 0
      %828 = vmatpush1.bf16.xpose.msra.mxu0 0
      %829 = vmatprep.subr.bf16.mxu0 0
      %830 = vmatpush1.bf16.xpose.msra.mxu0 0
      %831 = vmatprep.subr.bf16.mxu0 0
      %832 = vmatpush1.bf16.xpose.msra.mxu0 0
      %833 = vmatprep.subr.bf16.mxu0 0
      %834 = vmatpush1.bf16.xpose.msra.mxu0 0
      %835 = vmatprep.subr.bf16.mxu0 0
      %836 = vmatpush1.bf16.xpose.msra.mxu0 0
      %837 = vmatprep.subr.bf16.mxu0 0
      %838 = vmatpush1.bf16.xpose.msra.mxu0 0
      %839 = vmatprep.subr.bf16.mxu0 0
      %840 = vmatpush1.bf16.xpose.msra.mxu0 0
      %841 = vmatprep.subr.bf16.mxu0 0
      %842 = vmatpush1.bf16.xpose.msra.mxu0 0
      %843 = vmatprep.subr.bf16.mxu0 0
      %844 = vmatpush1.bf16.xpose.msra.mxu0 0
      %845 = vmatprep.mubr.bf16.mxu0 0
      %846 = vmatmul.mubr.bf16.gmra.mrb[0].mxu0 %v808
      %v847 = vpop.f32.mrb[0].mxu0
      %v848 = vadd.f32 0.0, %v847
      %v849 = vpop.f32.mrb[0].mxu0
      %v850 = vpop.f32.mrb[0].mxu0
      %v851 = vadd.f32 0.0, %v850
      %v852 = vpop.f32.mrb[0].mxu0
      %853 = vdwg.mxu0
      %v854 = vmul.f32 %v848, 0.35355338
      %v855 = vmul.f32 %v851, 0.35355338
      %v856 = vadd.f32 %v854, %v454
      %v857 = vadd.f32 %v855, %v454
      %v858 = vsel %vm458, %v856, -inf
      %859 = vmax.xlane.f32.xlu0 %v858
      %v860 = vpop.xlane.xlu0 %859
      %v861 = vsel %vm458, %v857, -inf
      %862 = vmax.xlane.f32.xlu0 %v861
      %v863 = vpop.xlane.xlu0 %862
      %v864 = vsub.f32 %v856, %v860
      %v865 = vsub.f32 %v857, %v863
      %v866 = vmul.f32 %v864, 1.442695
      %v867 = vpow.pop %v866
      %v868 = vmul.f32 %v865, 1.442695
      %v869 = vpow.pop %v868
      %v870 = vsel %vm458, %v867, 0.0
      %871 = vadd.xlane.f32.xlu0 %v870
      %v872 = vpop.xlane.xlu0 %871
      %v873 = vsel %vm458, %v869, 0.0
      %874 = vadd.xlane.f32.xlu0 %v873
      %v875 = vpop.xlane.xlu0 %874
      %v876 = vrcp.pop %v872
      %v877 = vrcp.pop %v875
      %v878 = vmul.f32 %v867, %v876
      %v879 = vmul.f32 %v869, %v877
      %v880 = vpack.c.bf16 %v879, %v878
      %881 = vrot.lane.b32.xlu0 %v396, 40
      %v882 = vpop.permute.xlu0 %881
      %v885 = vsel %vm458, %v880, 0
      %887 = vmatprep.subr.bf16.mxu0 0
      %888 = vmatpush1.bf16.msra.mxu0 %v882
      %889 = vmatprep.subr.bf16.mxu0 0
      %890 = vmatpush1.bf16.msra.mxu0 0
      %891 = vmatprep.subr.bf16.mxu0 0
      %892 = vmatpush1.bf16.msra.mxu0 0
      %893 = vmatprep.subr.bf16.mxu0 0
      %894 = vmatpush1.bf16.msra.mxu0 0
      %895 = vmatprep.subr.bf16.mxu0 0
      %896 = vmatpush1.bf16.msra.mxu0 0
      %897 = vmatprep.subr.bf16.mxu0 0
      %898 = vmatpush1.bf16.msra.mxu0 0
      %899 = vmatprep.subr.bf16.mxu0 0
      %900 = vmatpush1.bf16.msra.mxu0 0
      %901 = vmatprep.subr.bf16.mxu0 0
      %902 = vmatpush1.bf16.msra.mxu0 0
      %903 = vmatprep.subr.bf16.mxu0 0
      %904 = vmatpush1.bf16.msra.mxu0 0
      %905 = vmatprep.subr.bf16.mxu0 0
      %906 = vmatpush1.bf16.msra.mxu0 0
      %907 = vmatprep.subr.bf16.mxu0 0
      %908 = vmatpush1.bf16.msra.mxu0 0
      %909 = vmatprep.subr.bf16.mxu0 0
      %910 = vmatpush1.bf16.msra.mxu0 0
      %911 = vmatprep.subr.bf16.mxu0 0
      %912 = vmatpush1.bf16.msra.mxu0 0
      %913 = vmatprep.subr.bf16.mxu0 0
      %914 = vmatpush1.bf16.msra.mxu0 0
      %915 = vmatprep.subr.bf16.mxu0 0
      %916 = vmatpush1.bf16.msra.mxu0 0
      %917 = vmatprep.subr.bf16.mxu0 0
      %918 = vmatpush1.bf16.msra.mxu0 0
      %919 = vmatprep.mubr.bf16.mxu0 0
      %920 = vmatmul.mubr.bf16.gmra.mrb[0].mxu0 %v885
      %v921 = vpop.f32.mrb[0].mxu0
      %v922 = vadd.f32 0.0, %v921
      %v923 = vpop.f32.mrb[0].mxu0
      %v924 = vpop.f32.mrb[0].mxu0
      %v925 = vadd.f32 0.0, %v924
      %v926 = vpop.f32.mrb[0].mxu0
      %927 = vdwg.mxu0
      %930 = vrot.lane.b32.xlu0 %v922, 24
      %v931 = vpop.permute.xlu0 %930
      %932 = vrot.lane.b32.xlu0 %v925, 24
      %v933 = vpop.permute.xlu0 %932
      %vm936 = vcmask 261312
      %937 = vst.msk [vmem:[#allocation2] sm:$0xff] %vm936, %v931
      %938 = vst.msk [vmem:[#allocation2 + $0x8] sm:$0xff] %vm936, %v933
      %v939 = vld [vmem:[#allocation2] sm:$0xff]
      %v940 = vld [vmem:[#allocation2 + $0x8] sm:$0xff]
      %v941 = vpack.c.bf16 %v940, %v939
      %v942 = vld [vmem:[%s4] sm:$0xf]
      %v943 = vld [vmem:[%s4 + $0x4] sm:$0xf]
      %v944 = vld [vmem:[%s4 + $0x8] sm:$0xf]
      %v945 = vld [vmem:[%s4 + $0xc] sm:$0xf]
      %v946 = vld [vmem:[%s5] sm:$0x1]
      %v948 = vlaneseq
      %v949 = vshrl.u32 %v948, 7
      %v950 = vsub.s32 0, %v949
      %v951 = vrot.slane %v946, %v950
      %v957 = vunpack.c.l.b16 %v942
      %v958 = vunpack.c.l.b16 %v943
      %v959 = vunpack.c.l.b16 %v944
      %v960 = vunpack.c.l.b16 %v945
      %v961 = vpack.c.b16 %v958, %v957
      %v962 = vpack.c.b16 %v960, %v959
      %v966 = vsel %vm350, %v941, 0
      %968 = vmatprep.subr.bf16.mxu0 0
      %969 = vmatpush1.bf16.msra.mxu0 %v961
      %970 = vmatprep.subr.bf16.mxu0 0
      %971 = vmatpush1.bf16.msra.mxu0 %v962
      %972 = vmatprep.subr.bf16.mxu0 0
      %973 = vmatpush1.bf16.msra.mxu0 0
      %974 = vmatprep.subr.bf16.mxu0 0
      %975 = vmatpush1.bf16.msra.mxu0 0
      %976 = vmatprep.subr.bf16.mxu0 0
      %977 = vmatpush1.bf16.msra.mxu0 0
      %978 = vmatprep.subr.bf16.mxu0 0
      %979 = vmatpush1.bf16.msra.mxu0 0
      %980 = vmatprep.subr.bf16.mxu0 0
      %981 = vmatpush1.bf16.msra.mxu0 0
      %982 = vmatprep.subr.bf16.mxu0 0
      %983 = vmatpush1.bf16.msra.mxu0 0
      %984 = vmatprep.subr.bf16.mxu0 0
      %985 = vmatpush1.bf16.msra.mxu0 0
      %986 = vmatprep.subr.bf16.mxu0 0
      %987 = vmatpush1.bf16.msra.mxu0 0
      %988 = vmatprep.subr.bf16.mxu0 0
      %989 = vmatpush1.bf16.msra.mxu0 0
      %990 = vmatprep.subr.bf16.mxu0 0
      %991 = vmatpush1.bf16.msra.mxu0 0
      %992 = vmatprep.subr.bf16.mxu0 0
      %993 = vmatpush1.bf16.msra.mxu0 0
      %994 = vmatprep.subr.bf16.mxu0 0
      %995 = vmatpush1.bf16.msra.mxu0 0
      %996 = vmatprep.subr.bf16.mxu0 0
      %997 = vmatpush1.bf16.msra.mxu0 0
      %998 = vmatprep.subr.bf16.mxu0 0
      %999 = vmatpush1.bf16.msra.mxu0 0
      %1000 = vmatprep.mubr.bf16.mxu0 0
      %1001 = vmatmul.mubr.bf16.gmra.mrb[0].mxu0 %v966
      %v1002 = vpop.f32.mrb[0].mxu0
      %v1003 = vadd.f32 %v951, %v1002
      %v1004 = vpop.f32.mrb[0].mxu0
      %v1005 = vpop.f32.mrb[0].mxu0
      %v1006 = vadd.f32 %v951, %v1005
      %v1007 = vpop.f32.mrb[0].mxu0
      %1008 = vdwg.mxu0
      %v1009 = vadd.f32 %v1003, %v324
      %v1010 = vadd.f32 %v1006, %v325
      %v1011 = vld [vmem:[%s6] sm:$0x1]
      %v1012 = vld [vmem:[%s7] sm:$0x1]
      %v1013 = vsel %vm350, %v1009, 0.0
      %1014 = vadd.xlane.f32.xlu0 %v1013
      %v1015 = vpop.xlane.xlu0 %1014
      %v1016 = vsel %vm350, %v1010, 0.0
      %1017 = vadd.xlane.f32.xlu0 %v1016
      %v1018 = vpop.xlane.xlu0 %1017
      %v1019 = vrcp.pop 32.0
      %v1020 = vmul.f32 %v1015, %v1019
      %v1021 = vmul.f32 %v1018, %v1019
      %v1022 = vsub.f32 %v1009, %v1020
      %v1023 = vsub.f32 %v1010, %v1021
      %v1024 = vmul.f32 %v1022, %v1022
      %v1025 = vmul.f32 %v1023, %v1023
      %v1026 = vsel %vm350, %v1024, 0.0
      %1027 = vadd.xlane.f32.xlu0 %v1026
      %v1028 = vpop.xlane.xlu0 %1027
      %v1029 = vsel %vm350, %v1025, 0.0
      %1030 = vadd.xlane.f32.xlu0 %v1029
      %v1031 = vpop.xlane.xlu0 %1030
      %v1032 = vrcp.pop 31.0
      %v1033 = vmul.f32 %v1028, %v1032
      %v1034 = vmul.f32 %v1031, %v1032
      %v1035 = vrsqrt.pop %v1033
      %v1036 = vmul.f32 %v1033, %v1035
      %vm1037 = vcmp.eq.f32.partialorder %v1033, inf
      %v1038 = vsel %vm1037, %v1033, %v1036
      %vm1039 = vcmp.eq.f32.partialorder %v1033, 0.0
      %v1040 = vand.u32 %v1033, 2147483648
      %v1041 = vsel %vm1039, %v1040, %v1038
      %v1042 = vrsqrt.pop %v1034
      %v1043 = vmul.f32 %v1034, %v1042
      %vm1044 = vcmp.eq.f32.partialorder %v1034, inf
      %v1045 = vsel %vm1044, %v1034, %v1043
      %vm1046 = vcmp.eq.f32.partialorder %v1034, 0.0
      %v1047 = vand.u32 %v1034, 2147483648
      %v1048 = vsel %vm1046, %v1047, %v1045
      %v1049 = vadd.f32 %v1041, 1e-06
      %v1050 = vadd.f32 %v1048, 1e-06
      %v1051 = vrcp.pop %v1049
      %v1052 = vrcp.pop %v1050
      %v1053 = vmul.f32 %v1022, %v1051
      %v1054 = vmul.f32 %v1023, %v1052
      %v1056 = vlaneseq
      %v1057 = vshrl.u32 %v1056, 7
      %v1058 = vsub.s32 0, %v1057
      %v1059 = vrot.slane %v1011, %v1058
      %v1061 = vmul.f32 %v1059, %v1053
      %v1062 = vmul.f32 %v1059, %v1054
      %v1064 = vlaneseq
      %v1065 = vshrl.u32 %v1064, 7
      %v1066 = vsub.s32 0, %v1065
      %v1067 = vrot.slane %v1012, %v1066
      %v1069 = vadd.f32 %v1061, %v1067
      %v1070 = vadd.f32 %v1062, %v1067
      %1071 = vst.msk [vmem:[%s321] sm:$0xff] %vm350, %v1069
      %1072 = vst.msk [vmem:[%s321 + $0x8] sm:$0xff] %vm350, %v1070
      %s1073 = smul.u32 2, %s19
      %p1074 = scmp.lt.s32.totalorder %s1073, 3
      %s1075 = scalar_select %p1074, %s1073, 3
      %s1076 = smul.addr %s1075, 8
      %s1077 = scalar_lea.vmem %s8, %s1076
      // Predicated region
      $region53: #{forward.14} parent=51 // pred_check
        %p1078 = pneg %p215
      $region54: #{forward.14} parent=51 // pred_check_branch
        %1080 = sbr.rel (%p1078) target = $region56
      $region55: #{forward.14} parent=51 // pred_region
        %s1081 = smul.u32 2, %s19
      $region56: #{forward.14} parent=51 // pred_fallthru
        _
    $region52: #{forward.14} parent=5 // pred_fallthru
      _
    %p1082 = scmp.le.s32.totalorder 2, %s14
    // Predicated region
    $region57: #{forward.14} parent=5 // pred_check
      %p1083 = pneg %p1082
    $region58: #{forward.14} parent=5 // pred_check_branch
      %1085 = sbr.rel (%p1083) target = $region60
    $region59: #{forward.14} parent=5 // pred_region
      %s1086 = ssub.s32 %s14, 2
      // Predicated region
      $region61: #{forward.14} parent=59 // pred_check
        %p1087 = pneg %p221
      $region62: #{forward.14} parent=59 // pred_check_branch
        %1089 = sbr.rel (%p1087) target = $region64
      $region63: #{forward.14} parent=59 // pred_region
        %s1090 = smul.u32 2, %s20
        %p1091 = scmp.lt.s32.totalorder %s1090, 3
        %s1092 = scalar_select %p1091, %s1090, 3
        %s1093 = smul.addr %s1092, 8
        %s1094 = scalar_lea.vmem %s8, %s1093
      $region64: #{forward.14} parent=59 // pred_fallthru
        _
    $region60: #{forward.14} parent=5 // pred_fallthru
      _
  $region6: #{forward.14} parent=0 // loop_footer
    %s18 = sadd.s32 1, %s14
  $region7: #{forward.14} parent=0 // loop_footer_branch
    %13 = sbr.rel target = $region3
  $region8: #{forward.14} parent=0 // loop_exit
    _

// kernel: forward.15
$region0: #{forward.15}
  #allocation0 [shape = 'u32[]', space=smem, size = 0x4, offset = 0x4, fixed_abs, tag = 'smem constant byte address 0x4 - core index']
  #allocation1 [shape = 'u32[144,128]{1,0:T(1,128)}', space=vmem, size = 0x12000, scoped, tag = 'internal scratch']
  #allocation2 [shape = 'f32[16,32]{1,0:T(8,128)}', space=vmem, size = 0x2000, scoped, tag = 'scratch operand']
  %s0 = inlined_call_operand.vmem [shape: f32[32,32], index: 0, kind: input, shape index: {}]
  %s1 = inlined_call_operand.vmem [shape: f32[16,32], index: 1, kind: input, shape index: {}]
  %s2 = inlined_call_operand.vmem [shape: f32[2,1,8], index: 2, kind: input, shape index: {}]
  %s3 = inlined_call_operand.vmem [shape: bf16[32,32], index: 3, kind: input, shape index: {}]
  %s4 = inlined_call_operand.vmem [shape: f32[1,32], index: 4, kind: input, shape index: {}]
  %s5 = inlined_call_operand.vmem [shape: bf16[32,64], index: 5, kind: input, shape index: {}]
  %s6 = inlined_call_operand.vmem [shape: f32[1,64], index: 6, kind: input, shape index: {}]
  %s7 = inlined_call_operand.vmem [shape: bf16[32,32], index: 7, kind: input, shape index: {}]
  %s8 = inlined_call_operand.vmem [shape: f32[1,32], index: 8, kind: input, shape index: {}]
  %s9 = inlined_call_operand.vmem [shape: f32[1,32], index: 9, kind: input, shape index: {}]
  %s10 = inlined_call_operand.vmem [shape: f32[1,32], index: 10, kind: input, shape index: {}]
  %s11 = inlined_call_operand.vmem [shape: f32[32,32], index: 11, kind: output, shape index: {}]
  %s12 = sld [smem:[#allocation0]]
  $region77: #{forward.15} parent=0
    _
  %s14 = ssub.s32 1, %s12
  %s15 = scalar_select 0, %s14, %s12
  loop: start=0, step=1, limit=4
  $region2: #{forward.15} parent=0 // loop_pre_header
    _
  $region3: #{forward.15} parent=0 // loop_header
    %s17 = sphi 0, %s21
    %p18 = scmp.ge.s32.totalorder %s17, 4
    %s27 = sphi 0, %s29
    %s30 = sphi 0, %s27
    %s31 = sphi 0, %s30
    %s47 = sphi 0, %s31
    %s53 = sphi 0, %s55
    %s56 = sphi 0, %s53
    %s57 = sphi 0, %s56
    %s73 = sphi 0, %s57
    %s79 = sphi 0, %s81
    %s82 = sphi 0, %s79
    %s83 = sphi 0, %s82
    %s99 = sphi 0, %s83
    %s103 = sphi 0, %s103
    %s105 = sphi 0, %s103
    %s106 = sphi 0, %s105
    %s120 = sphi 0, %s106
    %s124 = sphi 0, %s124
    %s126 = sphi 0, %s124
    %s127 = sphi 0, %s126
    %s141 = sphi 0, %s127
    %s145 = sphi 0, %s145
    %s147 = sphi 0, %s145
    %s148 = sphi 0, %s147
    %s162 = sphi 0, %s148
    %s166 = sphi 0, %s166
    %s168 = sphi 0, %s166
    %s169 = sphi 0, %s168
    %s183 = sphi 0, %s169
    %s187 = sphi 0, %s187
    %s189 = sphi 0, %s187
    %s190 = sphi 0, %s189
    %s204 = sphi 0, %s190
    %s208 = sphi 0, %s208
    %s210 = sphi 0, %s208
    %s211 = sphi 0, %s210
    %s225 = sphi 0, %s211
    %s229 = sphi 0, %s229
    %s231 = sphi 0, %s229
    %s232 = sphi 0, %s231
    %s246 = sphi 0, %s232
    %s250 = sphi 0, %s250
    %s252 = sphi 0, %s250
    %s253 = sphi 0, %s252
    %s267 = sphi 0, %s253
    %s273 = sphi 0, %s275
    %s276 = sphi 0, %s273
    %s277 = sphi 0, %s276
    %s293 = sphi 0, %s277
  $region4: #{forward.15} parent=0 // loop_header_branch
    %20 = sbr.rel (%p18) target = $region8
  $region5: #{forward.15} parent=0 // loop_body
    %s22 = ssub.s32 %s17, 1
    %s23 = ssub.s32 %s17, 2
    %s24 = sadd.s32 %s17, 1
    %s25 = ssub.s32 %s17, %s24
    %p26 = scmp.eq.s32.totalorder %s25, 0
    %s28 = sadd.s32 %s27, 1
    %s29 = scalar_select %p26, %s27, %s28
    %p32 = pneg %p26
    %p33 = scmp.eq.s32.totalorder %s17, 1
    %p34 = por %p32, %p33
    %p35 = scmp.ne.s32.totalorder %s27, %s30
    %p36 = scmp.eq.s32.totalorder %s17, 0
    %p37 = por %p35, %p36
    %p38 = scmp.ne.s32.totalorder %s27, %s30
    %p39 = scmp.eq.s32.totalorder %s22, 1
    %p40 = por %p38, %p39
    %p41 = scmp.ne.s32.totalorder %s30, %s31
    %p42 = scmp.eq.s32.totalorder %s22, 0
    %p43 = por %p41, %p42
    %p44 = scmp.ne.s32.totalorder %s30, %s31
    %p45 = scmp.eq.s32.totalorder %s23, 1
    %p46 = por %p44, %p45
    %p48 = scmp.ne.s32.totalorder %s31, %s47
    %p49 = scmp.eq.s32.totalorder %s23, 0
    %p50 = por %p48, %p49
    %s51 = ssub.s32 %s17, %s24
    %p52 = scmp.eq.s32.totalorder %s51, 0
    %s54 = sadd.s32 %s53, 1
    %s55 = scalar_select %p52, %s53, %s54
    %p58 = pneg %p52
    %p59 = scmp.eq.s32.totalorder %s17, 1
    %p60 = por %p58, %p59
    %p61 = scmp.ne.s32.totalorder %s53, %s56
    %p62 = scmp.eq.s32.totalorder %s17, 0
    %p63 = por %p61, %p62
    %p64 = scmp.ne.s32.totalorder %s53, %s56
    %p65 = scmp.eq.s32.totalorder %s22, 1
    %p66 = por %p64, %p65
    %p67 = scmp.ne.s32.totalorder %s56, %s57
    %p68 = scmp.eq.s32.totalorder %s22, 0
    %p69 = por %p67, %p68
    %p70 = scmp.ne.s32.totalorder %s56, %s57
    %p71 = scmp.eq.s32.totalorder %s23, 1
    %p72 = por %p70, %p71
    %p74 = scmp.ne.s32.totalorder %s57, %s73
    %p75 = scmp.eq.s32.totalorder %s23, 0
    %p76 = por %p74, %p75
    %s77 = ssub.s32 %s17, %s24
    %p78 = scmp.eq.s32.totalorder %s77, 0
    %s80 = sadd.s32 %s79, 1
    %s81 = scalar_select %p78, %s79, %s80
    %p84 = pneg %p78
    %p85 = scmp.eq.s32.totalorder %s17, 1
    %p86 = por %p84, %p85
    %p87 = scmp.ne.s32.totalorder %s79, %s82
    %p88 = scmp.eq.s32.totalorder %s17, 0
    %p89 = por %p87, %p88
    %p90 = scmp.ne.s32.totalorder %s79, %s82
    %p91 = scmp.eq.s32.totalorder %s22, 1
    %p92 = por %p90, %p91
    %p93 = scmp.ne.s32.totalorder %s82, %s83
    %p94 = scmp.eq.s32.totalorder %s22, 0
    %p95 = por %p93, %p94
    %p96 = scmp.ne.s32.totalorder %s82, %s83
    %p97 = scmp.eq.s32.totalorder %s23, 1
    %p98 = por %p96, %p97
    %p100 = scmp.ne.s32.totalorder %s83, %s99
    %p101 = scmp.eq.s32.totalorder %s23, 0
    %p102 = por %p100, %p101
    %s104 = sadd.s32 %s103, 1
    %p107 = scmp.eq.s32.totalorder %s17, 1
    %p108 = scmp.ne.s32.totalorder %s103, %s105
    %p109 = scmp.eq.s32.totalorder %s17, 0
    %p110 = por %p108, %p109
    %p111 = scmp.ne.s32.totalorder %s103, %s105
    %p112 = scmp.eq.s32.totalorder %s22, 1
    %p113 = por %p111, %p112
    %p114 = scmp.ne.s32.totalorder %s105, %s106
    %p115 = scmp.eq.s32.totalorder %s22, 0
    %p116 = por %p114, %p115
    %p117 = scmp.ne.s32.totalorder %s105, %s106
    %p118 = scmp.eq.s32.totalorder %s23, 1
    %p119 = por %p117, %p118
    %p121 = scmp.ne.s32.totalorder %s106, %s120
    %p122 = scmp.eq.s32.totalorder %s23, 0
    %p123 = por %p121, %p122
    %s125 = sadd.s32 %s124, 1
    %p128 = scmp.eq.s32.totalorder %s17, 1
    %p129 = scmp.ne.s32.totalorder %s124, %s126
    %p130 = scmp.eq.s32.totalorder %s17, 0
    %p131 = por %p129, %p130
    %p132 = scmp.ne.s32.totalorder %s124, %s126
    %p133 = scmp.eq.s32.totalorder %s22, 1
    %p134 = por %p132, %p133
    %p135 = scmp.ne.s32.totalorder %s126, %s127
    %p136 = scmp.eq.s32.totalorder %s22, 0
    %p137 = por %p135, %p136
    %p138 = scmp.ne.s32.totalorder %s126, %s127
    %p139 = scmp.eq.s32.totalorder %s23, 1
    %p140 = por %p138, %p139
    %p142 = scmp.ne.s32.totalorder %s127, %s141
    %p143 = scmp.eq.s32.totalorder %s23, 0
    %p144 = por %p142, %p143
    %s146 = sadd.s32 %s145, 1
    %p149 = scmp.eq.s32.totalorder %s17, 1
    %p150 = scmp.ne.s32.totalorder %s145, %s147
    %p151 = scmp.eq.s32.totalorder %s17, 0
    %p152 = por %p150, %p151
    %p153 = scmp.ne.s32.totalorder %s145, %s147
    %p154 = scmp.eq.s32.totalorder %s22, 1
    %p155 = por %p153, %p154
    %p156 = scmp.ne.s32.totalorder %s147, %s148
    %p157 = scmp.eq.s32.totalorder %s22, 0
    %p158 = por %p156, %p157
    %p159 = scmp.ne.s32.totalorder %s147, %s148
    %p160 = scmp.eq.s32.totalorder %s23, 1
    %p161 = por %p159, %p160
    %p163 = scmp.ne.s32.totalorder %s148, %s162
    %p164 = scmp.eq.s32.totalorder %s23, 0
    %p165 = por %p163, %p164
    %s167 = sadd.s32 %s166, 1
    %p170 = scmp.eq.s32.totalorder %s17, 1
    %p171 = scmp.ne.s32.totalorder %s166, %s168
    %p172 = scmp.eq.s32.totalorder %s17, 0
    %p173 = por %p171, %p172
    %p174 = scmp.ne.s32.totalorder %s166, %s168
    %p175 = scmp.eq.s32.totalorder %s22, 1
    %p176 = por %p174, %p175
    %p177 = scmp.ne.s32.totalorder %s168, %s169
    %p178 = scmp.eq.s32.totalorder %s22, 0
    %p179 = por %p177, %p178
    %p180 = scmp.ne.s32.totalorder %s168, %s169
    %p181 = scmp.eq.s32.totalorder %s23, 1
    %p182 = por %p180, %p181
    %p184 = scmp.ne.s32.totalorder %s169, %s183
    %p185 = scmp.eq.s32.totalorder %s23, 0
    %p186 = por %p184, %p185
    %s188 = sadd.s32 %s187, 1
    %p191 = scmp.eq.s32.totalorder %s17, 1
    %p192 = scmp.ne.s32.totalorder %s187, %s189
    %p193 = scmp.eq.s32.totalorder %s17, 0
    %p194 = por %p192, %p193
    %p195 = scmp.ne.s32.totalorder %s187, %s189
    %p196 = scmp.eq.s32.totalorder %s22, 1
    %p197 = por %p195, %p196
    %p198 = scmp.ne.s32.totalorder %s189, %s190
    %p199 = scmp.eq.s32.totalorder %s22, 0
    %p200 = por %p198, %p199
    %p201 = scmp.ne.s32.totalorder %s189, %s190
    %p202 = scmp.eq.s32.totalorder %s23, 1
    %p203 = por %p201, %p202
    %p205 = scmp.ne.s32.totalorder %s190, %s204
    %p206 = scmp.eq.s32.totalorder %s23, 0
    %p207 = por %p205, %p206
    %s209 = sadd.s32 %s208, 1
    %p212 = scmp.eq.s32.totalorder %s17, 1
    %p213 = scmp.ne.s32.totalorder %s208, %s210
    %p214 = scmp.eq.s32.totalorder %s17, 0
    %p215 = por %p213, %p214
    %p216 = scmp.ne.s32.totalorder %s208, %s210
    %p217 = scmp.eq.s32.totalorder %s22, 1
    %p218 = por %p216, %p217
    %p219 = scmp.ne.s32.totalorder %s210, %s211
    %p220 = scmp.eq.s32.totalorder %s22, 0
    %p221 = por %p219, %p220
    %p222 = scmp.ne.s32.totalorder %s210, %s211
    %p223 = scmp.eq.s32.totalorder %s23, 1
    %p224 = por %p222, %p223
    %p226 = scmp.ne.s32.totalorder %s211, %s225
    %p227 = scmp.eq.s32.totalorder %s23, 0
    %p228 = por %p226, %p227
    %s230 = sadd.s32 %s229, 1
    %p233 = scmp.eq.s32.totalorder %s17, 1
    %p234 = scmp.ne.s32.totalorder %s229, %s231
    %p235 = scmp.eq.s32.totalorder %s17, 0
    %p236 = por %p234, %p235
    %p237 = scmp.ne.s32.totalorder %s229, %s231
    %p238 = scmp.eq.s32.totalorder %s22, 1
    %p239 = por %p237, %p238
    %p240 = scmp.ne.s32.totalorder %s231, %s232
    %p241 = scmp.eq.s32.totalorder %s22, 0
    %p242 = por %p240, %p241
    %p243 = scmp.ne.s32.totalorder %s231, %s232
    %p244 = scmp.eq.s32.totalorder %s23, 1
    %p245 = por %p243, %p244
    %p247 = scmp.ne.s32.totalorder %s232, %s246
    %p248 = scmp.eq.s32.totalorder %s23, 0
    %p249 = por %p247, %p248
    %s251 = sadd.s32 %s250, 1
    %p254 = scmp.eq.s32.totalorder %s17, 1
    %p255 = scmp.ne.s32.totalorder %s250, %s252
    %p256 = scmp.eq.s32.totalorder %s17, 0
    %p257 = por %p255, %p256
    %p258 = scmp.ne.s32.totalorder %s250, %s252
    %p259 = scmp.eq.s32.totalorder %s22, 1
    %p260 = por %p258, %p259
    %p261 = scmp.ne.s32.totalorder %s252, %s253
    %p262 = scmp.eq.s32.totalorder %s22, 0
    %p263 = por %p261, %p262
    %p264 = scmp.ne.s32.totalorder %s252, %s253
    %p265 = scmp.eq.s32.totalorder %s23, 1
    %p266 = por %p264, %p265
    %p268 = scmp.ne.s32.totalorder %s253, %s267
    %p269 = scmp.eq.s32.totalorder %s23, 0
    %p270 = por %p268, %p269
    %s271 = ssub.s32 %s17, %s24
    %p272 = scmp.eq.s32.totalorder %s271, 0
    %s274 = sadd.s32 %s273, 1
    %s275 = scalar_select %p272, %s273, %s274
    %p278 = pneg %p272
    %p279 = scmp.eq.s32.totalorder %s17, 1
    %p280 = por %p278, %p279
    %p281 = scmp.ne.s32.totalorder %s273, %s276
    %p282 = scmp.eq.s32.totalorder %s17, 0
    %p283 = por %p281, %p282
    %p284 = scmp.ne.s32.totalorder %s273, %s276
    %p285 = scmp.eq.s32.totalorder %s22, 1
    %p286 = por %p284, %p285
    %p287 = scmp.ne.s32.totalorder %s276, %s277
    %p288 = scmp.eq.s32.totalorder %s22, 0
    %p289 = por %p287, %p288
    %p290 = scmp.ne.s32.totalorder %s276, %s277
    %p291 = scmp.eq.s32.totalorder %s23, 1
    %p292 = por %p290, %p291
    %p294 = scmp.ne.s32.totalorder %s277, %s293
    %p295 = scmp.eq.s32.totalorder %s23, 0
    %p296 = por %p294, %p295
    %p297 = scmp.le.s32.totalorder 1, %s17
    %p298 = scmp.lt.s32.totalorder %s17, 3
    %p299 = pnand %p297, %p298
    %p300 = pneg %p299
    // Predicated region
    $region9: #{forward.15} parent=5 // pred_check
      _
    $region10: #{forward.15} parent=5 // pred_check_branch
      %302 = sbr.rel (%p299) target = $region12
    $region11: #{forward.15} parent=5 // pred_region
      %s303 = ssub.s32 %s17, 1
      // Predicated region
      $region13: #{forward.15} parent=11 // pred_check
        %p304 = pneg %p116
      $region14: #{forward.15} parent=11 // pred_check_branch
        %306 = sbr.rel (%p304) target = $region16
      $region15: #{forward.15} parent=11 // pred_region
        _
      $region16: #{forward.15} parent=11 // pred_fallthru
        _
      // Predicated region
      $region17: #{forward.15} parent=11 // pred_check
        %p307 = pneg %p137
      $region18: #{forward.15} parent=11 // pred_check_branch
        %309 = sbr.rel (%p307) target = $region20
      $region19: #{forward.15} parent=11 // pred_region
        _
      $region20: #{forward.15} parent=11 // pred_fallthru
        _
      // Predicated region
      $region21: #{forward.15} parent=11 // pred_check
        %p310 = pneg %p158
      $region22: #{forward.15} parent=11 // pred_check_branch
        %312 = sbr.rel (%p310) target = $region24
      $region23: #{forward.15} parent=11 // pred_region
        _
      $region24: #{forward.15} parent=11 // pred_fallthru
        _
      // Predicated region
      $region25: #{forward.15} parent=11 // pred_check
        %p313 = pneg %p179
      $region26: #{forward.15} parent=11 // pred_check_branch
        %315 = sbr.rel (%p313) target = $region28
      $region27: #{forward.15} parent=11 // pred_region
        _
      $region28: #{forward.15} parent=11 // pred_fallthru
        _
      // Predicated region
      $region29: #{forward.15} parent=11 // pred_check
        %p316 = pneg %p200
      $region30: #{forward.15} parent=11 // pred_check_branch
        %318 = sbr.rel (%p316) target = $region32
      $region31: #{forward.15} parent=11 // pred_region
        _
      $region32: #{forward.15} parent=11 // pred_fallthru
        _
      // Predicated region
      $region33: #{forward.15} parent=11 // pred_check
        %p319 = pneg %p221
      $region34: #{forward.15} parent=11 // pred_check_branch
        %321 = sbr.rel (%p319) target = $region36
      $region35: #{forward.15} parent=11 // pred_region
        _
      $region36: #{forward.15} parent=11 // pred_fallthru
        _
      // Predicated region
      $region37: #{forward.15} parent=11 // pred_check
        %p322 = pneg %p242
      $region38: #{forward.15} parent=11 // pred_check_branch
        %324 = sbr.rel (%p322) target = $region40
      $region39: #{forward.15} parent=11 // pred_region
        _
      $region40: #{forward.15} parent=11 // pred_fallthru
        _
      // Predicated region
      $region41: #{forward.15} parent=11 // pred_check
        %p325 = pneg %p263
      $region42: #{forward.15} parent=11 // pred_check_branch
        %327 = sbr.rel (%p325) target = $region44
      $region43: #{forward.15} parent=11 // pred_region
        _
      $region44: #{forward.15} parent=11 // pred_fallthru
        _
    $region12: #{forward.15} parent=5 // pred_fallthru
      _
    %p328 = scmp.lt.s32.totalorder %s17, 2
    // Predicated region
    $region45: #{forward.15} parent=5 // pred_check
      %p329 = pneg %p328
    $region46: #{forward.15} parent=5 // pred_check_branch
      %331 = sbr.rel (%p329) target = $region48
    $region47: #{forward.15} parent=5 // pred_region
      // Predicated region
      $region49: #{forward.15} parent=47 // pred_check
        %p332 = pneg %p37
      $region50: #{forward.15} parent=47 // pred_check_branch
        %334 = sbr.rel (%p332) target = $region52
      $region51: #{forward.15} parent=47 // pred_region
        %s335 = smul.u32 2, %s17
        %p336 = scmp.lt.s32.totalorder %s335, 3
        %s337 = scalar_select %p336, %s335, 3
        %s338 = smul.addr %s337, 8
        %s339 = scalar_lea.vmem %s0, %s338
        %s340 = smul.u32 2, %s17
      $region52: #{forward.15} parent=47 // pred_fallthru
        _
      // Predicated region
      $region53: #{forward.15} parent=47 // pred_check
        %p341 = pneg %p63
      $region54: #{forward.15} parent=47 // pred_check_branch
        %343 = sbr.rel (%p341) target = $region56
      $region55: #{forward.15} parent=47 // pred_region
        %p344 = scmp.lt.s32.totalorder %s17, 1
        %s345 = scalar_select %p344, %s17, 1
        %s346 = smul.addr %s345, 8
        %s347 = scalar_lea.vmem %s1, %s346
      $region56: #{forward.15} parent=47 // pred_fallthru
        _
      // Predicated region
      $region57: #{forward.15} parent=47 // pred_check
        %p348 = pneg %p89
      $region58: #{forward.15} parent=47 // pred_check_branch
        %350 = sbr.rel (%p348) target = $region60
      $region59: #{forward.15} parent=47 // pred_region
        %p351 = scmp.lt.s32.totalorder %s17, 1
        %s352 = scalar_select %p351, %s17, 1
        %s353 = scalar_lea.vmem %s2, %s352
      $region60: #{forward.15} parent=47 // pred_fallthru
        _
    $region48: #{forward.15} parent=5 // pred_fallthru
      _
    %p354 = scmp.le.s32.totalorder 1, %s17
    %p355 = scmp.lt.s32.totalorder %s17, 3
    %p356 = pnand %p354, %p355
    %p357 = pneg %p356
    // Predicated region
    $region61: #{forward.15} parent=5 // pred_check
      _
    $region62: #{forward.15} parent=5 // pred_check_branch
      %359 = sbr.rel (%p356) target = $region64
    $region63: #{forward.15} parent=5 // pred_region
      %s360 = ssub.s32 %s17, 1
      %s361 = smul.u32 2, %s22
      %p362 = scmp.lt.s32.totalorder %s361, 3
      %s363 = scalar_select %p362, %s361, 3
      %s364 = smul.addr %s363, 8
      %s365 = scalar_lea.vmem %s0, %s364
      %p366 = pneg %p43
      %p367 = pneg %p40
      %p368 = scmp.lt.s32.totalorder %s22, 1
      %s369 = scalar_select %p368, %s22, 1
      %s370 = smul.addr %s369, 8
      %s371 = scalar_lea.vmem %s1, %s370
      %p372 = pneg %p69
      %p373 = pneg %p66
      %p374 = scmp.lt.s32.totalorder %s22, 1
      %s375 = scalar_select %p374, %s22, 1
      %s376 = scalar_lea.vmem %s2, %s375
      %p377 = pneg %p95
      %p378 = pneg %p92
      %p379 = pneg %p116
      %p380 = pneg %p113
      %p381 = pneg %p137
      %p382 = pneg %p134
      %p383 = pneg %p158
      %p384 = pneg %p155
      %p385 = pneg %p179
      %p386 = pneg %p176
      %p387 = pneg %p200
      %p388 = pneg %p197
      %p389 = pneg %p221
      %p390 = pneg %p218
      %p391 = pneg %p242
      %p392 = pneg %p239
      %p393 = pneg %p263
      %p394 = pneg %p260
      %p395 = pneg %p289
      %p396 = pneg %p286
      %s397 = smul.u32 2, %s22
      %p398 = scmp.lt.s32.totalorder %s397, 3
      %s399 = scalar_select %p398, %s397, 3
      %s400 = smul.addr %s399, 8
      %s401 = scalar_lea.vmem %s11, %s400
      %s402 = smul.u32 2, %s22
      %p403 = scmp.lt.s32.totalorder %s402, 3
      %s404 = scalar_select %p403, %s402, 3
      %s405 = smul.addr %s404, 8
      %s406 = scalar_lea.vmem %s0, %s405
      %s407 = smul.u32 2, %s22
      %p408 = scmp.lt.s32.totalorder %s22, 1
      %s409 = scalar_select %p408, %s22, 1
      %s410 = smul.addr %s409, 8
      %s411 = scalar_lea.vmem %s1, %s410
      %p412 = scmp.lt.s32.totalorder %s22, 1
      %s413 = scalar_select %p412, %s22, 1
      %s414 = scalar_lea.vmem %s2, %s413
      %s415 = smul.u32 2, %s22
      %p416 = scmp.lt.s32.totalorder %s415, 3
      %s417 = scalar_select %p416, %s415, 3
      %s418 = smul.addr %s417, 8
      %s419 = scalar_lea.vmem %s11, %s418
      %s420 = smul.u32 2, %s22
      %v422 = vld [vmem:[%s406] sm:$0xff]
      %v423 = vld [vmem:[%s406 + $0x8] sm:$0xff]
      %v424 = vld [vmem:[%s411] sm:$0xff]
      %v425 = vpack.c.bf16 %v423, %v422
      %v426 = vld [vmem:[%s3] sm:$0xf]
      %v427 = vld [vmem:[%s3 + $0x4] sm:$0xf]
      %v428 = vld [vmem:[%s3 + $0x8] sm:$0xf]
      %v429 = vld [vmem:[%s3 + $0xc] sm:$0xf]
      %v430 = vld [vmem:[%s4] sm:$0x1]
      %v432 = vlaneseq
      %v433 = vshrl.u32 %v432, 7
      %v434 = vsub.s32 0, %v433
      %v435 = vrot.slane %v430, %v434
      %v441 = vunpack.c.l.b16 %v426
      %v442 = vunpack.c.l.b16 %v427
      %v443 = vunpack.c.l.b16 %v428
      %v444 = vunpack.c.l.b16 %v429
      %v445 = vpack.c.b16 %v442, %v441
      %v446 = vpack.c.b16 %v444, %v443
      %vm449 = vcmask 261120
      %v451 = vsel %vm449, %v425, 0
      %453 = vmatprep.subr.bf16.mxu0 0
      %454 = vmatpush1.bf16.msra.mxu0 %v445
      %455 = vmatprep.subr.bf16.mxu0 0
      %456 = vmatpush1.bf16.msra.mxu0 %v446
      %457 = vmatprep.subr.bf16.mxu0 0
      %458 = vmatpush1.bf16.msra.mxu0 0
      %459 = vmatprep.subr.bf16.mxu0 0
      %460 = vmatpush1.bf16.msra.mxu0 0
      %461 = vmatprep.subr.bf16.mxu0 0
      %462 = vmatpush1.bf16.msra.mxu0 0
      %463 = vmatprep.subr.bf16.mxu0 0
      %464 = vmatpush1.bf16.msra.mxu0 0
      %465 = vmatprep.subr.bf16.mxu0 0
      %466 = vmatpush1.bf16.msra.mxu0 0
      %467 = vmatprep.subr.bf16.mxu0 0
      %468 = vmatpush1.bf16.msra.mxu0 0
      %469 = vmatprep.subr.bf16.mxu0 0
      %470 = vmatpush1.bf16.msra.mxu0 0
      %471 = vmatprep.subr.bf16.mxu0 0
      %472 = vmatpush1.bf16.msra.mxu0 0
      %473 = vmatprep.subr.bf16.mxu0 0
      %474 = vmatpush1.bf16.msra.mxu0 0
      %475 = vmatprep.subr.bf16.mxu0 0
      %476 = vmatpush1.bf16.msra.mxu0 0
      %477 = vmatprep.subr.bf16.mxu0 0
      %478 = vmatpush1.bf16.msra.mxu0 0
      %479 = vmatprep.subr.bf16.mxu0 0
      %480 = vmatpush1.bf16.msra.mxu0 0
      %481 = vmatprep.subr.bf16.mxu0 0
      %482 = vmatpush1.bf16.msra.mxu0 0
      %483 = vmatprep.subr.bf16.mxu0 0
      %484 = vmatpush1.bf16.msra.mxu0 0
      %485 = vmatprep.mubr.bf16.mxu0 0
      %486 = vmatmul.mubr.bf16.gmra.mrb[0].mxu0 %v451
      %v487 = vpop.f32.mrb[0].mxu0
      %v488 = vadd.f32 %v435, %v487
      %v489 = vpop.f32.mrb[0].mxu0
      %v490 = vpop.f32.mrb[0].mxu0
      %v491 = vadd.f32 %v435, %v490
      %v492 = vpop.f32.mrb[0].mxu0
      %493 = vdwg.mxu0
      %v494 = vpack.c.bf16 %v424, %v424
      %v495 = vld [vmem:[%s5] sm:$0xf]
      %v496 = vld [vmem:[%s5 + $0x4] sm:$0xf]
      %v497 = vld [vmem:[%s5 + $0x8] sm:$0xf]
      %v498 = vld [vmem:[%s5 + $0xc] sm:$0xf]
      %v499 = vld [vmem:[%s6] sm:$0x1]
      %v501 = vlaneseq
      %v502 = vshrl.u32 %v501, 7
      %v503 = vsub.s32 0, %v502
      %v504 = vrot.slane %v499, %v503
      %v510 = vunpack.c.l.b16 %v495
      %v511 = vunpack.c.l.b16 %v496
      %v512 = vunpack.c.l.b16 %v497
      %v513 = vunpack.c.l.b16 %v498
      %v514 = vpack.c.b16 %v511, %v510
      %v515 = vpack.c.b16 %v513, %v512
      %v519 = vsel %vm449, %v494, 0
      %521 = vmatprep.subr.bf16.mxu0 0
      %522 = vmatpush1.bf16.msra.mxu0 %v514
      %523 = vmatprep.subr.bf16.mxu0 0
      %524 = vmatpush1.bf16.msra.mxu0 %v515
      %525 = vmatprep.subr.bf16.mxu0 0
      %526 = vmatpush1.bf16.msra.mxu0 0
      %527 = vmatprep.subr.bf16.mxu0 0
      %528 = vmatpush1.bf16.msra.mxu0 0
      %529 = vmatprep.subr.bf16.mxu0 0
      %530 = vmatpush1.bf16.msra.mxu0 0
      %531 = vmatprep.subr.bf16.mxu0 0
      %532 = vmatpush1.bf16.msra.mxu0 0
      %533 = vmatprep.subr.bf16.mxu0 0
      %534 = vmatpush1.bf16.msra.mxu0 0
      %535 = vmatprep.subr.bf16.mxu0 0
      %536 = vmatpush1.bf16.msra.mxu0 0
      %537 = vmatprep.subr.bf16.mxu0 0
      %538 = vmatpush1.bf16.msra.mxu0 0
      %539 = vmatprep.subr.bf16.mxu0 0
      %540 = vmatpush1.bf16.msra.mxu0 0
      %541 = vmatprep.subr.bf16.mxu0 0
      %542 = vmatpush1.bf16.msra.mxu0 0
      %543 = vmatprep.subr.bf16.mxu0 0
      %544 = vmatpush1.bf16.msra.mxu0 0
      %545 = vmatprep.subr.bf16.mxu0 0
      %546 = vmatpush1.bf16.msra.mxu0 0
      %547 = vmatprep.subr.bf16.mxu0 0
      %548 = vmatpush1.bf16.msra.mxu0 0
      %549 = vmatprep.subr.bf16.mxu0 0
      %550 = vmatpush1.bf16.msra.mxu0 0
      %551 = vmatprep.subr.bf16.mxu0 0
      %552 = vmatpush1.bf16.msra.mxu0 0
      %553 = vmatprep.mubr.bf16.mxu0 0
      %554 = vmatmul.mubr.bf16.gmra.mrb[0].mxu0 %v519
      %v555 = vpop.f32.mrb[0].mxu0
      %v556 = vadd.f32 %v504, %v555
      %v557 = vpop.f32.mrb[0].mxu0
      %v558 = vpop.f32.mrb[0].mxu0
      %v559 = vpop.f32.mrb[0].mxu0
      %560 = vdwg.mxu0
      %v561 = vld [vmem:[%s414] sm:$0x1]
      %v562 = vpack.c.bf16 %v491, %v488
      %v563 = vpack.c.bf16 %v556, %v556
      %vm564 = vcmask 64512
      %v566 = vsel %vm564, %v562, 0
      %v569 = vsel %vm564, %v563, 0
      %571 = vmatprep.subr.bf16.mxu0 0
      %572 = vmatpush1.bf16.xpose.msra.mxu0 %v569
      %573 = vmatprep.subr.bf16.mxu0 0
      %574 = vmatpush1.bf16.xpose.msra.mxu0 0
      %575 = vmatprep.subr.bf16.mxu0 0
      %576 = vmatpush1.bf16.xpose.msra.mxu0 0
      %577 = vmatprep.subr.bf16.mxu0 0
      %578 = vmatpush1.bf16.xpose.msra.mxu0 0
      %579 = vmatprep.subr.bf16.mxu0 0
      %580 = vmatpush1.bf16.xpose.msra.mxu0 0
      %581 = vmatprep.subr.bf16.mxu0 0
      %582 = vmatpush1.bf16.xpose.msra.mxu0 0
      %583 = vmatprep.subr.bf16.mxu0 0
      %584 = vmatpush1.bf16.xpose.msra.mxu0 0
      %585 = vmatprep.subr.bf16.mxu0 0
      %586 = vmatpush1.bf16.xpose.msra.mxu0 0
      %587 = vmatprep.subr.bf16.mxu0 0
      %588 = vmatpush1.bf16.xpose.msra.mxu0 0
      %589 = vmatprep.subr.bf16.mxu0 0
      %590 = vmatpush1.bf16.xpose.msra.mxu0 0
      %591 = vmatprep.subr.bf16.mxu0 0
      %592 = vmatpush1.bf16.xpose.msra.mxu0 0
      %593 = vmatprep.subr.bf16.mxu0 0
      %594 = vmatpush1.bf16.xpose.msra.mxu0 0
      %595 = vmatprep.subr.bf16.mxu0 0
      %596 = vmatpush1.bf16.xpose.msra.mxu0 0
      %597 = vmatprep.subr.bf16.mxu0 0
      %598 = vmatpush1.bf16.xpose.msra.mxu0 0
      %599 = vmatprep.subr.bf16.mxu0 0
      %600 = vmatpush1.bf16.xpose.msra.mxu0 0
      %601 = vmatprep.subr.bf16.mxu0 0
      %602 = vmatpush1.bf16.xpose.msra.mxu0 0
      %603 = vmatprep.mubr.bf16.mxu0 0
      %604 = vmatmul.mubr.bf16.gmra.mrb[0].mxu0 %v566
      %v605 = vpop.f32.mrb[0].mxu0
      %v606 = vadd.f32 0.0, %v605
      %v607 = vpop.f32.mrb[0].mxu0
      %v608 = vpop.f32.mrb[0].mxu0
      %v609 = vadd.f32 0.0, %v608
      %v610 = vpop.f32.mrb[0].mxu0
      %611 = vdwg.mxu0
      %v612 = vmul.f32 %v606, 0.35355338
      %v613 = vmul.f32 %v609, 0.35355338
      %v615 = vlaneseq
      %v616 = vshrl.u32 %v615, 7
      %v617 = vsub.s32 0, %v616
      %v618 = vrot.slane %v561, %v617
      %v620 = vadd.f32 %v612, %v618
      %v621 = vadd.f32 %v613, %v618
      %v622 = vsel %vm564, %v620, -inf
      %623 = vmax.xlane.f32.xlu0 %v622
      %v624 = vpop.xlane.xlu0 %623
      %v625 = vsel %vm564, %v621, -inf
      %626 = vmax.xlane.f32.xlu0 %v625
      %v627 = vpop.xlane.xlu0 %626
      %v628 = vsub.f32 %v620, %v624
      %v629 = vsub.f32 %v621, %v627
      %v630 = vmul.f32 %v628, 1.442695
      %v631 = vpow.pop %v630
      %v632 = vmul.f32 %v629, 1.442695
      %v633 = vpow.pop %v632
      %v634 = vsel %vm564, %v631, 0.0
      %635 = vadd.xlane.f32.xlu0 %v634
      %v636 = vpop.xlane.xlu0 %635
      %v637 = vsel %vm564, %v633, 0.0
      %638 = vadd.xlane.f32.xlu0 %v637
      %v639 = vpop.xlane.xlu0 %638
      %v640 = vrcp.pop %v636
      %v641 = vrcp.pop %v639
      %v642 = vmul.f32 %v631, %v640
      %v643 = vmul.f32 %v633, %v641
      %v644 = vpack.c.bf16 %v643, %v642
      %646 = vrot.lane.b32.xlu0 %v563, 96
      %v647 = vpop.permute.xlu0 %646
      %v649 = vsel %vm564, %v644, 0
      %vm651 = vcmask 1043456
      %v653 = vsel %vm651, %v647, 0
      %655 = vmatprep.subr.bf16.mxu0 0
      %656 = vmatpush1.bf16.msra.mxu0 %v653
      %657 = vmatprep.subr.bf16.mxu0 0
      %658 = vmatpush1.bf16.msra.mxu0 0
      %659 = vmatprep.subr.bf16.mxu0 0
      %660 = vmatpush1.bf16.msra.mxu0 0
      %661 = vmatprep.subr.bf16.mxu0 0
      %662 = vmatpush1.bf16.msra.mxu0 0
      %663 = vmatprep.subr.bf16.mxu0 0
      %664 = vmatpush1.bf16.msra.mxu0 0
      %665 = vmatprep.subr.bf16.mxu0 0
      %666 = vmatpush1.bf16.msra.mxu0 0
      %667 = vmatprep.subr.bf16.mxu0 0
      %668 = vmatpush1.bf16.msra.mxu0 0
      %669 = vmatprep.subr.bf16.mxu0 0
      %670 = vmatpush1.bf16.msra.mxu0 0
      %671 = vmatprep.subr.bf16.mxu0 0
      %672 = vmatpush1.bf16.msra.mxu0 0
      %673 = vmatprep.subr.bf16.mxu0 0
      %674 = vmatpush1.bf16.msra.mxu0 0
      %675 = vmatprep.subr.bf16.mxu0 0
      %676 = vmatpush1.bf16.msra.mxu0 0
      %677 = vmatprep.subr.bf16.mxu0 0
      %678 = vmatpush1.bf16.msra.mxu0 0
      %679 = vmatprep.subr.bf16.mxu0 0
      %680 = vmatpush1.bf16.msra.mxu0 0
      %681 = vmatprep.subr.bf16.mxu0 0
      %682 = vmatpush1.bf16.msra.mxu0 0
      %683 = vmatprep.subr.bf16.mxu0 0
      %684 = vmatpush1.bf16.msra.mxu0 0
      %685 = vmatprep.subr.bf16.mxu0 0
      %686 = vmatpush1.bf16.msra.mxu0 0
      %687 = vmatprep.mubr.bf16.mxu0 0
      %688 = vmatmul.mubr.bf16.gmra.mrb[0].mxu0 %v649
      %v689 = vpop.f32.mrb[0].mxu0
      %v690 = vadd.f32 0.0, %v689
      %v691 = vpop.f32.mrb[0].mxu0
      %v692 = vpop.f32.mrb[0].mxu0
      %v693 = vadd.f32 0.0, %v692
      %v694 = vpop.f32.mrb[0].mxu0
      %695 = vdwg.mxu0
      %696 = vst.msk [vmem:[#allocation2] sm:$0xff] %vm564, %v690
      %697 = vst.msk [vmem:[#allocation2 + $0x8] sm:$0xff] %vm564, %v693
      %699 = vrot.lane.b32.xlu0 %v562, 120
      %v700 = vpop.permute.xlu0 %699
      %701 = vrot.lane.b32.xlu0 %v563, 120
      %v702 = vpop.permute.xlu0 %701
      %v704 = vsel %vm564, %v700, 0
      %v707 = vsel %vm564, %v702, 0
      %709 = vmatprep.subr.bf16.mxu0 0
      %710 = vmatpush1.bf16.xpose.msra.mxu0 %v707
      %711 = vmatprep.subr.bf16.mxu0 0
      %712 = vmatpush1.bf16.xpose.msra.mxu0 0
      %713 = vmatprep.subr.bf16.mxu0 0
      %714 = vmatpush1.bf16.xpose.msra.mxu0 0
      %715 = vmatprep.subr.bf16.mxu0 0
      %716 = vmatpush1.bf16.xpose.msra.mxu0 0
      %717 = vmatprep.subr.bf16.mxu0 0
      %718 = vmatpush1.bf16.xpose.msra.mxu0 0
      %719 = vmatprep.subr.bf16.mxu0 0
      %720 = vmatpush1.bf16.xpose.msra.mxu0 0
      %721 = vmatprep.subr.bf16.mxu0 0
      %722 = vmatpush1.bf16.xpose.msra.mxu0 0
      %723 = vmatprep.subr.bf16.mxu0 0
      %724 = vmatpush1.bf16.xpose.msra.mxu0 0
      %725 = vmatprep.subr.bf16.mxu0 0
      %726 = vmatpush1.bf16.xpose.msra.mxu0 0
      %727 = vmatprep.subr.bf16.mxu0 0
      %728 = vmatpush1.bf16.xpose.msra.mxu0 0
      %729 = vmatprep.subr.bf16.mxu0 0
      %730 = vmatpush1.bf16.xpose.msra.mxu0 0
      %731 = vmatprep.subr.bf16.mxu0 0
      %732 = vmatpush1.bf16.xpose.msra.mxu0 0
      %733 = vmatprep.subr.bf16.mxu0 0
      %734 = vmatpush1.bf16.xpose.msra.mxu0 0
      %735 = vmatprep.subr.bf16.mxu0 0
      %736 = vmatpush1.bf16.xpose.msra.mxu0 0
      %737 = vmatprep.subr.bf16.mxu0 0
      %738 = vmatpush1.bf16.xpose.msra.mxu0 0
      %739 = vmatprep.subr.bf16.mxu0 0
      %740 = vmatpush1.bf16.xpose.msra.mxu0 0
      %741 = vmatprep.mubr.bf16.mxu0 0
      %742 = vmatmul.mubr.bf16.gmra.mrb[0].mxu0 %v704
      %v743 = vpop.f32.mrb[0].mxu0
      %v744 = vadd.f32 0.0, %v743
      %v745 = vpop.f32.mrb[0].mxu0
      %v746 = vpop.f32.mrb[0].mxu0
      %v747 = vadd.f32 0.0, %v746
      %v748 = vpop.f32.mrb[0].mxu0
      %749 = vdwg.mxu0
      %v750 = vmul.f32 %v744, 0.35355338
      %v751 = vmul.f32 %v747, 0.35355338
      %v752 = vadd.f32 %v750, %v618
      %v753 = vadd.f32 %v751, %v618
      %v754 = vsel %vm564, %v752, -inf
      %755 = vmax.xlane.f32.xlu0 %v754
      %v756 = vpop.xlane.xlu0 %755
      %v757 = vsel %vm564, %v753, -inf
      %758 = vmax.xlane.f32.xlu0 %v757
      %v759 = vpop.xlane.xlu0 %758
      %v760 = vsub.f32 %v752, %v756
      %v761 = vsub.f32 %v753, %v759
      %v762 = vmul.f32 %v760, 1.442695
      %v763 = vpow.pop %v762
      %v764 = vmul.f32 %v761, 1.442695
      %v765 = vpow.pop %v764
      %v766 = vsel %vm564, %v763, 0.0
      %767 = vadd.xlane.f32.xlu0 %v766
      %v768 = vpop.xlane.xlu0 %767
      %v769 = vsel %vm564, %v765, 0.0
      %770 = vadd.xlane.f32.xlu0 %v769
      %v771 = vpop.xlane.xlu0 %770
      %v772 = vrcp.pop %v768
      %v773 = vrcp.pop %v771
      %v774 = vmul.f32 %v763, %v772
      %v775 = vmul.f32 %v765, %v773
      %v776 = vpack.c.bf16 %v775, %v774
      %777 = vrot.lane.b32.xlu0 %v563, 88
      %v778 = vpop.permute.xlu0 %777
      %v780 = vsel %vm564, %v776, 0
      %v783 = vsel %vm651, %v778, 0
      %785 = vmatprep.subr.bf16.mxu0 0
      %786 = vmatpush1.bf16.msra.mxu0 %v783
      %787 = vmatprep.subr.bf16.mxu0 0
      %788 = vmatpush1.bf16.msra.mxu0 0
      %789 = vmatprep.subr.bf16.mxu0 0
      %790 = vmatpush1.bf16.msra.mxu0 0
      %791 = vmatprep.subr.bf16.mxu0 0
      %792 = vmatpush1.bf16.msra.mxu0 0
      %793 = vmatprep.subr.bf16.mxu0 0
      %794 = vmatpush1.bf16.msra.mxu0 0
      %795 = vmatprep.subr.bf16.mxu0 0
      %796 = vmatpush1.bf16.msra.mxu0 0
      %797 = vmatprep.subr.bf16.mxu0 0
      %798 = vmatpush1.bf16.msra.mxu0 0
      %799 = vmatprep.subr.bf16.mxu0 0
      %800 = vmatpush1.bf16.msra.mxu0 0
      %801 = vmatprep.subr.bf16.mxu0 0
      %802 = vmatpush1.bf16.msra.mxu0 0
      %803 = vmatprep.subr.bf16.mxu0 0
      %804 = vmatpush1.bf16.msra.mxu0 0
      %805 = vmatprep.subr.bf16.mxu0 0
      %806 = vmatpush1.bf16.msra.mxu0 0
      %807 = vmatprep.subr.bf16.mxu0 0
      %808 = vmatpush1.bf16.msra.mxu0 0
      %809 = vmatprep.subr.bf16.mxu0 0
      %810 = vmatpush1.bf16.msra.mxu0 0
      %811 = vmatprep.subr.bf16.mxu0 0
      %812 = vmatpush1.bf16.msra.mxu0 0
      %813 = vmatprep.subr.bf16.mxu0 0
      %814 = vmatpush1.bf16.msra.mxu0 0
      %815 = vmatprep.subr.bf16.mxu0 0
      %816 = vmatpush1.bf16.msra.mxu0 0
      %817 = vmatprep.mubr.bf16.mxu0 0
      %818 = vmatmul.mubr.bf16.gmra.mrb[0].mxu0 %v780
      %v819 = vpop.f32.mrb[0].mxu0
      %v820 = vadd.f32 0.0, %v819
      %v821 = vpop.f32.mrb[0].mxu0
      %v822 = vpop.f32.mrb[0].mxu0
      %v823 = vadd.f32 0.0, %v822
      %v824 = vpop.f32.mrb[0].mxu0
      %825 = vdwg.mxu0
      %828 = vrot.lane.b32.xlu0 %v820, 8
      %v829 = vpop.permute.xlu0 %828
      %830 = vrot.lane.b32.xlu0 %v823, 8
      %v831 = vpop.permute.xlu0 %830
      %vm834 = vcmask 130112
      %835 = vst.msk [vmem:[#allocation2] sm:$0xff] %vm834, %v829
      %836 = vst.msk [vmem:[#allocation2 + $0x8] sm:$0xff] %vm834, %v831
      %837 = vrot.lane.b32.xlu0 %v562, 112
      %v838 = vpop.permute.xlu0 %837
      %839 = vrot.lane.b32.xlu0 %v563, 112
      %v840 = vpop.permute.xlu0 %839
      %v842 = vsel %vm564, %v838, 0
      %v845 = vsel %vm564, %v840, 0
      %847 = vmatprep.subr.bf16.mxu0 0
      %848 = vmatpush1.bf16.xpose.msra.mxu0 %v845
      %849 = vmatprep.subr.bf16.mxu0 0
      %850 = vmatpush1.bf16.xpose.msra.mxu0 0
      %851 = vmatprep.subr.bf16.mxu0 0
      %852 = vmatpush1.bf16.xpose.msra.mxu0 0
      %853 = vmatprep.subr.bf16.mxu0 0
      %854 = vmatpush1.bf16.xpose.msra.mxu0 0
      %855 = vmatprep.subr.bf16.mxu0 0
      %856 = vmatpush1.bf16.xpose.msra.mxu0 0
      %857 = vmatprep.subr.bf16.mxu0 0
      %858 = vmatpush1.bf16.xpose.msra.mxu0 0
      %859 = vmatprep.subr.bf16.mxu0 0
      %860 = vmatpush1.bf16.xpose.msra.mxu0 0
      %861 = vmatprep.subr.bf16.mxu0 0
      %862 = vmatpush1.bf16.xpose.msra.mxu0 0
      %863 = vmatprep.subr.bf16.mxu0 0
      %864 = vmatpush1.bf16.xpose.msra.mxu0 0
      %865 = vmatprep.subr.bf16.mxu0 0
      %866 = vmatpush1.bf16.xpose.msra.mxu0 0
      %867 = vmatprep.subr.bf16.mxu0 0
      %868 = vmatpush1.bf16.xpose.msra.mxu0 0
      %869 = vmatprep.subr.bf16.mxu0 0
      %870 = vmatpush1.bf16.xpose.msra.mxu0 0
      %871 = vmatprep.subr.bf16.mxu0 0
      %872 = vmatpush1.bf16.xpose.msra.mxu0 0
      %873 = vmatprep.subr.bf16.mxu0 0
      %874 = vmatpush1.bf16.xpose.msra.mxu0 0
      %875 = vmatprep.subr.bf16.mxu0 0
      %876 = vmatpush1.bf16.xpose.msra.mxu0 0
      %877 = vmatprep.subr.bf16.mxu0 0
      %878 = vmatpush1.bf16.xpose.msra.mxu0 0
      %879 = vmatprep.mubr.bf16.mxu0 0
      %880 = vmatmul.mubr.bf16.gmra.mrb[0].mxu0 %v842
      %v881 = vpop.f32.mrb[0].mxu0
      %v882 = vadd.f32 0.0, %v881
      %v883 = vpop.f32.mrb[0].mxu0
      %v884 = vpop.f32.mrb[0].mxu0
      %v885 = vadd.f32 0.0, %v884
      %v886 = vpop.f32.mrb[0].mxu0
      %887 = vdwg.mxu0
      %v888 = vmul.f32 %v882, 0.35355338
      %v889 = vmul.f32 %v885, 0.35355338
      %v890 = vadd.f32 %v888, %v618
      %v891 = vadd.f32 %v889, %v618
      %v892 = vsel %vm564, %v890, -inf
      %893 = vmax.xlane.f32.xlu0 %v892
      %v894 = vpop.xlane.xlu0 %893
      %v895 = vsel %vm564, %v891, -inf
      %896 = vmax.xlane.f32.xlu0 %v895
      %v897 = vpop.xlane.xlu0 %896
      %v898 = vsub.f32 %v890, %v894
      %v899 = vsub.f32 %v891, %v897
      %v900 = vmul.f32 %v898, 1.442695
      %v901 = vpow.pop %v900
      %v902 = vmul.f32 %v899, 1.442695
      %v903 = vpow.pop %v902
      %v904 = vsel %vm564, %v901, 0.0
      %905 = vadd.xlane.f32.xlu0 %v904
      %v906 = vpop.xlane.xlu0 %905
      %v907 = vsel %vm564, %v903, 0.0
      %908 = vadd.xlane.f32.xlu0 %v907
      %v909 = vpop.xlane.xlu0 %908
      %v910 = vrcp.pop %v906
      %v911 = vrcp.pop %v909
      %v912 = vmul.f32 %v901, %v910
      %v913 = vmul.f32 %v903, %v911
      %v914 = vpack.c.bf16 %v913, %v912
      %915 = vrot.lane.b32.xlu0 %v563, 80
      %v916 = vpop.permute.xlu0 %915
      %v918 = vsel %vm564, %v914, 0
      %v921 = vsel %vm651, %v916, 0
      %923 = vmatprep.subr.bf16.mxu0 0
      %924 = vmatpush1.bf16.msra.mxu0 %v921
      %925 = vmatprep.subr.bf16.mxu0 0
      %926 = vmatpush1.bf16.msra.mxu0 0
      %927 = vmatprep.subr.bf16.mxu0 0
      %928 = vmatpush1.bf16.msra.mxu0 0
      %929 = vmatprep.subr.bf16.mxu0 0
      %930 = vmatpush1.bf16.msra.mxu0 0
      %931 = vmatprep.subr.bf16.mxu0 0
      %932 = vmatpush1.bf16.msra.mxu0 0
      %933 = vmatprep.subr.bf16.mxu0 0
      %934 = vmatpush1.bf16.msra.mxu0 0
      %935 = vmatprep.subr.bf16.mxu0 0
      %936 = vmatpush1.bf16.msra.mxu0 0
      %937 = vmatprep.subr.bf16.mxu0 0
      %938 = vmatpush1.bf16.msra.mxu0 0
      %939 = vmatprep.subr.bf16.mxu0 0
      %940 = vmatpush1.bf16.msra.mxu0 0
      %941 = vmatprep.subr.bf16.mxu0 0
      %942 = vmatpush1.bf16.msra.mxu0 0
      %943 = vmatprep.subr.bf16.mxu0 0
      %944 = vmatpush1.bf16.msra.mxu0 0
      %945 = vmatprep.subr.bf16.mxu0 0
      %946 = vmatpush1.bf16.msra.mxu0 0
      %947 = vmatprep.subr.bf16.mxu0 0
      %948 = vmatpush1.bf16.msra.mxu0 0
      %949 = vmatprep.subr.bf16.mxu0 0
      %950 = vmatpush1.bf16.msra.mxu0 0
      %951 = vmatprep.subr.bf16.mxu0 0
      %952 = vmatpush1.bf16.msra.mxu0 0
      %953 = vmatprep.subr.bf16.mxu0 0
      %954 = vmatpush1.bf16.msra.mxu0 0
      %955 = vmatprep.mubr.bf16.mxu0 0
      %956 = vmatmul.mubr.bf16.gmra.mrb[0].mxu0 %v918
      %v957 = vpop.f32.mrb[0].mxu0
      %v958 = vadd.f32 0.0, %v957
      %v959 = vpop.f32.mrb[0].mxu0
      %v960 = vpop.f32.mrb[0].mxu0
      %v961 = vadd.f32 0.0, %v960
      %v962 = vpop.f32.mrb[0].mxu0
      %963 = vdwg.mxu0
      %966 = vrot.lane.b32.xlu0 %v958, 16
      %v967 = vpop.permute.xlu0 %966
      %968 = vrot.lane.b32.xlu0 %v961, 16
      %v969 = vpop.permute.xlu0 %968
      %vm972 = vcmask 195712
      %973 = vst.msk [vmem:[#allocation2] sm:$0xff] %vm972, %v967
      %974 = vst.msk [vmem:[#allocation2 + $0x8] sm:$0xff] %vm972, %v969
      %975 = vrot.lane.b32.xlu0 %v562, 104
      %v976 = vpop.permute.xlu0 %975
      %977 = vrot.lane.b32.xlu0 %v563, 104
      %v978 = vpop.permute.xlu0 %977
      %v980 = vsel %vm564, %v976, 0
      %v983 = vsel %vm564, %v978, 0
      %985 = vmatprep.subr.bf16.mxu0 0
      %986 = vmatpush1.bf16.xpose.msra.mxu0 %v983
      %987 = vmatprep.subr.bf16.mxu0 0
      %988 = vmatpush1.bf16.xpose.msra.mxu0 0
      %989 = vmatprep.subr.bf16.mxu0 0
      %990 = vmatpush1.bf16.xpose.msra.mxu0 0
      %991 = vmatprep.subr.bf16.mxu0 0
      %992 = vmatpush1.bf16.xpose.msra.mxu0 0
      %993 = vmatprep.subr.bf16.mxu0 0
      %994 = vmatpush1.bf16.xpose.msra.mxu0 0
      %995 = vmatprep.subr.bf16.mxu0 0
      %996 = vmatpush1.bf16.xpose.msra.mxu0 0
      %997 = vmatprep.subr.bf16.mxu0 0
      %998 = vmatpush1.bf16.xpose.msra.mxu0 0
      %999 = vmatprep.subr.bf16.mxu0 0
      %1000 = vmatpush1.bf16.xpose.msra.mxu0 0
      %1001 = vmatprep.subr.bf16.mxu0 0
      %1002 = vmatpush1.bf16.xpose.msra.mxu0 0
      %1003 = vmatprep.subr.bf16.mxu0 0
      %1004 = vmatpush1.bf16.xpose.msra.mxu0 0
      %1005 = vmatprep.subr.bf16.mxu0 0
      %1006 = vmatpush1.bf16.xpose.msra.mxu0 0
      %1007 = vmatprep.subr.bf16.mxu0 0
      %1008 = vmatpush1.bf16.xpose.msra.mxu0 0
      %1009 = vmatprep.subr.bf16.mxu0 0
      %1010 = vmatpush1.bf16.xpose.msra.mxu0 0
      %1011 = vmatprep.subr.bf16.mxu0 0
      %1012 = vmatpush1.bf16.xpose.msra.mxu0 0
      %1013 = vmatprep.subr.bf16.mxu0 0
      %1014 = vmatpush1.bf16.xpose.msra.mxu0 0
      %1015 = vmatprep.subr.bf16.mxu0 0
      %1016 = vmatpush1.bf16.xpose.msra.mxu0 0
      %1017 = vmatprep.mubr.bf16.mxu0 0
      %1018 = vmatmul.mubr.bf16.gmra.mrb[0].mxu0 %v980
      %v1019 = vpop.f32.mrb[0].mxu0
      %v1020 = vadd.f32 0.0, %v1019
      %v1021 = vpop.f32.mrb[0].mxu0
      %v1022 = vpop.f32.mrb[0].mxu0
      %v1023 = vadd.f32 0.0, %v1022
      %v1024 = vpop.f32.mrb[0].mxu0
      %1025 = vdwg.mxu0
      %v1026 = vmul.f32 %v1020, 0.35355338
      %v1027 = vmul.f32 %v1023, 0.35355338
      %v1028 = vadd.f32 %v1026, %v618
      %v1029 = vadd.f32 %v1027, %v618
      %v1030 = vsel %vm564, %v1028, -inf
      %1031 = vmax.xlane.f32.xlu0 %v1030
      %v1032 = vpop.xlane.xlu0 %1031
      %v1033 = vsel %vm564, %v1029, -inf
      %1034 = vmax.xlane.f32.xlu0 %v1033
      %v1035 = vpop.xlane.xlu0 %1034
      %v1036 = vsub.f32 %v1028, %v1032
      %v1037 = vsub.f32 %v1029, %v1035
      %v1038 = vmul.f32 %v1036, 1.442695
      %v1039 = vpow.pop %v1038
      %v1040 = vmul.f32 %v1037, 1.442695
      %v1041 = vpow.pop %v1040
      %v1042 = vsel %vm564, %v1039, 0.0
      %1043 = vadd.xlane.f32.xlu0 %v1042
      %v1044 = vpop.xlane.xlu0 %1043
      %v1045 = vsel %vm564, %v1041, 0.0
      %1046 = vadd.xlane.f32.xlu0 %v1045
      %v1047 = vpop.xlane.xlu0 %1046
      %v1048 = vrcp.pop %v1044
      %v1049 = vrcp.pop %v1047
      %v1050 = vmul.f32 %v1039, %v1048
      %v1051 = vmul.f32 %v1041, %v1049
      %v1052 = vpack.c.bf16 %v1051, %v1050
      %1053 = vrot.lane.b32.xlu0 %v563, 72
      %v1054 = vpop.permute.xlu0 %1053
      %v1056 = vsel %vm564, %v1052, 0
      %v1059 = vsel %vm651, %v1054, 0
      %1061 = vmatprep.subr.bf16.mxu0 0
      %1062 = vmatpush1.bf16.msra.mxu0 %v1059
      %1063 = vmatprep.subr.bf16.mxu0 0
      %1064 = vmatpush1.bf16.msra.mxu0 0
      %1065 = vmatprep.subr.bf16.mxu0 0
      %1066 = vmatpush1.bf16.msra.mxu0 0
      %1067 = vmatprep.subr.bf16.mxu0 0
      %1068 = vmatpush1.bf16.msra.mxu0 0
      %1069 = vmatprep.subr.bf16.mxu0 0
      %1070 = vmatpush1.bf16.msra.mxu0 0
      %1071 = vmatprep.subr.bf16.mxu0 0
      %1072 = vmatpush1.bf16.msra.mxu0 0
      %1073 = vmatprep.subr.bf16.mxu0 0
      %1074 = vmatpush1.bf16.msra.mxu0 0
      %1075 = vmatprep.subr.bf16.mxu0 0
      %1076 = vmatpush1.bf16.msra.mxu0 0
      %1077 = vmatprep.subr.bf16.mxu0 0
      %1078 = vmatpush1.bf16.msra.mxu0 0
      %1079 = vmatprep.subr.bf16.mxu0 0
      %1080 = vmatpush1.bf16.msra.mxu0 0
      %1081 = vmatprep.subr.bf16.mxu0 0
      %1082 = vmatpush1.bf16.msra.mxu0 0
      %1083 = vmatprep.subr.bf16.mxu0 0
      %1084 = vmatpush1.bf16.msra.mxu0 0
      %1085 = vmatprep.subr.bf16.mxu0 0
      %1086 = vmatpush1.bf16.msra.mxu0 0
      %1087 = vmatprep.subr.bf16.mxu0 0
      %1088 = vmatpush1.bf16.msra.mxu0 0
      %1089 = vmatprep.subr.bf16.mxu0 0
      %1090 = vmatpush1.bf16.msra.mxu0 0
      %1091 = vmatprep.subr.bf16.mxu0 0
      %1092 = vmatpush1.bf16.msra.mxu0 0
      %1093 = vmatprep.mubr.bf16.mxu0 0
      %1094 = vmatmul.mubr.bf16.gmra.mrb[0].mxu0 %v1056
      %v1095 = vpop.f32.mrb[0].mxu0
      %v1096 = vadd.f32 0.0, %v1095
      %v1097 = vpop.f32.mrb[0].mxu0
      %v1098 = vpop.f32.mrb[0].mxu0
      %v1099 = vadd.f32 0.0, %v1098
      %v1100 = vpop.f32.mrb[0].mxu0
      %1101 = vdwg.mxu0
      %1104 = vrot.lane.b32.xlu0 %v1096, 24
      %v1105 = vpop.permute.xlu0 %1104
      %1106 = vrot.lane.b32.xlu0 %v1099, 24
      %v1107 = vpop.permute.xlu0 %1106
      %vm1110 = vcmask 261312
      %1111 = vst.msk [vmem:[#allocation2] sm:$0xff] %vm1110, %v1105
      %1112 = vst.msk [vmem:[#allocation2 + $0x8] sm:$0xff] %vm1110, %v1107
      %v1113 = vld [vmem:[#allocation2] sm:$0xff]
      %v1114 = vld [vmem:[#allocation2 + $0x8] sm:$0xff]
      %v1115 = vpack.c.bf16 %v1114, %v1113
      %v1116 = vld [vmem:[%s7] sm:$0xf]
      %v1117 = vld [vmem:[%s7 + $0x4] sm:$0xf]
      %v1118 = vld [vmem:[%s7 + $0x8] sm:$0xf]
      %v1119 = vld [vmem:[%s7 + $0xc] sm:$0xf]
      %v1120 = vld [vmem:[%s8] sm:$0x1]
      %v1122 = vlaneseq
      %v1123 = vshrl.u32 %v1122, 7
      %v1124 = vsub.s32 0, %v1123
      %v1125 = vrot.slane %v1120, %v1124
      %v1131 = vunpack.c.l.b16 %v1116
      %v1132 = vunpack.c.l.b16 %v1117
      %v1133 = vunpack.c.l.b16 %v1118
      %v1134 = vunpack.c.l.b16 %v1119
      %v1135 = vpack.c.b16 %v1132, %v1131
      %v1136 = vpack.c.b16 %v1134, %v1133
      %v1140 = vsel %vm449, %v1115, 0
      %1142 = vmatprep.subr.bf16.mxu0 0
      %1143 = vmatpush1.bf16.msra.mxu0 %v1135
      %1144 = vmatprep.subr.bf16.mxu0 0
      %1145 = vmatpush1.bf16.msra.mxu0 %v1136
      %1146 = vmatprep.subr.bf16.mxu0 0
      %1147 = vmatpush1.bf16.msra.mxu0 0
      %1148 = vmatprep.subr.bf16.mxu0 0
      %1149 = vmatpush1.bf16.msra.mxu0 0
      %1150 = vmatprep.subr.bf16.mxu0 0
      %1151 = vmatpush1.bf16.msra.mxu0 0
      %1152 = vmatprep.subr.bf16.mxu0 0
      %1153 = vmatpush1.bf16.msra.mxu0 0
      %1154 = vmatprep.subr.bf16.mxu0 0
      %1155 = vmatpush1.bf16.msra.mxu0 0
      %1156 = vmatprep.subr.bf16.mxu0 0
      %1157 = vmatpush1.bf16.msra.mxu0 0
      %1158 = vmatprep.subr.bf16.mxu0 0
      %1159 = vmatpush1.bf16.msra.mxu0 0
      %1160 = vmatprep.subr.bf16.mxu0 0
      %1161 = vmatpush1.bf16.msra.mxu0 0
      %1162 = vmatprep.subr.bf16.mxu0 0
      %1163 = vmatpush1.bf16.msra.mxu0 0
      %1164 = vmatprep.subr.bf16.mxu0 0
      %1165 = vmatpush1.bf16.msra.mxu0 0
      %1166 = vmatprep.subr.bf16.mxu0 0
      %1167 = vmatpush1.bf16.msra.mxu0 0
      %1168 = vmatprep.subr.bf16.mxu0 0
      %1169 = vmatpush1.bf16.msra.mxu0 0
      %1170 = vmatprep.subr.bf16.mxu0 0
      %1171 = vmatpush1.bf16.msra.mxu0 0
      %1172 = vmatprep.subr.bf16.mxu0 0
      %1173 = vmatpush1.bf16.msra.mxu0 0
      %1174 = vmatprep.mubr.bf16.mxu0 0
      %1175 = vmatmul.mubr.bf16.gmra.mrb[0].mxu0 %v1140
      %v1176 = vpop.f32.mrb[0].mxu0
      %v1177 = vadd.f32 %v1125, %v1176
      %v1178 = vpop.f32.mrb[0].mxu0
      %v1179 = vpop.f32.mrb[0].mxu0
      %v1180 = vadd.f32 %v1125, %v1179
      %v1181 = vpop.f32.mrb[0].mxu0
      %1182 = vdwg.mxu0
      %v1183 = vadd.f32 %v1177, %v422
      %v1184 = vadd.f32 %v1180, %v423
      %v1185 = vld [vmem:[%s9] sm:$0x1]
      %v1186 = vld [vmem:[%s10] sm:$0x1]
      %v1187 = vsel %vm449, %v1183, 0.0
      %1188 = vadd.xlane.f32.xlu0 %v1187
      %v1189 = vpop.xlane.xlu0 %1188
      %v1190 = vsel %vm449, %v1184, 0.0
      %1191 = vadd.xlane.f32.xlu0 %v1190
      %v1192 = vpop.xlane.xlu0 %1191
      %v1193 = vrcp.pop 32.0
      %v1194 = vmul.f32 %v1189, %v1193
      %v1195 = vmul.f32 %v1192, %v1193
      %v1196 = vsub.f32 %v1183, %v1194
      %v1197 = vsub.f32 %v1184, %v1195
      %v1198 = vmul.f32 %v1196, %v1196
      %v1199 = vmul.f32 %v1197, %v1197
      %v1200 = vsel %vm449, %v1198, 0.0
      %1201 = vadd.xlane.f32.xlu0 %v1200
      %v1202 = vpop.xlane.xlu0 %1201
      %v1203 = vsel %vm449, %v1199, 0.0
      %1204 = vadd.xlane.f32.xlu0 %v1203
      %v1205 = vpop.xlane.xlu0 %1204
      %v1206 = vrcp.pop 31.0
      %v1207 = vmul.f32 %v1202, %v1206
      %v1208 = vmul.f32 %v1205, %v1206
      %v1209 = vrsqrt.pop %v1207
      %v1210 = vmul.f32 %v1207, %v1209
      %vm1211 = vcmp.eq.f32.partialorder %v1207, inf
      %v1212 = vsel %vm1211, %v1207, %v1210
      %vm1213 = vcmp.eq.f32.partialorder %v1207, 0.0
      %v1214 = vand.u32 %v1207, 2147483648
      %v1215 = vsel %vm1213, %v1214, %v1212
      %v1216 = vrsqrt.pop %v1208
      %v1217 = vmul.f32 %v1208, %v1216
      %vm1218 = vcmp.eq.f32.partialorder %v1208, inf
      %v1219 = vsel %vm1218, %v1208, %v1217
      %vm1220 = vcmp.eq.f32.partialorder %v1208, 0.0
      %v1221 = vand.u32 %v1208, 2147483648
      %v1222 = vsel %vm1220, %v1221, %v1219
      %v1223 = vadd.f32 %v1215, 1e-06
      %v1224 = vadd.f32 %v1222, 1e-06
      %v1225 = vrcp.pop %v1223
      %v1226 = vrcp.pop %v1224
      %v1227 = vmul.f32 %v1196, %v1225
      %v1228 = vmul.f32 %v1197, %v1226
      %v1230 = vlaneseq
      %v1231 = vshrl.u32 %v1230, 7
      %v1232 = vsub.s32 0, %v1231
      %v1233 = vrot.slane %v1185, %v1232
      %v1235 = vmul.f32 %v1233, %v1227
      %v1236 = vmul.f32 %v1233, %v1228
      %v1238 = vlaneseq
      %v1239 = vshrl.u32 %v1238, 7
      %v1240 = vsub.s32 0, %v1239
      %v1241 = vrot.slane %v1186, %v1240
      %v1243 = vadd.f32 %v1235, %v1241
      %v1244 = vadd.f32 %v1236, %v1241
      %1245 = vst.msk [vmem:[%s419] sm:$0xff] %vm449, %v1243
      %1246 = vst.msk [vmem:[%s419 + $0x8] sm:$0xff] %vm449, %v1244
      %s1247 = smul.u32 2, %s22
      %p1248 = scmp.lt.s32.totalorder %s1247, 3
      %s1249 = scalar_select %p1248, %s1247, 3
      %s1250 = smul.addr %s1249, 8
      %s1251 = scalar_lea.vmem %s11, %s1250
      // Predicated region
      $region65: #{forward.15} parent=63 // pred_check
        %p1252 = pneg %p286
      $region66: #{forward.15} parent=63 // pred_check_branch
        %1254 = sbr.rel (%p1252) target = $region68
      $region67: #{forward.15} parent=63 // pred_region
        %s1255 = smul.u32 2, %s22
      $region68: #{forward.15} parent=63 // pred_fallthru
        _
    $region64: #{forward.15} parent=5 // pred_fallthru
      _
    %p1256 = scmp.le.s32.totalorder 2, %s17
    // Predicated region
    $region69: #{forward.15} parent=5 // pred_check
      %p1257 = pneg %p1256
    $region70: #{forward.15} parent=5 // pred_check_branch
      %1259 = sbr.rel (%p1257) target = $region72
    $region71: #{forward.15} parent=5 // pred_region
      %s1260 = ssub.s32 %s17, 2
      // Predicated region
      $region73: #{forward.15} parent=71 // pred_check
        %p1261 = pneg %p292
      $region74: #{forward.15} parent=71 // pred_check_branch
        %1263 = sbr.rel (%p1261) target = $region76
      $region75: #{forward.15} parent=71 // pred_region
        %s1264 = smul.u32 2, %s23
        %p1265 = scmp.lt.s32.totalorder %s1264, 3
        %s1266 = scalar_select %p1265, %s1264, 3
        %s1267 = smul.addr %s1266, 8
        %s1268 = scalar_lea.vmem %s11, %s1267
      $region76: #{forward.15} parent=71 // pred_fallthru
        _
    $region72: #{forward.15} parent=5 // pred_fallthru
      _
  $region6: #{forward.15} parent=0 // loop_footer
    %s21 = sadd.s32 1, %s17
  $region7: #{forward.15} parent=0 // loop_footer_branch
    %16 = sbr.rel target = $region3
  $region8: #{forward.15} parent=0 // loop_exit
    _

// kernel: forward.16
$region0: #{forward.16}
  #allocation0 [shape = 'u32[]', space=smem, size = 0x4, offset = 0x4, fixed_abs, tag = 'smem constant byte address 0x4 - core index']
  #allocation1 [shape = 'u32[144,128]{1,0:T(1,128)}', space=vmem, size = 0x12000, scoped, tag = 'internal scratch']
  %s0 = inlined_call_operand.vmem [shape: f32[32,32], index: 0, kind: input, shape index: {}]
  %s1 = inlined_call_operand.vmem [shape: bf16[32,64], index: 1, kind: input, shape index: {}]
  %s2 = inlined_call_operand.vmem [shape: f32[1,64], index: 2, kind: input, shape index: {}]
  %s3 = inlined_call_operand.vmem [shape: bf16[64,32], index: 3, kind: input, shape index: {}]
  %s4 = inlined_call_operand.vmem [shape: f32[1,32], index: 4, kind: input, shape index: {}]
  %s5 = inlined_call_operand.vmem [shape: f32[1,32], index: 5, kind: input, shape index: {}]
  %s6 = inlined_call_operand.vmem [shape: f32[1,32], index: 6, kind: input, shape index: {}]
  %s7 = inlined_call_operand.vmem [shape: f32[32,32], index: 7, kind: output, shape index: {}]
  %s8 = sld [smem:[#allocation0]]
  $region61: #{forward.16} parent=0
    _
  %s10 = ssub.s32 1, %s8
  %s11 = scalar_select 0, %s10, %s8
  loop: start=0, step=1, limit=4
  $region2: #{forward.16} parent=0 // loop_pre_header
    _
  $region3: #{forward.16} parent=0 // loop_header
    %s13 = sphi 0, %s17
    %p14 = scmp.ge.s32.totalorder %s13, 4
    %s23 = sphi 0, %s25
    %s26 = sphi 0, %s23
    %s27 = sphi 0, %s26
    %s43 = sphi 0, %s27
    %s47 = sphi 0, %s47
    %s49 = sphi 0, %s47
    %s50 = sphi 0, %s49
    %s64 = sphi 0, %s50
    %s68 = sphi 0, %s68
    %s70 = sphi 0, %s68
    %s71 = sphi 0, %s70
    %s85 = sphi 0, %s71
    %s89 = sphi 0, %s89
    %s91 = sphi 0, %s89
    %s92 = sphi 0, %s91
    %s106 = sphi 0, %s92
    %s110 = sphi 0, %s110
    %s112 = sphi 0, %s110
    %s113 = sphi 0, %s112
    %s127 = sphi 0, %s113
    %s131 = sphi 0, %s131
    %s133 = sphi 0, %s131
    %s134 = sphi 0, %s133
    %s148 = sphi 0, %s134
    %s152 = sphi 0, %s152
    %s154 = sphi 0, %s152
    %s155 = sphi 0, %s154
    %s169 = sphi 0, %s155
    %s175 = sphi 0, %s177
    %s178 = sphi 0, %s175
    %s179 = sphi 0, %s178
    %s195 = sphi 0, %s179
  $region4: #{forward.16} parent=0 // loop_header_branch
    %16 = sbr.rel (%p14) target = $region8
  $region5: #{forward.16} parent=0 // loop_body
    %s18 = ssub.s32 %s13, 1
    %s19 = ssub.s32 %s13, 2
    %s20 = sadd.s32 %s13, 1
    %s21 = ssub.s32 %s13, %s20
    %p22 = scmp.eq.s32.totalorder %s21, 0
    %s24 = sadd.s32 %s23, 1
    %s25 = scalar_select %p22, %s23, %s24
    %p28 = pneg %p22
    %p29 = scmp.eq.s32.totalorder %s13, 1
    %p30 = por %p28, %p29
    %p31 = scmp.ne.s32.totalorder %s23, %s26
    %p32 = scmp.eq.s32.totalorder %s13, 0
    %p33 = por %p31, %p32
    %p34 = scmp.ne.s32.totalorder %s23, %s26
    %p35 = scmp.eq.s32.totalorder %s18, 1
    %p36 = por %p34, %p35
    %p37 = scmp.ne.s32.totalorder %s26, %s27
    %p38 = scmp.eq.s32.totalorder %s18, 0
    %p39 = por %p37, %p38
    %p40 = scmp.ne.s32.totalorder %s26, %s27
    %p41 = scmp.eq.s32.totalorder %s19, 1
    %p42 = por %p40, %p41
    %p44 = scmp.ne.s32.totalorder %s27, %s43
    %p45 = scmp.eq.s32.totalorder %s19, 0
    %p46 = por %p44, %p45
    %s48 = sadd.s32 %s47, 1
    %p51 = scmp.eq.s32.totalorder %s13, 1
    %p52 = scmp.ne.s32.totalorder %s47, %s49
    %p53 = scmp.eq.s32.totalorder %s13, 0
    %p54 = por %p52, %p53
    %p55 = scmp.ne.s32.totalorder %s47, %s49
    %p56 = scmp.eq.s32.totalorder %s18, 1
    %p57 = por %p55, %p56
    %p58 = scmp.ne.s32.totalorder %s49, %s50
    %p59 = scmp.eq.s32.totalorder %s18, 0
    %p60 = por %p58, %p59
    %p61 = scmp.ne.s32.totalorder %s49, %s50
    %p62 = scmp.eq.s32.totalorder %s19, 1
    %p63 = por %p61, %p62
    %p65 = scmp.ne.s32.totalorder %s50, %s64
    %p66 = scmp.eq.s32.totalorder %s19, 0
    %p67 = por %p65, %p66
    %s69 = sadd.s32 %s68, 1
    %p72 = scmp.eq.s32.totalorder %s13, 1
    %p73 = scmp.ne.s32.totalorder %s68, %s70
    %p74 = scmp.eq.s32.totalorder %s13, 0
    %p75 = por %p73, %p74
    %p76 = scmp.ne.s32.totalorder %s68, %s70
    %p77 = scmp.eq.s32.totalorder %s18, 1
    %p78 = por %p76, %p77
    %p79 = scmp.ne.s32.totalorder %s70, %s71
    %p80 = scmp.eq.s32.totalorder %s18, 0
    %p81 = por %p79, %p80
    %p82 = scmp.ne.s32.totalorder %s70, %s71
    %p83 = scmp.eq.s32.totalorder %s19, 1
    %p84 = por %p82, %p83
    %p86 = scmp.ne.s32.totalorder %s71, %s85
    %p87 = scmp.eq.s32.totalorder %s19, 0
    %p88 = por %p86, %p87
    %s90 = sadd.s32 %s89, 1
    %p93 = scmp.eq.s32.totalorder %s13, 1
    %p94 = scmp.ne.s32.totalorder %s89, %s91
    %p95 = scmp.eq.s32.totalorder %s13, 0
    %p96 = por %p94, %p95
    %p97 = scmp.ne.s32.totalorder %s89, %s91
    %p98 = scmp.eq.s32.totalorder %s18, 1
    %p99 = por %p97, %p98
    %p100 = scmp.ne.s32.totalorder %s91, %s92
    %p101 = scmp.eq.s32.totalorder %s18, 0
    %p102 = por %p100, %p101
    %p103 = scmp.ne.s32.totalorder %s91, %s92
    %p104 = scmp.eq.s32.totalorder %s19, 1
    %p105 = por %p103, %p104
    %p107 = scmp.ne.s32.totalorder %s92, %s106
    %p108 = scmp.eq.s32.totalorder %s19, 0
    %p109 = por %p107, %p108
    %s111 = sadd.s32 %s110, 1
    %p114 = scmp.eq.s32.totalorder %s13, 1
    %p115 = scmp.ne.s32.totalorder %s110, %s112
    %p116 = scmp.eq.s32.totalorder %s13, 0
    %p117 = por %p115, %p116
    %p118 = scmp.ne.s32.totalorder %s110, %s112
    %p119 = scmp.eq.s32.totalorder %s18, 1
    %p120 = por %p118, %p119
    %p121 = scmp.ne.s32.totalorder %s112, %s113
    %p122 = scmp.eq.s32.totalorder %s18, 0
    %p123 = por %p121, %p122
    %p124 = scmp.ne.s32.totalorder %s112, %s113
    %p125 = scmp.eq.s32.totalorder %s19, 1
    %p126 = por %p124, %p125
    %p128 = scmp.ne.s32.totalorder %s113, %s127
    %p129 = scmp.eq.s32.totalorder %s19, 0
    %p130 = por %p128, %p129
    %s132 = sadd.s32 %s131, 1
    %p135 = scmp.eq.s32.totalorder %s13, 1
    %p136 = scmp.ne.s32.totalorder %s131, %s133
    %p137 = scmp.eq.s32.totalorder %s13, 0
    %p138 = por %p136, %p137
    %p139 = scmp.ne.s32.totalorder %s131, %s133
    %p140 = scmp.eq.s32.totalorder %s18, 1
    %p141 = por %p139, %p140
    %p142 = scmp.ne.s32.totalorder %s133, %s134
    %p143 = scmp.eq.s32.totalorder %s18, 0
    %p144 = por %p142, %p143
    %p145 = scmp.ne.s32.totalorder %s133, %s134
    %p146 = scmp.eq.s32.totalorder %s19, 1
    %p147 = por %p145, %p146
    %p149 = scmp.ne.s32.totalorder %s134, %s148
    %p150 = scmp.eq.s32.totalorder %s19, 0
    %p151 = por %p149, %p150
    %s153 = sadd.s32 %s152, 1
    %p156 = scmp.eq.s32.totalorder %s13, 1
    %p157 = scmp.ne.s32.totalorder %s152, %s154
    %p158 = scmp.eq.s32.totalorder %s13, 0
    %p159 = por %p157, %p158
    %p160 = scmp.ne.s32.totalorder %s152, %s154
    %p161 = scmp.eq.s32.totalorder %s18, 1
    %p162 = por %p160, %p161
    %p163 = scmp.ne.s32.totalorder %s154, %s155
    %p164 = scmp.eq.s32.totalorder %s18, 0
    %p165 = por %p163, %p164
    %p166 = scmp.ne.s32.totalorder %s154, %s155
    %p167 = scmp.eq.s32.totalorder %s19, 1
    %p168 = por %p166, %p167
    %p170 = scmp.ne.s32.totalorder %s155, %s169
    %p171 = scmp.eq.s32.totalorder %s19, 0
    %p172 = por %p170, %p171
    %s173 = ssub.s32 %s13, %s20
    %p174 = scmp.eq.s32.totalorder %s173, 0
    %s176 = sadd.s32 %s175, 1
    %s177 = scalar_select %p174, %s175, %s176
    %p180 = pneg %p174
    %p181 = scmp.eq.s32.totalorder %s13, 1
    %p182 = por %p180, %p181
    %p183 = scmp.ne.s32.totalorder %s175, %s178
    %p184 = scmp.eq.s32.totalorder %s13, 0
    %p185 = por %p183, %p184
    %p186 = scmp.ne.s32.totalorder %s175, %s178
    %p187 = scmp.eq.s32.totalorder %s18, 1
    %p188 = por %p186, %p187
    %p189 = scmp.ne.s32.totalorder %s178, %s179
    %p190 = scmp.eq.s32.totalorder %s18, 0
    %p191 = por %p189, %p190
    %p192 = scmp.ne.s32.totalorder %s178, %s179
    %p193 = scmp.eq.s32.totalorder %s19, 1
    %p194 = por %p192, %p193
    %p196 = scmp.ne.s32.totalorder %s179, %s195
    %p197 = scmp.eq.s32.totalorder %s19, 0
    %p198 = por %p196, %p197
    %p199 = scmp.le.s32.totalorder 1, %s13
    %p200 = scmp.lt.s32.totalorder %s13, 3
    %p201 = pnand %p199, %p200
    %p202 = pneg %p201
    // Predicated region
    $region9: #{forward.16} parent=5 // pred_check
      _
    $region10: #{forward.16} parent=5 // pred_check_branch
      %204 = sbr.rel (%p201) target = $region12
    $region11: #{forward.16} parent=5 // pred_region
      %s205 = ssub.s32 %s13, 1
      // Predicated region
      $region13: #{forward.16} parent=11 // pred_check
        %p206 = pneg %p60
      $region14: #{forward.16} parent=11 // pred_check_branch
        %208 = sbr.rel (%p206) target = $region16
      $region15: #{forward.16} parent=11 // pred_region
        _
      $region16: #{forward.16} parent=11 // pred_fallthru
        _
      // Predicated region
      $region17: #{forward.16} parent=11 // pred_check
        %p209 = pneg %p81
      $region18: #{forward.16} parent=11 // pred_check_branch
        %211 = sbr.rel (%p209) target = $region20
      $region19: #{forward.16} parent=11 // pred_region
        _
      $region20: #{forward.16} parent=11 // pred_fallthru
        _
      // Predicated region
      $region21: #{forward.16} parent=11 // pred_check
        %p212 = pneg %p102
      $region22: #{forward.16} parent=11 // pred_check_branch
        %214 = sbr.rel (%p212) target = $region24
      $region23: #{forward.16} parent=11 // pred_region
        _
      $region24: #{forward.16} parent=11 // pred_fallthru
        _
      // Predicated region
      $region25: #{forward.16} parent=11 // pred_check
        %p215 = pneg %p123
      $region26: #{forward.16} parent=11 // pred_check_branch
        %217 = sbr.rel (%p215) target = $region28
      $region27: #{forward.16} parent=11 // pred_region
        _
      $region28: #{forward.16} parent=11 // pred_fallthru
        _
      // Predicated region
      $region29: #{forward.16} parent=11 // pred_check
        %p218 = pneg %p144
      $region30: #{forward.16} parent=11 // pred_check_branch
        %220 = sbr.rel (%p218) target = $region32
      $region31: #{forward.16} parent=11 // pred_region
        _
      $region32: #{forward.16} parent=11 // pred_fallthru
        _
      // Predicated region
      $region33: #{forward.16} parent=11 // pred_check
        %p221 = pneg %p165
      $region34: #{forward.16} parent=11 // pred_check_branch
        %223 = sbr.rel (%p221) target = $region36
      $region35: #{forward.16} parent=11 // pred_region
        _
      $region36: #{forward.16} parent=11 // pred_fallthru
        _
    $region12: #{forward.16} parent=5 // pred_fallthru
      _
    %p224 = scmp.lt.s32.totalorder %s13, 2
    // Predicated region
    $region37: #{forward.16} parent=5 // pred_check
      %p225 = pneg %p224
    $region38: #{forward.16} parent=5 // pred_check_branch
      %227 = sbr.rel (%p225) target = $region40
    $region39: #{forward.16} parent=5 // pred_region
      // Predicated region
      $region41: #{forward.16} parent=39 // pred_check
        %p228 = pneg %p33
      $region42: #{forward.16} parent=39 // pred_check_branch
        %230 = sbr.rel (%p228) target = $region44
      $region43: #{forward.16} parent=39 // pred_region
        %s231 = smul.u32 2, %s13
        %p232 = scmp.lt.s32.totalorder %s231, 3
        %s233 = scalar_select %p232, %s231, 3
        %s234 = smul.addr %s233, 8
        %s235 = scalar_lea.vmem %s0, %s234
        %s236 = smul.u32 2, %s13
      $region44: #{forward.16} parent=39 // pred_fallthru
        _
    $region40: #{forward.16} parent=5 // pred_fallthru
      _
    %p237 = scmp.le.s32.totalorder 1, %s13
    %p238 = scmp.lt.s32.totalorder %s13, 3
    %p239 = pnand %p237, %p238
    %p240 = pneg %p239
    // Predicated region
    $region45: #{forward.16} parent=5 // pred_check
      _
    $region46: #{forward.16} parent=5 // pred_check_branch
      %242 = sbr.rel (%p239) target = $region48
    $region47: #{forward.16} parent=5 // pred_region
      %s243 = ssub.s32 %s13, 1
      %s244 = smul.u32 2, %s18
      %p245 = scmp.lt.s32.totalorder %s244, 3
      %s246 = scalar_select %p245, %s244, 3
      %s247 = smul.addr %s246, 8
      %s248 = scalar_lea.vmem %s0, %s247
      %p249 = pneg %p39
      %p250 = pneg %p36
      %p251 = pneg %p60
      %p252 = pneg %p57
      %p253 = pneg %p81
      %p254 = pneg %p78
      %p255 = pneg %p102
      %p256 = pneg %p99
      %p257 = pneg %p123
      %p258 = pneg %p120
      %p259 = pneg %p144
      %p260 = pneg %p141
      %p261 = pneg %p165
      %p262 = pneg %p162
      %p263 = pneg %p191
      %p264 = pneg %p188
      %s265 = smul.u32 2, %s18
      %p266 = scmp.lt.s32.totalorder %s265, 3
      %s267 = scalar_select %p266, %s265, 3
      %s268 = smul.addr %s267, 8
      %s269 = scalar_lea.vmem %s7, %s268
      %s270 = smul.u32 2, %s18
      %p271 = scmp.lt.s32.totalorder %s270, 3
      %s272 = scalar_select %p271, %s270, 3
      %s273 = smul.addr %s272, 8
      %s274 = scalar_lea.vmem %s0, %s273
      %s275 = smul.u32 2, %s18
      %s276 = smul.u32 2, %s18
      %p277 = scmp.lt.s32.totalorder %s276, 3
      %s278 = scalar_select %p277, %s276, 3
      %s279 = smul.addr %s278, 8
      %s280 = scalar_lea.vmem %s7, %s279
      %s281 = smul.u32 2, %s18
      %v283 = vld [vmem:[%s274] sm:$0xff]
      %v284 = vld [vmem:[%s274 + $0x8] sm:$0xff]
      %v285 = vpack.c.bf16 %v284, %v283
      %v286 = vld [vmem:[%s1] sm:$0xf]
      %v287 = vld [vmem:[%s1 + $0x4] sm:$0xf]
      %v288 = vld [vmem:[%s1 + $0x8] sm:$0xf]
      %v289 = vld [vmem:[%s1 + $0xc] sm:$0xf]
      %v290 = vld [vmem:[%s2] sm:$0x1]
      %v292 = vlaneseq
      %v293 = vshrl.u32 %v292, 7
      %v294 = vsub.s32 0, %v293
      %v295 = vrot.slane %v290, %v294
      %v301 = vunpack.c.l.b16 %v286
      %v302 = vunpack.c.l.b16 %v287
      %v303 = vunpack.c.l.b16 %v288
      %v304 = vunpack.c.l.b16 %v289
      %v305 = vpack.c.b16 %v302, %v301
      %v306 = vpack.c.b16 %v304, %v303
      %vm309 = vcmask 261120
      %v311 = vsel %vm309, %v285, 0
      %313 = vmatprep.subr.bf16.mxu0 0
      %314 = vmatpush1.bf16.msra.mxu0 %v305
      %315 = vmatprep.subr.bf16.mxu0 0
      %316 = vmatpush1.bf16.msra.mxu0 %v306
      %317 = vmatprep.subr.bf16.mxu0 0
      %318 = vmatpush1.bf16.msra.mxu0 0
      %319 = vmatprep.subr.bf16.mxu0 0
      %320 = vmatpush1.bf16.msra.mxu0 0
      %321 = vmatprep.subr.bf16.mxu0 0
      %322 = vmatpush1.bf16.msra.mxu0 0
      %323 = vmatprep.subr.bf16.mxu0 0
      %324 = vmatpush1.bf16.msra.mxu0 0
      %325 = vmatprep.subr.bf16.mxu0 0
      %326 = vmatpush1.bf16.msra.mxu0 0
      %327 = vmatprep.subr.bf16.mxu0 0
      %328 = vmatpush1.bf16.msra.mxu0 0
      %329 = vmatprep.subr.bf16.mxu0 0
      %330 = vmatpush1.bf16.msra.mxu0 0
      %331 = vmatprep.subr.bf16.mxu0 0
      %332 = vmatpush1.bf16.msra.mxu0 0
      %333 = vmatprep.subr.bf16.mxu0 0
      %334 = vmatpush1.bf16.msra.mxu0 0
      %335 = vmatprep.subr.bf16.mxu0 0
      %336 = vmatpush1.bf16.msra.mxu0 0
      %337 = vmatprep.subr.bf16.mxu0 0
      %338 = vmatpush1.bf16.msra.mxu0 0
      %339 = vmatprep.subr.bf16.mxu0 0
      %340 = vmatpush1.bf16.msra.mxu0 0
      %341 = vmatprep.subr.bf16.mxu0 0
      %342 = vmatpush1.bf16.msra.mxu0 0
      %343 = vmatprep.subr.bf16.mxu0 0
      %344 = vmatpush1.bf16.msra.mxu0 0
      %345 = vmatprep.mubr.bf16.mxu0 0
      %346 = vmatmul.mubr.bf16.gmra.mrb[0].mxu0 %v311
      %v347 = vpop.f32.mrb[0].mxu0
      %v348 = vadd.f32 %v295, %v347
      %v349 = vpop.f32.mrb[0].mxu0
      %v350 = vpop.f32.mrb[0].mxu0
      %v351 = vadd.f32 %v295, %v350
      %v352 = vpop.f32.mrb[0].mxu0
      %353 = vdwg.mxu0
      %v354 = vmax.f32 %v348, 0.0
      %v355 = vmax.f32 %v351, 0.0
      %v356 = vpack.c.bf16 %v355, %v354
      %v357 = vld [vmem:[%s3] sm:$0xf]
      %v358 = vld [vmem:[%s3 + $0x4] sm:$0xf]
      %v359 = vld [vmem:[%s3 + $0x8] sm:$0xf]
      %v360 = vld [vmem:[%s3 + $0xc] sm:$0xf]
      %v361 = vld [vmem:[%s3 + $0x10] sm:$0xf]
      %v362 = vld [vmem:[%s3 + $0x14] sm:$0xf]
      %v363 = vld [vmem:[%s3 + $0x18] sm:$0xf]
      %v364 = vld [vmem:[%s3 + $0x1c] sm:$0xf]
      %v365 = vld [vmem:[%s4] sm:$0x1]
      %v367 = vlaneseq
      %v368 = vshrl.u32 %v367, 7
      %v369 = vsub.s32 0, %v368
      %v370 = vrot.slane %v365, %v369
      %v380 = vunpack.c.l.b16 %v357
      %v381 = vunpack.c.l.b16 %v358
      %v382 = vunpack.c.l.b16 %v359
      %v383 = vunpack.c.l.b16 %v360
      %v384 = vunpack.c.l.b16 %v361
      %v385 = vunpack.c.l.b16 %v362
      %v386 = vunpack.c.l.b16 %v363
      %v387 = vunpack.c.l.b16 %v364
      %v388 = vpack.c.b16 %v381, %v380
      %v389 = vpack.c.b16 %v383, %v382
      %v390 = vpack.c.b16 %v385, %v384
      %v391 = vpack.c.b16 %v387, %v386
      %vm396 = vcmask 523264
      %v398 = vsel %vm396, %v356, 0
      %400 = vmatprep.subr.bf16.mxu0 0
      %401 = vmatpush1.bf16.msra.mxu0 %v388
      %402 = vmatprep.subr.bf16.mxu0 0
      %403 = vmatpush1.bf16.msra.mxu0 %v389
      %404 = vmatprep.subr.bf16.mxu0 0
      %405 = vmatpush1.bf16.msra.mxu0 %v390
      %406 = vmatprep.subr.bf16.mxu0 0
      %407 = vmatpush1.bf16.msra.mxu0 %v391
      %408 = vmatprep.subr.bf16.mxu0 0
      %409 = vmatpush1.bf16.msra.mxu0 0
      %410 = vmatprep.subr.bf16.mxu0 0
      %411 = vmatpush1.bf16.msra.mxu0 0
      %412 = vmatprep.subr.bf16.mxu0 0
      %413 = vmatpush1.bf16.msra.mxu0 0
      %414 = vmatprep.subr.bf16.mxu0 0
      %415 = vmatpush1.bf16.msra.mxu0 0
      %416 = vmatprep.subr.bf16.mxu0 0
      %417 = vmatpush1.bf16.msra.mxu0 0
      %418 = vmatprep.subr.bf16.mxu0 0
      %419 = vmatpush1.bf16.msra.mxu0 0
      %420 = vmatprep.subr.bf16.mxu0 0
      %421 = vmatpush1.bf16.msra.mxu0 0
      %422 = vmatprep.subr.bf16.mxu0 0
      %423 = vmatpush1.bf16.msra.mxu0 0
      %424 = vmatprep.subr.bf16.mxu0 0
      %425 = vmatpush1.bf16.msra.mxu0 0
      %426 = vmatprep.subr.bf16.mxu0 0
      %427 = vmatpush1.bf16.msra.mxu0 0
      %428 = vmatprep.subr.bf16.mxu0 0
      %429 = vmatpush1.bf16.msra.mxu0 0
      %430 = vmatprep.subr.bf16.mxu0 0
      %431 = vmatpush1.bf16.msra.mxu0 0
      %432 = vmatprep.mubr.bf16.mxu0 0
      %433 = vmatmul.mubr.bf16.gmra.mrb[0].mxu0 %v398
      %v434 = vpop.f32.mrb[0].mxu0
      %v435 = vadd.f32 %v370, %v434
      %v436 = vpop.f32.mrb[0].mxu0
      %v437 = vpop.f32.mrb[0].mxu0
      %v438 = vadd.f32 %v370, %v437
      %v439 = vpop.f32.mrb[0].mxu0
      %440 = vdwg.mxu0
      %v441 = vadd.f32 %v435, %v283
      %v442 = vadd.f32 %v438, %v284
      %v443 = vld [vmem:[%s5] sm:$0x1]
      %v444 = vld [vmem:[%s6] sm:$0x1]
      %v445 = vsel %vm309, %v441, 0.0
      %446 = vadd.xlane.f32.xlu0 %v445
      %v447 = vpop.xlane.xlu0 %446
      %v448 = vsel %vm309, %v442, 0.0
      %449 = vadd.xlane.f32.xlu0 %v448
      %v450 = vpop.xlane.xlu0 %449
      %v451 = vrcp.pop 32.0
      %v452 = vmul.f32 %v447, %v451
      %v453 = vmul.f32 %v450, %v451
      %v454 = vsub.f32 %v441, %v452
      %v455 = vsub.f32 %v442, %v453
      %v456 = vmul.f32 %v454, %v454
      %v457 = vmul.f32 %v455, %v455
      %v458 = vsel %vm309, %v456, 0.0
      %459 = vadd.xlane.f32.xlu0 %v458
      %v460 = vpop.xlane.xlu0 %459
      %v461 = vsel %vm309, %v457, 0.0
      %462 = vadd.xlane.f32.xlu0 %v461
      %v463 = vpop.xlane.xlu0 %462
      %v464 = vrcp.pop 31.0
      %v465 = vmul.f32 %v460, %v464
      %v466 = vmul.f32 %v463, %v464
      %v467 = vrsqrt.pop %v465
      %v468 = vmul.f32 %v465, %v467
      %vm469 = vcmp.eq.f32.partialorder %v465, inf
      %v470 = vsel %vm469, %v465, %v468
      %vm471 = vcmp.eq.f32.partialorder %v465, 0.0
      %v472 = vand.u32 %v465, 2147483648
      %v473 = vsel %vm471, %v472, %v470
      %v474 = vrsqrt.pop %v466
      %v475 = vmul.f32 %v466, %v474
      %vm476 = vcmp.eq.f32.partialorder %v466, inf
      %v477 = vsel %vm476, %v466, %v475
      %vm478 = vcmp.eq.f32.partialorder %v466, 0.0
      %v479 = vand.u32 %v466, 2147483648
      %v480 = vsel %vm478, %v479, %v477
      %v481 = vadd.f32 %v473, 1e-06
      %v482 = vadd.f32 %v480, 1e-06
      %v483 = vrcp.pop %v481
      %v484 = vrcp.pop %v482
      %v485 = vmul.f32 %v454, %v483
      %v486 = vmul.f32 %v455, %v484
      %v488 = vlaneseq
      %v489 = vshrl.u32 %v488, 7
      %v490 = vsub.s32 0, %v489
      %v491 = vrot.slane %v443, %v490
      %v493 = vmul.f32 %v491, %v485
      %v494 = vmul.f32 %v491, %v486
      %v496 = vlaneseq
      %v497 = vshrl.u32 %v496, 7
      %v498 = vsub.s32 0, %v497
      %v499 = vrot.slane %v444, %v498
      %v501 = vadd.f32 %v493, %v499
      %v502 = vadd.f32 %v494, %v499
      %503 = vst.msk [vmem:[%s280] sm:$0xff] %vm309, %v501
      %504 = vst.msk [vmem:[%s280 + $0x8] sm:$0xff] %vm309, %v502
      %s505 = smul.u32 2, %s18
      %p506 = scmp.lt.s32.totalorder %s505, 3
      %s507 = scalar_select %p506, %s505, 3
      %s508 = smul.addr %s507, 8
      %s509 = scalar_lea.vmem %s7, %s508
      // Predicated region
      $region49: #{forward.16} parent=47 // pred_check
        %p510 = pneg %p188
      $region50: #{forward.16} parent=47 // pred_check_branch
        %512 = sbr.rel (%p510) target = $region52
      $region51: #{forward.16} parent=47 // pred_region
        %s513 = smul.u32 2, %s18
      $region52: #{forward.16} parent=47 // pred_fallthru
        _
    $region48: #{forward.16} parent=5 // pred_fallthru
      _
    %p514 = scmp.le.s32.totalorder 2, %s13
    // Predicated region
    $region53: #{forward.16} parent=5 // pred_check
      %p515 = pneg %p514
    $region54: #{forward.16} parent=5 // pred_check_branch
      %517 = sbr.rel (%p515) target = $region56
    $region55: #{forward.16} parent=5 // pred_region
      %s518 = ssub.s32 %s13, 2
      // Predicated region
      $region57: #{forward.16} parent=55 // pred_check
        %p519 = pneg %p194
      $region58: #{forward.16} parent=55 // pred_check_branch
        %521 = sbr.rel (%p519) target = $region60
      $region59: #{forward.16} parent=55 // pred_region
        %s522 = smul.u32 2, %s19
        %p523 = scmp.lt.s32.totalorder %s522, 3
        %s524 = scalar_select %p523, %s522, 3
        %s525 = smul.addr %s524, 8
        %s526 = scalar_lea.vmem %s7, %s525
      $region60: #{forward.16} parent=55 // pred_fallthru
        _
    $region56: #{forward.16} parent=5 // pred_fallthru
      _
  $region6: #{forward.16} parent=0 // loop_footer
    %s17 = sadd.s32 1, %s13
  $region7: #{forward.16} parent=0 // loop_footer_branch
    %12 = sbr.rel target = $region3
  $region8: #{forward.16} parent=0 // loop_exit
    _

// kernel: forward.19
$region0: #{forward.19}
  #allocation0 [shape = 'u32[]', space=smem, size = 0x4, offset = 0x4, fixed_abs, tag = 'smem constant byte address 0x4 - core index']
  #allocation1 [shape = 'u32[144,128]{1,0:T(1,128)}', space=vmem, size = 0x12000, scoped, tag = 'internal scratch']
  %s0 = inlined_call_operand.vmem [shape: f32[16,32], index: 0, kind: input, shape index: {}]
  %s1 = inlined_call_operand.vmem [shape: bf16[32,64], index: 1, kind: input, shape index: {}]
  %s2 = inlined_call_operand.vmem [shape: f32[1,64], index: 2, kind: input, shape index: {}]
  %s3 = inlined_call_operand.vmem [shape: bf16[64,32], index: 3, kind: input, shape index: {}]
  %s4 = inlined_call_operand.vmem [shape: f32[1,32], index: 4, kind: input, shape index: {}]
  %s5 = inlined_call_operand.vmem [shape: f32[1,32], index: 5, kind: input, shape index: {}]
  %s6 = inlined_call_operand.vmem [shape: f32[1,32], index: 6, kind: input, shape index: {}]
  %s7 = inlined_call_operand.hbm [shape: f32[16,32], index: 7, kind: output, shape index: {}]
  %s8 = sld [smem:[#allocation0]]
  $region61: #{forward.19} parent=0
    _
  %s10 = ssub.s32 1, %s8
  %s11 = scalar_select 0, %s10, %s8
  $region1: #{forward.19} parent=0
    #allocation2 [shape = 'u8[8192]{0}', space=vmem, size = 0x2000, scoped, tag = 'output window, operand 0']
    #allocation3 [shape = 's32[2]{0}', space=sflag, size = 0x8, scoped, tag = 'scoped memory for forward.19']
    %12 = vsyncpa [#allocation3], 0
    %s13 = scalar_lea.sflag [#allocation3], 1
    %14 = vsyncpa %s13, 0
    loop: start=0, step=1, limit=4
    $region2: #{forward.19} parent=1 // loop_pre_header
      _
    $region3: #{forward.19} parent=1 // loop_header
      %s16 = sphi 0, %s20
      %p17 = scmp.ge.s32.totalorder %s16, 4
      %s26 = sphi 0, %s28
      %s29 = sphi 0, %s26
      %s30 = sphi 0, %s29
      %s46 = sphi 0, %s30
      %s50 = sphi 0, %s50
      %s52 = sphi 0, %s50
      %s53 = sphi 0, %s52
      %s67 = sphi 0, %s53
      %s71 = sphi 0, %s71
      %s73 = sphi 0, %s71
      %s74 = sphi 0, %s73
      %s88 = sphi 0, %s74
      %s92 = sphi 0, %s92
      %s94 = sphi 0, %s92
      %s95 = sphi 0, %s94
      %s109 = sphi 0, %s95
      %s113 = sphi 0, %s113
      %s115 = sphi 0, %s113
      %s116 = sphi 0, %s115
      %s130 = sphi 0, %s116
      %s134 = sphi 0, %s134
      %s136 = sphi 0, %s134
      %s137 = sphi 0, %s136
      %s151 = sphi 0, %s137
      %s155 = sphi 0, %s155
      %s157 = sphi 0, %s155
      %s158 = sphi 0, %s157
      %s172 = sphi 0, %s158
      %s178 = sphi 0, %s180
      %s181 = sphi 0, %s178
      %s182 = sphi 0, %s181
      %s198 = sphi 0, %s182
    $region4: #{forward.19} parent=1 // loop_header_branch
      %19 = sbr.rel (%p17) target = $region8
    $region5: #{forward.19} parent=1 // loop_body
      %s21 = ssub.s32 %s16, 1
      %s22 = ssub.s32 %s16, 2
      %s23 = sadd.s32 %s16, 1
      %s24 = ssub.s32 %s16, %s23
      %p25 = scmp.eq.s32.totalorder %s24, 0
      %s27 = sadd.s32 %s26, 1
      %s28 = scalar_select %p25, %s26, %s27
      %p31 = pneg %p25
      %p32 = scmp.eq.s32.totalorder %s16, 1
      %p33 = por %p31, %p32
      %p34 = scmp.ne.s32.totalorder %s26, %s29
      %p35 = scmp.eq.s32.totalorder %s16, 0
      %p36 = por %p34, %p35
      %p37 = scmp.ne.s32.totalorder %s26, %s29
      %p38 = scmp.eq.s32.totalorder %s21, 1
      %p39 = por %p37, %p38
      %p40 = scmp.ne.s32.totalorder %s29, %s30
      %p41 = scmp.eq.s32.totalorder %s21, 0
      %p42 = por %p40, %p41
      %p43 = scmp.ne.s32.totalorder %s29, %s30
      %p44 = scmp.eq.s32.totalorder %s22, 1
      %p45 = por %p43, %p44
      %p47 = scmp.ne.s32.totalorder %s30, %s46
      %p48 = scmp.eq.s32.totalorder %s22, 0
      %p49 = por %p47, %p48
      %s51 = sadd.s32 %s50, 1
      %p54 = scmp.eq.s32.totalorder %s16, 1
      %p55 = scmp.ne.s32.totalorder %s50, %s52
      %p56 = scmp.eq.s32.totalorder %s16, 0
      %p57 = por %p55, %p56
      %p58 = scmp.ne.s32.totalorder %s50, %s52
      %p59 = scmp.eq.s32.totalorder %s21, 1
      %p60 = por %p58, %p59
      %p61 = scmp.ne.s32.totalorder %s52, %s53
      %p62 = scmp.eq.s32.totalorder %s21, 0
      %p63 = por %p61, %p62
      %p64 = scmp.ne.s32.totalorder %s52, %s53
      %p65 = scmp.eq.s32.totalorder %s22, 1
      %p66 = por %p64, %p65
      %p68 = scmp.ne.s32.totalorder %s53, %s67
      %p69 = scmp.eq.s32.totalorder %s22, 0
      %p70 = por %p68, %p69
      %s72 = sadd.s32 %s71, 1
      %p75 = scmp.eq.s32.totalorder %s16, 1
      %p76 = scmp.ne.s32.totalorder %s71, %s73
      %p77 = scmp.eq.s32.totalorder %s16, 0
      %p78 = por %p76, %p77
      %p79 = scmp.ne.s32.totalorder %s71, %s73
      %p80 = scmp.eq.s32.totalorder %s21, 1
      %p81 = por %p79, %p80
      %p82 = scmp.ne.s32.totalorder %s73, %s74
      %p83 = scmp.eq.s32.totalorder %s21, 0
      %p84 = por %p82, %p83
      %p85 = scmp.ne.s32.totalorder %s73, %s74
      %p86 = scmp.eq.s32.totalorder %s22, 1
      %p87 = por %p85, %p86
      %p89 = scmp.ne.s32.totalorder %s74, %s88
      %p90 = scmp.eq.s32.totalorder %s22, 0
      %p91 = por %p89, %p90
      %s93 = sadd.s32 %s92, 1
      %p96 = scmp.eq.s32.totalorder %s16, 1
      %p97 = scmp.ne.s32.totalorder %s92, %s94
      %p98 = scmp.eq.s32.totalorder %s16, 0
      %p99 = por %p97, %p98
      %p100 = scmp.ne.s32.totalorder %s92, %s94
      %p101 = scmp.eq.s32.totalorder %s21, 1
      %p102 = por %p100, %p101
      %p103 = scmp.ne.s32.totalorder %s94, %s95
      %p104 = scmp.eq.s32.totalorder %s21, 0
      %p105 = por %p103, %p104
      %p106 = scmp.ne.s32.totalorder %s94, %s95
      %p107 = scmp.eq.s32.totalorder %s22, 1
      %p108 = por %p106, %p107
      %p110 = scmp.ne.s32.totalorder %s95, %s109
      %p111 = scmp.eq.s32.totalorder %s22, 0
      %p112 = por %p110, %p111
      %s114 = sadd.s32 %s113, 1
      %p117 = scmp.eq.s32.totalorder %s16, 1
      %p118 = scmp.ne.s32.totalorder %s113, %s115
      %p119 = scmp.eq.s32.totalorder %s16, 0
      %p120 = por %p118, %p119
      %p121 = scmp.ne.s32.totalorder %s113, %s115
      %p122 = scmp.eq.s32.totalorder %s21, 1
      %p123 = por %p121, %p122
      %p124 = scmp.ne.s32.totalorder %s115, %s116
      %p125 = scmp.eq.s32.totalorder %s21, 0
      %p126 = por %p124, %p125
      %p127 = scmp.ne.s32.totalorder %s115, %s116
      %p128 = scmp.eq.s32.totalorder %s22, 1
      %p129 = por %p127, %p128
      %p131 = scmp.ne.s32.totalorder %s116, %s130
      %p132 = scmp.eq.s32.totalorder %s22, 0
      %p133 = por %p131, %p132
      %s135 = sadd.s32 %s134, 1
      %p138 = scmp.eq.s32.totalorder %s16, 1
      %p139 = scmp.ne.s32.totalorder %s134, %s136
      %p140 = scmp.eq.s32.totalorder %s16, 0
      %p141 = por %p139, %p140
      %p142 = scmp.ne.s32.totalorder %s134, %s136
      %p143 = scmp.eq.s32.totalorder %s21, 1
      %p144 = por %p142, %p143
      %p145 = scmp.ne.s32.totalorder %s136, %s137
      %p146 = scmp.eq.s32.totalorder %s21, 0
      %p147 = por %p145, %p146
      %p148 = scmp.ne.s32.totalorder %s136, %s137
      %p149 = scmp.eq.s32.totalorder %s22, 1
      %p150 = por %p148, %p149
      %p152 = scmp.ne.s32.totalorder %s137, %s151
      %p153 = scmp.eq.s32.totalorder %s22, 0
      %p154 = por %p152, %p153
      %s156 = sadd.s32 %s155, 1
      %p159 = scmp.eq.s32.totalorder %s16, 1
      %p160 = scmp.ne.s32.totalorder %s155, %s157
      %p161 = scmp.eq.s32.totalorder %s16, 0
      %p162 = por %p160, %p161
      %p163 = scmp.ne.s32.totalorder %s155, %s157
      %p164 = scmp.eq.s32.totalorder %s21, 1
      %p165 = por %p163, %p164
      %p166 = scmp.ne.s32.totalorder %s157, %s158
      %p167 = scmp.eq.s32.totalorder %s21, 0
      %p168 = por %p166, %p167
      %p169 = scmp.ne.s32.totalorder %s157, %s158
      %p170 = scmp.eq.s32.totalorder %s22, 1
      %p171 = por %p169, %p170
      %p173 = scmp.ne.s32.totalorder %s158, %s172
      %p174 = scmp.eq.s32.totalorder %s22, 0
      %p175 = por %p173, %p174
      %s176 = ssub.s32 %s16, %s23
      %p177 = scmp.eq.s32.totalorder %s176, 0
      %s179 = sadd.s32 %s178, 1
      %s180 = scalar_select %p177, %s178, %s179
      %p183 = pneg %p177
      %p184 = scmp.eq.s32.totalorder %s16, 1
      %p185 = por %p183, %p184
      %p186 = scmp.ne.s32.totalorder %s178, %s181
      %p187 = scmp.eq.s32.totalorder %s16, 0
      %p188 = por %p186, %p187
      %p189 = scmp.ne.s32.totalorder %s178, %s181
      %p190 = scmp.eq.s32.totalorder %s21, 1
      %p191 = por %p189, %p190
      %p192 = scmp.ne.s32.totalorder %s181, %s182
      %p193 = scmp.eq.s32.totalorder %s21, 0
      %p194 = por %p192, %p193
      %p195 = scmp.ne.s32.totalorder %s181, %s182
      %p196 = scmp.eq.s32.totalorder %s22, 1
      %p197 = por %p195, %p196
      %p199 = scmp.ne.s32.totalorder %s182, %s198
      %p200 = scmp.eq.s32.totalorder %s22, 0
      %p201 = por %p199, %p200
      %p202 = scmp.le.s32.totalorder 1, %s16
      %p203 = scmp.lt.s32.totalorder %s16, 3
      %p204 = pnand %p202, %p203
      %p205 = pneg %p204
      // Predicated region
      $region9: #{forward.19} parent=5 // pred_check
        _
      $region10: #{forward.19} parent=5 // pred_check_branch
        %207 = sbr.rel (%p204) target = $region12
      $region11: #{forward.19} parent=5 // pred_region
        %s208 = ssub.s32 %s16, 1
        // Predicated region
        $region13: #{forward.19} parent=11 // pred_check
          %p209 = pneg %p63
        $region14: #{forward.19} parent=11 // pred_check_branch
          %211 = sbr.rel (%p209) target = $region16
        $region15: #{forward.19} parent=11 // pred_region
          _
        $region16: #{forward.19} parent=11 // pred_fallthru
          _
        // Predicated region
        $region17: #{forward.19} parent=11 // pred_check
          %p212 = pneg %p84
        $region18: #{forward.19} parent=11 // pred_check_branch
          %214 = sbr.rel (%p212) target = $region20
        $region19: #{forward.19} parent=11 // pred_region
          _
        $region20: #{forward.19} parent=11 // pred_fallthru
          _
        // Predicated region
        $region21: #{forward.19} parent=11 // pred_check
          %p215 = pneg %p105
        $region22: #{forward.19} parent=11 // pred_check_branch
          %217 = sbr.rel (%p215) target = $region24
        $region23: #{forward.19} parent=11 // pred_region
          _
        $region24: #{forward.19} parent=11 // pred_fallthru
          _
        // Predicated region
        $region25: #{forward.19} parent=11 // pred_check
          %p218 = pneg %p126
        $region26: #{forward.19} parent=11 // pred_check_branch
          %220 = sbr.rel (%p218) target = $region28
        $region27: #{forward.19} parent=11 // pred_region
          _
        $region28: #{forward.19} parent=11 // pred_fallthru
          _
        // Predicated region
        $region29: #{forward.19} parent=11 // pred_check
          %p221 = pneg %p147
        $region30: #{forward.19} parent=11 // pred_check_branch
          %223 = sbr.rel (%p221) target = $region32
        $region31: #{forward.19} parent=11 // pred_region
          _
        $region32: #{forward.19} parent=11 // pred_fallthru
          _
        // Predicated region
        $region33: #{forward.19} parent=11 // pred_check
          %p224 = pneg %p168
        $region34: #{forward.19} parent=11 // pred_check_branch
          %226 = sbr.rel (%p224) target = $region36
        $region35: #{forward.19} parent=11 // pred_region
          _
        $region36: #{forward.19} parent=11 // pred_fallthru
          _
      $region12: #{forward.19} parent=5 // pred_fallthru
        _
      %p227 = scmp.lt.s32.totalorder %s16, 2
      // Predicated region
      $region37: #{forward.19} parent=5 // pred_check
        %p228 = pneg %p227
      $region38: #{forward.19} parent=5 // pred_check_branch
        %230 = sbr.rel (%p228) target = $region40
      $region39: #{forward.19} parent=5 // pred_region
        // Predicated region
        $region41: #{forward.19} parent=39 // pred_check
          %p231 = pneg %p36
        $region42: #{forward.19} parent=39 // pred_check_branch
          %233 = sbr.rel (%p231) target = $region44
        $region43: #{forward.19} parent=39 // pred_region
          %p234 = scmp.lt.s32.totalorder %s16, 1
          %s235 = scalar_select %p234, %s16, 1
          %s236 = smul.addr %s235, 8
          %s237 = scalar_lea.vmem %s0, %s236
        $region44: #{forward.19} parent=39 // pred_fallthru
          _
      $region40: #{forward.19} parent=5 // pred_fallthru
        _
      %p238 = scmp.le.s32.totalorder 1, %s16
      %p239 = scmp.lt.s32.totalorder %s16, 3
      %p240 = pnand %p238, %p239
      %p241 = pneg %p240
      // Predicated region
      $region45: #{forward.19} parent=5 // pred_check
        _
      $region46: #{forward.19} parent=5 // pred_check_branch
        %243 = sbr.rel (%p240) target = $region48
      $region47: #{forward.19} parent=5 // pred_region
        %s244 = ssub.s32 %s16, 1
        %p245 = scmp.lt.s32.totalorder %s21, 1
        %s246 = scalar_select %p245, %s21, 1
        %s247 = smul.addr %s246, 8
        %s248 = scalar_lea.vmem %s0, %s247
        %p249 = pneg %p42
        %p250 = pneg %p39
        %p251 = pneg %p63
        %p252 = pneg %p60
        %p253 = pneg %p84
        %p254 = pneg %p81
        %p255 = pneg %p105
        %p256 = pneg %p102
        %p257 = pneg %p126
        %p258 = pneg %p123
        %p259 = pneg %p147
        %p260 = pneg %p144
        %p261 = pneg %p168
        %p262 = pneg %p165
        %p263 = pneg %p194
        %p264 = pneg %p191
        %s265 = sand.u32 %s181, 1
        %s266 = scalar_lea.sflag [#allocation3], %s265
        %s267 = sand.u32 %s181, 1
        %s268 = smul.addr %s267, 8
        %s269 = scalar_lea.vmem [#allocation2], %s268
        %p270 = scmp.lt.s32.totalorder %s21, 1
        %s271 = scalar_select %p270, %s21, 1
        %s272 = smul.addr %s271, 8
        %s273 = scalar_lea.vmem %s0, %s272
        %v275 = vld [vmem:[%s273] sm:$0xff]
        %v276 = vpack.c.bf16 %v275, %v275
        %v277 = vld [vmem:[%s1] sm:$0xf]
        %v278 = vld [vmem:[%s1 + $0x4] sm:$0xf]
        %v279 = vld [vmem:[%s1 + $0x8] sm:$0xf]
        %v280 = vld [vmem:[%s1 + $0xc] sm:$0xf]
        %v281 = vld [vmem:[%s2] sm:$0x1]
        %v283 = vlaneseq
        %v284 = vshrl.u32 %v283, 7
        %v285 = vsub.s32 0, %v284
        %v286 = vrot.slane %v281, %v285
        %v292 = vunpack.c.l.b16 %v277
        %v293 = vunpack.c.l.b16 %v278
        %v294 = vunpack.c.l.b16 %v279
        %v295 = vunpack.c.l.b16 %v280
        %v296 = vpack.c.b16 %v293, %v292
        %v297 = vpack.c.b16 %v295, %v294
        %vm300 = vcmask 261120
        %v302 = vsel %vm300, %v276, 0
        %304 = vmatprep.subr.bf16.mxu0 0
        %305 = vmatpush1.bf16.msra.mxu0 %v296
        %306 = vmatprep.subr.bf16.mxu0 0
        %307 = vmatpush1.bf16.msra.mxu0 %v297
        %308 = vmatprep.subr.bf16.mxu0 0
        %309 = vmatpush1.bf16.msra.mxu0 0
        %310 = vmatprep.subr.bf16.mxu0 0
        %311 = vmatpush1.bf16.msra.mxu0 0
        %312 = vmatprep.subr.bf16.mxu0 0
        %313 = vmatpush1.bf16.msra.mxu0 0
        %314 = vmatprep.subr.bf16.mxu0 0
        %315 = vmatpush1.bf16.msra.mxu0 0
        %316 = vmatprep.subr.bf16.mxu0 0
        %317 = vmatpush1.bf16.msra.mxu0 0
        %318 = vmatprep.subr.bf16.mxu0 0
        %319 = vmatpush1.bf16.msra.mxu0 0
        %320 = vmatprep.subr.bf16.mxu0 0
        %321 = vmatpush1.bf16.msra.mxu0 0
        %322 = vmatprep.subr.bf16.mxu0 0
        %323 = vmatpush1.bf16.msra.mxu0 0
        %324 = vmatprep.subr.bf16.mxu0 0
        %325 = vmatpush1.bf16.msra.mxu0 0
        %326 = vmatprep.subr.bf16.mxu0 0
        %327 = vmatpush1.bf16.msra.mxu0 0
        %328 = vmatprep.subr.bf16.mxu0 0
        %329 = vmatpush1.bf16.msra.mxu0 0
        %330 = vmatprep.subr.bf16.mxu0 0
        %331 = vmatpush1.bf16.msra.mxu0 0
        %332 = vmatprep.subr.bf16.mxu0 0
        %333 = vmatpush1.bf16.msra.mxu0 0
        %334 = vmatprep.subr.bf16.mxu0 0
        %335 = vmatpush1.bf16.msra.mxu0 0
        %336 = vmatprep.mubr.bf16.mxu0 0
        %337 = vmatmul.mubr.bf16.gmra.mrb[0].mxu0 %v302
        %v338 = vpop.f32.mrb[0].mxu0
        %v339 = vadd.f32 %v286, %v338
        %v340 = vpop.f32.mrb[0].mxu0
        %v341 = vpop.f32.mrb[0].mxu0
        %v342 = vpop.f32.mrb[0].mxu0
        %343 = vdwg.mxu0
        %v344 = vmax.f32 %v339, 0.0
        %v345 = vpack.c.bf16 %v344, %v344
        %v346 = vld [vmem:[%s3] sm:$0xf]
        %v347 = vld [vmem:[%s3 + $0x4] sm:$0xf]
        %v348 = vld [vmem:[%s3 + $0x8] sm:$0xf]
        %v349 = vld [vmem:[%s3 + $0xc] sm:$0xf]
        %v350 = vld [vmem:[%s3 + $0x10] sm:$0xf]
        %v351 = vld [vmem:[%s3 + $0x14] sm:$0xf]
        %v352 = vld [vmem:[%s3 + $0x18] sm:$0xf]
        %v353 = vld [vmem:[%s3 + $0x1c] sm:$0xf]
        %v354 = vld [vmem:[%s4] sm:$0x1]
        %v356 = vlaneseq
        %v357 = vshrl.u32 %v356, 7
        %v358 = vsub.s32 0, %v357
        %v359 = vrot.slane %v354, %v358
        %v369 = vunpack.c.l.b16 %v346
        %v370 = vunpack.c.l.b16 %v347
        %v371 = vunpack.c.l.b16 %v348
        %v372 = vunpack.c.l.b16 %v349
        %v373 = vunpack.c.l.b16 %v350
        %v374 = vunpack.c.l.b16 %v351
        %v375 = vunpack.c.l.b16 %v352
        %v376 = vunpack.c.l.b16 %v353
        %v377 = vpack.c.b16 %v370, %v369
        %v378 = vpack.c.b16 %v372, %v371
        %v379 = vpack.c.b16 %v374, %v373
        %v380 = vpack.c.b16 %v376, %v375
        %vm385 = vcmask 523264
        %v387 = vsel %vm385, %v345, 0
        %389 = vmatprep.subr.bf16.mxu0 0
        %390 = vmatpush1.bf16.msra.mxu0 %v377
        %391 = vmatprep.subr.bf16.mxu0 0
        %392 = vmatpush1.bf16.msra.mxu0 %v378
        %393 = vmatprep.subr.bf16.mxu0 0
        %394 = vmatpush1.bf16.msra.mxu0 %v379
        %395 = vmatprep.subr.bf16.mxu0 0
        %396 = vmatpush1.bf16.msra.mxu0 %v380
        %397 = vmatprep.subr.bf16.mxu0 0
        %398 = vmatpush1.bf16.msra.mxu0 0
        %399 = vmatprep.subr.bf16.mxu0 0
        %400 = vmatpush1.bf16.msra.mxu0 0
        %401 = vmatprep.subr.bf16.mxu0 0
        %402 = vmatpush1.bf16.msra.mxu0 0
        %403 = vmatprep.subr.bf16.mxu0 0
        %404 = vmatpush1.bf16.msra.mxu0 0
        %405 = vmatprep.subr.bf16.mxu0 0
        %406 = vmatpush1.bf16.msra.mxu0 0
        %407 = vmatprep.subr.bf16.mxu0 0
        %408 = vmatpush1.bf16.msra.mxu0 0
        %409 = vmatprep.subr.bf16.mxu0 0
        %410 = vmatpush1.bf16.msra.mxu0 0
        %411 = vmatprep.subr.bf16.mxu0 0
        %412 = vmatpush1.bf16.msra.mxu0 0
        %413 = vmatprep.subr.bf16.mxu0 0
        %414 = vmatpush1.bf16.msra.mxu0 0
        %415 = vmatprep.subr.bf16.mxu0 0
        %416 = vmatpush1.bf16.msra.mxu0 0
        %417 = vmatprep.subr.bf16.mxu0 0
        %418 = vmatpush1.bf16.msra.mxu0 0
        %419 = vmatprep.subr.bf16.mxu0 0
        %420 = vmatpush1.bf16.msra.mxu0 0
        %421 = vmatprep.mubr.bf16.mxu0 0
        %422 = vmatmul.mubr.bf16.gmra.mrb[0].mxu0 %v387
        %v423 = vpop.f32.mrb[0].mxu0
        %v424 = vadd.f32 %v359, %v423
        %v425 = vpop.f32.mrb[0].mxu0
        %v426 = vpop.f32.mrb[0].mxu0
        %v427 = vpop.f32.mrb[0].mxu0
        %428 = vdwg.mxu0
        %v429 = vld [vmem:[%s5] sm:$0x1]
        %v430 = vld [vmem:[%s6] sm:$0x1]
        %v431 = vsel %vm300, %v424, 0.0
        %432 = vadd.xlane.f32.xlu0 %v431
        %v433 = vpop.xlane.xlu0 %432
        %v434 = vrcp.pop 32.0
        %v435 = vmul.f32 %v433, %v434
        %v436 = vsub.f32 %v424, %v435
        %v437 = vmul.f32 %v436, %v436
        %v438 = vsel %vm300, %v437, 0.0
        %439 = vadd.xlane.f32.xlu0 %v438
        %v440 = vpop.xlane.xlu0 %439
        %v441 = vrcp.pop 31.0
        %v442 = vmul.f32 %v440, %v441
        %v443 = vrsqrt.pop %v442
        %v444 = vmul.f32 %v442, %v443
        %vm445 = vcmp.eq.f32.partialorder %v442, inf
        %v446 = vsel %vm445, %v442, %v444
        %vm447 = vcmp.eq.f32.partialorder %v442, 0.0
        %v448 = vand.u32 %v442, 2147483648
        %v449 = vsel %vm447, %v448, %v446
        %v450 = vadd.f32 %v449, 1e-06
        %v451 = vrcp.pop %v450
        %v452 = vmul.f32 %v436, %v451
        %v454 = vlaneseq
        %v455 = vshrl.u32 %v454, 7
        %v456 = vsub.s32 0, %v455
        %v457 = vrot.slane %v429, %v456
        %v459 = vmul.f32 %v457, %v452
        %v461 = vlaneseq
        %v462 = vshrl.u32 %v461, 7
        %v463 = vsub.s32 0, %v462
        %v464 = vrot.slane %v430, %v463
        %v466 = vadd.f32 %v459, %v464
        %467 = vst.msk [vmem:[%s269] sm:$0xff] %vm300, %v466
        %s468 = sand.u32 %s181, 1
        %s469 = scalar_lea.sflag [#allocation3], %s468
        %s470 = sand.u32 %s181, 1
        %s471 = smul.addr %s470, 8
        %s472 = scalar_lea.vmem [#allocation2], %s471
        // Predicated region
        $region49: #{forward.19} parent=47 // pred_check
          %p473 = pneg %p191
        $region50: #{forward.19} parent=47 // pred_check_branch
          %475 = sbr.rel (%p473) target = $region52
        $region51: #{forward.19} parent=47 // pred_region
          %s477 = ssub.s32 128, 128
          %478 = vsyncadd %s469, %s477
          %s479 = smul.addr %s21, 128
          %s480 = scalar_lea.hbm %s7, %s479
          %s482 = sshll.u32 %s472, 4
          %s483 = int_to_ptr.vmem [resolvable:$true] %s482
          %485 = dma.vmem_to_hbm [thread:$0]  %s483, 128, %s480, %s469
        $region52: #{forward.19} parent=47 // pred_fallthru
          _
      $region48: #{forward.19} parent=5 // pred_fallthru
        _
      %p486 = scmp.le.s32.totalorder 2, %s16
      // Predicated region
      $region53: #{forward.19} parent=5 // pred_check
        %p487 = pneg %p486
      $region54: #{forward.19} parent=5 // pred_check_branch
        %489 = sbr.rel (%p487) target = $region56
      $region55: #{forward.19} parent=5 // pred_region
        %s490 = ssub.s32 %s16, 2
        // Predicated region
        $region57: #{forward.19} parent=55 // pred_check
          %p491 = pneg %p197
        $region58: #{forward.19} parent=55 // pred_check_branch
          %493 = sbr.rel (%p491) target = $region60
        $region59: #{forward.19} parent=55 // pred_region
          %s494 = sand.u32 %s182, 1
          %s495 = scalar_lea.sflag [#allocation3], %s494
          %s496 = sand.u32 %s182, 1
          %s497 = smul.addr %s496, 8
          %s498 = scalar_lea.vmem [#allocation2], %s497
          %499 = dma.done %s495, 128
        $region60: #{forward.19} parent=55 // pred_fallthru
          _
      $region56: #{forward.19} parent=5 // pred_fallthru
        _
    $region6: #{forward.19} parent=1 // loop_footer
      %s20 = sadd.s32 1, %s16
    $region7: #{forward.19} parent=1 // loop_footer_branch
      %15 = sbr.rel target = $region3
    $region8: #{forward.19} parent=1 // loop_exit
      _
    %500 = vsyncpa [#allocation3], 1
    %s501 = scalar_lea.sflag [#allocation3], 1
    %502 = vsyncpa %s501, 1

// kernel: forward.18
$region0: #{forward.18}
  #allocation0 [shape = 'u32[]', space=smem, size = 0x4, offset = 0x4, fixed_abs, tag = 'smem constant byte address 0x4 - core index']
  #allocation1 [shape = 'u32[144,128]{1,0:T(1,128)}', space=vmem, size = 0x12000, scoped, tag = 'internal scratch']
  #allocation2 [shape = 'f32[8,32]{1,0:T(8,128)}', space=vmem, size = 0x1000, scoped, tag = 'scratch operand']
  %s0 = inlined_call_operand.vmem [shape: f32[16,32], index: 0, kind: input, shape index: {}]
  %s1 = inlined_call_operand.vmem [shape: f32[32,32], index: 1, kind: input, shape index: {}]
  %s2 = inlined_call_operand.vmem [shape: f32[2,1,16], index: 2, kind: input, shape index: {}]
  %s3 = inlined_call_operand.vmem [shape: bf16[32,32], index: 3, kind: input, shape index: {}]
  %s4 = inlined_call_operand.vmem [shape: f32[1,32], index: 4, kind: input, shape index: {}]
  %s5 = inlined_call_operand.vmem [shape: bf16[32,64], index: 5, kind: input, shape index: {}]
  %s6 = inlined_call_operand.vmem [shape: f32[1,64], index: 6, kind: input, shape index: {}]
  %s7 = inlined_call_operand.vmem [shape: bf16[32,32], index: 7, kind: input, shape index: {}]
  %s8 = inlined_call_operand.vmem [shape: f32[1,32], index: 8, kind: input, shape index: {}]
  %s9 = inlined_call_operand.vmem [shape: f32[1,32], index: 9, kind: input, shape index: {}]
  %s10 = inlined_call_operand.vmem [shape: f32[1,32], index: 10, kind: input, shape index: {}]
  %s11 = inlined_call_operand.vmem [shape: f32[16,32], index: 11, kind: output, shape index: {}]
  %s12 = sld [smem:[#allocation0]]
  $region77: #{forward.18} parent=0
    _
  %s14 = ssub.s32 1, %s12
  %s15 = scalar_select 0, %s14, %s12
  loop: start=0, step=1, limit=4
  $region2: #{forward.18} parent=0 // loop_pre_header
    _
  $region3: #{forward.18} parent=0 // loop_header
    %s17 = sphi 0, %s21
    %p18 = scmp.ge.s32.totalorder %s17, 4
    %s27 = sphi 0, %s29
    %s30 = sphi 0, %s27
    %s31 = sphi 0, %s30
    %s47 = sphi 0, %s31
    %s53 = sphi 0, %s55
    %s56 = sphi 0, %s53
    %s57 = sphi 0, %s56
    %s73 = sphi 0, %s57
    %s79 = sphi 0, %s81
    %s82 = sphi 0, %s79
    %s83 = sphi 0, %s82
    %s99 = sphi 0, %s83
    %s103 = sphi 0, %s103
    %s105 = sphi 0, %s103
    %s106 = sphi 0, %s105
    %s120 = sphi 0, %s106
    %s124 = sphi 0, %s124
    %s126 = sphi 0, %s124
    %s127 = sphi 0, %s126
    %s141 = sphi 0, %s127
    %s145 = sphi 0, %s145
    %s147 = sphi 0, %s145
    %s148 = sphi 0, %s147
    %s162 = sphi 0, %s148
    %s166 = sphi 0, %s166
    %s168 = sphi 0, %s166
    %s169 = sphi 0, %s168
    %s183 = sphi 0, %s169
    %s187 = sphi 0, %s187
    %s189 = sphi 0, %s187
    %s190 = sphi 0, %s189
    %s204 = sphi 0, %s190
    %s208 = sphi 0, %s208
    %s210 = sphi 0, %s208
    %s211 = sphi 0, %s210
    %s225 = sphi 0, %s211
    %s229 = sphi 0, %s229
    %s231 = sphi 0, %s229
    %s232 = sphi 0, %s231
    %s246 = sphi 0, %s232
    %s250 = sphi 0, %s250
    %s252 = sphi 0, %s250
    %s253 = sphi 0, %s252
    %s267 = sphi 0, %s253
    %s273 = sphi 0, %s275
    %s276 = sphi 0, %s273
    %s277 = sphi 0, %s276
    %s293 = sphi 0, %s277
  $region4: #{forward.18} parent=0 // loop_header_branch
    %20 = sbr.rel (%p18) target = $region8
  $region5: #{forward.18} parent=0 // loop_body
    %s22 = ssub.s32 %s17, 1
    %s23 = ssub.s32 %s17, 2
    %s24 = sadd.s32 %s17, 1
    %s25 = ssub.s32 %s17, %s24
    %p26 = scmp.eq.s32.totalorder %s25, 0
    %s28 = sadd.s32 %s27, 1
    %s29 = scalar_select %p26, %s27, %s28
    %p32 = pneg %p26
    %p33 = scmp.eq.s32.totalorder %s17, 1
    %p34 = por %p32, %p33
    %p35 = scmp.ne.s32.totalorder %s27, %s30
    %p36 = scmp.eq.s32.totalorder %s17, 0
    %p37 = por %p35, %p36
    %p38 = scmp.ne.s32.totalorder %s27, %s30
    %p39 = scmp.eq.s32.totalorder %s22, 1
    %p40 = por %p38, %p39
    %p41 = scmp.ne.s32.totalorder %s30, %s31
    %p42 = scmp.eq.s32.totalorder %s22, 0
    %p43 = por %p41, %p42
    %p44 = scmp.ne.s32.totalorder %s30, %s31
    %p45 = scmp.eq.s32.totalorder %s23, 1
    %p46 = por %p44, %p45
    %p48 = scmp.ne.s32.totalorder %s31, %s47
    %p49 = scmp.eq.s32.totalorder %s23, 0
    %p50 = por %p48, %p49
    %s51 = ssub.s32 %s17, %s24
    %p52 = scmp.eq.s32.totalorder %s51, 0
    %s54 = sadd.s32 %s53, 1
    %s55 = scalar_select %p52, %s53, %s54
    %p58 = pneg %p52
    %p59 = scmp.eq.s32.totalorder %s17, 1
    %p60 = por %p58, %p59
    %p61 = scmp.ne.s32.totalorder %s53, %s56
    %p62 = scmp.eq.s32.totalorder %s17, 0
    %p63 = por %p61, %p62
    %p64 = scmp.ne.s32.totalorder %s53, %s56
    %p65 = scmp.eq.s32.totalorder %s22, 1
    %p66 = por %p64, %p65
    %p67 = scmp.ne.s32.totalorder %s56, %s57
    %p68 = scmp.eq.s32.totalorder %s22, 0
    %p69 = por %p67, %p68
    %p70 = scmp.ne.s32.totalorder %s56, %s57
    %p71 = scmp.eq.s32.totalorder %s23, 1
    %p72 = por %p70, %p71
    %p74 = scmp.ne.s32.totalorder %s57, %s73
    %p75 = scmp.eq.s32.totalorder %s23, 0
    %p76 = por %p74, %p75
    %s77 = ssub.s32 %s17, %s24
    %p78 = scmp.eq.s32.totalorder %s77, 0
    %s80 = sadd.s32 %s79, 1
    %s81 = scalar_select %p78, %s79, %s80
    %p84 = pneg %p78
    %p85 = scmp.eq.s32.totalorder %s17, 1
    %p86 = por %p84, %p85
    %p87 = scmp.ne.s32.totalorder %s79, %s82
    %p88 = scmp.eq.s32.totalorder %s17, 0
    %p89 = por %p87, %p88
    %p90 = scmp.ne.s32.totalorder %s79, %s82
    %p91 = scmp.eq.s32.totalorder %s22, 1
    %p92 = por %p90, %p91
    %p93 = scmp.ne.s32.totalorder %s82, %s83
    %p94 = scmp.eq.s32.totalorder %s22, 0
    %p95 = por %p93, %p94
    %p96 = scmp.ne.s32.totalorder %s82, %s83
    %p97 = scmp.eq.s32.totalorder %s23, 1
    %p98 = por %p96, %p97
    %p100 = scmp.ne.s32.totalorder %s83, %s99
    %p101 = scmp.eq.s32.totalorder %s23, 0
    %p102 = por %p100, %p101
    %s104 = sadd.s32 %s103, 1
    %p107 = scmp.eq.s32.totalorder %s17, 1
    %p108 = scmp.ne.s32.totalorder %s103, %s105
    %p109 = scmp.eq.s32.totalorder %s17, 0
    %p110 = por %p108, %p109
    %p111 = scmp.ne.s32.totalorder %s103, %s105
    %p112 = scmp.eq.s32.totalorder %s22, 1
    %p113 = por %p111, %p112
    %p114 = scmp.ne.s32.totalorder %s105, %s106
    %p115 = scmp.eq.s32.totalorder %s22, 0
    %p116 = por %p114, %p115
    %p117 = scmp.ne.s32.totalorder %s105, %s106
    %p118 = scmp.eq.s32.totalorder %s23, 1
    %p119 = por %p117, %p118
    %p121 = scmp.ne.s32.totalorder %s106, %s120
    %p122 = scmp.eq.s32.totalorder %s23, 0
    %p123 = por %p121, %p122
    %s125 = sadd.s32 %s124, 1
    %p128 = scmp.eq.s32.totalorder %s17, 1
    %p129 = scmp.ne.s32.totalorder %s124, %s126
    %p130 = scmp.eq.s32.totalorder %s17, 0
    %p131 = por %p129, %p130
    %p132 = scmp.ne.s32.totalorder %s124, %s126
    %p133 = scmp.eq.s32.totalorder %s22, 1
    %p134 = por %p132, %p133
    %p135 = scmp.ne.s32.totalorder %s126, %s127
    %p136 = scmp.eq.s32.totalorder %s22, 0
    %p137 = por %p135, %p136
    %p138 = scmp.ne.s32.totalorder %s126, %s127
    %p139 = scmp.eq.s32.totalorder %s23, 1
    %p140 = por %p138, %p139
    %p142 = scmp.ne.s32.totalorder %s127, %s141
    %p143 = scmp.eq.s32.totalorder %s23, 0
    %p144 = por %p142, %p143
    %s146 = sadd.s32 %s145, 1
    %p149 = scmp.eq.s32.totalorder %s17, 1
    %p150 = scmp.ne.s32.totalorder %s145, %s147
    %p151 = scmp.eq.s32.totalorder %s17, 0
    %p152 = por %p150, %p151
    %p153 = scmp.ne.s32.totalorder %s145, %s147
    %p154 = scmp.eq.s32.totalorder %s22, 1
    %p155 = por %p153, %p154
    %p156 = scmp.ne.s32.totalorder %s147, %s148
    %p157 = scmp.eq.s32.totalorder %s22, 0
    %p158 = por %p156, %p157
    %p159 = scmp.ne.s32.totalorder %s147, %s148
    %p160 = scmp.eq.s32.totalorder %s23, 1
    %p161 = por %p159, %p160
    %p163 = scmp.ne.s32.totalorder %s148, %s162
    %p164 = scmp.eq.s32.totalorder %s23, 0
    %p165 = por %p163, %p164
    %s167 = sadd.s32 %s166, 1
    %p170 = scmp.eq.s32.totalorder %s17, 1
    %p171 = scmp.ne.s32.totalorder %s166, %s168
    %p172 = scmp.eq.s32.totalorder %s17, 0
    %p173 = por %p171, %p172
    %p174 = scmp.ne.s32.totalorder %s166, %s168
    %p175 = scmp.eq.s32.totalorder %s22, 1
    %p176 = por %p174, %p175
    %p177 = scmp.ne.s32.totalorder %s168, %s169
    %p178 = scmp.eq.s32.totalorder %s22, 0
    %p179 = por %p177, %p178
    %p180 = scmp.ne.s32.totalorder %s168, %s169
    %p181 = scmp.eq.s32.totalorder %s23, 1
    %p182 = por %p180, %p181
    %p184 = scmp.ne.s32.totalorder %s169, %s183
    %p185 = scmp.eq.s32.totalorder %s23, 0
    %p186 = por %p184, %p185
    %s188 = sadd.s32 %s187, 1
    %p191 = scmp.eq.s32.totalorder %s17, 1
    %p192 = scmp.ne.s32.totalorder %s187, %s189
    %p193 = scmp.eq.s32.totalorder %s17, 0
    %p194 = por %p192, %p193
    %p195 = scmp.ne.s32.totalorder %s187, %s189
    %p196 = scmp.eq.s32.totalorder %s22, 1
    %p197 = por %p195, %p196
    %p198 = scmp.ne.s32.totalorder %s189, %s190
    %p199 = scmp.eq.s32.totalorder %s22, 0
    %p200 = por %p198, %p199
    %p201 = scmp.ne.s32.totalorder %s189, %s190
    %p202 = scmp.eq.s32.totalorder %s23, 1
    %p203 = por %p201, %p202
    %p205 = scmp.ne.s32.totalorder %s190, %s204
    %p206 = scmp.eq.s32.totalorder %s23, 0
    %p207 = por %p205, %p206
    %s209 = sadd.s32 %s208, 1
    %p212 = scmp.eq.s32.totalorder %s17, 1
    %p213 = scmp.ne.s32.totalorder %s208, %s210
    %p214 = scmp.eq.s32.totalorder %s17, 0
    %p215 = por %p213, %p214
    %p216 = scmp.ne.s32.totalorder %s208, %s210
    %p217 = scmp.eq.s32.totalorder %s22, 1
    %p218 = por %p216, %p217
    %p219 = scmp.ne.s32.totalorder %s210, %s211
    %p220 = scmp.eq.s32.totalorder %s22, 0
    %p221 = por %p219, %p220
    %p222 = scmp.ne.s32.totalorder %s210, %s211
    %p223 = scmp.eq.s32.totalorder %s23, 1
    %p224 = por %p222, %p223
    %p226 = scmp.ne.s32.totalorder %s211, %s225
    %p227 = scmp.eq.s32.totalorder %s23, 0
    %p228 = por %p226, %p227
    %s230 = sadd.s32 %s229, 1
    %p233 = scmp.eq.s32.totalorder %s17, 1
    %p234 = scmp.ne.s32.totalorder %s229, %s231
    %p235 = scmp.eq.s32.totalorder %s17, 0
    %p236 = por %p234, %p235
    %p237 = scmp.ne.s32.totalorder %s229, %s231
    %p238 = scmp.eq.s32.totalorder %s22, 1
    %p239 = por %p237, %p238
    %p240 = scmp.ne.s32.totalorder %s231, %s232
    %p241 = scmp.eq.s32.totalorder %s22, 0
    %p242 = por %p240, %p241
    %p243 = scmp.ne.s32.totalorder %s231, %s232
    %p244 = scmp.eq.s32.totalorder %s23, 1
    %p245 = por %p243, %p244
    %p247 = scmp.ne.s32.totalorder %s232, %s246
    %p248 = scmp.eq.s32.totalorder %s23, 0
    %p249 = por %p247, %p248
    %s251 = sadd.s32 %s250, 1
    %p254 = scmp.eq.s32.totalorder %s17, 1
    %p255 = scmp.ne.s32.totalorder %s250, %s252
    %p256 = scmp.eq.s32.totalorder %s17, 0
    %p257 = por %p255, %p256
    %p258 = scmp.ne.s32.totalorder %s250, %s252
    %p259 = scmp.eq.s32.totalorder %s22, 1
    %p260 = por %p258, %p259
    %p261 = scmp.ne.s32.totalorder %s252, %s253
    %p262 = scmp.eq.s32.totalorder %s22, 0
    %p263 = por %p261, %p262
    %p264 = scmp.ne.s32.totalorder %s252, %s253
    %p265 = scmp.eq.s32.totalorder %s23, 1
    %p266 = por %p264, %p265
    %p268 = scmp.ne.s32.totalorder %s253, %s267
    %p269 = scmp.eq.s32.totalorder %s23, 0
    %p270 = por %p268, %p269
    %s271 = ssub.s32 %s17, %s24
    %p272 = scmp.eq.s32.totalorder %s271, 0
    %s274 = sadd.s32 %s273, 1
    %s275 = scalar_select %p272, %s273, %s274
    %p278 = pneg %p272
    %p279 = scmp.eq.s32.totalorder %s17, 1
    %p280 = por %p278, %p279
    %p281 = scmp.ne.s32.totalorder %s273, %s276
    %p282 = scmp.eq.s32.totalorder %s17, 0
    %p283 = por %p281, %p282
    %p284 = scmp.ne.s32.totalorder %s273, %s276
    %p285 = scmp.eq.s32.totalorder %s22, 1
    %p286 = por %p284, %p285
    %p287 = scmp.ne.s32.totalorder %s276, %s277
    %p288 = scmp.eq.s32.totalorder %s22, 0
    %p289 = por %p287, %p288
    %p290 = scmp.ne.s32.totalorder %s276, %s277
    %p291 = scmp.eq.s32.totalorder %s23, 1
    %p292 = por %p290, %p291
    %p294 = scmp.ne.s32.totalorder %s277, %s293
    %p295 = scmp.eq.s32.totalorder %s23, 0
    %p296 = por %p294, %p295
    %p297 = scmp.le.s32.totalorder 1, %s17
    %p298 = scmp.lt.s32.totalorder %s17, 3
    %p299 = pnand %p297, %p298
    %p300 = pneg %p299
    // Predicated region
    $region9: #{forward.18} parent=5 // pred_check
      _
    $region10: #{forward.18} parent=5 // pred_check_branch
      %302 = sbr.rel (%p299) target = $region12
    $region11: #{forward.18} parent=5 // pred_region
      %s303 = ssub.s32 %s17, 1
      // Predicated region
      $region13: #{forward.18} parent=11 // pred_check
        %p304 = pneg %p116
      $region14: #{forward.18} parent=11 // pred_check_branch
        %306 = sbr.rel (%p304) target = $region16
      $region15: #{forward.18} parent=11 // pred_region
        _
      $region16: #{forward.18} parent=11 // pred_fallthru
        _
      // Predicated region
      $region17: #{forward.18} parent=11 // pred_check
        %p307 = pneg %p137
      $region18: #{forward.18} parent=11 // pred_check_branch
        %309 = sbr.rel (%p307) target = $region20
      $region19: #{forward.18} parent=11 // pred_region
        _
      $region20: #{forward.18} parent=11 // pred_fallthru
        _
      // Predicated region
      $region21: #{forward.18} parent=11 // pred_check
        %p310 = pneg %p158
      $region22: #{forward.18} parent=11 // pred_check_branch
        %312 = sbr.rel (%p310) target = $region24
      $region23: #{forward.18} parent=11 // pred_region
        _
      $region24: #{forward.18} parent=11 // pred_fallthru
        _
      // Predicated region
      $region25: #{forward.18} parent=11 // pred_check
        %p313 = pneg %p179
      $region26: #{forward.18} parent=11 // pred_check_branch
        %315 = sbr.rel (%p313) target = $region28
      $region27: #{forward.18} parent=11 // pred_region
        _
      $region28: #{forward.18} parent=11 // pred_fallthru
        _
      // Predicated region
      $region29: #{forward.18} parent=11 // pred_check
        %p316 = pneg %p200
      $region30: #{forward.18} parent=11 // pred_check_branch
        %318 = sbr.rel (%p316) target = $region32
      $region31: #{forward.18} parent=11 // pred_region
        _
      $region32: #{forward.18} parent=11 // pred_fallthru
        _
      // Predicated region
      $region33: #{forward.18} parent=11 // pred_check
        %p319 = pneg %p221
      $region34: #{forward.18} parent=11 // pred_check_branch
        %321 = sbr.rel (%p319) target = $region36
      $region35: #{forward.18} parent=11 // pred_region
        _
      $region36: #{forward.18} parent=11 // pred_fallthru
        _
      // Predicated region
      $region37: #{forward.18} parent=11 // pred_check
        %p322 = pneg %p242
      $region38: #{forward.18} parent=11 // pred_check_branch
        %324 = sbr.rel (%p322) target = $region40
      $region39: #{forward.18} parent=11 // pred_region
        _
      $region40: #{forward.18} parent=11 // pred_fallthru
        _
      // Predicated region
      $region41: #{forward.18} parent=11 // pred_check
        %p325 = pneg %p263
      $region42: #{forward.18} parent=11 // pred_check_branch
        %327 = sbr.rel (%p325) target = $region44
      $region43: #{forward.18} parent=11 // pred_region
        _
      $region44: #{forward.18} parent=11 // pred_fallthru
        _
    $region12: #{forward.18} parent=5 // pred_fallthru
      _
    %p328 = scmp.lt.s32.totalorder %s17, 2
    // Predicated region
    $region45: #{forward.18} parent=5 // pred_check
      %p329 = pneg %p328
    $region46: #{forward.18} parent=5 // pred_check_branch
      %331 = sbr.rel (%p329) target = $region48
    $region47: #{forward.18} parent=5 // pred_region
      // Predicated region
      $region49: #{forward.18} parent=47 // pred_check
        %p332 = pneg %p37
      $region50: #{forward.18} parent=47 // pred_check_branch
        %334 = sbr.rel (%p332) target = $region52
      $region51: #{forward.18} parent=47 // pred_region
        %p335 = scmp.lt.s32.totalorder %s17, 1
        %s336 = scalar_select %p335, %s17, 1
        %s337 = smul.addr %s336, 8
        %s338 = scalar_lea.vmem %s0, %s337
      $region52: #{forward.18} parent=47 // pred_fallthru
        _
      // Predicated region
      $region53: #{forward.18} parent=47 // pred_check
        %p339 = pneg %p63
      $region54: #{forward.18} parent=47 // pred_check_branch
        %341 = sbr.rel (%p339) target = $region56
      $region55: #{forward.18} parent=47 // pred_region
        %s342 = smul.u32 2, %s17
        %p343 = scmp.lt.s32.totalorder %s342, 3
        %s344 = scalar_select %p343, %s342, 3
        %s345 = smul.addr %s344, 8
        %s346 = scalar_lea.vmem %s1, %s345
        %s347 = smul.u32 2, %s17
      $region56: #{forward.18} parent=47 // pred_fallthru
        _
      // Predicated region
      $region57: #{forward.18} parent=47 // pred_check
        %p348 = pneg %p89
      $region58: #{forward.18} parent=47 // pred_check_branch
        %350 = sbr.rel (%p348) target = $region60
      $region59: #{forward.18} parent=47 // pred_region
        %p351 = scmp.lt.s32.totalorder %s17, 1
        %s352 = scalar_select %p351, %s17, 1
        %s353 = scalar_lea.vmem %s2, %s352
      $region60: #{forward.18} parent=47 // pred_fallthru
        _
    $region48: #{forward.18} parent=5 // pred_fallthru
      _
    %p354 = scmp.le.s32.totalorder 1, %s17
    %p355 = scmp.lt.s32.totalorder %s17, 3
    %p356 = pnand %p354, %p355
    %p357 = pneg %p356
    // Predicated region
    $region61: #{forward.18} parent=5 // pred_check
      _
    $region62: #{forward.18} parent=5 // pred_check_branch
      %359 = sbr.rel (%p356) target = $region64
    $region63: #{forward.18} parent=5 // pred_region
      %s360 = ssub.s32 %s17, 1
      %p361 = scmp.lt.s32.totalorder %s22, 1
      %s362 = scalar_select %p361, %s22, 1
      %s363 = smul.addr %s362, 8
      %s364 = scalar_lea.vmem %s0, %s363
      %p365 = pneg %p43
      %p366 = pneg %p40
      %s367 = smul.u32 2, %s22
      %p368 = scmp.lt.s32.totalorder %s367, 3
      %s369 = scalar_select %p368, %s367, 3
      %s370 = smul.addr %s369, 8
      %s371 = scalar_lea.vmem %s1, %s370
      %p372 = pneg %p69
      %p373 = pneg %p66
      %p374 = scmp.lt.s32.totalorder %s22, 1
      %s375 = scalar_select %p374, %s22, 1
      %s376 = scalar_lea.vmem %s2, %s375
      %p377 = pneg %p95
      %p378 = pneg %p92
      %p379 = pneg %p116
      %p380 = pneg %p113
      %p381 = pneg %p137
      %p382 = pneg %p134
      %p383 = pneg %p158
      %p384 = pneg %p155
      %p385 = pneg %p179
      %p386 = pneg %p176
      %p387 = pneg %p200
      %p388 = pneg %p197
      %p389 = pneg %p221
      %p390 = pneg %p218
      %p391 = pneg %p242
      %p392 = pneg %p239
      %p393 = pneg %p263
      %p394 = pneg %p260
      %p395 = pneg %p289
      %p396 = pneg %p286
      %p397 = scmp.lt.s32.totalorder %s22, 1
      %s398 = scalar_select %p397, %s22, 1
      %s399 = smul.addr %s398, 8
      %s400 = scalar_lea.vmem %s11, %s399
      %p401 = scmp.lt.s32.totalorder %s22, 1
      %s402 = scalar_select %p401, %s22, 1
      %s403 = smul.addr %s402, 8
      %s404 = scalar_lea.vmem %s0, %s403
      %s405 = smul.u32 2, %s22
      %p406 = scmp.lt.s32.totalorder %s405, 3
      %s407 = scalar_select %p406, %s405, 3
      %s408 = smul.addr %s407, 8
      %s409 = scalar_lea.vmem %s1, %s408
      %s410 = smul.u32 2, %s22
      %p411 = scmp.lt.s32.totalorder %s22, 1
      %s412 = scalar_select %p411, %s22, 1
      %s413 = scalar_lea.vmem %s2, %s412
      %p414 = scmp.lt.s32.totalorder %s22, 1
      %s415 = scalar_select %p414, %s22, 1
      %s416 = smul.addr %s415, 8
      %s417 = scalar_lea.vmem %s11, %s416
      %v419 = vld [vmem:[%s404] sm:$0xff]
      %v420 = vld [vmem:[%s409] sm:$0xff]
      %v421 = vld [vmem:[%s409 + $0x8] sm:$0xff]
      %v422 = vpack.c.bf16 %v419, %v419
      %v423 = vld [vmem:[%s3] sm:$0xf]
      %v424 = vld [vmem:[%s3 + $0x4] sm:$0xf]
      %v425 = vld [vmem:[%s3 + $0x8] sm:$0xf]
      %v426 = vld [vmem:[%s3 + $0xc] sm:$0xf]
      %v427 = vld [vmem:[%s4] sm:$0x1]
      %v429 = vlaneseq
      %v430 = vshrl.u32 %v429, 7
      %v431 = vsub.s32 0, %v430
      %v432 = vrot.slane %v427, %v431
      %v438 = vunpack.c.l.b16 %v423
      %v439 = vunpack.c.l.b16 %v424
      %v440 = vunpack.c.l.b16 %v425
      %v441 = vunpack.c.l.b16 %v426
      %v442 = vpack.c.b16 %v439, %v438
      %v443 = vpack.c.b16 %v441, %v440
      %vm446 = vcmask 261120
      %v448 = vsel %vm446, %v422, 0
      %450 = vmatprep.subr.bf16.mxu0 0
      %451 = vmatpush1.bf16.msra.mxu0 %v442
      %452 = vmatprep.subr.bf16.mxu0 0
      %453 = vmatpush1.bf16.msra.mxu0 %v443
      %454 = vmatprep.subr.bf16.mxu0 0
      %455 = vmatpush1.bf16.msra.mxu0 0
      %456 = vmatprep.subr.bf16.mxu0 0
      %457 = vmatpush1.bf16.msra.mxu0 0
      %458 = vmatprep.subr.bf16.mxu0 0
      %459 = vmatpush1.bf16.msra.mxu0 0
      %460 = vmatprep.subr.bf16.mxu0 0
      %461 = vmatpush1.bf16.msra.mxu0 0
      %462 = vmatprep.subr.bf16.mxu0 0
      %463 = vmatpush1.bf16.msra.mxu0 0
      %464 = vmatprep.subr.bf16.mxu0 0
      %465 = vmatpush1.bf16.msra.mxu0 0
      %466 = vmatprep.subr.bf16.mxu0 0
      %467 = vmatpush1.bf16.msra.mxu0 0
      %468 = vmatprep.subr.bf16.mxu0 0
      %469 = vmatpush1.bf16.msra.mxu0 0
      %470 = vmatprep.subr.bf16.mxu0 0
      %471 = vmatpush1.bf16.msra.mxu0 0
      %472 = vmatprep.subr.bf16.mxu0 0
      %473 = vmatpush1.bf16.msra.mxu0 0
      %474 = vmatprep.subr.bf16.mxu0 0
      %475 = vmatpush1.bf16.msra.mxu0 0
      %476 = vmatprep.subr.bf16.mxu0 0
      %477 = vmatpush1.bf16.msra.mxu0 0
      %478 = vmatprep.subr.bf16.mxu0 0
      %479 = vmatpush1.bf16.msra.mxu0 0
      %480 = vmatprep.subr.bf16.mxu0 0
      %481 = vmatpush1.bf16.msra.mxu0 0
      %482 = vmatprep.mubr.bf16.mxu0 0
      %483 = vmatmul.mubr.bf16.gmra.mrb[0].mxu0 %v448
      %v484 = vpop.f32.mrb[0].mxu0
      %v485 = vadd.f32 %v432, %v484
      %v486 = vpop.f32.mrb[0].mxu0
      %v487 = vpop.f32.mrb[0].mxu0
      %v488 = vpop.f32.mrb[0].mxu0
      %489 = vdwg.mxu0
      %v490 = vpack.c.bf16 %v421, %v420
      %v491 = vld [vmem:[%s5] sm:$0xf]
      %v492 = vld [vmem:[%s5 + $0x4] sm:$0xf]
      %v493 = vld [vmem:[%s5 + $0x8] sm:$0xf]
      %v494 = vld [vmem:[%s5 + $0xc] sm:$0xf]
      %v495 = vld [vmem:[%s6] sm:$0x1]
      %v497 = vlaneseq
      %v498 = vshrl.u32 %v497, 7
      %v499 = vsub.s32 0, %v498
      %v500 = vrot.slane %v495, %v499
      %v506 = vunpack.c.l.b16 %v491
      %v507 = vunpack.c.l.b16 %v492
      %v508 = vunpack.c.l.b16 %v493
      %v509 = vunpack.c.l.b16 %v494
      %v510 = vpack.c.b16 %v507, %v506
      %v511 = vpack.c.b16 %v509, %v508
      %v515 = vsel %vm446, %v490, 0
      %517 = vmatprep.subr.bf16.mxu0 0
      %518 = vmatpush1.bf16.msra.mxu0 %v510
      %519 = vmatprep.subr.bf16.mxu0 0
      %520 = vmatpush1.bf16.msra.mxu0 %v511
      %521 = vmatprep.subr.bf16.mxu0 0
      %522 = vmatpush1.bf16.msra.mxu0 0
      %523 = vmatprep.subr.bf16.mxu0 0
      %524 = vmatpush1.bf16.msra.mxu0 0
      %525 = vmatprep.subr.bf16.mxu0 0
      %526 = vmatpush1.bf16.msra.mxu0 0
      %527 = vmatprep.subr.bf16.mxu0 0
      %528 = vmatpush1.bf16.msra.mxu0 0
      %529 = vmatprep.subr.bf16.mxu0 0
      %530 = vmatpush1.bf16.msra.mxu0 0
      %531 = vmatprep.subr.bf16.mxu0 0
      %532 = vmatpush1.bf16.msra.mxu0 0
      %533 = vmatprep.subr.bf16.mxu0 0
      %534 = vmatpush1.bf16.msra.mxu0 0
      %535 = vmatprep.subr.bf16.mxu0 0
      %536 = vmatpush1.bf16.msra.mxu0 0
      %537 = vmatprep.subr.bf16.mxu0 0
      %538 = vmatpush1.bf16.msra.mxu0 0
      %539 = vmatprep.subr.bf16.mxu0 0
      %540 = vmatpush1.bf16.msra.mxu0 0
      %541 = vmatprep.subr.bf16.mxu0 0
      %542 = vmatpush1.bf16.msra.mxu0 0
      %543 = vmatprep.subr.bf16.mxu0 0
      %544 = vmatpush1.bf16.msra.mxu0 0
      %545 = vmatprep.subr.bf16.mxu0 0
      %546 = vmatpush1.bf16.msra.mxu0 0
      %547 = vmatprep.subr.bf16.mxu0 0
      %548 = vmatpush1.bf16.msra.mxu0 0
      %549 = vmatprep.mubr.bf16.mxu0 0
      %550 = vmatmul.mubr.bf16.gmra.mrb[0].mxu0 %v515
      %v551 = vpop.f32.mrb[0].mxu0
      %v552 = vadd.f32 %v500, %v551
      %v553 = vpop.f32.mrb[0].mxu0
      %v554 = vpop.f32.mrb[0].mxu0
      %v555 = vadd.f32 %v500, %v554
      %v556 = vpop.f32.mrb[0].mxu0
      %557 = vdwg.mxu0
      %v558 = vld [vmem:[%s413] sm:$0x1]
      %v559 = vpack.c.bf16 %v485, %v485
      %v560 = vpack.c.bf16 %v555, %v552
      %vm561 = vcmask 64512
      %v563 = vsel %vm561, %v559, 0
      %v566 = vsel %vm561, %v560, 0
      %568 = vmatprep.subr.bf16.mxu0 0
      %569 = vmatpush1.bf16.xpose.msra.mxu0 %v566
      %570 = vmatprep.subr.bf16.mxu0 0
      %571 = vmatpush1.bf16.xpose.msra.mxu0 0
      %572 = vmatprep.subr.bf16.mxu0 0
      %573 = vmatpush1.bf16.xpose.msra.mxu0 0
      %574 = vmatprep.subr.bf16.mxu0 0
      %575 = vmatpush1.bf16.xpose.msra.mxu0 0
      %576 = vmatprep.subr.bf16.mxu0 0
      %577 = vmatpush1.bf16.xpose.msra.mxu0 0
      %578 = vmatprep.subr.bf16.mxu0 0
      %579 = vmatpush1.bf16.xpose.msra.mxu0 0
      %580 = vmatprep.subr.bf16.mxu0 0
      %581 = vmatpush1.bf16.xpose.msra.mxu0 0
      %582 = vmatprep.subr.bf16.mxu0 0
      %583 = vmatpush1.bf16.xpose.msra.mxu0 0
      %584 = vmatprep.subr.bf16.mxu0 0
      %585 = vmatpush1.bf16.xpose.msra.mxu0 0
      %586 = vmatprep.subr.bf16.mxu0 0
      %587 = vmatpush1.bf16.xpose.msra.mxu0 0
      %588 = vmatprep.subr.bf16.mxu0 0
      %589 = vmatpush1.bf16.xpose.msra.mxu0 0
      %590 = vmatprep.subr.bf16.mxu0 0
      %591 = vmatpush1.bf16.xpose.msra.mxu0 0
      %592 = vmatprep.subr.bf16.mxu0 0
      %593 = vmatpush1.bf16.xpose.msra.mxu0 0
      %594 = vmatprep.subr.bf16.mxu0 0
      %595 = vmatpush1.bf16.xpose.msra.mxu0 0
      %596 = vmatprep.subr.bf16.mxu0 0
      %597 = vmatpush1.bf16.xpose.msra.mxu0 0
      %598 = vmatprep.subr.bf16.mxu0 0
      %599 = vmatpush1.bf16.xpose.msra.mxu0 0
      %600 = vmatprep.mubr.bf16.mxu0 0
      %601 = vmatmul.mubr.bf16.gmra.mrb[0].mxu0 %v563
      %v602 = vpop.f32.mrb[0].mxu0
      %v603 = vadd.f32 0.0, %v602
      %v604 = vpop.f32.mrb[0].mxu0
      %v605 = vpop.f32.mrb[0].mxu0
      %v606 = vpop.f32.mrb[0].mxu0
      %607 = vdwg.mxu0
      %v608 = vmul.f32 %v603, 0.35355338
      %v610 = vlaneseq
      %v611 = vshrl.u32 %v610, 7
      %v612 = vsub.s32 0, %v611
      %v613 = vrot.slane %v558, %v612
      %v615 = vadd.f32 %v608, %v613
      %vm616 = vcmask 130048
      %v617 = vsel %vm616, %v615, -inf
      %618 = vmax.xlane.f32.xlu0 %v617
      %v619 = vpop.xlane.xlu0 %618
      %v620 = vsub.f32 %v615, %v619
      %v621 = vmul.f32 %v620, 1.442695
      %v622 = vpow.pop %v621
      %v623 = vsel %vm616, %v622, 0.0
      %624 = vadd.xlane.f32.xlu0 %v623
      %v625 = vpop.xlane.xlu0 %624
      %v626 = vrcp.pop %v625
      %v627 = vmul.f32 %v622, %v626
      %v628 = vpack.c.bf16 %v627, %v627
      %630 = vrot.lane.b32.xlu0 %v560, 96
      %v631 = vpop.permute.xlu0 %630
      %v634 = vsel %vm616, %v628, 0
      %636 = vmatprep.subr.bf16.mxu0 0
      %637 = vmatpush1.bf16.msra.mxu0 %v631
      %638 = vmatprep.subr.bf16.mxu0 0
      %639 = vmatpush1.bf16.msra.mxu0 0
      %640 = vmatprep.subr.bf16.mxu0 0
      %641 = vmatpush1.bf16.msra.mxu0 0
      %642 = vmatprep.subr.bf16.mxu0 0
      %643 = vmatpush1.bf16.msra.mxu0 0
      %644 = vmatprep.subr.bf16.mxu0 0
      %645 = vmatpush1.bf16.msra.mxu0 0
      %646 = vmatprep.subr.bf16.mxu0 0
      %647 = vmatpush1.bf16.msra.mxu0 0
      %648 = vmatprep.subr.bf16.mxu0 0
      %649 = vmatpush1.bf16.msra.mxu0 0
      %650 = vmatprep.subr.bf16.mxu0 0
      %651 = vmatpush1.bf16.msra.mxu0 0
      %652 = vmatprep.subr.bf16.mxu0 0
      %653 = vmatpush1.bf16.msra.mxu0 0
      %654 = vmatprep.subr.bf16.mxu0 0
      %655 = vmatpush1.bf16.msra.mxu0 0
      %656 = vmatprep.subr.bf16.mxu0 0
      %657 = vmatpush1.bf16.msra.mxu0 0
      %658 = vmatprep.subr.bf16.mxu0 0
      %659 = vmatpush1.bf16.msra.mxu0 0
      %660 = vmatprep.subr.bf16.mxu0 0
      %661 = vmatpush1.bf16.msra.mxu0 0
      %662 = vmatprep.subr.bf16.mxu0 0
      %663 = vmatpush1.bf16.msra.mxu0 0
      %664 = vmatprep.subr.bf16.mxu0 0
      %665 = vmatpush1.bf16.msra.mxu0 0
      %666 = vmatprep.subr.bf16.mxu0 0
      %667 = vmatpush1.bf16.msra.mxu0 0
      %668 = vmatprep.mubr.bf16.mxu0 0
      %669 = vmatmul.mubr.bf16.gmra.mrb[0].mxu0 %v634
      %v670 = vpop.f32.mrb[0].mxu0
      %v671 = vadd.f32 0.0, %v670
      %v672 = vpop.f32.mrb[0].mxu0
      %v673 = vpop.f32.mrb[0].mxu0
      %v674 = vpop.f32.mrb[0].mxu0
      %675 = vdwg.mxu0
      %676 = vst.msk [vmem:[#allocation2] sm:$0xff] %vm561, %v671
      %678 = vrot.lane.b32.xlu0 %v559, 120
      %v679 = vpop.permute.xlu0 %678
      %680 = vrot.lane.b32.xlu0 %v560, 120
      %v681 = vpop.permute.xlu0 %680
      %v683 = vsel %vm561, %v679, 0
      %v686 = vsel %vm561, %v681, 0
      %688 = vmatprep.subr.bf16.mxu0 0
      %689 = vmatpush1.bf16.xpose.msra.mxu0 %v686
      %690 = vmatprep.subr.bf16.mxu0 0
      %691 = vmatpush1.bf16.xpose.msra.mxu0 0
      %692 = vmatprep.subr.bf16.mxu0 0
      %693 = vmatpush1.bf16.xpose.msra.mxu0 0
      %694 = vmatprep.subr.bf16.mxu0 0
      %695 = vmatpush1.bf16.xpose.msra.mxu0 0
      %696 = vmatprep.subr.bf16.mxu0 0
      %697 = vmatpush1.bf16.xpose.msra.mxu0 0
      %698 = vmatprep.subr.bf16.mxu0 0
      %699 = vmatpush1.bf16.xpose.msra.mxu0 0
      %700 = vmatprep.subr.bf16.mxu0 0
      %701 = vmatpush1.bf16.xpose.msra.mxu0 0
      %702 = vmatprep.subr.bf16.mxu0 0
      %703 = vmatpush1.bf16.xpose.msra.mxu0 0
      %704 = vmatprep.subr.bf16.mxu0 0
      %705 = vmatpush1.bf16.xpose.msra.mxu0 0
      %706 = vmatprep.subr.bf16.mxu0 0
      %707 = vmatpush1.bf16.xpose.msra.mxu0 0
      %708 = vmatprep.subr.bf16.mxu0 0
      %709 = vmatpush1.bf16.xpose.msra.mxu0 0
      %710 = vmatprep.subr.bf16.mxu0 0
      %711 = vmatpush1.bf16.xpose.msra.mxu0 0
      %712 = vmatprep.subr.bf16.mxu0 0
      %713 = vmatpush1.bf16.xpose.msra.mxu0 0
      %714 = vmatprep.subr.bf16.mxu0 0
      %715 = vmatpush1.bf16.xpose.msra.mxu0 0
      %716 = vmatprep.subr.bf16.mxu0 0
      %717 = vmatpush1.bf16.xpose.msra.mxu0 0
      %718 = vmatprep.subr.bf16.mxu0 0
      %719 = vmatpush1.bf16.xpose.msra.mxu0 0
      %720 = vmatprep.mubr.bf16.mxu0 0
      %721 = vmatmul.mubr.bf16.gmra.mrb[0].mxu0 %v683
      %v722 = vpop.f32.mrb[0].mxu0
      %v723 = vadd.f32 0.0, %v722
      %v724 = vpop.f32.mrb[0].mxu0
      %v725 = vpop.f32.mrb[0].mxu0
      %v726 = vpop.f32.mrb[0].mxu0
      %727 = vdwg.mxu0
      %v728 = vmul.f32 %v723, 0.35355338
      %v729 = vadd.f32 %v728, %v613
      %v730 = vsel %vm616, %v729, -inf
      %731 = vmax.xlane.f32.xlu0 %v730
      %v732 = vpop.xlane.xlu0 %731
      %v733 = vsub.f32 %v729, %v732
      %v734 = vmul.f32 %v733, 1.442695
      %v735 = vpow.pop %v734
      %v736 = vsel %vm616, %v735, 0.0
      %737 = vadd.xlane.f32.xlu0 %v736
      %v738 = vpop.xlane.xlu0 %737
      %v739 = vrcp.pop %v738
      %v740 = vmul.f32 %v735, %v739
      %v741 = vpack.c.bf16 %v740, %v740
      %742 = vrot.lane.b32.xlu0 %v560, 88
      %v743 = vpop.permute.xlu0 %742
      %v746 = vsel %vm616, %v741, 0
      %748 = vmatprep.subr.bf16.mxu0 0
      %749 = vmatpush1.bf16.msra.mxu0 %v743
      %750 = vmatprep.subr.bf16.mxu0 0
      %751 = vmatpush1.bf16.msra.mxu0 0
      %752 = vmatprep.subr.bf16.mxu0 0
      %753 = vmatpush1.bf16.msra.mxu0 0
      %754 = vmatprep.subr.bf16.mxu0 0
      %755 = vmatpush1.bf16.msra.mxu0 0
      %756 = vmatprep.subr.bf16.mxu0 0
      %757 = vmatpush1.bf16.msra.mxu0 0
      %758 = vmatprep.subr.bf16.mxu0 0
      %759 = vmatpush1.bf16.msra.mxu0 0
      %760 = vmatprep.subr.bf16.mxu0 0
      %761 = vmatpush1.bf16.msra.mxu0 0
      %762 = vmatprep.subr.bf16.mxu0 0
      %763 = vmatpush1.bf16.msra.mxu0 0
      %764 = vmatprep.subr.bf16.mxu0 0
      %765 = vmatpush1.bf16.msra.mxu0 0
      %766 = vmatprep.subr.bf16.mxu0 0
      %767 = vmatpush1.bf16.msra.mxu0 0
      %768 = vmatprep.subr.bf16.mxu0 0
      %769 = vmatpush1.bf16.msra.mxu0 0
      %770 = vmatprep.subr.bf16.mxu0 0
      %771 = vmatpush1.bf16.msra.mxu0 0
      %772 = vmatprep.subr.bf16.mxu0 0
      %773 = vmatpush1.bf16.msra.mxu0 0
      %774 = vmatprep.subr.bf16.mxu0 0
      %775 = vmatpush1.bf16.msra.mxu0 0
      %776 = vmatprep.subr.bf16.mxu0 0
      %777 = vmatpush1.bf16.msra.mxu0 0
      %778 = vmatprep.subr.bf16.mxu0 0
      %779 = vmatpush1.bf16.msra.mxu0 0
      %780 = vmatprep.mubr.bf16.mxu0 0
      %781 = vmatmul.mubr.bf16.gmra.mrb[0].mxu0 %v746
      %v782 = vpop.f32.mrb[0].mxu0
      %v783 = vadd.f32 0.0, %v782
      %v784 = vpop.f32.mrb[0].mxu0
      %v785 = vpop.f32.mrb[0].mxu0
      %v786 = vpop.f32.mrb[0].mxu0
      %787 = vdwg.mxu0
      %789 = vrot.lane.b32.xlu0 %v783, 8
      %v790 = vpop.permute.xlu0 %789
      %vm792 = vcmask 130112
      %793 = vst.msk [vmem:[#allocation2] sm:$0xff] %vm792, %v790
      %794 = vrot.lane.b32.xlu0 %v559, 112
      %v795 = vpop.permute.xlu0 %794
      %796 = vrot.lane.b32.xlu0 %v560, 112
      %v797 = vpop.permute.xlu0 %796
      %v799 = vsel %vm561, %v795, 0
      %v802 = vsel %vm561, %v797, 0
      %804 = vmatprep.subr.bf16.mxu0 0
      %805 = vmatpush1.bf16.xpose.msra.mxu0 %v802
      %806 = vmatprep.subr.bf16.mxu0 0
      %807 = vmatpush1.bf16.xpose.msra.mxu0 0
      %808 = vmatprep.subr.bf16.mxu0 0
      %809 = vmatpush1.bf16.xpose.msra.mxu0 0
      %810 = vmatprep.subr.bf16.mxu0 0
      %811 = vmatpush1.bf16.xpose.msra.mxu0 0
      %812 = vmatprep.subr.bf16.mxu0 0
      %813 = vmatpush1.bf16.xpose.msra.mxu0 0
      %814 = vmatprep.subr.bf16.mxu0 0
      %815 = vmatpush1.bf16.xpose.msra.mxu0 0
      %816 = vmatprep.subr.bf16.mxu0 0
      %817 = vmatpush1.bf16.xpose.msra.mxu0 0
      %818 = vmatprep.subr.bf16.mxu0 0
      %819 = vmatpush1.bf16.xpose.msra.mxu0 0
      %820 = vmatprep.subr.bf16.mxu0 0
      %821 = vmatpush1.bf16.xpose.msra.mxu0 0
      %822 = vmatprep.subr.bf16.mxu0 0
      %823 = vmatpush1.bf16.xpose.msra.mxu0 0
      %824 = vmatprep.subr.bf16.mxu0 0
      %825 = vmatpush1.bf16.xpose.msra.mxu0 0
      %826 = vmatprep.subr.bf16.mxu0 0
      %827 = vmatpush1.bf16.xpose.msra.mxu0 0
      %828 = vmatprep.subr.bf16.mxu0 0
      %829 = vmatpush1.bf16.xpose.msra.mxu0 0
      %830 = vmatprep.subr.bf16.mxu0 0
      %831 = vmatpush1.bf16.xpose.msra.mxu0 0
      %832 = vmatprep.subr.bf16.mxu0 0
      %833 = vmatpush1.bf16.xpose.msra.mxu0 0
      %834 = vmatprep.subr.bf16.mxu0 0
      %835 = vmatpush1.bf16.xpose.msra.mxu0 0
      %836 = vmatprep.mubr.bf16.mxu0 0
      %837 = vmatmul.mubr.bf16.gmra.mrb[0].mxu0 %v799
      %v838 = vpop.f32.mrb[0].mxu0
      %v839 = vadd.f32 0.0, %v838
      %v840 = vpop.f32.mrb[0].mxu0
      %v841 = vpop.f32.mrb[0].mxu0
      %v842 = vpop.f32.mrb[0].mxu0
      %843 = vdwg.mxu0
      %v844 = vmul.f32 %v839, 0.35355338
      %v845 = vadd.f32 %v844, %v613
      %v846 = vsel %vm616, %v845, -inf
      %847 = vmax.xlane.f32.xlu0 %v846
      %v848 = vpop.xlane.xlu0 %847
      %v849 = vsub.f32 %v845, %v848
      %v850 = vmul.f32 %v849, 1.442695
      %v851 = vpow.pop %v850
      %v852 = vsel %vm616, %v851, 0.0
      %853 = vadd.xlane.f32.xlu0 %v852
      %v854 = vpop.xlane.xlu0 %853
      %v855 = vrcp.pop %v854
      %v856 = vmul.f32 %v851, %v855
      %v857 = vpack.c.bf16 %v856, %v856
      %858 = vrot.lane.b32.xlu0 %v560, 80
      %v859 = vpop.permute.xlu0 %858
      %v862 = vsel %vm616, %v857, 0
      %864 = vmatprep.subr.bf16.mxu0 0
      %865 = vmatpush1.bf16.msra.mxu0 %v859
      %866 = vmatprep.subr.bf16.mxu0 0
      %867 = vmatpush1.bf16.msra.mxu0 0
      %868 = vmatprep.subr.bf16.mxu0 0
      %869 = vmatpush1.bf16.msra.mxu0 0
      %870 = vmatprep.subr.bf16.mxu0 0
      %871 = vmatpush1.bf16.msra.mxu0 0
      %872 = vmatprep.subr.bf16.mxu0 0
      %873 = vmatpush1.bf16.msra.mxu0 0
      %874 = vmatprep.subr.bf16.mxu0 0
      %875 = vmatpush1.bf16.msra.mxu0 0
      %876 = vmatprep.subr.bf16.mxu0 0
      %877 = vmatpush1.bf16.msra.mxu0 0
      %878 = vmatprep.subr.bf16.mxu0 0
      %879 = vmatpush1.bf16.msra.mxu0 0
      %880 = vmatprep.subr.bf16.mxu0 0
      %881 = vmatpush1.bf16.msra.mxu0 0
      %882 = vmatprep.subr.bf16.mxu0 0
      %883 = vmatpush1.bf16.msra.mxu0 0
      %884 = vmatprep.subr.bf16.mxu0 0
      %885 = vmatpush1.bf16.msra.mxu0 0
      %886 = vmatprep.subr.bf16.mxu0 0
      %887 = vmatpush1.bf16.msra.mxu0 0
      %888 = vmatprep.subr.bf16.mxu0 0
      %889 = vmatpush1.bf16.msra.mxu0 0
      %890 = vmatprep.subr.bf16.mxu0 0
      %891 = vmatpush1.bf16.msra.mxu0 0
      %892 = vmatprep.subr.bf16.mxu0 0
      %893 = vmatpush1.bf16.msra.mxu0 0
      %894 = vmatprep.subr.bf16.mxu0 0
      %895 = vmatpush1.bf16.msra.mxu0 0
      %896 = vmatprep.mubr.bf16.mxu0 0
      %897 = vmatmul.mubr.bf16.gmra.mrb[0].mxu0 %v862
      %v898 = vpop.f32.mrb[0].mxu0
      %v899 = vadd.f32 0.0, %v898
      %v900 = vpop.f32.mrb[0].mxu0
      %v901 = vpop.f32.mrb[0].mxu0
      %v902 = vpop.f32.mrb[0].mxu0
      %903 = vdwg.mxu0
      %905 = vrot.lane.b32.xlu0 %v899, 16
      %v906 = vpop.permute.xlu0 %905
      %vm908 = vcmask 195712
      %909 = vst.msk [vmem:[#allocation2] sm:$0xff] %vm908, %v906
      %910 = vrot.lane.b32.xlu0 %v559, 104
      %v911 = vpop.permute.xlu0 %910
      %912 = vrot.lane.b32.xlu0 %v560, 104
      %v913 = vpop.permute.xlu0 %912
      %v915 = vsel %vm561, %v911, 0
      %v918 = vsel %vm561, %v913, 0
      %920 = vmatprep.subr.bf16.mxu0 0
      %921 = vmatpush1.bf16.xpose.msra.mxu0 %v918
      %922 = vmatprep.subr.bf16.mxu0 0
      %923 = vmatpush1.bf16.xpose.msra.mxu0 0
      %924 = vmatprep.subr.bf16.mxu0 0
      %925 = vmatpush1.bf16.xpose.msra.mxu0 0
      %926 = vmatprep.subr.bf16.mxu0 0
      %927 = vmatpush1.bf16.xpose.msra.mxu0 0
      %928 = vmatprep.subr.bf16.mxu0 0
      %929 = vmatpush1.bf16.xpose.msra.mxu0 0
      %930 = vmatprep.subr.bf16.mxu0 0
      %931 = vmatpush1.bf16.xpose.msra.mxu0 0
      %932 = vmatprep.subr.bf16.mxu0 0
      %933 = vmatpush1.bf16.xpose.msra.mxu0 0
      %934 = vmatprep.subr.bf16.mxu0 0
      %935 = vmatpush1.bf16.xpose.msra.mxu0 0
      %936 = vmatprep.subr.bf16.mxu0 0
      %937 = vmatpush1.bf16.xpose.msra.mxu0 0
      %938 = vmatprep.subr.bf16.mxu0 0
      %939 = vmatpush1.bf16.xpose.msra.mxu0 0
      %940 = vmatprep.subr.bf16.mxu0 0
      %941 = vmatpush1.bf16.xpose.msra.mxu0 0
      %942 = vmatprep.subr.bf16.mxu0 0
      %943 = vmatpush1.bf16.xpose.msra.mxu0 0
      %944 = vmatprep.subr.bf16.mxu0 0
      %945 = vmatpush1.bf16.xpose.msra.mxu0 0
      %946 = vmatprep.subr.bf16.mxu0 0
      %947 = vmatpush1.bf16.xpose.msra.mxu0 0
      %948 = vmatprep.subr.bf16.mxu0 0
      %949 = vmatpush1.bf16.xpose.msra.mxu0 0
      %950 = vmatprep.subr.bf16.mxu0 0
      %951 = vmatpush1.bf16.xpose.msra.mxu0 0
      %952 = vmatprep.mubr.bf16.mxu0 0
      %953 = vmatmul.mubr.bf16.gmra.mrb[0].mxu0 %v915
      %v954 = vpop.f32.mrb[0].mxu0
      %v955 = vadd.f32 0.0, %v954
      %v956 = vpop.f32.mrb[0].mxu0
      %v957 = vpop.f32.mrb[0].mxu0
      %v958 = vpop.f32.mrb[0].mxu0
      %959 = vdwg.mxu0
      %v960 = vmul.f32 %v955, 0.35355338
      %v961 = vadd.f32 %v960, %v613
      %v962 = vsel %vm616, %v961, -inf
      %963 = vmax.xlane.f32.xlu0 %v962
      %v964 = vpop.xlane.xlu0 %963
      %v965 = vsub.f32 %v961, %v964
      %v966 = vmul.f32 %v965, 1.442695
      %v967 = vpow.pop %v966
      %v968 = vsel %vm616, %v967, 0.0
      %969 = vadd.xlane.f32.xlu0 %v968
      %v970 = vpop.xlane.xlu0 %969
      %v971 = vrcp.pop %v970
      %v972 = vmul.f32 %v967, %v971
      %v973 = vpack.c.bf16 %v972, %v972
      %974 = vrot.lane.b32.xlu0 %v560, 72
      %v975 = vpop.permute.xlu0 %974
      %v978 = vsel %vm616, %v973, 0
      %980 = vmatprep.subr.bf16.mxu0 0
      %981 = vmatpush1.bf16.msra.mxu0 %v975
      %982 = vmatprep.subr.bf16.mxu0 0
      %983 = vmatpush1.bf16.msra.mxu0 0
      %984 = vmatprep.subr.bf16.mxu0 0
      %985 = vmatpush1.bf16.msra.mxu0 0
      %986 = vmatprep.subr.bf16.mxu0 0
      %987 = vmatpush1.bf16.msra.mxu0 0
      %988 = vmatprep.subr.bf16.mxu0 0
      %989 = vmatpush1.bf16.msra.mxu0 0
      %990 = vmatprep.subr.bf16.mxu0 0
      %991 = vmatpush1.bf16.msra.mxu0 0
      %992 = vmatprep.subr.bf16.mxu0 0
      %993 = vmatpush1.bf16.msra.mxu0 0
      %994 = vmatprep.subr.bf16.mxu0 0
      %995 = vmatpush1.bf16.msra.mxu0 0
      %996 = vmatprep.subr.bf16.mxu0 0
      %997 = vmatpush1.bf16.msra.mxu0 0
      %998 = vmatprep.subr.bf16.mxu0 0
      %999 = vmatpush1.bf16.msra.mxu0 0
      %1000 = vmatprep.subr.bf16.mxu0 0
      %1001 = vmatpush1.bf16.msra.mxu0 0
      %1002 = vmatprep.subr.bf16.mxu0 0
      %1003 = vmatpush1.bf16.msra.mxu0 0
      %1004 = vmatprep.subr.bf16.mxu0 0
      %1005 = vmatpush1.bf16.msra.mxu0 0
      %1006 = vmatprep.subr.bf16.mxu0 0
      %1007 = vmatpush1.bf16.msra.mxu0 0
      %1008 = vmatprep.subr.bf16.mxu0 0
      %1009 = vmatpush1.bf16.msra.mxu0 0
      %1010 = vmatprep.subr.bf16.mxu0 0
      %1011 = vmatpush1.bf16.msra.mxu0 0
      %1012 = vmatprep.mubr.bf16.mxu0 0
      %1013 = vmatmul.mubr.bf16.gmra.mrb[0].mxu0 %v978
      %v1014 = vpop.f32.mrb[0].mxu0
      %v1015 = vadd.f32 0.0, %v1014
      %v1016 = vpop.f32.mrb[0].mxu0
      %v1017 = vpop.f32.mrb[0].mxu0
      %v1018 = vpop.f32.mrb[0].mxu0
      %1019 = vdwg.mxu0
      %1021 = vrot.lane.b32.xlu0 %v1015, 24
      %v1022 = vpop.permute.xlu0 %1021
      %vm1024 = vcmask 261312
      %1025 = vst.msk [vmem:[#allocation2] sm:$0xff] %vm1024, %v1022
      %v1026 = vld [vmem:[#allocation2] sm:$0xff]
      %v1027 = vpack.c.bf16 %v1026, %v1026
      %v1028 = vld [vmem:[%s7] sm:$0xf]
      %v1029 = vld [vmem:[%s7 + $0x4] sm:$0xf]
      %v1030 = vld [vmem:[%s7 + $0x8] sm:$0xf]
      %v1031 = vld [vmem:[%s7 + $0xc] sm:$0xf]
      %v1032 = vld [vmem:[%s8] sm:$0x1]
      %v1034 = vlaneseq
      %v1035 = vshrl.u32 %v1034, 7
      %v1036 = vsub.s32 0, %v1035
      %v1037 = vrot.slane %v1032, %v1036
      %v1043 = vunpack.c.l.b16 %v1028
      %v1044 = vunpack.c.l.b16 %v1029
      %v1045 = vunpack.c.l.b16 %v1030
      %v1046 = vunpack.c.l.b16 %v1031
      %v1047 = vpack.c.b16 %v1044, %v1043
      %v1048 = vpack.c.b16 %v1046, %v1045
      %v1052 = vsel %vm446, %v1027, 0
      %1054 = vmatprep.subr.bf16.mxu0 0
      %1055 = vmatpush1.bf16.msra.mxu0 %v1047
      %1056 = vmatprep.subr.bf16.mxu0 0
      %1057 = vmatpush1.bf16.msra.mxu0 %v1048
      %1058 = vmatprep.subr.bf16.mxu0 0
      %1059 = vmatpush1.bf16.msra.mxu0 0
      %1060 = vmatprep.subr.bf16.mxu0 0
      %1061 = vmatpush1.bf16.msra.mxu0 0
      %1062 = vmatprep.subr.bf16.mxu0 0
      %1063 = vmatpush1.bf16.msra.mxu0 0
      %1064 = vmatprep.subr.bf16.mxu0 0
      %1065 = vmatpush1.bf16.msra.mxu0 0
      %1066 = vmatprep.subr.bf16.mxu0 0
      %1067 = vmatpush1.bf16.msra.mxu0 0
      %1068 = vmatprep.subr.bf16.mxu0 0
      %1069 = vmatpush1.bf16.msra.mxu0 0
      %1070 = vmatprep.subr.bf16.mxu0 0
      %1071 = vmatpush1.bf16.msra.mxu0 0
      %1072 = vmatprep.subr.bf16.mxu0 0
      %1073 = vmatpush1.bf16.msra.mxu0 0
      %1074 = vmatprep.subr.bf16.mxu0 0
      %1075 = vmatpush1.bf16.msra.mxu0 0
      %1076 = vmatprep.subr.bf16.mxu0 0
      %1077 = vmatpush1.bf16.msra.mxu0 0
      %1078 = vmatprep.subr.bf16.mxu0 0
      %1079 = vmatpush1.bf16.msra.mxu0 0
      %1080 = vmatprep.subr.bf16.mxu0 0
      %1081 = vmatpush1.bf16.msra.mxu0 0
      %1082 = vmatprep.subr.bf16.mxu0 0
      %1083 = vmatpush1.bf16.msra.mxu0 0
      %1084 = vmatprep.subr.bf16.mxu0 0
      %1085 = vmatpush1.bf16.msra.mxu0 0
      %1086 = vmatprep.mubr.bf16.mxu0 0
      %1087 = vmatmul.mubr.bf16.gmra.mrb[0].mxu0 %v1052
      %v1088 = vpop.f32.mrb[0].mxu0
      %v1089 = vadd.f32 %v1037, %v1088
      %v1090 = vpop.f32.mrb[0].mxu0
      %v1091 = vpop.f32.mrb[0].mxu0
      %v1092 = vpop.f32.mrb[0].mxu0
      %1093 = vdwg.mxu0
      %v1094 = vld [vmem:[%s9] sm:$0x1]
      %v1095 = vld [vmem:[%s10] sm:$0x1]
      %v1096 = vsel %vm446, %v1089, 0.0
      %1097 = vadd.xlane.f32.xlu0 %v1096
      %v1098 = vpop.xlane.xlu0 %1097
      %v1099 = vrcp.pop 32.0
      %v1100 = vmul.f32 %v1098, %v1099
      %v1101 = vsub.f32 %v1089, %v1100
      %v1102 = vmul.f32 %v1101, %v1101
      %v1103 = vsel %vm446, %v1102, 0.0
      %1104 = vadd.xlane.f32.xlu0 %v1103
      %v1105 = vpop.xlane.xlu0 %1104
      %v1106 = vrcp.pop 31.0
      %v1107 = vmul.f32 %v1105, %v1106
      %v1108 = vrsqrt.pop %v1107
      %v1109 = vmul.f32 %v1107, %v1108
      %vm1110 = vcmp.eq.f32.partialorder %v1107, inf
      %v1111 = vsel %vm1110, %v1107, %v1109
      %vm1112 = vcmp.eq.f32.partialorder %v1107, 0.0
      %v1113 = vand.u32 %v1107, 2147483648
      %v1114 = vsel %vm1112, %v1113, %v1111
      %v1115 = vadd.f32 %v1114, 1e-06
      %v1116 = vrcp.pop %v1115
      %v1117 = vmul.f32 %v1101, %v1116
      %v1119 = vlaneseq
      %v1120 = vshrl.u32 %v1119, 7
      %v1121 = vsub.s32 0, %v1120
      %v1122 = vrot.slane %v1094, %v1121
      %v1124 = vmul.f32 %v1122, %v1117
      %v1126 = vlaneseq
      %v1127 = vshrl.u32 %v1126, 7
      %v1128 = vsub.s32 0, %v1127
      %v1129 = vrot.slane %v1095, %v1128
      %v1131 = vadd.f32 %v1124, %v1129
      %1132 = vst.msk [vmem:[%s417] sm:$0xff] %vm446, %v1131
      %p1133 = scmp.lt.s32.totalorder %s22, 1
      %s1134 = scalar_select %p1133, %s22, 1
      %s1135 = smul.addr %s1134, 8
      %s1136 = scalar_lea.vmem %s11, %s1135
      // Predicated region
      $region65: #{forward.18} parent=63 // pred_check
        %p1137 = pneg %p286
      $region66: #{forward.18} parent=63 // pred_check_branch
        %1139 = sbr.rel (%p1137) target = $region68
      $region67: #{forward.18} parent=63 // pred_region
        _
      $region68: #{forward.18} parent=63 // pred_fallthru
        _
    $region64: #{forward.18} parent=5 // pred_fallthru
      _
    %p1140 = scmp.le.s32.totalorder 2, %s17
    // Predicated region
    $region69: #{forward.18} parent=5 // pred_check
      %p1141 = pneg %p1140
    $region70: #{forward.18} parent=5 // pred_check_branch
      %1143 = sbr.rel (%p1141) target = $region72
    $region71: #{forward.18} parent=5 // pred_region
      %s1144 = ssub.s32 %s17, 2
      // Predicated region
      $region73: #{forward.18} parent=71 // pred_check
        %p1145 = pneg %p292
      $region74: #{forward.18} parent=71 // pred_check_branch
        %1147 = sbr.rel (%p1145) target = $region76
      $region75: #{forward.18} parent=71 // pred_region
        %p1148 = scmp.lt.s32.totalorder %s23, 1
        %s1149 = scalar_select %p1148, %s23, 1
        %s1150 = smul.addr %s1149, 8
        %s1151 = scalar_lea.vmem %s11, %s1150
      $region76: #{forward.18} parent=71 // pred_fallthru
        _
    $region72: #{forward.18} parent=5 // pred_fallthru
      _
  $region6: #{forward.18} parent=0 // loop_footer
    %s21 = sadd.s32 1, %s17
  $region7: #{forward.18} parent=0 // loop_footer_branch
    %16 = sbr.rel target = $region3
  $region8: #{forward.18} parent=0 // loop_exit
    _

</llo_original>
